<compile_context>
chip_gen: v6e
topology: v6e:2x2x1
jax: 0.10.0
libtpu: 0.0.40
codegen_flags: <defaults>
</compile_context>

<pallas_src>
import functools

import jax
import jax.numpy as jnp
from jax.experimental import pallas as pl
from jax.experimental.pallas import tpu as pltpu

BN_EPS = 1e-5


def _head_kernel(x_ref, gamma_ref, beta_ref, w_ref, gfeat_ref, cls_ref,
                 *, inv_hw, eps):
    ci = pl.program_id(0)
    hw = pl.program_id(1)

    @pl.when(hw == 0)
    def _init_gfeat():
        gfeat_ref[...] = jnp.zeros_like(gfeat_ref)

    # Spatial partial sum for this (C-tile, HW-tile); f32 accumulation,
    # cross-lane reduction over the HW lane axis into the resident out block.
    x = x_ref[...].astype(jnp.float32)                  # (B, c_tile, hw_tile)
    gfeat_ref[...] += jnp.sum(x, axis=-1)               # (B, c_tile)

    @pl.when(hw == pl.num_programs(1) - 1)
    def _finalize():
        gfeat = gfeat_ref[...] * inv_hw                 # global average pool
        gfeat_ref[...] = gfeat
        # BatchNorm1d, training mode: per-channel batch stats, biased variance.
        mu = jnp.mean(gfeat, axis=0, keepdims=True)
        var = jnp.mean(jnp.square(gfeat - mu), axis=0, keepdims=True)
        feat = (gfeat - mu) * jax.lax.rsqrt(var + eps)
        feat = feat * gamma_ref[...] + beta_ref[...]
        # Classifier partial product for this C tile: transposed-RHS matmul on
        # the native (num_classes, c_tile) weight block (bf16 MXU, f32 acc).
        partial = jax.lax.dot_general(
            feat.astype(jnp.bfloat16),
            w_ref[...].astype(jnp.bfloat16),
            dimension_numbers=(((1,), (1,)), ((), ())),
            preferred_element_type=jnp.float32)         # (B, num_classes)

        @pl.when(ci == 0)
        def _first():
            cls_ref[...] = partial

        @pl.when(ci > 0)
        def _accum():
            cls_ref[...] += partial


def _vmem_capacity_bytes():
    """Physical per-core VMEM for this generation; conservative fallback."""
    try:
        info = pltpu.get_tpu_info()
        for attr in ("vmem_capacity_bytes", "vmem_bytes", "vmem_size_bytes"):
            v = getattr(info, attr, None)
            if v:
                return int(v)
    except Exception:
        pass
    return 64 * 1024 * 1024        # v7x-sized fallback (safe everywhere)


def _fits(B, c_tile, hw_tile, x_item, n_cls, w_item, budget):
    # Count everything that lives in VMEM at once (double-buffered pipeline).
    x_bytes = 2 * B * c_tile * hw_tile * x_item          # input windows
    w_bytes = 2 * n_cls * c_tile * w_item                # classifier weight
    gb_bytes = 2 * 2 * c_tile * 4                        # gamma + beta (f32)
    out_bytes = 2 * (B * c_tile + B * n_cls) * 4         # resident out blocks
    return x_bytes + w_bytes + gb_bytes + out_bytes <= budget


def _choose_tiles(B, C, HW, x_item, n_cls, w_item, budget):
    """Prefer the collapsed grid (full C, full HW); shrink C before HW."""
    c_cands = [C] + [c for c in (1024, 512, 256, 128) if c < C and C % c == 0]
    hw_cands = [HW] + [h for h in (2048, 1024, 512, 256, 128)
                       if h < HW and HW % h == 0]
    for hw_tile in hw_cands:          # keep hw_tile == HW as long as possible
        for c_tile in c_cands:        # shrink the channel tile first
            if _fits(B, c_tile, hw_tile, x_item, n_cls, w_item, budget):
                return c_tile, hw_tile
    return c_cands[-1], hw_cands[-1]


def backbone_head(x_nchw, bn_gamma, bn_beta, classifier_w, *, eps=BN_EPS):
    """Fused head of Backbone.forward (training, neck='bnneck').

    Args:
      x_nchw: (B, C, H, W) output of the ResNet base, any float dtype.
      bn_gamma, bn_beta: (C,) BatchNorm1d affine params.
      classifier_w: (num_classes, C) Linear weight (bias=False), native layout.
    Returns:
      (cls_score (B, num_classes) f32, global_feat (B, C) f32)
    """
    B, C, H, W = x_nchw.shape
    HW = H * W
    num_classes = classifier_w.shape[0]

    # Free reshape (no HBM transpose): spatial goes onto the lane axis.
    x = x_nchw.reshape(B, C, HW)
    gamma = bn_gamma.reshape(1, C).astype(jnp.float32)
    beta = bn_beta.reshape(1, C).astype(jnp.float32)

    # Per-generation scoped-VMEM limit; derive the tile budget from the same
    # number we hand to the compiler (headroom for (8,128)-tile padding).
    vmem_phys = _vmem_capacity_bytes()
    vmem_limit = min((vmem_phys * 3) // 4, 96 * 1024 * 1024)
    budget = (vmem_limit * 3) // 4

    c_tile, hw_tile = _choose_tiles(B, C, HW, x.dtype.itemsize,
                                    num_classes, classifier_w.dtype.itemsize,
                                    budget)
    num_c_tiles = C // c_tile
    num_hw_tiles = HW // hw_tile

    kernel = functools.partial(_head_kernel, inv_hw=1.0 / float(HW), eps=eps)

    grid_spec = pltpu.PrefetchScalarGridSpec(
        num_scalar_prefetch=0,
        grid=(num_c_tiles, num_hw_tiles),
        in_specs=[
            pl.BlockSpec((B, c_tile, hw_tile), lambda ci, hi: (0, ci, hi)),
            pl.BlockSpec((1, c_tile), lambda ci, hi: (0, ci)),
            pl.BlockSpec((1, c_tile), lambda ci, hi: (0, ci)),
            pl.BlockSpec((num_classes, c_tile), lambda ci, hi: (0, ci)),
        ],
        out_specs=[
            pl.BlockSpec((B, c_tile), lambda ci, hi: (0, ci)),
            pl.BlockSpec((B, num_classes), lambda ci, hi: (0, 0)),
        ],
    )

    global_feat, cls_score = pl.pallas_call(
        kernel,
        grid_spec=grid_spec,
        out_shape=(
            jax.ShapeDtypeStruct((B, C), jnp.float32),
            jax.ShapeDtypeStruct((B, num_classes), jnp.float32),
        ),
        compiler_params=pltpu.CompilerParams(
            # Both outputs are resident accumulators across their grid axes
            # (gfeat over hw, cls over ci and hw), so both axes are reductions.
            dimension_semantics=("arbitrary", "arbitrary"),
            vmem_limit_bytes=vmem_limit,
        ),
    )(x, gamma, beta, classifier_w)

    return cls_score, global_feat


def backbone_head_reference(x_nchw, bn_gamma, bn_beta, classifier_w, *, eps=BN_EPS):
    """Pure-JAX reference mirroring the PyTorch forward (training, bnneck)."""
    xf = x_nchw.astype(jnp.float32)
    global_feat = jnp.mean(xf, axis=(2, 3))                         # (B, C)
    mu = jnp.mean(global_feat, axis=0, keepdims=True)
    var = jnp.mean((global_feat - mu) ** 2, axis=0, keepdims=True)  # biased
    feat = (global_feat - mu) / jnp.sqrt(var + eps) * bn_gamma + bn_beta
    cls_score = feat @ classifier_w.astype(jnp.float32).T
    return cls_score, global_feat


if __name__ == "__main__":
    # resnet18-style head (in_planes=512), base output spatial 8x8, batch 2.
    B, C, H, W = 2, 512, 8, 8
    NUM_CLASSES = 16

    key = jax.random.PRNGKey(0)
    kx, kw = jax.random.split(key)

    # Base output in its native (bf16) dtype -- the kernel accumulates in f32.
    x = jax.random.normal(kx, (B, C, H, W), dtype=jnp.float32).astype(jnp.bfloat16)

    # Parameter init matching the module: classifier ~ N(0, 0.001), no bias;
    # bottleneck BatchNorm1d weight=1, bias=0 (kaiming init path).
    classifier_w = 0.001 * jax.random.normal(kw, (NUM_CLASSES, C),
                                             dtype=jnp.float32)
    bn_gamma = jnp.ones((C,), dtype=jnp.float32)
    bn_beta = jnp.zeros((C,), dtype=jnp.float32)

    cls_score, global_feat = backbone_head(x, bn_gamma, bn_beta, classifier_w)
    jax.block_until_ready((cls_score, global_feat))

    ref_cls, ref_gfeat = backbone_head_reference(x, bn_gamma, bn_beta,
                                                 classifier_w)
    assert cls_score.shape == (B, NUM_CLASSES)
    assert global_feat.shape == (B, C)
    assert jnp.allclose(global_feat, ref_gfeat, atol=1e-4, rtol=1e-4), \
        float(jnp.max(jnp.abs(global_feat - ref_gfeat)))
    # Classifier matmul runs in bf16 on the MXU (f32 accumulate) vs f32 reference.
    assert jnp.allclose(cls_score, ref_cls, atol=2e-3, rtol=0.0), \
        float(jnp.max(jnp.abs(cls_score - ref_cls)))

    print("KERNEL_OK")
</pallas_src>

<mosaic_0001>
module attributes {stable_mosaic.version = 11 : i64} {
  func.func @_head_kernel(%arg0: i32, %arg1: i32, %arg2: memref<2x512x64xbf16, #tpu.memory_space<vmem>>, %arg3: memref<1x512xf32, #tpu.memory_space<vmem>>, %arg4: memref<1x512xf32, #tpu.memory_space<vmem>>, %arg5: memref<16x512xf32, #tpu.memory_space<vmem>>, %arg6: memref<2x512xf32, #tpu.memory_space<vmem>>, %arg7: memref<2x16xf32, #tpu.memory_space<vmem>>) attributes {dimension_semantics = [#tpu.dimension_semantics<arbitrary>, #tpu.dimension_semantics<arbitrary>], iteration_bounds = array<i64: 1, 1>, scalar_prefetch = 0 : i64, scratch_operands = 0 : i64, tpu.core_type = #tpu.core_type<tc>, window_params = [{transform_indices = @transform_0, window_bounds = array<i64: 2, 512, 64>}, {transform_indices = @transform_1, window_bounds = array<i64: 1, 512>}, {transform_indices = @transform_2, window_bounds = array<i64: 1, 512>}, {transform_indices = @transform_3, window_bounds = array<i64: 16, 512>}, {transform_indices = @transform_4, window_bounds = array<i64: 2, 512>}, {pipeline_mode = #tpu.pipeline_mode<synchronous>, transform_indices = @transform_5, window_bounds = array<i64: 2, 16>}]} {
    %c0_i32 = arith.constant 0 : i32
    %0 = arith.cmpi eq, %arg1, %c0_i32 : i32
    %1 = arith.extui %0 : i1 to i32
    %c0_i32_0 = arith.constant 0 : i32
    %2 = arith.cmpi ne, %1, %c0_i32_0 : i32
    scf.if %2 {
      %cst_9 = arith.constant 0.000000e+00 : f32
      %12 = vector.broadcast %cst_9 : f32 to vector<2x512xf32>
      %c0_10 = arith.constant 0 : index
      %c0_11 = arith.constant 0 : index
      %13 = vector.load %arg6[%c0_10, %c0_11] : memref<2x512xf32, #tpu.memory_space<vmem>>, vector<2x512xf32>
      tpu.vector_store %arg6[%c0_10, %c0_11], %12 {strides = array<i32>} : memref<2x512xf32, #tpu.memory_space<vmem>>, vector<2x512xf32>,
    } else {
    }
    %c0 = arith.constant 0 : index
    %c0_1 = arith.constant 0 : index
    %c0_2 = arith.constant 0 : index
    %3 = vector.load %arg2[%c0, %c0_1, %c0_2] : memref<2x512x64xbf16, #tpu.memory_space<vmem>>, vector<2x512x64xbf16>
    %4 = arith.extf %3 : vector<2x512x64xbf16> to vector<2x512x64xf32>
    %c0_3 = arith.constant 0 : index
    %c0_4 = arith.constant 0 : index
    %5 = vector.load %arg6[%c0_3, %c0_4] : memref<2x512xf32, #tpu.memory_space<vmem>>, vector<2x512xf32>
    %cst = arith.constant dense<0.000000e+00> : vector<2x512xf32>
    %6 = vector.multi_reduction <add>, %4, %cst [2] : vector<2x512x64xf32> to vector<2x512xf32>
    %7 = arith.addf %5, %6 : vector<2x512xf32>
    %c0_5 = arith.constant 0 : index
    %c0_6 = arith.constant 0 : index
    %8 = vector.load %arg6[%c0_5, %c0_6] : memref<2x512xf32, #tpu.memory_space<vmem>>, vector<2x512xf32>
    tpu.vector_store %arg6[%c0_5, %c0_6], %7 {strides = array<i32>} : memref<2x512xf32, #tpu.memory_space<vmem>>, vector<2x512xf32>,
    %c0_i32_7 = arith.constant 0 : i32
    %9 = arith.cmpi eq, %arg1, %c0_i32_7 : i32
    %10 = arith.extui %9 : i1 to i32
    %c0_i32_8 = arith.constant 0 : i32
    %11 = arith.cmpi ne, %10, %c0_i32_8 : i32
    scf.if %11 {
      %c0_9 = arith.constant 0 : index
      %c0_10 = arith.constant 0 : index
      %12 = vector.load %arg6[%c0_9, %c0_10] : memref<2x512xf32, #tpu.memory_space<vmem>>, vector<2x512xf32>
      %cst_11 = arith.constant 1.562500e-02 : f32
      %13 = vector.broadcast %cst_11 : f32 to vector<2x512xf32>
      %14 = arith.mulf %12, %13 : vector<2x512xf32>
      %c0_12 = arith.constant 0 : index
      %c0_13 = arith.constant 0 : index
      %15 = vector.load %arg6[%c0_12, %c0_13] : memref<2x512xf32, #tpu.memory_space<vmem>>, vector<2x512xf32>
      tpu.vector_store %arg6[%c0_12, %c0_13], %14 {strides = array<i32>} : memref<2x512xf32, #tpu.memory_space<vmem>>, vector<2x512xf32>,
      %cst_14 = arith.constant dense<0.000000e+00> : vector<512xf32>
      %16 = vector.multi_reduction <add>, %14, %cst_14 [0] : vector<2x512xf32> to vector<512xf32>
      %17 = vector.shape_cast %16 : vector<512xf32> to vector<1x512xf32>
      %cst_15 = arith.constant 2.000000e+00 : f32
      %18 = vector.broadcast %cst_15 : f32 to vector<1x512xf32>
      %19 = arith.divf %17, %18 : vector<1x512xf32>
      %20 = vector.broadcast %19 : vector<1x512xf32> to vector<2x512xf32>
      %21 = arith.subf %14, %20 : vector<2x512xf32>
      %22 = arith.mulf %21, %21 : vector<2x512xf32>
      %cst_16 = arith.constant dense<0.000000e+00> : vector<512xf32>
      %23 = vector.multi_reduction <add>, %22, %cst_16 [0] : vector<2x512xf32> to vector<512xf32>
      %24 = vector.shape_cast %23 : vector<512xf32> to vector<1x512xf32>
      %cst_17 = arith.constant 2.000000e+00 : f32
      %25 = vector.broadcast %cst_17 : f32 to vector<1x512xf32>
      %26 = arith.divf %24, %25 : vector<1x512xf32>
      %27 = vector.broadcast %19 : vector<1x512xf32> to vector<2x512xf32>
      %28 = arith.subf %14, %27 : vector<2x512xf32>
      %cst_18 = arith.constant 9.99999974E-6 : f32
      %29 = vector.broadcast %cst_18 : f32 to vector<1x512xf32>
      %30 = arith.addf %26, %29 : vector<1x512xf32>
      %31 = math.rsqrt %30 : vector<1x512xf32>
      %32 = vector.broadcast %31 : vector<1x512xf32> to vector<2x512xf32>
      %33 = arith.mulf %28, %32 : vector<2x512xf32>
      %c0_19 = arith.constant 0 : index
      %c0_20 = arith.constant 0 : index
      %34 = vector.load %arg3[%c0_19, %c0_20] : memref<1x512xf32, #tpu.memory_space<vmem>>, vector<1x512xf32>
      %35 = vector.broadcast %34 : vector<1x512xf32> to vector<2x512xf32>
      %36 = arith.mulf %33, %35 : vector<2x512xf32>
      %c0_21 = arith.constant 0 : index
      %c0_22 = arith.constant 0 : index
      %37 = vector.load %arg4[%c0_21, %c0_22] : memref<1x512xf32, #tpu.memory_space<vmem>>, vector<1x512xf32>
      %38 = vector.broadcast %37 : vector<1x512xf32> to vector<2x512xf32>
      %39 = arith.addf %36, %38 : vector<2x512xf32>
      %40 = arith.truncf %39 : vector<2x512xf32> to vector<2x512xbf16>
      %c0_23 = arith.constant 0 : index
      %c0_24 = arith.constant 0 : index
      %41 = vector.load %arg5[%c0_23, %c0_24] : memref<16x512xf32, #tpu.memory_space<vmem>>, vector<16x512xf32>
      %42 = arith.truncf %41 : vector<16x512xf32> to vector<16x512xbf16>
      %cst_25 = arith.constant dense<0.000000e+00> : vector<2x16xf32>
      %43 = tpu.matmul %40, %42, %cst_25 {dimension_numbers = #tpu.dot_dimension_numbers<[1], [1], [0], [0], [0, 0, 1, 0], [], []>} : vector<2x512xbf16>, vector<16x512xbf16>, vector<2x16xf32> -> vector<2x16xf32>
      %c0_i32_26 = arith.constant 0 : i32
      %44 = arith.cmpi eq, %arg0, %c0_i32_26 : i32
      %45 = arith.extui %44 : i1 to i32
      %c0_i32_27 = arith.constant 0 : i32
      %46 = arith.cmpi ne, %45, %c0_i32_27 : i32
      scf.if %46 {
        %c0_30 = arith.constant 0 : index
        %c0_31 = arith.constant 0 : index
        %50 = vector.load %arg7[%c0_30, %c0_31] : memref<2x16xf32, #tpu.memory_space<vmem>>, vector<2x16xf32>
        tpu.vector_store %arg7[%c0_30, %c0_31], %43 {strides = array<i32>} : memref<2x16xf32, #tpu.memory_space<vmem>>, vector<2x16xf32>,
      } else {
      }
      %c0_i32_28 = arith.constant 0 : i32
      %47 = arith.cmpi sgt, %arg0, %c0_i32_28 : i32
      %48 = arith.extui %47 : i1 to i32
      %c0_i32_29 = arith.constant 0 : i32
      %49 = arith.cmpi ne, %48, %c0_i32_29 : i32
      scf.if %49 {
        %c0_30 = arith.constant 0 : index
        %c0_31 = arith.constant 0 : index
        %50 = vector.load %arg7[%c0_30, %c0_31] : memref<2x16xf32, #tpu.memory_space<vmem>>, vector<2x16xf32>
        %51 = arith.addf %50, %43 : vector<2x16xf32>
        %c0_32 = arith.constant 0 : index
        %c0_33 = arith.constant 0 : index
        %52 = vector.load %arg7[%c0_32, %c0_33] : memref<2x16xf32, #tpu.memory_space<vmem>>, vector<2x16xf32>
        tpu.vector_store %arg7[%c0_32, %c0_33], %51 {strides = array<i32>} : memref<2x16xf32, #tpu.memory_space<vmem>>, vector<2x16xf32>,
      } else {
      }
    } else {
    }
    return
  }
  func.func @transform_0(%arg0: i32, %arg1: i32) -> (i32, i32, i32) {
    %c0_i32 = arith.constant 0 : i32
    %c0_i32_0 = arith.constant 0 : i32
    return %c0_i32, %arg0, %arg1 : i32, i32, i32
  }
  func.func @transform_1(%arg0: i32, %arg1: i32) -> (i32, i32) {
    %c0_i32 = arith.constant 0 : i32
    %c0_i32_0 = arith.constant 0 : i32
    return %c0_i32, %arg0 : i32, i32
  }
  func.func @transform_2(%arg0: i32, %arg1: i32) -> (i32, i32) {
    %c0_i32 = arith.constant 0 : i32
    %c0_i32_0 = arith.constant 0 : i32
    return %c0_i32, %arg0 : i32, i32
  }
  func.func @transform_3(%arg0: i32, %arg1: i32) -> (i32, i32) {
    %c0_i32 = arith.constant 0 : i32
    %c0_i32_0 = arith.constant 0 : i32
    return %c0_i32, %arg0 : i32, i32
  }
  func.func @transform_4(%arg0: i32, %arg1: i32) -> (i32, i32) {
    %c0_i32 = arith.constant 0 : i32
    %c0_i32_0 = arith.constant 0 : i32
    return %c0_i32, %arg0 : i32, i32
  }
  func.func @transform_5(%arg0: i32, %arg1: i32) -> (i32, i32) {
    %c0_i32 = arith.constant 0 : i32
    %c0_i32_0 = arith.constant 0 : i32
    %c0_i32_1 = arith.constant 0 : i32
    return %c0_i32, %c0_i32_0 : i32, i32
  }
}

</mosaic_0001>

<llo_original>
// kernel: tpu_custom_call.1
$region0: #{tpu_custom_call.1}
  #allocation0 [shape = 'u32[]', space=smem, size = 0x4, offset = 0x4, fixed_abs, tag = 'smem constant byte address 0x4 - core index']
  #allocation1 [shape = 'u32[144,128]{1,0:T(1,128)}', space=vmem, size = 0x12000, scoped, tag = 'internal scratch']
  %s0 = inlined_call_operand.vmem [shape: bf16[2,512,64], index: 0, kind: input, shape index: {}]
  %s1 = inlined_call_operand.vmem [shape: f32[1,512], index: 1, kind: input, shape index: {}]
  %s2 = inlined_call_operand.vmem [shape: f32[1,512], index: 2, kind: input, shape index: {}]
  %s3 = inlined_call_operand.vmem [shape: f32[16,512], index: 3, kind: input, shape index: {}]
  %s4 = inlined_call_operand.hbm [shape: f32[2,512], index: 4, kind: output, shape index: {0}]
  %s5 = inlined_call_operand.hbm [shape: f32[2,16], index: 5, kind: output, shape index: {1}]
  %6 = xla_tuple %s4, %s5
  %s7 = sld [smem:[#allocation0]]
  $region50: #{tpu_custom_call.1} parent=0
    _
  %s9 = ssub.s32 1, %s7
  %s10 = scalar_select 0, %s9, %s7
  $region1: #{tpu_custom_call.1} parent=0
    #allocation2 [shape = 'u8[4096]{0}', space=vmem, size = 0x1000, scoped, tag = 'output window, operand 0, single buffered']
    #allocation3 [shape = 's32[1]{0}', space=sflag, size = 0x4, scoped, tag = 'scoped memory for tpu_custom_call.1']
    #allocation4 [shape = 'u8[1024]{0}', space=vmem, size = 0x400, scoped, tag = 'output window, operand 1, single buffered']
    #allocation5 [shape = 's32[1]{0}', space=sflag, size = 0x4, scoped, tag = 'scoped memory for tpu_custom_call.1']
    %11 = vsyncpa [#allocation3], 0
    %12 = vsyncpa [#allocation5], 0
    // Predicated region
    $region2: #{tpu_custom_call.1} parent=1 // pred_check
      _
    $region3: #{tpu_custom_call.1} parent=1 // pred_check_branch
      %14 = sbr.rel (0) target = $region5
    $region4: #{tpu_custom_call.1} parent=1 // pred_region
      _
    $region5: #{tpu_custom_call.1} parent=1 // pred_fallthru
      _
    // Predicated region
    $region6: #{tpu_custom_call.1} parent=1 // pred_check
      _
    $region7: #{tpu_custom_call.1} parent=1 // pred_check_branch
      %16 = sbr.rel (0) target = $region9
    $region8: #{tpu_custom_call.1} parent=1 // pred_region
      _
    $region9: #{tpu_custom_call.1} parent=1 // pred_fallthru
      _
    // Predicated region
    $region10: #{tpu_custom_call.1} parent=1 // pred_check
      _
    $region11: #{tpu_custom_call.1} parent=1 // pred_check_branch
      %18 = sbr.rel (0) target = $region13
    $region12: #{tpu_custom_call.1} parent=1 // pred_region
      _
    $region13: #{tpu_custom_call.1} parent=1 // pred_fallthru
      _
    // Predicated region
    $region14: #{tpu_custom_call.1} parent=1 // pred_check
      _
    $region15: #{tpu_custom_call.1} parent=1 // pred_check_branch
      %20 = sbr.rel (0) target = $region17
    $region16: #{tpu_custom_call.1} parent=1 // pred_region
      _
    $region17: #{tpu_custom_call.1} parent=1 // pred_fallthru
      _
    %p22 = scmp.eq.s32.totalorder 0, 0
    // Predicated region
    $region18: #{tpu_custom_call.1} parent=1 // pred_check
      %p23 = pneg %p22
    $region19: #{tpu_custom_call.1} parent=1 // pred_check_branch
      %25 = sbr.rel (%p23) target = $region21
    $region20: #{tpu_custom_call.1} parent=1 // pred_region
      %26 = vst [vmem:[#allocation2] sm:$0xff] 0.0
    $region21: #{tpu_custom_call.1} parent=1 // pred_fallthru
      _
    %v27 = vld [vmem:[%s0] sm:$0xf]
    %v28 = vld [vmem:[%s0 + $0x4] sm:$0xf]
    %v29 = vld [vmem:[%s0 + $0x8] sm:$0xf]
    %v30 = vld [vmem:[%s0 + $0xc] sm:$0xf]
    %v31 = vld [vmem:[%s0 + $0x10] sm:$0xf]
    %v32 = vld [vmem:[%s0 + $0x14] sm:$0xf]
    %v33 = vld [vmem:[%s0 + $0x18] sm:$0xf]
    %v34 = vld [vmem:[%s0 + $0x1c] sm:$0xf]
    %v35 = vld [vmem:[%s0 + $0x20] sm:$0xf]
    %v36 = vld [vmem:[%s0 + $0x24] sm:$0xf]
    %v37 = vld [vmem:[%s0 + $0x28] sm:$0xf]
    %v38 = vld [vmem:[%s0 + $0x2c] sm:$0xf]
    %v39 = vld [vmem:[%s0 + $0x30] sm:$0xf]
    %v40 = vld [vmem:[%s0 + $0x34] sm:$0xf]
    %v41 = vld [vmem:[%s0 + $0x38] sm:$0xf]
    %v42 = vld [vmem:[%s0 + $0x3c] sm:$0xf]
    %v43 = vld [vmem:[%s0 + $0x40] sm:$0xf]
    %v44 = vld [vmem:[%s0 + $0x44] sm:$0xf]
    %v45 = vld [vmem:[%s0 + $0x48] sm:$0xf]
    %v46 = vld [vmem:[%s0 + $0x4c] sm:$0xf]
    %v47 = vld [vmem:[%s0 + $0x50] sm:$0xf]
    %v48 = vld [vmem:[%s0 + $0x54] sm:$0xf]
    %v49 = vld [vmem:[%s0 + $0x58] sm:$0xf]
    %v50 = vld [vmem:[%s0 + $0x5c] sm:$0xf]
    %v51 = vld [vmem:[%s0 + $0x60] sm:$0xf]
    %v52 = vld [vmem:[%s0 + $0x64] sm:$0xf]
    %v53 = vld [vmem:[%s0 + $0x68] sm:$0xf]
    %v54 = vld [vmem:[%s0 + $0x6c] sm:$0xf]
    %v55 = vld [vmem:[%s0 + $0x70] sm:$0xf]
    %v56 = vld [vmem:[%s0 + $0x74] sm:$0xf]
    %v57 = vld [vmem:[%s0 + $0x78] sm:$0xf]
    %v58 = vld [vmem:[%s0 + $0x7c] sm:$0xf]
    %v59 = vld [vmem:[%s0 + $0x80] sm:$0xf]
    %v60 = vld [vmem:[%s0 + $0x84] sm:$0xf]
    %v61 = vld [vmem:[%s0 + $0x88] sm:$0xf]
    %v62 = vld [vmem:[%s0 + $0x8c] sm:$0xf]
    %v63 = vld [vmem:[%s0 + $0x90] sm:$0xf]
    %v64 = vld [vmem:[%s0 + $0x94] sm:$0xf]
    %v65 = vld [vmem:[%s0 + $0x98] sm:$0xf]
    %v66 = vld [vmem:[%s0 + $0x9c] sm:$0xf]
    %v67 = vld [vmem:[%s0 + $0xa0] sm:$0xf]
    %v68 = vld [vmem:[%s0 + $0xa4] sm:$0xf]
    %v69 = vld [vmem:[%s0 + $0xa8] sm:$0xf]
    %v70 = vld [vmem:[%s0 + $0xac] sm:$0xf]
    %v71 = vld [vmem:[%s0 + $0xb0] sm:$0xf]
    %v72 = vld [vmem:[%s0 + $0xb4] sm:$0xf]
    %v73 = vld [vmem:[%s0 + $0xb8] sm:$0xf]
    %v74 = vld [vmem:[%s0 + $0xbc] sm:$0xf]
    %v75 = vld [vmem:[%s0 + $0xc0] sm:$0xf]
    %v76 = vld [vmem:[%s0 + $0xc4] sm:$0xf]
    %v77 = vld [vmem:[%s0 + $0xc8] sm:$0xf]
    %v78 = vld [vmem:[%s0 + $0xcc] sm:$0xf]
    %v79 = vld [vmem:[%s0 + $0xd0] sm:$0xf]
    %v80 = vld [vmem:[%s0 + $0xd4] sm:$0xf]
    %v81 = vld [vmem:[%s0 + $0xd8] sm:$0xf]
    %v82 = vld [vmem:[%s0 + $0xdc] sm:$0xf]
    %v83 = vld [vmem:[%s0 + $0xe0] sm:$0xf]
    %v84 = vld [vmem:[%s0 + $0xe4] sm:$0xf]
    %v85 = vld [vmem:[%s0 + $0xe8] sm:$0xf]
    %v86 = vld [vmem:[%s0 + $0xec] sm:$0xf]
    %v87 = vld [vmem:[%s0 + $0xf0] sm:$0xf]
    %v88 = vld [vmem:[%s0 + $0xf4] sm:$0xf]
    %v89 = vld [vmem:[%s0 + $0xf8] sm:$0xf]
    %v90 = vld [vmem:[%s0 + $0xfc] sm:$0xf]
    %v91 = vld [vmem:[%s0 + $0x100] sm:$0xf]
    %v92 = vld [vmem:[%s0 + $0x104] sm:$0xf]
    %v93 = vld [vmem:[%s0 + $0x108] sm:$0xf]
    %v94 = vld [vmem:[%s0 + $0x10c] sm:$0xf]
    %v95 = vld [vmem:[%s0 + $0x110] sm:$0xf]
    %v96 = vld [vmem:[%s0 + $0x114] sm:$0xf]
    %v97 = vld [vmem:[%s0 + $0x118] sm:$0xf]
    %v98 = vld [vmem:[%s0 + $0x11c] sm:$0xf]
    %v99 = vld [vmem:[%s0 + $0x120] sm:$0xf]
    %v100 = vld [vmem:[%s0 + $0x124] sm:$0xf]
    %v101 = vld [vmem:[%s0 + $0x128] sm:$0xf]
    %v102 = vld [vmem:[%s0 + $0x12c] sm:$0xf]
    %v103 = vld [vmem:[%s0 + $0x130] sm:$0xf]
    %v104 = vld [vmem:[%s0 + $0x134] sm:$0xf]
    %v105 = vld [vmem:[%s0 + $0x138] sm:$0xf]
    %v106 = vld [vmem:[%s0 + $0x13c] sm:$0xf]
    %v107 = vld [vmem:[%s0 + $0x140] sm:$0xf]
    %v108 = vld [vmem:[%s0 + $0x144] sm:$0xf]
    %v109 = vld [vmem:[%s0 + $0x148] sm:$0xf]
    %v110 = vld [vmem:[%s0 + $0x14c] sm:$0xf]
    %v111 = vld [vmem:[%s0 + $0x150] sm:$0xf]
    %v112 = vld [vmem:[%s0 + $0x154] sm:$0xf]
    %v113 = vld [vmem:[%s0 + $0x158] sm:$0xf]
    %v114 = vld [vmem:[%s0 + $0x15c] sm:$0xf]
    %v115 = vld [vmem:[%s0 + $0x160] sm:$0xf]
    %v116 = vld [vmem:[%s0 + $0x164] sm:$0xf]
    %v117 = vld [vmem:[%s0 + $0x168] sm:$0xf]
    %v118 = vld [vmem:[%s0 + $0x16c] sm:$0xf]
    %v119 = vld [vmem:[%s0 + $0x170] sm:$0xf]
    %v120 = vld [vmem:[%s0 + $0x174] sm:$0xf]
    %v121 = vld [vmem:[%s0 + $0x178] sm:$0xf]
    %v122 = vld [vmem:[%s0 + $0x17c] sm:$0xf]
    %v123 = vld [vmem:[%s0 + $0x180] sm:$0xf]
    %v124 = vld [vmem:[%s0 + $0x184] sm:$0xf]
    %v125 = vld [vmem:[%s0 + $0x188] sm:$0xf]
    %v126 = vld [vmem:[%s0 + $0x18c] sm:$0xf]
    %v127 = vld [vmem:[%s0 + $0x190] sm:$0xf]
    %v128 = vld [vmem:[%s0 + $0x194] sm:$0xf]
    %v129 = vld [vmem:[%s0 + $0x198] sm:$0xf]
    %v130 = vld [vmem:[%s0 + $0x19c] sm:$0xf]
    %v131 = vld [vmem:[%s0 + $0x1a0] sm:$0xf]
    %v132 = vld [vmem:[%s0 + $0x1a4] sm:$0xf]
    %v133 = vld [vmem:[%s0 + $0x1a8] sm:$0xf]
    %v134 = vld [vmem:[%s0 + $0x1ac] sm:$0xf]
    %v135 = vld [vmem:[%s0 + $0x1b0] sm:$0xf]
    %v136 = vld [vmem:[%s0 + $0x1b4] sm:$0xf]
    %v137 = vld [vmem:[%s0 + $0x1b8] sm:$0xf]
    %v138 = vld [vmem:[%s0 + $0x1bc] sm:$0xf]
    %v139 = vld [vmem:[%s0 + $0x1c0] sm:$0xf]
    %v140 = vld [vmem:[%s0 + $0x1c4] sm:$0xf]
    %v141 = vld [vmem:[%s0 + $0x1c8] sm:$0xf]
    %v142 = vld [vmem:[%s0 + $0x1cc] sm:$0xf]
    %v143 = vld [vmem:[%s0 + $0x1d0] sm:$0xf]
    %v144 = vld [vmem:[%s0 + $0x1d4] sm:$0xf]
    %v145 = vld [vmem:[%s0 + $0x1d8] sm:$0xf]
    %v146 = vld [vmem:[%s0 + $0x1dc] sm:$0xf]
    %v147 = vld [vmem:[%s0 + $0x1e0] sm:$0xf]
    %v148 = vld [vmem:[%s0 + $0x1e4] sm:$0xf]
    %v149 = vld [vmem:[%s0 + $0x1e8] sm:$0xf]
    %v150 = vld [vmem:[%s0 + $0x1ec] sm:$0xf]
    %v151 = vld [vmem:[%s0 + $0x1f0] sm:$0xf]
    %v152 = vld [vmem:[%s0 + $0x1f4] sm:$0xf]
    %v153 = vld [vmem:[%s0 + $0x1f8] sm:$0xf]
    %v154 = vld [vmem:[%s0 + $0x1fc] sm:$0xf]
    %v155 = vunpack.c.l.bf16 %v27
    %v156 = vunpack.c.l.bf16 %v28
    %v157 = vunpack.c.l.bf16 %v29
    %v158 = vunpack.c.l.bf16 %v30
    %v159 = vunpack.c.l.bf16 %v31
    %v160 = vunpack.c.l.bf16 %v32
    %v161 = vunpack.c.l.bf16 %v33
    %v162 = vunpack.c.l.bf16 %v34
    %v163 = vunpack.c.l.bf16 %v35
    %v164 = vunpack.c.l.bf16 %v36
    %v165 = vunpack.c.l.bf16 %v37
    %v166 = vunpack.c.l.bf16 %v38
    %v167 = vunpack.c.l.bf16 %v39
    %v168 = vunpack.c.l.bf16 %v40
    %v169 = vunpack.c.l.bf16 %v41
    %v170 = vunpack.c.l.bf16 %v42
    %v171 = vunpack.c.l.bf16 %v43
    %v172 = vunpack.c.l.bf16 %v44
    %v173 = vunpack.c.l.bf16 %v45
    %v174 = vunpack.c.l.bf16 %v46
    %v175 = vunpack.c.l.bf16 %v47
    %v176 = vunpack.c.l.bf16 %v48
    %v177 = vunpack.c.l.bf16 %v49
    %v178 = vunpack.c.l.bf16 %v50
    %v179 = vunpack.c.l.bf16 %v51
    %v180 = vunpack.c.l.bf16 %v52
    %v181 = vunpack.c.l.bf16 %v53
    %v182 = vunpack.c.l.bf16 %v54
    %v183 = vunpack.c.l.bf16 %v55
    %v184 = vunpack.c.l.bf16 %v56
    %v185 = vunpack.c.l.bf16 %v57
    %v186 = vunpack.c.l.bf16 %v58
    %v187 = vunpack.c.l.bf16 %v59
    %v188 = vunpack.c.l.bf16 %v60
    %v189 = vunpack.c.l.bf16 %v61
    %v190 = vunpack.c.l.bf16 %v62
    %v191 = vunpack.c.l.bf16 %v63
    %v192 = vunpack.c.l.bf16 %v64
    %v193 = vunpack.c.l.bf16 %v65
    %v194 = vunpack.c.l.bf16 %v66
    %v195 = vunpack.c.l.bf16 %v67
    %v196 = vunpack.c.l.bf16 %v68
    %v197 = vunpack.c.l.bf16 %v69
    %v198 = vunpack.c.l.bf16 %v70
    %v199 = vunpack.c.l.bf16 %v71
    %v200 = vunpack.c.l.bf16 %v72
    %v201 = vunpack.c.l.bf16 %v73
    %v202 = vunpack.c.l.bf16 %v74
    %v203 = vunpack.c.l.bf16 %v75
    %v204 = vunpack.c.l.bf16 %v76
    %v205 = vunpack.c.l.bf16 %v77
    %v206 = vunpack.c.l.bf16 %v78
    %v207 = vunpack.c.l.bf16 %v79
    %v208 = vunpack.c.l.bf16 %v80
    %v209 = vunpack.c.l.bf16 %v81
    %v210 = vunpack.c.l.bf16 %v82
    %v211 = vunpack.c.l.bf16 %v83
    %v212 = vunpack.c.l.bf16 %v84
    %v213 = vunpack.c.l.bf16 %v85
    %v214 = vunpack.c.l.bf16 %v86
    %v215 = vunpack.c.l.bf16 %v87
    %v216 = vunpack.c.l.bf16 %v88
    %v217 = vunpack.c.l.bf16 %v89
    %v218 = vunpack.c.l.bf16 %v90
    %v219 = vunpack.c.l.bf16 %v91
    %v220 = vunpack.c.l.bf16 %v92
    %v221 = vunpack.c.l.bf16 %v93
    %v222 = vunpack.c.l.bf16 %v94
    %v223 = vunpack.c.l.bf16 %v95
    %v224 = vunpack.c.l.bf16 %v96
    %v225 = vunpack.c.l.bf16 %v97
    %v226 = vunpack.c.l.bf16 %v98
    %v227 = vunpack.c.l.bf16 %v99
    %v228 = vunpack.c.l.bf16 %v100
    %v229 = vunpack.c.l.bf16 %v101
    %v230 = vunpack.c.l.bf16 %v102
    %v231 = vunpack.c.l.bf16 %v103
    %v232 = vunpack.c.l.bf16 %v104
    %v233 = vunpack.c.l.bf16 %v105
    %v234 = vunpack.c.l.bf16 %v106
    %v235 = vunpack.c.l.bf16 %v107
    %v236 = vunpack.c.l.bf16 %v108
    %v237 = vunpack.c.l.bf16 %v109
    %v238 = vunpack.c.l.bf16 %v110
    %v239 = vunpack.c.l.bf16 %v111
    %v240 = vunpack.c.l.bf16 %v112
    %v241 = vunpack.c.l.bf16 %v113
    %v242 = vunpack.c.l.bf16 %v114
    %v243 = vunpack.c.l.bf16 %v115
    %v244 = vunpack.c.l.bf16 %v116
    %v245 = vunpack.c.l.bf16 %v117
    %v246 = vunpack.c.l.bf16 %v118
    %v247 = vunpack.c.l.bf16 %v119
    %v248 = vunpack.c.l.bf16 %v120
    %v249 = vunpack.c.l.bf16 %v121
    %v250 = vunpack.c.l.bf16 %v122
    %v251 = vunpack.c.l.bf16 %v123
    %v252 = vunpack.c.l.bf16 %v124
    %v253 = vunpack.c.l.bf16 %v125
    %v254 = vunpack.c.l.bf16 %v126
    %v255 = vunpack.c.l.bf16 %v127
    %v256 = vunpack.c.l.bf16 %v128
    %v257 = vunpack.c.l.bf16 %v129
    %v258 = vunpack.c.l.bf16 %v130
    %v259 = vunpack.c.l.bf16 %v131
    %v260 = vunpack.c.l.bf16 %v132
    %v261 = vunpack.c.l.bf16 %v133
    %v262 = vunpack.c.l.bf16 %v134
    %v263 = vunpack.c.l.bf16 %v135
    %v264 = vunpack.c.l.bf16 %v136
    %v265 = vunpack.c.l.bf16 %v137
    %v266 = vunpack.c.l.bf16 %v138
    %v267 = vunpack.c.l.bf16 %v139
    %v268 = vunpack.c.l.bf16 %v140
    %v269 = vunpack.c.l.bf16 %v141
    %v270 = vunpack.c.l.bf16 %v142
    %v271 = vunpack.c.l.bf16 %v143
    %v272 = vunpack.c.l.bf16 %v144
    %v273 = vunpack.c.l.bf16 %v145
    %v274 = vunpack.c.l.bf16 %v146
    %v275 = vunpack.c.l.bf16 %v147
    %v276 = vunpack.c.l.bf16 %v148
    %v277 = vunpack.c.l.bf16 %v149
    %v278 = vunpack.c.l.bf16 %v150
    %v279 = vunpack.c.l.bf16 %v151
    %v280 = vunpack.c.l.bf16 %v152
    %v281 = vunpack.c.l.bf16 %v153
    %v282 = vunpack.c.l.bf16 %v154
    %v283 = vld [vmem:[#allocation2] sm:$0xff]
    %vm284 = vcmask 523264
    %v285 = vsel %vm284, %v155, 0.0
    %286 = vadd.xlane.f32.xlu0 %v285
    %v287 = vpop.xlane.xlu0 %286
    %v288 = vsel %vm284, %v156, 0.0
    %289 = vadd.xlane.f32.xlu0 %v288
    %v290 = vpop.xlane.xlu0 %289
    %v291 = vsel %vm284, %v157, 0.0
    %292 = vadd.xlane.f32.xlu0 %v291
    %v293 = vpop.xlane.xlu0 %292
    %v294 = vsel %vm284, %v158, 0.0
    %295 = vadd.xlane.f32.xlu0 %v294
    %v296 = vpop.xlane.xlu0 %295
    %v297 = vsel %vm284, %v159, 0.0
    %298 = vadd.xlane.f32.xlu0 %v297
    %v299 = vpop.xlane.xlu0 %298
    %v300 = vsel %vm284, %v160, 0.0
    %301 = vadd.xlane.f32.xlu0 %v300
    %v302 = vpop.xlane.xlu0 %301
    %v303 = vsel %vm284, %v161, 0.0
    %304 = vadd.xlane.f32.xlu0 %v303
    %v305 = vpop.xlane.xlu0 %304
    %v306 = vsel %vm284, %v162, 0.0
    %307 = vadd.xlane.f32.xlu0 %v306
    %v308 = vpop.xlane.xlu0 %307
    %v309 = vsel %vm284, %v163, 0.0
    %310 = vadd.xlane.f32.xlu0 %v309
    %v311 = vpop.xlane.xlu0 %310
    %v312 = vsel %vm284, %v164, 0.0
    %313 = vadd.xlane.f32.xlu0 %v312
    %v314 = vpop.xlane.xlu0 %313
    %v315 = vsel %vm284, %v165, 0.0
    %316 = vadd.xlane.f32.xlu0 %v315
    %v317 = vpop.xlane.xlu0 %316
    %v318 = vsel %vm284, %v166, 0.0
    %319 = vadd.xlane.f32.xlu0 %v318
    %v320 = vpop.xlane.xlu0 %319
    %v321 = vsel %vm284, %v167, 0.0
    %322 = vadd.xlane.f32.xlu0 %v321
    %v323 = vpop.xlane.xlu0 %322
    %v324 = vsel %vm284, %v168, 0.0
    %325 = vadd.xlane.f32.xlu0 %v324
    %v326 = vpop.xlane.xlu0 %325
    %v327 = vsel %vm284, %v169, 0.0
    %328 = vadd.xlane.f32.xlu0 %v327
    %v329 = vpop.xlane.xlu0 %328
    %v330 = vsel %vm284, %v170, 0.0
    %331 = vadd.xlane.f32.xlu0 %v330
    %v332 = vpop.xlane.xlu0 %331
    %v333 = vsel %vm284, %v171, 0.0
    %334 = vadd.xlane.f32.xlu0 %v333
    %v335 = vpop.xlane.xlu0 %334
    %v336 = vsel %vm284, %v172, 0.0
    %337 = vadd.xlane.f32.xlu0 %v336
    %v338 = vpop.xlane.xlu0 %337
    %v339 = vsel %vm284, %v173, 0.0
    %340 = vadd.xlane.f32.xlu0 %v339
    %v341 = vpop.xlane.xlu0 %340
    %v342 = vsel %vm284, %v174, 0.0
    %343 = vadd.xlane.f32.xlu0 %v342
    %v344 = vpop.xlane.xlu0 %343
    %v345 = vsel %vm284, %v175, 0.0
    %346 = vadd.xlane.f32.xlu0 %v345
    %v347 = vpop.xlane.xlu0 %346
    %v348 = vsel %vm284, %v176, 0.0
    %349 = vadd.xlane.f32.xlu0 %v348
    %v350 = vpop.xlane.xlu0 %349
    %v351 = vsel %vm284, %v177, 0.0
    %352 = vadd.xlane.f32.xlu0 %v351
    %v353 = vpop.xlane.xlu0 %352
    %v354 = vsel %vm284, %v178, 0.0
    %355 = vadd.xlane.f32.xlu0 %v354
    %v356 = vpop.xlane.xlu0 %355
    %v357 = vsel %vm284, %v179, 0.0
    %358 = vadd.xlane.f32.xlu0 %v357
    %v359 = vpop.xlane.xlu0 %358
    %v360 = vsel %vm284, %v180, 0.0
    %361 = vadd.xlane.f32.xlu0 %v360
    %v362 = vpop.xlane.xlu0 %361
    %v363 = vsel %vm284, %v181, 0.0
    %364 = vadd.xlane.f32.xlu0 %v363
    %v365 = vpop.xlane.xlu0 %364
    %v366 = vsel %vm284, %v182, 0.0
    %367 = vadd.xlane.f32.xlu0 %v366
    %v368 = vpop.xlane.xlu0 %367
    %v369 = vsel %vm284, %v183, 0.0
    %370 = vadd.xlane.f32.xlu0 %v369
    %v371 = vpop.xlane.xlu0 %370
    %v372 = vsel %vm284, %v184, 0.0
    %373 = vadd.xlane.f32.xlu0 %v372
    %v374 = vpop.xlane.xlu0 %373
    %v375 = vsel %vm284, %v185, 0.0
    %376 = vadd.xlane.f32.xlu0 %v375
    %v377 = vpop.xlane.xlu0 %376
    %v378 = vsel %vm284, %v186, 0.0
    %379 = vadd.xlane.f32.xlu0 %v378
    %v380 = vpop.xlane.xlu0 %379
    %v381 = vsel %vm284, %v187, 0.0
    %382 = vadd.xlane.f32.xlu0 %v381
    %v383 = vpop.xlane.xlu0 %382
    %v384 = vsel %vm284, %v188, 0.0
    %385 = vadd.xlane.f32.xlu0 %v384
    %v386 = vpop.xlane.xlu0 %385
    %v387 = vsel %vm284, %v189, 0.0
    %388 = vadd.xlane.f32.xlu0 %v387
    %v389 = vpop.xlane.xlu0 %388
    %v390 = vsel %vm284, %v190, 0.0
    %391 = vadd.xlane.f32.xlu0 %v390
    %v392 = vpop.xlane.xlu0 %391
    %v393 = vsel %vm284, %v191, 0.0
    %394 = vadd.xlane.f32.xlu0 %v393
    %v395 = vpop.xlane.xlu0 %394
    %v396 = vsel %vm284, %v192, 0.0
    %397 = vadd.xlane.f32.xlu0 %v396
    %v398 = vpop.xlane.xlu0 %397
    %v399 = vsel %vm284, %v193, 0.0
    %400 = vadd.xlane.f32.xlu0 %v399
    %v401 = vpop.xlane.xlu0 %400
    %v402 = vsel %vm284, %v194, 0.0
    %403 = vadd.xlane.f32.xlu0 %v402
    %v404 = vpop.xlane.xlu0 %403
    %v405 = vsel %vm284, %v195, 0.0
    %406 = vadd.xlane.f32.xlu0 %v405
    %v407 = vpop.xlane.xlu0 %406
    %v408 = vsel %vm284, %v196, 0.0
    %409 = vadd.xlane.f32.xlu0 %v408
    %v410 = vpop.xlane.xlu0 %409
    %v411 = vsel %vm284, %v197, 0.0
    %412 = vadd.xlane.f32.xlu0 %v411
    %v413 = vpop.xlane.xlu0 %412
    %v414 = vsel %vm284, %v198, 0.0
    %415 = vadd.xlane.f32.xlu0 %v414
    %v416 = vpop.xlane.xlu0 %415
    %v417 = vsel %vm284, %v199, 0.0
    %418 = vadd.xlane.f32.xlu0 %v417
    %v419 = vpop.xlane.xlu0 %418
    %v420 = vsel %vm284, %v200, 0.0
    %421 = vadd.xlane.f32.xlu0 %v420
    %v422 = vpop.xlane.xlu0 %421
    %v423 = vsel %vm284, %v201, 0.0
    %424 = vadd.xlane.f32.xlu0 %v423
    %v425 = vpop.xlane.xlu0 %424
    %v426 = vsel %vm284, %v202, 0.0
    %427 = vadd.xlane.f32.xlu0 %v426
    %v428 = vpop.xlane.xlu0 %427
    %v429 = vsel %vm284, %v203, 0.0
    %430 = vadd.xlane.f32.xlu0 %v429
    %v431 = vpop.xlane.xlu0 %430
    %v432 = vsel %vm284, %v204, 0.0
    %433 = vadd.xlane.f32.xlu0 %v432
    %v434 = vpop.xlane.xlu0 %433
    %v435 = vsel %vm284, %v205, 0.0
    %436 = vadd.xlane.f32.xlu0 %v435
    %v437 = vpop.xlane.xlu0 %436
    %v438 = vsel %vm284, %v206, 0.0
    %439 = vadd.xlane.f32.xlu0 %v438
    %v440 = vpop.xlane.xlu0 %439
    %v441 = vsel %vm284, %v207, 0.0
    %442 = vadd.xlane.f32.xlu0 %v441
    %v443 = vpop.xlane.xlu0 %442
    %v444 = vsel %vm284, %v208, 0.0
    %445 = vadd.xlane.f32.xlu0 %v444
    %v446 = vpop.xlane.xlu0 %445
    %v447 = vsel %vm284, %v209, 0.0
    %448 = vadd.xlane.f32.xlu0 %v447
    %v449 = vpop.xlane.xlu0 %448
    %v450 = vsel %vm284, %v210, 0.0
    %451 = vadd.xlane.f32.xlu0 %v450
    %v452 = vpop.xlane.xlu0 %451
    %v453 = vsel %vm284, %v211, 0.0
    %454 = vadd.xlane.f32.xlu0 %v453
    %v455 = vpop.xlane.xlu0 %454
    %v456 = vsel %vm284, %v212, 0.0
    %457 = vadd.xlane.f32.xlu0 %v456
    %v458 = vpop.xlane.xlu0 %457
    %v459 = vsel %vm284, %v213, 0.0
    %460 = vadd.xlane.f32.xlu0 %v459
    %v461 = vpop.xlane.xlu0 %460
    %v462 = vsel %vm284, %v214, 0.0
    %463 = vadd.xlane.f32.xlu0 %v462
    %v464 = vpop.xlane.xlu0 %463
    %v465 = vsel %vm284, %v215, 0.0
    %466 = vadd.xlane.f32.xlu0 %v465
    %v467 = vpop.xlane.xlu0 %466
    %v468 = vsel %vm284, %v216, 0.0
    %469 = vadd.xlane.f32.xlu0 %v468
    %v470 = vpop.xlane.xlu0 %469
    %v471 = vsel %vm284, %v217, 0.0
    %472 = vadd.xlane.f32.xlu0 %v471
    %v473 = vpop.xlane.xlu0 %472
    %v474 = vsel %vm284, %v218, 0.0
    %475 = vadd.xlane.f32.xlu0 %v474
    %v476 = vpop.xlane.xlu0 %475
    %v477 = vsel %vm284, %v219, 0.0
    %478 = vadd.xlane.f32.xlu0 %v477
    %v479 = vpop.xlane.xlu0 %478
    %v480 = vsel %vm284, %v220, 0.0
    %481 = vadd.xlane.f32.xlu0 %v480
    %v482 = vpop.xlane.xlu0 %481
    %v483 = vsel %vm284, %v221, 0.0
    %484 = vadd.xlane.f32.xlu0 %v483
    %v485 = vpop.xlane.xlu0 %484
    %v486 = vsel %vm284, %v222, 0.0
    %487 = vadd.xlane.f32.xlu0 %v486
    %v488 = vpop.xlane.xlu0 %487
    %v489 = vsel %vm284, %v223, 0.0
    %490 = vadd.xlane.f32.xlu0 %v489
    %v491 = vpop.xlane.xlu0 %490
    %v492 = vsel %vm284, %v224, 0.0
    %493 = vadd.xlane.f32.xlu0 %v492
    %v494 = vpop.xlane.xlu0 %493
    %v495 = vsel %vm284, %v225, 0.0
    %496 = vadd.xlane.f32.xlu0 %v495
    %v497 = vpop.xlane.xlu0 %496
    %v498 = vsel %vm284, %v226, 0.0
    %499 = vadd.xlane.f32.xlu0 %v498
    %v500 = vpop.xlane.xlu0 %499
    %v501 = vsel %vm284, %v227, 0.0
    %502 = vadd.xlane.f32.xlu0 %v501
    %v503 = vpop.xlane.xlu0 %502
    %v504 = vsel %vm284, %v228, 0.0
    %505 = vadd.xlane.f32.xlu0 %v504
    %v506 = vpop.xlane.xlu0 %505
    %v507 = vsel %vm284, %v229, 0.0
    %508 = vadd.xlane.f32.xlu0 %v507
    %v509 = vpop.xlane.xlu0 %508
    %v510 = vsel %vm284, %v230, 0.0
    %511 = vadd.xlane.f32.xlu0 %v510
    %v512 = vpop.xlane.xlu0 %511
    %v513 = vsel %vm284, %v231, 0.0
    %514 = vadd.xlane.f32.xlu0 %v513
    %v515 = vpop.xlane.xlu0 %514
    %v516 = vsel %vm284, %v232, 0.0
    %517 = vadd.xlane.f32.xlu0 %v516
    %v518 = vpop.xlane.xlu0 %517
    %v519 = vsel %vm284, %v233, 0.0
    %520 = vadd.xlane.f32.xlu0 %v519
    %v521 = vpop.xlane.xlu0 %520
    %v522 = vsel %vm284, %v234, 0.0
    %523 = vadd.xlane.f32.xlu0 %v522
    %v524 = vpop.xlane.xlu0 %523
    %v525 = vsel %vm284, %v235, 0.0
    %526 = vadd.xlane.f32.xlu0 %v525
    %v527 = vpop.xlane.xlu0 %526
    %v528 = vsel %vm284, %v236, 0.0
    %529 = vadd.xlane.f32.xlu0 %v528
    %v530 = vpop.xlane.xlu0 %529
    %v531 = vsel %vm284, %v237, 0.0
    %532 = vadd.xlane.f32.xlu0 %v531
    %v533 = vpop.xlane.xlu0 %532
    %v534 = vsel %vm284, %v238, 0.0
    %535 = vadd.xlane.f32.xlu0 %v534
    %v536 = vpop.xlane.xlu0 %535
    %v537 = vsel %vm284, %v239, 0.0
    %538 = vadd.xlane.f32.xlu0 %v537
    %v539 = vpop.xlane.xlu0 %538
    %v540 = vsel %vm284, %v240, 0.0
    %541 = vadd.xlane.f32.xlu0 %v540
    %v542 = vpop.xlane.xlu0 %541
    %v543 = vsel %vm284, %v241, 0.0
    %544 = vadd.xlane.f32.xlu0 %v543
    %v545 = vpop.xlane.xlu0 %544
    %v546 = vsel %vm284, %v242, 0.0
    %547 = vadd.xlane.f32.xlu0 %v546
    %v548 = vpop.xlane.xlu0 %547
    %v549 = vsel %vm284, %v243, 0.0
    %550 = vadd.xlane.f32.xlu0 %v549
    %v551 = vpop.xlane.xlu0 %550
    %v552 = vsel %vm284, %v244, 0.0
    %553 = vadd.xlane.f32.xlu0 %v552
    %v554 = vpop.xlane.xlu0 %553
    %v555 = vsel %vm284, %v245, 0.0
    %556 = vadd.xlane.f32.xlu0 %v555
    %v557 = vpop.xlane.xlu0 %556
    %v558 = vsel %vm284, %v246, 0.0
    %559 = vadd.xlane.f32.xlu0 %v558
    %v560 = vpop.xlane.xlu0 %559
    %v561 = vsel %vm284, %v247, 0.0
    %562 = vadd.xlane.f32.xlu0 %v561
    %v563 = vpop.xlane.xlu0 %562
    %v564 = vsel %vm284, %v248, 0.0
    %565 = vadd.xlane.f32.xlu0 %v564
    %v566 = vpop.xlane.xlu0 %565
    %v567 = vsel %vm284, %v249, 0.0
    %568 = vadd.xlane.f32.xlu0 %v567
    %v569 = vpop.xlane.xlu0 %568
    %v570 = vsel %vm284, %v250, 0.0
    %571 = vadd.xlane.f32.xlu0 %v570
    %v572 = vpop.xlane.xlu0 %571
    %v573 = vsel %vm284, %v251, 0.0
    %574 = vadd.xlane.f32.xlu0 %v573
    %v575 = vpop.xlane.xlu0 %574
    %v576 = vsel %vm284, %v252, 0.0
    %577 = vadd.xlane.f32.xlu0 %v576
    %v578 = vpop.xlane.xlu0 %577
    %v579 = vsel %vm284, %v253, 0.0
    %580 = vadd.xlane.f32.xlu0 %v579
    %v581 = vpop.xlane.xlu0 %580
    %v582 = vsel %vm284, %v254, 0.0
    %583 = vadd.xlane.f32.xlu0 %v582
    %v584 = vpop.xlane.xlu0 %583
    %v585 = vsel %vm284, %v255, 0.0
    %586 = vadd.xlane.f32.xlu0 %v585
    %v587 = vpop.xlane.xlu0 %586
    %v588 = vsel %vm284, %v256, 0.0
    %589 = vadd.xlane.f32.xlu0 %v588
    %v590 = vpop.xlane.xlu0 %589
    %v591 = vsel %vm284, %v257, 0.0
    %592 = vadd.xlane.f32.xlu0 %v591
    %v593 = vpop.xlane.xlu0 %592
    %v594 = vsel %vm284, %v258, 0.0
    %595 = vadd.xlane.f32.xlu0 %v594
    %v596 = vpop.xlane.xlu0 %595
    %v597 = vsel %vm284, %v259, 0.0
    %598 = vadd.xlane.f32.xlu0 %v597
    %v599 = vpop.xlane.xlu0 %598
    %v600 = vsel %vm284, %v260, 0.0
    %601 = vadd.xlane.f32.xlu0 %v600
    %v602 = vpop.xlane.xlu0 %601
    %v603 = vsel %vm284, %v261, 0.0
    %604 = vadd.xlane.f32.xlu0 %v603
    %v605 = vpop.xlane.xlu0 %604
    %v606 = vsel %vm284, %v262, 0.0
    %607 = vadd.xlane.f32.xlu0 %v606
    %v608 = vpop.xlane.xlu0 %607
    %v609 = vsel %vm284, %v263, 0.0
    %610 = vadd.xlane.f32.xlu0 %v609
    %v611 = vpop.xlane.xlu0 %610
    %v612 = vsel %vm284, %v264, 0.0
    %613 = vadd.xlane.f32.xlu0 %v612
    %v614 = vpop.xlane.xlu0 %613
    %v615 = vsel %vm284, %v265, 0.0
    %616 = vadd.xlane.f32.xlu0 %v615
    %v617 = vpop.xlane.xlu0 %616
    %v618 = vsel %vm284, %v266, 0.0
    %619 = vadd.xlane.f32.xlu0 %v618
    %v620 = vpop.xlane.xlu0 %619
    %v621 = vsel %vm284, %v267, 0.0
    %622 = vadd.xlane.f32.xlu0 %v621
    %v623 = vpop.xlane.xlu0 %622
    %v624 = vsel %vm284, %v268, 0.0
    %625 = vadd.xlane.f32.xlu0 %v624
    %v626 = vpop.xlane.xlu0 %625
    %v627 = vsel %vm284, %v269, 0.0
    %628 = vadd.xlane.f32.xlu0 %v627
    %v629 = vpop.xlane.xlu0 %628
    %v630 = vsel %vm284, %v270, 0.0
    %631 = vadd.xlane.f32.xlu0 %v630
    %v632 = vpop.xlane.xlu0 %631
    %v633 = vsel %vm284, %v271, 0.0
    %634 = vadd.xlane.f32.xlu0 %v633
    %v635 = vpop.xlane.xlu0 %634
    %v636 = vsel %vm284, %v272, 0.0
    %637 = vadd.xlane.f32.xlu0 %v636
    %v638 = vpop.xlane.xlu0 %637
    %v639 = vsel %vm284, %v273, 0.0
    %640 = vadd.xlane.f32.xlu0 %v639
    %v641 = vpop.xlane.xlu0 %640
    %v642 = vsel %vm284, %v274, 0.0
    %643 = vadd.xlane.f32.xlu0 %v642
    %v644 = vpop.xlane.xlu0 %643
    %v645 = vsel %vm284, %v275, 0.0
    %646 = vadd.xlane.f32.xlu0 %v645
    %v647 = vpop.xlane.xlu0 %646
    %v648 = vsel %vm284, %v276, 0.0
    %649 = vadd.xlane.f32.xlu0 %v648
    %v650 = vpop.xlane.xlu0 %649
    %v651 = vsel %vm284, %v277, 0.0
    %652 = vadd.xlane.f32.xlu0 %v651
    %v653 = vpop.xlane.xlu0 %652
    %v654 = vsel %vm284, %v278, 0.0
    %655 = vadd.xlane.f32.xlu0 %v654
    %v656 = vpop.xlane.xlu0 %655
    %v657 = vsel %vm284, %v279, 0.0
    %658 = vadd.xlane.f32.xlu0 %v657
    %v659 = vpop.xlane.xlu0 %658
    %v660 = vsel %vm284, %v280, 0.0
    %661 = vadd.xlane.f32.xlu0 %v660
    %v662 = vpop.xlane.xlu0 %661
    %v663 = vsel %vm284, %v281, 0.0
    %664 = vadd.xlane.f32.xlu0 %v663
    %v665 = vpop.xlane.xlu0 %664
    %v666 = vsel %vm284, %v282, 0.0
    %667 = vadd.xlane.f32.xlu0 %v666
    %v668 = vpop.xlane.xlu0 %667
    %v798 = vunpack.c.l.s4 269488144
    %v799 = vunpack.c.0.s8 %v798
    %v800 = vlaneseq
    %v801 = vshrl.u32 %v800, 7
    %v802 = vsub.s32 %v799, %v801
    %v803 = vrot.slane %v287, %v802
    %v805 = vunpack.c.l.s4 842150450
    %v806 = vunpack.c.0.s8 %v805
    %v807 = vlaneseq
    %v808 = vshrl.u32 %v807, 7
    %v809 = vsub.s32 %v806, %v808
    %v810 = vrot.slane %v287, %v809
    %v812 = vunpack.c.l.s4 1414812756
    %v813 = vunpack.c.0.s8 %v812
    %v814 = vlaneseq
    %v815 = vshrl.u32 %v814, 7
    %v816 = vsub.s32 %v813, %v815
    %v817 = vrot.slane %v287, %v816
    %v819 = vunpack.c.l.s4 1987475062
    %v820 = vunpack.c.0.s8 %v819
    %v821 = vlaneseq
    %v822 = vshrl.u32 %v821, 7
    %v823 = vsub.s32 %v820, %v822
    %v824 = vrot.slane %v287, %v823
    %v826 = vunpack.c.l.s4 269488144
    %v827 = vunpack.c.0.s8 %v826
    %v828 = vlaneseq
    %v829 = vshrl.u32 %v828, 7
    %v830 = vsub.s32 %v827, %v829
    %v831 = vrot.slane %v290, %v830
    %v833 = vunpack.c.l.s4 842150450
    %v834 = vunpack.c.0.s8 %v833
    %v835 = vlaneseq
    %v836 = vshrl.u32 %v835, 7
    %v837 = vsub.s32 %v834, %v836
    %v838 = vrot.slane %v290, %v837
    %v840 = vunpack.c.l.s4 1414812756
    %v841 = vunpack.c.0.s8 %v840
    %v842 = vlaneseq
    %v843 = vshrl.u32 %v842, 7
    %v844 = vsub.s32 %v841, %v843
    %v845 = vrot.slane %v290, %v844
    %v847 = vunpack.c.l.s4 1987475062
    %v848 = vunpack.c.0.s8 %v847
    %v849 = vlaneseq
    %v850 = vshrl.u32 %v849, 7
    %v851 = vsub.s32 %v848, %v850
    %v852 = vrot.slane %v290, %v851
    %v854 = vunpack.c.l.s4 269488144
    %v855 = vunpack.c.0.s8 %v854
    %v856 = vlaneseq
    %v857 = vshrl.u32 %v856, 7
    %v858 = vsub.s32 %v855, %v857
    %v859 = vrot.slane %v293, %v858
    %v861 = vunpack.c.l.s4 842150450
    %v862 = vunpack.c.0.s8 %v861
    %v863 = vlaneseq
    %v864 = vshrl.u32 %v863, 7
    %v865 = vsub.s32 %v862, %v864
    %v866 = vrot.slane %v293, %v865
    %v868 = vunpack.c.l.s4 1414812756
    %v869 = vunpack.c.0.s8 %v868
    %v870 = vlaneseq
    %v871 = vshrl.u32 %v870, 7
    %v872 = vsub.s32 %v869, %v871
    %v873 = vrot.slane %v293, %v872
    %v875 = vunpack.c.l.s4 1987475062
    %v876 = vunpack.c.0.s8 %v875
    %v877 = vlaneseq
    %v878 = vshrl.u32 %v877, 7
    %v879 = vsub.s32 %v876, %v878
    %v880 = vrot.slane %v293, %v879
    %v882 = vunpack.c.l.s4 269488144
    %v883 = vunpack.c.0.s8 %v882
    %v884 = vlaneseq
    %v885 = vshrl.u32 %v884, 7
    %v886 = vsub.s32 %v883, %v885
    %v887 = vrot.slane %v296, %v886
    %v889 = vunpack.c.l.s4 842150450
    %v890 = vunpack.c.0.s8 %v889
    %v891 = vlaneseq
    %v892 = vshrl.u32 %v891, 7
    %v893 = vsub.s32 %v890, %v892
    %v894 = vrot.slane %v296, %v893
    %v896 = vunpack.c.l.s4 1414812756
    %v897 = vunpack.c.0.s8 %v896
    %v898 = vlaneseq
    %v899 = vshrl.u32 %v898, 7
    %v900 = vsub.s32 %v897, %v899
    %v901 = vrot.slane %v296, %v900
    %v903 = vunpack.c.l.s4 1987475062
    %v904 = vunpack.c.0.s8 %v903
    %v905 = vlaneseq
    %v906 = vshrl.u32 %v905, 7
    %v907 = vsub.s32 %v904, %v906
    %v908 = vrot.slane %v296, %v907
    %v910 = vunpack.c.l.s4 269488144
    %v911 = vunpack.c.0.s8 %v910
    %v912 = vlaneseq
    %v913 = vshrl.u32 %v912, 7
    %v914 = vsub.s32 %v911, %v913
    %v915 = vrot.slane %v299, %v914
    %v917 = vunpack.c.l.s4 842150450
    %v918 = vunpack.c.0.s8 %v917
    %v919 = vlaneseq
    %v920 = vshrl.u32 %v919, 7
    %v921 = vsub.s32 %v918, %v920
    %v922 = vrot.slane %v299, %v921
    %v924 = vunpack.c.l.s4 1414812756
    %v925 = vunpack.c.0.s8 %v924
    %v926 = vlaneseq
    %v927 = vshrl.u32 %v926, 7
    %v928 = vsub.s32 %v925, %v927
    %v929 = vrot.slane %v299, %v928
    %v931 = vunpack.c.l.s4 1987475062
    %v932 = vunpack.c.0.s8 %v931
    %v933 = vlaneseq
    %v934 = vshrl.u32 %v933, 7
    %v935 = vsub.s32 %v932, %v934
    %v936 = vrot.slane %v299, %v935
    %v938 = vunpack.c.l.s4 269488144
    %v939 = vunpack.c.0.s8 %v938
    %v940 = vlaneseq
    %v941 = vshrl.u32 %v940, 7
    %v942 = vsub.s32 %v939, %v941
    %v943 = vrot.slane %v302, %v942
    %v945 = vunpack.c.l.s4 842150450
    %v946 = vunpack.c.0.s8 %v945
    %v947 = vlaneseq
    %v948 = vshrl.u32 %v947, 7
    %v949 = vsub.s32 %v946, %v948
    %v950 = vrot.slane %v302, %v949
    %v952 = vunpack.c.l.s4 1414812756
    %v953 = vunpack.c.0.s8 %v952
    %v954 = vlaneseq
    %v955 = vshrl.u32 %v954, 7
    %v956 = vsub.s32 %v953, %v955
    %v957 = vrot.slane %v302, %v956
    %v959 = vunpack.c.l.s4 1987475062
    %v960 = vunpack.c.0.s8 %v959
    %v961 = vlaneseq
    %v962 = vshrl.u32 %v961, 7
    %v963 = vsub.s32 %v960, %v962
    %v964 = vrot.slane %v302, %v963
    %v966 = vunpack.c.l.s4 269488144
    %v967 = vunpack.c.0.s8 %v966
    %v968 = vlaneseq
    %v969 = vshrl.u32 %v968, 7
    %v970 = vsub.s32 %v967, %v969
    %v971 = vrot.slane %v305, %v970
    %v973 = vunpack.c.l.s4 842150450
    %v974 = vunpack.c.0.s8 %v973
    %v975 = vlaneseq
    %v976 = vshrl.u32 %v975, 7
    %v977 = vsub.s32 %v974, %v976
    %v978 = vrot.slane %v305, %v977
    %v980 = vunpack.c.l.s4 1414812756
    %v981 = vunpack.c.0.s8 %v980
    %v982 = vlaneseq
    %v983 = vshrl.u32 %v982, 7
    %v984 = vsub.s32 %v981, %v983
    %v985 = vrot.slane %v305, %v984
    %v987 = vunpack.c.l.s4 1987475062
    %v988 = vunpack.c.0.s8 %v987
    %v989 = vlaneseq
    %v990 = vshrl.u32 %v989, 7
    %v991 = vsub.s32 %v988, %v990
    %v992 = vrot.slane %v305, %v991
    %v994 = vunpack.c.l.s4 269488144
    %v995 = vunpack.c.0.s8 %v994
    %v996 = vlaneseq
    %v997 = vshrl.u32 %v996, 7
    %v998 = vsub.s32 %v995, %v997
    %v999 = vrot.slane %v308, %v998
    %v1001 = vunpack.c.l.s4 842150450
    %v1002 = vunpack.c.0.s8 %v1001
    %v1003 = vlaneseq
    %v1004 = vshrl.u32 %v1003, 7
    %v1005 = vsub.s32 %v1002, %v1004
    %v1006 = vrot.slane %v308, %v1005
    %v1008 = vunpack.c.l.s4 1414812756
    %v1009 = vunpack.c.0.s8 %v1008
    %v1010 = vlaneseq
    %v1011 = vshrl.u32 %v1010, 7
    %v1012 = vsub.s32 %v1009, %v1011
    %v1013 = vrot.slane %v308, %v1012
    %v1015 = vunpack.c.l.s4 1987475062
    %v1016 = vunpack.c.0.s8 %v1015
    %v1017 = vlaneseq
    %v1018 = vshrl.u32 %v1017, 7
    %v1019 = vsub.s32 %v1016, %v1018
    %v1020 = vrot.slane %v308, %v1019
    %v1022 = vunpack.c.l.s4 269488144
    %v1023 = vunpack.c.0.s8 %v1022
    %v1024 = vlaneseq
    %v1025 = vshrl.u32 %v1024, 7
    %v1026 = vsub.s32 %v1023, %v1025
    %v1027 = vrot.slane %v311, %v1026
    %v1029 = vunpack.c.l.s4 842150450
    %v1030 = vunpack.c.0.s8 %v1029
    %v1031 = vlaneseq
    %v1032 = vshrl.u32 %v1031, 7
    %v1033 = vsub.s32 %v1030, %v1032
    %v1034 = vrot.slane %v311, %v1033
    %v1036 = vunpack.c.l.s4 1414812756
    %v1037 = vunpack.c.0.s8 %v1036
    %v1038 = vlaneseq
    %v1039 = vshrl.u32 %v1038, 7
    %v1040 = vsub.s32 %v1037, %v1039
    %v1041 = vrot.slane %v311, %v1040
    %v1043 = vunpack.c.l.s4 1987475062
    %v1044 = vunpack.c.0.s8 %v1043
    %v1045 = vlaneseq
    %v1046 = vshrl.u32 %v1045, 7
    %v1047 = vsub.s32 %v1044, %v1046
    %v1048 = vrot.slane %v311, %v1047
    %v1050 = vunpack.c.l.s4 269488144
    %v1051 = vunpack.c.0.s8 %v1050
    %v1052 = vlaneseq
    %v1053 = vshrl.u32 %v1052, 7
    %v1054 = vsub.s32 %v1051, %v1053
    %v1055 = vrot.slane %v314, %v1054
    %v1057 = vunpack.c.l.s4 842150450
    %v1058 = vunpack.c.0.s8 %v1057
    %v1059 = vlaneseq
    %v1060 = vshrl.u32 %v1059, 7
    %v1061 = vsub.s32 %v1058, %v1060
    %v1062 = vrot.slane %v314, %v1061
    %v1064 = vunpack.c.l.s4 1414812756
    %v1065 = vunpack.c.0.s8 %v1064
    %v1066 = vlaneseq
    %v1067 = vshrl.u32 %v1066, 7
    %v1068 = vsub.s32 %v1065, %v1067
    %v1069 = vrot.slane %v314, %v1068
    %v1071 = vunpack.c.l.s4 1987475062
    %v1072 = vunpack.c.0.s8 %v1071
    %v1073 = vlaneseq
    %v1074 = vshrl.u32 %v1073, 7
    %v1075 = vsub.s32 %v1072, %v1074
    %v1076 = vrot.slane %v314, %v1075
    %v1078 = vunpack.c.l.s4 269488144
    %v1079 = vunpack.c.0.s8 %v1078
    %v1080 = vlaneseq
    %v1081 = vshrl.u32 %v1080, 7
    %v1082 = vsub.s32 %v1079, %v1081
    %v1083 = vrot.slane %v317, %v1082
    %v1085 = vunpack.c.l.s4 842150450
    %v1086 = vunpack.c.0.s8 %v1085
    %v1087 = vlaneseq
    %v1088 = vshrl.u32 %v1087, 7
    %v1089 = vsub.s32 %v1086, %v1088
    %v1090 = vrot.slane %v317, %v1089
    %v1092 = vunpack.c.l.s4 1414812756
    %v1093 = vunpack.c.0.s8 %v1092
    %v1094 = vlaneseq
    %v1095 = vshrl.u32 %v1094, 7
    %v1096 = vsub.s32 %v1093, %v1095
    %v1097 = vrot.slane %v317, %v1096
    %v1099 = vunpack.c.l.s4 1987475062
    %v1100 = vunpack.c.0.s8 %v1099
    %v1101 = vlaneseq
    %v1102 = vshrl.u32 %v1101, 7
    %v1103 = vsub.s32 %v1100, %v1102
    %v1104 = vrot.slane %v317, %v1103
    %v1106 = vunpack.c.l.s4 269488144
    %v1107 = vunpack.c.0.s8 %v1106
    %v1108 = vlaneseq
    %v1109 = vshrl.u32 %v1108, 7
    %v1110 = vsub.s32 %v1107, %v1109
    %v1111 = vrot.slane %v320, %v1110
    %v1113 = vunpack.c.l.s4 842150450
    %v1114 = vunpack.c.0.s8 %v1113
    %v1115 = vlaneseq
    %v1116 = vshrl.u32 %v1115, 7
    %v1117 = vsub.s32 %v1114, %v1116
    %v1118 = vrot.slane %v320, %v1117
    %v1120 = vunpack.c.l.s4 1414812756
    %v1121 = vunpack.c.0.s8 %v1120
    %v1122 = vlaneseq
    %v1123 = vshrl.u32 %v1122, 7
    %v1124 = vsub.s32 %v1121, %v1123
    %v1125 = vrot.slane %v320, %v1124
    %v1127 = vunpack.c.l.s4 1987475062
    %v1128 = vunpack.c.0.s8 %v1127
    %v1129 = vlaneseq
    %v1130 = vshrl.u32 %v1129, 7
    %v1131 = vsub.s32 %v1128, %v1130
    %v1132 = vrot.slane %v320, %v1131
    %v1134 = vunpack.c.l.s4 269488144
    %v1135 = vunpack.c.0.s8 %v1134
    %v1136 = vlaneseq
    %v1137 = vshrl.u32 %v1136, 7
    %v1138 = vsub.s32 %v1135, %v1137
    %v1139 = vrot.slane %v323, %v1138
    %v1141 = vunpack.c.l.s4 842150450
    %v1142 = vunpack.c.0.s8 %v1141
    %v1143 = vlaneseq
    %v1144 = vshrl.u32 %v1143, 7
    %v1145 = vsub.s32 %v1142, %v1144
    %v1146 = vrot.slane %v323, %v1145
    %v1148 = vunpack.c.l.s4 1414812756
    %v1149 = vunpack.c.0.s8 %v1148
    %v1150 = vlaneseq
    %v1151 = vshrl.u32 %v1150, 7
    %v1152 = vsub.s32 %v1149, %v1151
    %v1153 = vrot.slane %v323, %v1152
    %v1155 = vunpack.c.l.s4 1987475062
    %v1156 = vunpack.c.0.s8 %v1155
    %v1157 = vlaneseq
    %v1158 = vshrl.u32 %v1157, 7
    %v1159 = vsub.s32 %v1156, %v1158
    %v1160 = vrot.slane %v323, %v1159
    %v1162 = vunpack.c.l.s4 269488144
    %v1163 = vunpack.c.0.s8 %v1162
    %v1164 = vlaneseq
    %v1165 = vshrl.u32 %v1164, 7
    %v1166 = vsub.s32 %v1163, %v1165
    %v1167 = vrot.slane %v326, %v1166
    %v1169 = vunpack.c.l.s4 842150450
    %v1170 = vunpack.c.0.s8 %v1169
    %v1171 = vlaneseq
    %v1172 = vshrl.u32 %v1171, 7
    %v1173 = vsub.s32 %v1170, %v1172
    %v1174 = vrot.slane %v326, %v1173
    %v1176 = vunpack.c.l.s4 1414812756
    %v1177 = vunpack.c.0.s8 %v1176
    %v1178 = vlaneseq
    %v1179 = vshrl.u32 %v1178, 7
    %v1180 = vsub.s32 %v1177, %v1179
    %v1181 = vrot.slane %v326, %v1180
    %v1183 = vunpack.c.l.s4 1987475062
    %v1184 = vunpack.c.0.s8 %v1183
    %v1185 = vlaneseq
    %v1186 = vshrl.u32 %v1185, 7
    %v1187 = vsub.s32 %v1184, %v1186
    %v1188 = vrot.slane %v326, %v1187
    %v1190 = vunpack.c.l.s4 269488144
    %v1191 = vunpack.c.0.s8 %v1190
    %v1192 = vlaneseq
    %v1193 = vshrl.u32 %v1192, 7
    %v1194 = vsub.s32 %v1191, %v1193
    %v1195 = vrot.slane %v329, %v1194
    %v1197 = vunpack.c.l.s4 842150450
    %v1198 = vunpack.c.0.s8 %v1197
    %v1199 = vlaneseq
    %v1200 = vshrl.u32 %v1199, 7
    %v1201 = vsub.s32 %v1198, %v1200
    %v1202 = vrot.slane %v329, %v1201
    %v1204 = vunpack.c.l.s4 1414812756
    %v1205 = vunpack.c.0.s8 %v1204
    %v1206 = vlaneseq
    %v1207 = vshrl.u32 %v1206, 7
    %v1208 = vsub.s32 %v1205, %v1207
    %v1209 = vrot.slane %v329, %v1208
    %v1211 = vunpack.c.l.s4 1987475062
    %v1212 = vunpack.c.0.s8 %v1211
    %v1213 = vlaneseq
    %v1214 = vshrl.u32 %v1213, 7
    %v1215 = vsub.s32 %v1212, %v1214
    %v1216 = vrot.slane %v329, %v1215
    %v1218 = vunpack.c.l.s4 269488144
    %v1219 = vunpack.c.0.s8 %v1218
    %v1220 = vlaneseq
    %v1221 = vshrl.u32 %v1220, 7
    %v1222 = vsub.s32 %v1219, %v1221
    %v1223 = vrot.slane %v332, %v1222
    %v1225 = vunpack.c.l.s4 842150450
    %v1226 = vunpack.c.0.s8 %v1225
    %v1227 = vlaneseq
    %v1228 = vshrl.u32 %v1227, 7
    %v1229 = vsub.s32 %v1226, %v1228
    %v1230 = vrot.slane %v332, %v1229
    %v1232 = vunpack.c.l.s4 1414812756
    %v1233 = vunpack.c.0.s8 %v1232
    %v1234 = vlaneseq
    %v1235 = vshrl.u32 %v1234, 7
    %v1236 = vsub.s32 %v1233, %v1235
    %v1237 = vrot.slane %v332, %v1236
    %v1239 = vunpack.c.l.s4 1987475062
    %v1240 = vunpack.c.0.s8 %v1239
    %v1241 = vlaneseq
    %v1242 = vshrl.u32 %v1241, 7
    %v1243 = vsub.s32 %v1240, %v1242
    %v1244 = vrot.slane %v332, %v1243
    %v1246 = vunpack.c.l.s4 269488144
    %v1247 = vunpack.c.0.s8 %v1246
    %v1248 = vlaneseq
    %v1249 = vshrl.u32 %v1248, 7
    %v1250 = vsub.s32 %v1247, %v1249
    %v1251 = vrot.slane %v335, %v1250
    %v1253 = vunpack.c.l.s4 842150450
    %v1254 = vunpack.c.0.s8 %v1253
    %v1255 = vlaneseq
    %v1256 = vshrl.u32 %v1255, 7
    %v1257 = vsub.s32 %v1254, %v1256
    %v1258 = vrot.slane %v335, %v1257
    %v1260 = vunpack.c.l.s4 1414812756
    %v1261 = vunpack.c.0.s8 %v1260
    %v1262 = vlaneseq
    %v1263 = vshrl.u32 %v1262, 7
    %v1264 = vsub.s32 %v1261, %v1263
    %v1265 = vrot.slane %v335, %v1264
    %v1267 = vunpack.c.l.s4 1987475062
    %v1268 = vunpack.c.0.s8 %v1267
    %v1269 = vlaneseq
    %v1270 = vshrl.u32 %v1269, 7
    %v1271 = vsub.s32 %v1268, %v1270
    %v1272 = vrot.slane %v335, %v1271
    %v1274 = vunpack.c.l.s4 269488144
    %v1275 = vunpack.c.0.s8 %v1274
    %v1276 = vlaneseq
    %v1277 = vshrl.u32 %v1276, 7
    %v1278 = vsub.s32 %v1275, %v1277
    %v1279 = vrot.slane %v338, %v1278
    %v1281 = vunpack.c.l.s4 842150450
    %v1282 = vunpack.c.0.s8 %v1281
    %v1283 = vlaneseq
    %v1284 = vshrl.u32 %v1283, 7
    %v1285 = vsub.s32 %v1282, %v1284
    %v1286 = vrot.slane %v338, %v1285
    %v1288 = vunpack.c.l.s4 1414812756
    %v1289 = vunpack.c.0.s8 %v1288
    %v1290 = vlaneseq
    %v1291 = vshrl.u32 %v1290, 7
    %v1292 = vsub.s32 %v1289, %v1291
    %v1293 = vrot.slane %v338, %v1292
    %v1295 = vunpack.c.l.s4 1987475062
    %v1296 = vunpack.c.0.s8 %v1295
    %v1297 = vlaneseq
    %v1298 = vshrl.u32 %v1297, 7
    %v1299 = vsub.s32 %v1296, %v1298
    %v1300 = vrot.slane %v338, %v1299
    %v1302 = vunpack.c.l.s4 269488144
    %v1303 = vunpack.c.0.s8 %v1302
    %v1304 = vlaneseq
    %v1305 = vshrl.u32 %v1304, 7
    %v1306 = vsub.s32 %v1303, %v1305
    %v1307 = vrot.slane %v341, %v1306
    %v1309 = vunpack.c.l.s4 842150450
    %v1310 = vunpack.c.0.s8 %v1309
    %v1311 = vlaneseq
    %v1312 = vshrl.u32 %v1311, 7
    %v1313 = vsub.s32 %v1310, %v1312
    %v1314 = vrot.slane %v341, %v1313
    %v1316 = vunpack.c.l.s4 1414812756
    %v1317 = vunpack.c.0.s8 %v1316
    %v1318 = vlaneseq
    %v1319 = vshrl.u32 %v1318, 7
    %v1320 = vsub.s32 %v1317, %v1319
    %v1321 = vrot.slane %v341, %v1320
    %v1323 = vunpack.c.l.s4 1987475062
    %v1324 = vunpack.c.0.s8 %v1323
    %v1325 = vlaneseq
    %v1326 = vshrl.u32 %v1325, 7
    %v1327 = vsub.s32 %v1324, %v1326
    %v1328 = vrot.slane %v341, %v1327
    %v1330 = vunpack.c.l.s4 269488144
    %v1331 = vunpack.c.0.s8 %v1330
    %v1332 = vlaneseq
    %v1333 = vshrl.u32 %v1332, 7
    %v1334 = vsub.s32 %v1331, %v1333
    %v1335 = vrot.slane %v344, %v1334
    %v1337 = vunpack.c.l.s4 842150450
    %v1338 = vunpack.c.0.s8 %v1337
    %v1339 = vlaneseq
    %v1340 = vshrl.u32 %v1339, 7
    %v1341 = vsub.s32 %v1338, %v1340
    %v1342 = vrot.slane %v344, %v1341
    %v1344 = vunpack.c.l.s4 1414812756
    %v1345 = vunpack.c.0.s8 %v1344
    %v1346 = vlaneseq
    %v1347 = vshrl.u32 %v1346, 7
    %v1348 = vsub.s32 %v1345, %v1347
    %v1349 = vrot.slane %v344, %v1348
    %v1351 = vunpack.c.l.s4 1987475062
    %v1352 = vunpack.c.0.s8 %v1351
    %v1353 = vlaneseq
    %v1354 = vshrl.u32 %v1353, 7
    %v1355 = vsub.s32 %v1352, %v1354
    %v1356 = vrot.slane %v344, %v1355
    %v1358 = vunpack.c.l.s4 269488144
    %v1359 = vunpack.c.0.s8 %v1358
    %v1360 = vlaneseq
    %v1361 = vshrl.u32 %v1360, 7
    %v1362 = vsub.s32 %v1359, %v1361
    %v1363 = vrot.slane %v347, %v1362
    %v1365 = vunpack.c.l.s4 842150450
    %v1366 = vunpack.c.0.s8 %v1365
    %v1367 = vlaneseq
    %v1368 = vshrl.u32 %v1367, 7
    %v1369 = vsub.s32 %v1366, %v1368
    %v1370 = vrot.slane %v347, %v1369
    %v1372 = vunpack.c.l.s4 1414812756
    %v1373 = vunpack.c.0.s8 %v1372
    %v1374 = vlaneseq
    %v1375 = vshrl.u32 %v1374, 7
    %v1376 = vsub.s32 %v1373, %v1375
    %v1377 = vrot.slane %v347, %v1376
    %v1379 = vunpack.c.l.s4 1987475062
    %v1380 = vunpack.c.0.s8 %v1379
    %v1381 = vlaneseq
    %v1382 = vshrl.u32 %v1381, 7
    %v1383 = vsub.s32 %v1380, %v1382
    %v1384 = vrot.slane %v347, %v1383
    %v1386 = vunpack.c.l.s4 269488144
    %v1387 = vunpack.c.0.s8 %v1386
    %v1388 = vlaneseq
    %v1389 = vshrl.u32 %v1388, 7
    %v1390 = vsub.s32 %v1387, %v1389
    %v1391 = vrot.slane %v350, %v1390
    %v1393 = vunpack.c.l.s4 842150450
    %v1394 = vunpack.c.0.s8 %v1393
    %v1395 = vlaneseq
    %v1396 = vshrl.u32 %v1395, 7
    %v1397 = vsub.s32 %v1394, %v1396
    %v1398 = vrot.slane %v350, %v1397
    %v1400 = vunpack.c.l.s4 1414812756
    %v1401 = vunpack.c.0.s8 %v1400
    %v1402 = vlaneseq
    %v1403 = vshrl.u32 %v1402, 7
    %v1404 = vsub.s32 %v1401, %v1403
    %v1405 = vrot.slane %v350, %v1404
    %v1407 = vunpack.c.l.s4 1987475062
    %v1408 = vunpack.c.0.s8 %v1407
    %v1409 = vlaneseq
    %v1410 = vshrl.u32 %v1409, 7
    %v1411 = vsub.s32 %v1408, %v1410
    %v1412 = vrot.slane %v350, %v1411
    %v1414 = vunpack.c.l.s4 269488144
    %v1415 = vunpack.c.0.s8 %v1414
    %v1416 = vlaneseq
    %v1417 = vshrl.u32 %v1416, 7
    %v1418 = vsub.s32 %v1415, %v1417
    %v1419 = vrot.slane %v353, %v1418
    %v1421 = vunpack.c.l.s4 842150450
    %v1422 = vunpack.c.0.s8 %v1421
    %v1423 = vlaneseq
    %v1424 = vshrl.u32 %v1423, 7
    %v1425 = vsub.s32 %v1422, %v1424
    %v1426 = vrot.slane %v353, %v1425
    %v1428 = vunpack.c.l.s4 1414812756
    %v1429 = vunpack.c.0.s8 %v1428
    %v1430 = vlaneseq
    %v1431 = vshrl.u32 %v1430, 7
    %v1432 = vsub.s32 %v1429, %v1431
    %v1433 = vrot.slane %v353, %v1432
    %v1435 = vunpack.c.l.s4 1987475062
    %v1436 = vunpack.c.0.s8 %v1435
    %v1437 = vlaneseq
    %v1438 = vshrl.u32 %v1437, 7
    %v1439 = vsub.s32 %v1436, %v1438
    %v1440 = vrot.slane %v353, %v1439
    %v1442 = vunpack.c.l.s4 269488144
    %v1443 = vunpack.c.0.s8 %v1442
    %v1444 = vlaneseq
    %v1445 = vshrl.u32 %v1444, 7
    %v1446 = vsub.s32 %v1443, %v1445
    %v1447 = vrot.slane %v356, %v1446
    %v1449 = vunpack.c.l.s4 842150450
    %v1450 = vunpack.c.0.s8 %v1449
    %v1451 = vlaneseq
    %v1452 = vshrl.u32 %v1451, 7
    %v1453 = vsub.s32 %v1450, %v1452
    %v1454 = vrot.slane %v356, %v1453
    %v1456 = vunpack.c.l.s4 1414812756
    %v1457 = vunpack.c.0.s8 %v1456
    %v1458 = vlaneseq
    %v1459 = vshrl.u32 %v1458, 7
    %v1460 = vsub.s32 %v1457, %v1459
    %v1461 = vrot.slane %v356, %v1460
    %v1463 = vunpack.c.l.s4 1987475062
    %v1464 = vunpack.c.0.s8 %v1463
    %v1465 = vlaneseq
    %v1466 = vshrl.u32 %v1465, 7
    %v1467 = vsub.s32 %v1464, %v1466
    %v1468 = vrot.slane %v356, %v1467
    %v1470 = vunpack.c.l.s4 269488144
    %v1471 = vunpack.c.0.s8 %v1470
    %v1472 = vlaneseq
    %v1473 = vshrl.u32 %v1472, 7
    %v1474 = vsub.s32 %v1471, %v1473
    %v1475 = vrot.slane %v359, %v1474
    %v1477 = vunpack.c.l.s4 842150450
    %v1478 = vunpack.c.0.s8 %v1477
    %v1479 = vlaneseq
    %v1480 = vshrl.u32 %v1479, 7
    %v1481 = vsub.s32 %v1478, %v1480
    %v1482 = vrot.slane %v359, %v1481
    %v1484 = vunpack.c.l.s4 1414812756
    %v1485 = vunpack.c.0.s8 %v1484
    %v1486 = vlaneseq
    %v1487 = vshrl.u32 %v1486, 7
    %v1488 = vsub.s32 %v1485, %v1487
    %v1489 = vrot.slane %v359, %v1488
    %v1491 = vunpack.c.l.s4 1987475062
    %v1492 = vunpack.c.0.s8 %v1491
    %v1493 = vlaneseq
    %v1494 = vshrl.u32 %v1493, 7
    %v1495 = vsub.s32 %v1492, %v1494
    %v1496 = vrot.slane %v359, %v1495
    %v1498 = vunpack.c.l.s4 269488144
    %v1499 = vunpack.c.0.s8 %v1498
    %v1500 = vlaneseq
    %v1501 = vshrl.u32 %v1500, 7
    %v1502 = vsub.s32 %v1499, %v1501
    %v1503 = vrot.slane %v362, %v1502
    %v1505 = vunpack.c.l.s4 842150450
    %v1506 = vunpack.c.0.s8 %v1505
    %v1507 = vlaneseq
    %v1508 = vshrl.u32 %v1507, 7
    %v1509 = vsub.s32 %v1506, %v1508
    %v1510 = vrot.slane %v362, %v1509
    %v1512 = vunpack.c.l.s4 1414812756
    %v1513 = vunpack.c.0.s8 %v1512
    %v1514 = vlaneseq
    %v1515 = vshrl.u32 %v1514, 7
    %v1516 = vsub.s32 %v1513, %v1515
    %v1517 = vrot.slane %v362, %v1516
    %v1519 = vunpack.c.l.s4 1987475062
    %v1520 = vunpack.c.0.s8 %v1519
    %v1521 = vlaneseq
    %v1522 = vshrl.u32 %v1521, 7
    %v1523 = vsub.s32 %v1520, %v1522
    %v1524 = vrot.slane %v362, %v1523
    %v1526 = vunpack.c.l.s4 269488144
    %v1527 = vunpack.c.0.s8 %v1526
    %v1528 = vlaneseq
    %v1529 = vshrl.u32 %v1528, 7
    %v1530 = vsub.s32 %v1527, %v1529
    %v1531 = vrot.slane %v365, %v1530
    %v1533 = vunpack.c.l.s4 842150450
    %v1534 = vunpack.c.0.s8 %v1533
    %v1535 = vlaneseq
    %v1536 = vshrl.u32 %v1535, 7
    %v1537 = vsub.s32 %v1534, %v1536
    %v1538 = vrot.slane %v365, %v1537
    %v1540 = vunpack.c.l.s4 1414812756
    %v1541 = vunpack.c.0.s8 %v1540
    %v1542 = vlaneseq
    %v1543 = vshrl.u32 %v1542, 7
    %v1544 = vsub.s32 %v1541, %v1543
    %v1545 = vrot.slane %v365, %v1544
    %v1547 = vunpack.c.l.s4 1987475062
    %v1548 = vunpack.c.0.s8 %v1547
    %v1549 = vlaneseq
    %v1550 = vshrl.u32 %v1549, 7
    %v1551 = vsub.s32 %v1548, %v1550
    %v1552 = vrot.slane %v365, %v1551
    %v1554 = vunpack.c.l.s4 269488144
    %v1555 = vunpack.c.0.s8 %v1554
    %v1556 = vlaneseq
    %v1557 = vshrl.u32 %v1556, 7
    %v1558 = vsub.s32 %v1555, %v1557
    %v1559 = vrot.slane %v368, %v1558
    %v1561 = vunpack.c.l.s4 842150450
    %v1562 = vunpack.c.0.s8 %v1561
    %v1563 = vlaneseq
    %v1564 = vshrl.u32 %v1563, 7
    %v1565 = vsub.s32 %v1562, %v1564
    %v1566 = vrot.slane %v368, %v1565
    %v1568 = vunpack.c.l.s4 1414812756
    %v1569 = vunpack.c.0.s8 %v1568
    %v1570 = vlaneseq
    %v1571 = vshrl.u32 %v1570, 7
    %v1572 = vsub.s32 %v1569, %v1571
    %v1573 = vrot.slane %v368, %v1572
    %v1575 = vunpack.c.l.s4 1987475062
    %v1576 = vunpack.c.0.s8 %v1575
    %v1577 = vlaneseq
    %v1578 = vshrl.u32 %v1577, 7
    %v1579 = vsub.s32 %v1576, %v1578
    %v1580 = vrot.slane %v368, %v1579
    %v1582 = vunpack.c.l.s4 269488144
    %v1583 = vunpack.c.0.s8 %v1582
    %v1584 = vlaneseq
    %v1585 = vshrl.u32 %v1584, 7
    %v1586 = vsub.s32 %v1583, %v1585
    %v1587 = vrot.slane %v371, %v1586
    %v1589 = vunpack.c.l.s4 842150450
    %v1590 = vunpack.c.0.s8 %v1589
    %v1591 = vlaneseq
    %v1592 = vshrl.u32 %v1591, 7
    %v1593 = vsub.s32 %v1590, %v1592
    %v1594 = vrot.slane %v371, %v1593
    %v1596 = vunpack.c.l.s4 1414812756
    %v1597 = vunpack.c.0.s8 %v1596
    %v1598 = vlaneseq
    %v1599 = vshrl.u32 %v1598, 7
    %v1600 = vsub.s32 %v1597, %v1599
    %v1601 = vrot.slane %v371, %v1600
    %v1603 = vunpack.c.l.s4 1987475062
    %v1604 = vunpack.c.0.s8 %v1603
    %v1605 = vlaneseq
    %v1606 = vshrl.u32 %v1605, 7
    %v1607 = vsub.s32 %v1604, %v1606
    %v1608 = vrot.slane %v371, %v1607
    %v1610 = vunpack.c.l.s4 269488144
    %v1611 = vunpack.c.0.s8 %v1610
    %v1612 = vlaneseq
    %v1613 = vshrl.u32 %v1612, 7
    %v1614 = vsub.s32 %v1611, %v1613
    %v1615 = vrot.slane %v374, %v1614
    %v1617 = vunpack.c.l.s4 842150450
    %v1618 = vunpack.c.0.s8 %v1617
    %v1619 = vlaneseq
    %v1620 = vshrl.u32 %v1619, 7
    %v1621 = vsub.s32 %v1618, %v1620
    %v1622 = vrot.slane %v374, %v1621
    %v1624 = vunpack.c.l.s4 1414812756
    %v1625 = vunpack.c.0.s8 %v1624
    %v1626 = vlaneseq
    %v1627 = vshrl.u32 %v1626, 7
    %v1628 = vsub.s32 %v1625, %v1627
    %v1629 = vrot.slane %v374, %v1628
    %v1631 = vunpack.c.l.s4 1987475062
    %v1632 = vunpack.c.0.s8 %v1631
    %v1633 = vlaneseq
    %v1634 = vshrl.u32 %v1633, 7
    %v1635 = vsub.s32 %v1632, %v1634
    %v1636 = vrot.slane %v374, %v1635
    %v1638 = vunpack.c.l.s4 269488144
    %v1639 = vunpack.c.0.s8 %v1638
    %v1640 = vlaneseq
    %v1641 = vshrl.u32 %v1640, 7
    %v1642 = vsub.s32 %v1639, %v1641
    %v1643 = vrot.slane %v377, %v1642
    %v1645 = vunpack.c.l.s4 842150450
    %v1646 = vunpack.c.0.s8 %v1645
    %v1647 = vlaneseq
    %v1648 = vshrl.u32 %v1647, 7
    %v1649 = vsub.s32 %v1646, %v1648
    %v1650 = vrot.slane %v377, %v1649
    %v1652 = vunpack.c.l.s4 1414812756
    %v1653 = vunpack.c.0.s8 %v1652
    %v1654 = vlaneseq
    %v1655 = vshrl.u32 %v1654, 7
    %v1656 = vsub.s32 %v1653, %v1655
    %v1657 = vrot.slane %v377, %v1656
    %v1659 = vunpack.c.l.s4 1987475062
    %v1660 = vunpack.c.0.s8 %v1659
    %v1661 = vlaneseq
    %v1662 = vshrl.u32 %v1661, 7
    %v1663 = vsub.s32 %v1660, %v1662
    %v1664 = vrot.slane %v377, %v1663
    %v1666 = vunpack.c.l.s4 269488144
    %v1667 = vunpack.c.0.s8 %v1666
    %v1668 = vlaneseq
    %v1669 = vshrl.u32 %v1668, 7
    %v1670 = vsub.s32 %v1667, %v1669
    %v1671 = vrot.slane %v380, %v1670
    %v1673 = vunpack.c.l.s4 842150450
    %v1674 = vunpack.c.0.s8 %v1673
    %v1675 = vlaneseq
    %v1676 = vshrl.u32 %v1675, 7
    %v1677 = vsub.s32 %v1674, %v1676
    %v1678 = vrot.slane %v380, %v1677
    %v1680 = vunpack.c.l.s4 1414812756
    %v1681 = vunpack.c.0.s8 %v1680
    %v1682 = vlaneseq
    %v1683 = vshrl.u32 %v1682, 7
    %v1684 = vsub.s32 %v1681, %v1683
    %v1685 = vrot.slane %v380, %v1684
    %v1687 = vunpack.c.l.s4 1987475062
    %v1688 = vunpack.c.0.s8 %v1687
    %v1689 = vlaneseq
    %v1690 = vshrl.u32 %v1689, 7
    %v1691 = vsub.s32 %v1688, %v1690
    %v1692 = vrot.slane %v380, %v1691
    %v1694 = vunpack.c.l.s4 269488144
    %v1695 = vunpack.c.0.s8 %v1694
    %v1696 = vlaneseq
    %v1697 = vshrl.u32 %v1696, 7
    %v1698 = vsub.s32 %v1695, %v1697
    %v1699 = vrot.slane %v383, %v1698
    %v1701 = vunpack.c.l.s4 842150450
    %v1702 = vunpack.c.0.s8 %v1701
    %v1703 = vlaneseq
    %v1704 = vshrl.u32 %v1703, 7
    %v1705 = vsub.s32 %v1702, %v1704
    %v1706 = vrot.slane %v383, %v1705
    %v1708 = vunpack.c.l.s4 1414812756
    %v1709 = vunpack.c.0.s8 %v1708
    %v1710 = vlaneseq
    %v1711 = vshrl.u32 %v1710, 7
    %v1712 = vsub.s32 %v1709, %v1711
    %v1713 = vrot.slane %v383, %v1712
    %v1715 = vunpack.c.l.s4 1987475062
    %v1716 = vunpack.c.0.s8 %v1715
    %v1717 = vlaneseq
    %v1718 = vshrl.u32 %v1717, 7
    %v1719 = vsub.s32 %v1716, %v1718
    %v1720 = vrot.slane %v383, %v1719
    %v1722 = vunpack.c.l.s4 269488144
    %v1723 = vunpack.c.0.s8 %v1722
    %v1724 = vlaneseq
    %v1725 = vshrl.u32 %v1724, 7
    %v1726 = vsub.s32 %v1723, %v1725
    %v1727 = vrot.slane %v386, %v1726
    %v1729 = vunpack.c.l.s4 842150450
    %v1730 = vunpack.c.0.s8 %v1729
    %v1731 = vlaneseq
    %v1732 = vshrl.u32 %v1731, 7
    %v1733 = vsub.s32 %v1730, %v1732
    %v1734 = vrot.slane %v386, %v1733
    %v1736 = vunpack.c.l.s4 1414812756
    %v1737 = vunpack.c.0.s8 %v1736
    %v1738 = vlaneseq
    %v1739 = vshrl.u32 %v1738, 7
    %v1740 = vsub.s32 %v1737, %v1739
    %v1741 = vrot.slane %v386, %v1740
    %v1743 = vunpack.c.l.s4 1987475062
    %v1744 = vunpack.c.0.s8 %v1743
    %v1745 = vlaneseq
    %v1746 = vshrl.u32 %v1745, 7
    %v1747 = vsub.s32 %v1744, %v1746
    %v1748 = vrot.slane %v386, %v1747
    %v1750 = vunpack.c.l.s4 269488144
    %v1751 = vunpack.c.0.s8 %v1750
    %v1752 = vlaneseq
    %v1753 = vshrl.u32 %v1752, 7
    %v1754 = vsub.s32 %v1751, %v1753
    %v1755 = vrot.slane %v389, %v1754
    %v1757 = vunpack.c.l.s4 842150450
    %v1758 = vunpack.c.0.s8 %v1757
    %v1759 = vlaneseq
    %v1760 = vshrl.u32 %v1759, 7
    %v1761 = vsub.s32 %v1758, %v1760
    %v1762 = vrot.slane %v389, %v1761
    %v1764 = vunpack.c.l.s4 1414812756
    %v1765 = vunpack.c.0.s8 %v1764
    %v1766 = vlaneseq
    %v1767 = vshrl.u32 %v1766, 7
    %v1768 = vsub.s32 %v1765, %v1767
    %v1769 = vrot.slane %v389, %v1768
    %v1771 = vunpack.c.l.s4 1987475062
    %v1772 = vunpack.c.0.s8 %v1771
    %v1773 = vlaneseq
    %v1774 = vshrl.u32 %v1773, 7
    %v1775 = vsub.s32 %v1772, %v1774
    %v1776 = vrot.slane %v389, %v1775
    %v1778 = vunpack.c.l.s4 269488144
    %v1779 = vunpack.c.0.s8 %v1778
    %v1780 = vlaneseq
    %v1781 = vshrl.u32 %v1780, 7
    %v1782 = vsub.s32 %v1779, %v1781
    %v1783 = vrot.slane %v392, %v1782
    %v1785 = vunpack.c.l.s4 842150450
    %v1786 = vunpack.c.0.s8 %v1785
    %v1787 = vlaneseq
    %v1788 = vshrl.u32 %v1787, 7
    %v1789 = vsub.s32 %v1786, %v1788
    %v1790 = vrot.slane %v392, %v1789
    %v1792 = vunpack.c.l.s4 1414812756
    %v1793 = vunpack.c.0.s8 %v1792
    %v1794 = vlaneseq
    %v1795 = vshrl.u32 %v1794, 7
    %v1796 = vsub.s32 %v1793, %v1795
    %v1797 = vrot.slane %v392, %v1796
    %v1799 = vunpack.c.l.s4 1987475062
    %v1800 = vunpack.c.0.s8 %v1799
    %v1801 = vlaneseq
    %v1802 = vshrl.u32 %v1801, 7
    %v1803 = vsub.s32 %v1800, %v1802
    %v1804 = vrot.slane %v392, %v1803
    %v1806 = vunpack.c.l.s4 269488144
    %v1807 = vunpack.c.0.s8 %v1806
    %v1808 = vlaneseq
    %v1809 = vshrl.u32 %v1808, 7
    %v1810 = vsub.s32 %v1807, %v1809
    %v1811 = vrot.slane %v395, %v1810
    %v1813 = vunpack.c.l.s4 842150450
    %v1814 = vunpack.c.0.s8 %v1813
    %v1815 = vlaneseq
    %v1816 = vshrl.u32 %v1815, 7
    %v1817 = vsub.s32 %v1814, %v1816
    %v1818 = vrot.slane %v395, %v1817
    %v1820 = vunpack.c.l.s4 1414812756
    %v1821 = vunpack.c.0.s8 %v1820
    %v1822 = vlaneseq
    %v1823 = vshrl.u32 %v1822, 7
    %v1824 = vsub.s32 %v1821, %v1823
    %v1825 = vrot.slane %v395, %v1824
    %v1827 = vunpack.c.l.s4 1987475062
    %v1828 = vunpack.c.0.s8 %v1827
    %v1829 = vlaneseq
    %v1830 = vshrl.u32 %v1829, 7
    %v1831 = vsub.s32 %v1828, %v1830
    %v1832 = vrot.slane %v395, %v1831
    %v1834 = vunpack.c.l.s4 269488144
    %v1835 = vunpack.c.0.s8 %v1834
    %v1836 = vlaneseq
    %v1837 = vshrl.u32 %v1836, 7
    %v1838 = vsub.s32 %v1835, %v1837
    %v1839 = vrot.slane %v398, %v1838
    %v1841 = vunpack.c.l.s4 842150450
    %v1842 = vunpack.c.0.s8 %v1841
    %v1843 = vlaneseq
    %v1844 = vshrl.u32 %v1843, 7
    %v1845 = vsub.s32 %v1842, %v1844
    %v1846 = vrot.slane %v398, %v1845
    %v1848 = vunpack.c.l.s4 1414812756
    %v1849 = vunpack.c.0.s8 %v1848
    %v1850 = vlaneseq
    %v1851 = vshrl.u32 %v1850, 7
    %v1852 = vsub.s32 %v1849, %v1851
    %v1853 = vrot.slane %v398, %v1852
    %v1855 = vunpack.c.l.s4 1987475062
    %v1856 = vunpack.c.0.s8 %v1855
    %v1857 = vlaneseq
    %v1858 = vshrl.u32 %v1857, 7
    %v1859 = vsub.s32 %v1856, %v1858
    %v1860 = vrot.slane %v398, %v1859
    %v1862 = vunpack.c.l.s4 269488144
    %v1863 = vunpack.c.0.s8 %v1862
    %v1864 = vlaneseq
    %v1865 = vshrl.u32 %v1864, 7
    %v1866 = vsub.s32 %v1863, %v1865
    %v1867 = vrot.slane %v401, %v1866
    %v1869 = vunpack.c.l.s4 842150450
    %v1870 = vunpack.c.0.s8 %v1869
    %v1871 = vlaneseq
    %v1872 = vshrl.u32 %v1871, 7
    %v1873 = vsub.s32 %v1870, %v1872
    %v1874 = vrot.slane %v401, %v1873
    %v1876 = vunpack.c.l.s4 1414812756
    %v1877 = vunpack.c.0.s8 %v1876
    %v1878 = vlaneseq
    %v1879 = vshrl.u32 %v1878, 7
    %v1880 = vsub.s32 %v1877, %v1879
    %v1881 = vrot.slane %v401, %v1880
    %v1883 = vunpack.c.l.s4 1987475062
    %v1884 = vunpack.c.0.s8 %v1883
    %v1885 = vlaneseq
    %v1886 = vshrl.u32 %v1885, 7
    %v1887 = vsub.s32 %v1884, %v1886
    %v1888 = vrot.slane %v401, %v1887
    %v1890 = vunpack.c.l.s4 269488144
    %v1891 = vunpack.c.0.s8 %v1890
    %v1892 = vlaneseq
    %v1893 = vshrl.u32 %v1892, 7
    %v1894 = vsub.s32 %v1891, %v1893
    %v1895 = vrot.slane %v404, %v1894
    %v1897 = vunpack.c.l.s4 842150450
    %v1898 = vunpack.c.0.s8 %v1897
    %v1899 = vlaneseq
    %v1900 = vshrl.u32 %v1899, 7
    %v1901 = vsub.s32 %v1898, %v1900
    %v1902 = vrot.slane %v404, %v1901
    %v1904 = vunpack.c.l.s4 1414812756
    %v1905 = vunpack.c.0.s8 %v1904
    %v1906 = vlaneseq
    %v1907 = vshrl.u32 %v1906, 7
    %v1908 = vsub.s32 %v1905, %v1907
    %v1909 = vrot.slane %v404, %v1908
    %v1911 = vunpack.c.l.s4 1987475062
    %v1912 = vunpack.c.0.s8 %v1911
    %v1913 = vlaneseq
    %v1914 = vshrl.u32 %v1913, 7
    %v1915 = vsub.s32 %v1912, %v1914
    %v1916 = vrot.slane %v404, %v1915
    %v1918 = vunpack.c.l.s4 269488144
    %v1919 = vunpack.c.0.s8 %v1918
    %v1920 = vlaneseq
    %v1921 = vshrl.u32 %v1920, 7
    %v1922 = vsub.s32 %v1919, %v1921
    %v1923 = vrot.slane %v407, %v1922
    %v1925 = vunpack.c.l.s4 842150450
    %v1926 = vunpack.c.0.s8 %v1925
    %v1927 = vlaneseq
    %v1928 = vshrl.u32 %v1927, 7
    %v1929 = vsub.s32 %v1926, %v1928
    %v1930 = vrot.slane %v407, %v1929
    %v1932 = vunpack.c.l.s4 1414812756
    %v1933 = vunpack.c.0.s8 %v1932
    %v1934 = vlaneseq
    %v1935 = vshrl.u32 %v1934, 7
    %v1936 = vsub.s32 %v1933, %v1935
    %v1937 = vrot.slane %v407, %v1936
    %v1939 = vunpack.c.l.s4 1987475062
    %v1940 = vunpack.c.0.s8 %v1939
    %v1941 = vlaneseq
    %v1942 = vshrl.u32 %v1941, 7
    %v1943 = vsub.s32 %v1940, %v1942
    %v1944 = vrot.slane %v407, %v1943
    %v1946 = vunpack.c.l.s4 269488144
    %v1947 = vunpack.c.0.s8 %v1946
    %v1948 = vlaneseq
    %v1949 = vshrl.u32 %v1948, 7
    %v1950 = vsub.s32 %v1947, %v1949
    %v1951 = vrot.slane %v410, %v1950
    %v1953 = vunpack.c.l.s4 842150450
    %v1954 = vunpack.c.0.s8 %v1953
    %v1955 = vlaneseq
    %v1956 = vshrl.u32 %v1955, 7
    %v1957 = vsub.s32 %v1954, %v1956
    %v1958 = vrot.slane %v410, %v1957
    %v1960 = vunpack.c.l.s4 1414812756
    %v1961 = vunpack.c.0.s8 %v1960
    %v1962 = vlaneseq
    %v1963 = vshrl.u32 %v1962, 7
    %v1964 = vsub.s32 %v1961, %v1963
    %v1965 = vrot.slane %v410, %v1964
    %v1967 = vunpack.c.l.s4 1987475062
    %v1968 = vunpack.c.0.s8 %v1967
    %v1969 = vlaneseq
    %v1970 = vshrl.u32 %v1969, 7
    %v1971 = vsub.s32 %v1968, %v1970
    %v1972 = vrot.slane %v410, %v1971
    %v1974 = vunpack.c.l.s4 269488144
    %v1975 = vunpack.c.0.s8 %v1974
    %v1976 = vlaneseq
    %v1977 = vshrl.u32 %v1976, 7
    %v1978 = vsub.s32 %v1975, %v1977
    %v1979 = vrot.slane %v413, %v1978
    %v1981 = vunpack.c.l.s4 842150450
    %v1982 = vunpack.c.0.s8 %v1981
    %v1983 = vlaneseq
    %v1984 = vshrl.u32 %v1983, 7
    %v1985 = vsub.s32 %v1982, %v1984
    %v1986 = vrot.slane %v413, %v1985
    %v1988 = vunpack.c.l.s4 1414812756
    %v1989 = vunpack.c.0.s8 %v1988
    %v1990 = vlaneseq
    %v1991 = vshrl.u32 %v1990, 7
    %v1992 = vsub.s32 %v1989, %v1991
    %v1993 = vrot.slane %v413, %v1992
    %v1995 = vunpack.c.l.s4 1987475062
    %v1996 = vunpack.c.0.s8 %v1995
    %v1997 = vlaneseq
    %v1998 = vshrl.u32 %v1997, 7
    %v1999 = vsub.s32 %v1996, %v1998
    %v2000 = vrot.slane %v413, %v1999
    %v2002 = vunpack.c.l.s4 269488144
    %v2003 = vunpack.c.0.s8 %v2002
    %v2004 = vlaneseq
    %v2005 = vshrl.u32 %v2004, 7
    %v2006 = vsub.s32 %v2003, %v2005
    %v2007 = vrot.slane %v416, %v2006
    %v2009 = vunpack.c.l.s4 842150450
    %v2010 = vunpack.c.0.s8 %v2009
    %v2011 = vlaneseq
    %v2012 = vshrl.u32 %v2011, 7
    %v2013 = vsub.s32 %v2010, %v2012
    %v2014 = vrot.slane %v416, %v2013
    %v2016 = vunpack.c.l.s4 1414812756
    %v2017 = vunpack.c.0.s8 %v2016
    %v2018 = vlaneseq
    %v2019 = vshrl.u32 %v2018, 7
    %v2020 = vsub.s32 %v2017, %v2019
    %v2021 = vrot.slane %v416, %v2020
    %v2023 = vunpack.c.l.s4 1987475062
    %v2024 = vunpack.c.0.s8 %v2023
    %v2025 = vlaneseq
    %v2026 = vshrl.u32 %v2025, 7
    %v2027 = vsub.s32 %v2024, %v2026
    %v2028 = vrot.slane %v416, %v2027
    %v2030 = vunpack.c.l.s4 269488144
    %v2031 = vunpack.c.0.s8 %v2030
    %v2032 = vlaneseq
    %v2033 = vshrl.u32 %v2032, 7
    %v2034 = vsub.s32 %v2031, %v2033
    %v2035 = vrot.slane %v419, %v2034
    %v2037 = vunpack.c.l.s4 842150450
    %v2038 = vunpack.c.0.s8 %v2037
    %v2039 = vlaneseq
    %v2040 = vshrl.u32 %v2039, 7
    %v2041 = vsub.s32 %v2038, %v2040
    %v2042 = vrot.slane %v419, %v2041
    %v2044 = vunpack.c.l.s4 1414812756
    %v2045 = vunpack.c.0.s8 %v2044
    %v2046 = vlaneseq
    %v2047 = vshrl.u32 %v2046, 7
    %v2048 = vsub.s32 %v2045, %v2047
    %v2049 = vrot.slane %v419, %v2048
    %v2051 = vunpack.c.l.s4 1987475062
    %v2052 = vunpack.c.0.s8 %v2051
    %v2053 = vlaneseq
    %v2054 = vshrl.u32 %v2053, 7
    %v2055 = vsub.s32 %v2052, %v2054
    %v2056 = vrot.slane %v419, %v2055
    %v2058 = vunpack.c.l.s4 269488144
    %v2059 = vunpack.c.0.s8 %v2058
    %v2060 = vlaneseq
    %v2061 = vshrl.u32 %v2060, 7
    %v2062 = vsub.s32 %v2059, %v2061
    %v2063 = vrot.slane %v422, %v2062
    %v2065 = vunpack.c.l.s4 842150450
    %v2066 = vunpack.c.0.s8 %v2065
    %v2067 = vlaneseq
    %v2068 = vshrl.u32 %v2067, 7
    %v2069 = vsub.s32 %v2066, %v2068
    %v2070 = vrot.slane %v422, %v2069
    %v2072 = vunpack.c.l.s4 1414812756
    %v2073 = vunpack.c.0.s8 %v2072
    %v2074 = vlaneseq
    %v2075 = vshrl.u32 %v2074, 7
    %v2076 = vsub.s32 %v2073, %v2075
    %v2077 = vrot.slane %v422, %v2076
    %v2079 = vunpack.c.l.s4 1987475062
    %v2080 = vunpack.c.0.s8 %v2079
    %v2081 = vlaneseq
    %v2082 = vshrl.u32 %v2081, 7
    %v2083 = vsub.s32 %v2080, %v2082
    %v2084 = vrot.slane %v422, %v2083
    %v2086 = vunpack.c.l.s4 269488144
    %v2087 = vunpack.c.0.s8 %v2086
    %v2088 = vlaneseq
    %v2089 = vshrl.u32 %v2088, 7
    %v2090 = vsub.s32 %v2087, %v2089
    %v2091 = vrot.slane %v425, %v2090
    %v2093 = vunpack.c.l.s4 842150450
    %v2094 = vunpack.c.0.s8 %v2093
    %v2095 = vlaneseq
    %v2096 = vshrl.u32 %v2095, 7
    %v2097 = vsub.s32 %v2094, %v2096
    %v2098 = vrot.slane %v425, %v2097
    %v2100 = vunpack.c.l.s4 1414812756
    %v2101 = vunpack.c.0.s8 %v2100
    %v2102 = vlaneseq
    %v2103 = vshrl.u32 %v2102, 7
    %v2104 = vsub.s32 %v2101, %v2103
    %v2105 = vrot.slane %v425, %v2104
    %v2107 = vunpack.c.l.s4 1987475062
    %v2108 = vunpack.c.0.s8 %v2107
    %v2109 = vlaneseq
    %v2110 = vshrl.u32 %v2109, 7
    %v2111 = vsub.s32 %v2108, %v2110
    %v2112 = vrot.slane %v425, %v2111
    %v2114 = vunpack.c.l.s4 269488144
    %v2115 = vunpack.c.0.s8 %v2114
    %v2116 = vlaneseq
    %v2117 = vshrl.u32 %v2116, 7
    %v2118 = vsub.s32 %v2115, %v2117
    %v2119 = vrot.slane %v428, %v2118
    %v2121 = vunpack.c.l.s4 842150450
    %v2122 = vunpack.c.0.s8 %v2121
    %v2123 = vlaneseq
    %v2124 = vshrl.u32 %v2123, 7
    %v2125 = vsub.s32 %v2122, %v2124
    %v2126 = vrot.slane %v428, %v2125
    %v2128 = vunpack.c.l.s4 1414812756
    %v2129 = vunpack.c.0.s8 %v2128
    %v2130 = vlaneseq
    %v2131 = vshrl.u32 %v2130, 7
    %v2132 = vsub.s32 %v2129, %v2131
    %v2133 = vrot.slane %v428, %v2132
    %v2135 = vunpack.c.l.s4 1987475062
    %v2136 = vunpack.c.0.s8 %v2135
    %v2137 = vlaneseq
    %v2138 = vshrl.u32 %v2137, 7
    %v2139 = vsub.s32 %v2136, %v2138
    %v2140 = vrot.slane %v428, %v2139
    %v2142 = vunpack.c.l.s4 269488144
    %v2143 = vunpack.c.0.s8 %v2142
    %v2144 = vlaneseq
    %v2145 = vshrl.u32 %v2144, 7
    %v2146 = vsub.s32 %v2143, %v2145
    %v2147 = vrot.slane %v431, %v2146
    %v2149 = vunpack.c.l.s4 842150450
    %v2150 = vunpack.c.0.s8 %v2149
    %v2151 = vlaneseq
    %v2152 = vshrl.u32 %v2151, 7
    %v2153 = vsub.s32 %v2150, %v2152
    %v2154 = vrot.slane %v431, %v2153
    %v2156 = vunpack.c.l.s4 1414812756
    %v2157 = vunpack.c.0.s8 %v2156
    %v2158 = vlaneseq
    %v2159 = vshrl.u32 %v2158, 7
    %v2160 = vsub.s32 %v2157, %v2159
    %v2161 = vrot.slane %v431, %v2160
    %v2163 = vunpack.c.l.s4 1987475062
    %v2164 = vunpack.c.0.s8 %v2163
    %v2165 = vlaneseq
    %v2166 = vshrl.u32 %v2165, 7
    %v2167 = vsub.s32 %v2164, %v2166
    %v2168 = vrot.slane %v431, %v2167
    %v2170 = vunpack.c.l.s4 269488144
    %v2171 = vunpack.c.0.s8 %v2170
    %v2172 = vlaneseq
    %v2173 = vshrl.u32 %v2172, 7
    %v2174 = vsub.s32 %v2171, %v2173
    %v2175 = vrot.slane %v434, %v2174
    %v2177 = vunpack.c.l.s4 842150450
    %v2178 = vunpack.c.0.s8 %v2177
    %v2179 = vlaneseq
    %v2180 = vshrl.u32 %v2179, 7
    %v2181 = vsub.s32 %v2178, %v2180
    %v2182 = vrot.slane %v434, %v2181
    %v2184 = vunpack.c.l.s4 1414812756
    %v2185 = vunpack.c.0.s8 %v2184
    %v2186 = vlaneseq
    %v2187 = vshrl.u32 %v2186, 7
    %v2188 = vsub.s32 %v2185, %v2187
    %v2189 = vrot.slane %v434, %v2188
    %v2191 = vunpack.c.l.s4 1987475062
    %v2192 = vunpack.c.0.s8 %v2191
    %v2193 = vlaneseq
    %v2194 = vshrl.u32 %v2193, 7
    %v2195 = vsub.s32 %v2192, %v2194
    %v2196 = vrot.slane %v434, %v2195
    %v2198 = vunpack.c.l.s4 269488144
    %v2199 = vunpack.c.0.s8 %v2198
    %v2200 = vlaneseq
    %v2201 = vshrl.u32 %v2200, 7
    %v2202 = vsub.s32 %v2199, %v2201
    %v2203 = vrot.slane %v437, %v2202
    %v2205 = vunpack.c.l.s4 842150450
    %v2206 = vunpack.c.0.s8 %v2205
    %v2207 = vlaneseq
    %v2208 = vshrl.u32 %v2207, 7
    %v2209 = vsub.s32 %v2206, %v2208
    %v2210 = vrot.slane %v437, %v2209
    %v2212 = vunpack.c.l.s4 1414812756
    %v2213 = vunpack.c.0.s8 %v2212
    %v2214 = vlaneseq
    %v2215 = vshrl.u32 %v2214, 7
    %v2216 = vsub.s32 %v2213, %v2215
    %v2217 = vrot.slane %v437, %v2216
    %v2219 = vunpack.c.l.s4 1987475062
    %v2220 = vunpack.c.0.s8 %v2219
    %v2221 = vlaneseq
    %v2222 = vshrl.u32 %v2221, 7
    %v2223 = vsub.s32 %v2220, %v2222
    %v2224 = vrot.slane %v437, %v2223
    %v2226 = vunpack.c.l.s4 269488144
    %v2227 = vunpack.c.0.s8 %v2226
    %v2228 = vlaneseq
    %v2229 = vshrl.u32 %v2228, 7
    %v2230 = vsub.s32 %v2227, %v2229
    %v2231 = vrot.slane %v440, %v2230
    %v2233 = vunpack.c.l.s4 842150450
    %v2234 = vunpack.c.0.s8 %v2233
    %v2235 = vlaneseq
    %v2236 = vshrl.u32 %v2235, 7
    %v2237 = vsub.s32 %v2234, %v2236
    %v2238 = vrot.slane %v440, %v2237
    %v2240 = vunpack.c.l.s4 1414812756
    %v2241 = vunpack.c.0.s8 %v2240
    %v2242 = vlaneseq
    %v2243 = vshrl.u32 %v2242, 7
    %v2244 = vsub.s32 %v2241, %v2243
    %v2245 = vrot.slane %v440, %v2244
    %v2247 = vunpack.c.l.s4 1987475062
    %v2248 = vunpack.c.0.s8 %v2247
    %v2249 = vlaneseq
    %v2250 = vshrl.u32 %v2249, 7
    %v2251 = vsub.s32 %v2248, %v2250
    %v2252 = vrot.slane %v440, %v2251
    %v2254 = vunpack.c.l.s4 269488144
    %v2255 = vunpack.c.0.s8 %v2254
    %v2256 = vlaneseq
    %v2257 = vshrl.u32 %v2256, 7
    %v2258 = vsub.s32 %v2255, %v2257
    %v2259 = vrot.slane %v443, %v2258
    %v2261 = vunpack.c.l.s4 842150450
    %v2262 = vunpack.c.0.s8 %v2261
    %v2263 = vlaneseq
    %v2264 = vshrl.u32 %v2263, 7
    %v2265 = vsub.s32 %v2262, %v2264
    %v2266 = vrot.slane %v443, %v2265
    %v2268 = vunpack.c.l.s4 1414812756
    %v2269 = vunpack.c.0.s8 %v2268
    %v2270 = vlaneseq
    %v2271 = vshrl.u32 %v2270, 7
    %v2272 = vsub.s32 %v2269, %v2271
    %v2273 = vrot.slane %v443, %v2272
    %v2275 = vunpack.c.l.s4 1987475062
    %v2276 = vunpack.c.0.s8 %v2275
    %v2277 = vlaneseq
    %v2278 = vshrl.u32 %v2277, 7
    %v2279 = vsub.s32 %v2276, %v2278
    %v2280 = vrot.slane %v443, %v2279
    %v2282 = vunpack.c.l.s4 269488144
    %v2283 = vunpack.c.0.s8 %v2282
    %v2284 = vlaneseq
    %v2285 = vshrl.u32 %v2284, 7
    %v2286 = vsub.s32 %v2283, %v2285
    %v2287 = vrot.slane %v446, %v2286
    %v2289 = vunpack.c.l.s4 842150450
    %v2290 = vunpack.c.0.s8 %v2289
    %v2291 = vlaneseq
    %v2292 = vshrl.u32 %v2291, 7
    %v2293 = vsub.s32 %v2290, %v2292
    %v2294 = vrot.slane %v446, %v2293
    %v2296 = vunpack.c.l.s4 1414812756
    %v2297 = vunpack.c.0.s8 %v2296
    %v2298 = vlaneseq
    %v2299 = vshrl.u32 %v2298, 7
    %v2300 = vsub.s32 %v2297, %v2299
    %v2301 = vrot.slane %v446, %v2300
    %v2303 = vunpack.c.l.s4 1987475062
    %v2304 = vunpack.c.0.s8 %v2303
    %v2305 = vlaneseq
    %v2306 = vshrl.u32 %v2305, 7
    %v2307 = vsub.s32 %v2304, %v2306
    %v2308 = vrot.slane %v446, %v2307
    %v2310 = vunpack.c.l.s4 269488144
    %v2311 = vunpack.c.0.s8 %v2310
    %v2312 = vlaneseq
    %v2313 = vshrl.u32 %v2312, 7
    %v2314 = vsub.s32 %v2311, %v2313
    %v2315 = vrot.slane %v449, %v2314
    %v2317 = vunpack.c.l.s4 842150450
    %v2318 = vunpack.c.0.s8 %v2317
    %v2319 = vlaneseq
    %v2320 = vshrl.u32 %v2319, 7
    %v2321 = vsub.s32 %v2318, %v2320
    %v2322 = vrot.slane %v449, %v2321
    %v2324 = vunpack.c.l.s4 1414812756
    %v2325 = vunpack.c.0.s8 %v2324
    %v2326 = vlaneseq
    %v2327 = vshrl.u32 %v2326, 7
    %v2328 = vsub.s32 %v2325, %v2327
    %v2329 = vrot.slane %v449, %v2328
    %v2331 = vunpack.c.l.s4 1987475062
    %v2332 = vunpack.c.0.s8 %v2331
    %v2333 = vlaneseq
    %v2334 = vshrl.u32 %v2333, 7
    %v2335 = vsub.s32 %v2332, %v2334
    %v2336 = vrot.slane %v449, %v2335
    %v2338 = vunpack.c.l.s4 269488144
    %v2339 = vunpack.c.0.s8 %v2338
    %v2340 = vlaneseq
    %v2341 = vshrl.u32 %v2340, 7
    %v2342 = vsub.s32 %v2339, %v2341
    %v2343 = vrot.slane %v452, %v2342
    %v2345 = vunpack.c.l.s4 842150450
    %v2346 = vunpack.c.0.s8 %v2345
    %v2347 = vlaneseq
    %v2348 = vshrl.u32 %v2347, 7
    %v2349 = vsub.s32 %v2346, %v2348
    %v2350 = vrot.slane %v452, %v2349
    %v2352 = vunpack.c.l.s4 1414812756
    %v2353 = vunpack.c.0.s8 %v2352
    %v2354 = vlaneseq
    %v2355 = vshrl.u32 %v2354, 7
    %v2356 = vsub.s32 %v2353, %v2355
    %v2357 = vrot.slane %v452, %v2356
    %v2359 = vunpack.c.l.s4 1987475062
    %v2360 = vunpack.c.0.s8 %v2359
    %v2361 = vlaneseq
    %v2362 = vshrl.u32 %v2361, 7
    %v2363 = vsub.s32 %v2360, %v2362
    %v2364 = vrot.slane %v452, %v2363
    %v2366 = vunpack.c.l.s4 269488144
    %v2367 = vunpack.c.0.s8 %v2366
    %v2368 = vlaneseq
    %v2369 = vshrl.u32 %v2368, 7
    %v2370 = vsub.s32 %v2367, %v2369
    %v2371 = vrot.slane %v455, %v2370
    %v2373 = vunpack.c.l.s4 842150450
    %v2374 = vunpack.c.0.s8 %v2373
    %v2375 = vlaneseq
    %v2376 = vshrl.u32 %v2375, 7
    %v2377 = vsub.s32 %v2374, %v2376
    %v2378 = vrot.slane %v455, %v2377
    %v2380 = vunpack.c.l.s4 1414812756
    %v2381 = vunpack.c.0.s8 %v2380
    %v2382 = vlaneseq
    %v2383 = vshrl.u32 %v2382, 7
    %v2384 = vsub.s32 %v2381, %v2383
    %v2385 = vrot.slane %v455, %v2384
    %v2387 = vunpack.c.l.s4 1987475062
    %v2388 = vunpack.c.0.s8 %v2387
    %v2389 = vlaneseq
    %v2390 = vshrl.u32 %v2389, 7
    %v2391 = vsub.s32 %v2388, %v2390
    %v2392 = vrot.slane %v455, %v2391
    %v2394 = vunpack.c.l.s4 269488144
    %v2395 = vunpack.c.0.s8 %v2394
    %v2396 = vlaneseq
    %v2397 = vshrl.u32 %v2396, 7
    %v2398 = vsub.s32 %v2395, %v2397
    %v2399 = vrot.slane %v458, %v2398
    %v2401 = vunpack.c.l.s4 842150450
    %v2402 = vunpack.c.0.s8 %v2401
    %v2403 = vlaneseq
    %v2404 = vshrl.u32 %v2403, 7
    %v2405 = vsub.s32 %v2402, %v2404
    %v2406 = vrot.slane %v458, %v2405
    %v2408 = vunpack.c.l.s4 1414812756
    %v2409 = vunpack.c.0.s8 %v2408
    %v2410 = vlaneseq
    %v2411 = vshrl.u32 %v2410, 7
    %v2412 = vsub.s32 %v2409, %v2411
    %v2413 = vrot.slane %v458, %v2412
    %v2415 = vunpack.c.l.s4 1987475062
    %v2416 = vunpack.c.0.s8 %v2415
    %v2417 = vlaneseq
    %v2418 = vshrl.u32 %v2417, 7
    %v2419 = vsub.s32 %v2416, %v2418
    %v2420 = vrot.slane %v458, %v2419
    %v2422 = vunpack.c.l.s4 269488144
    %v2423 = vunpack.c.0.s8 %v2422
    %v2424 = vlaneseq
    %v2425 = vshrl.u32 %v2424, 7
    %v2426 = vsub.s32 %v2423, %v2425
    %v2427 = vrot.slane %v461, %v2426
    %v2429 = vunpack.c.l.s4 842150450
    %v2430 = vunpack.c.0.s8 %v2429
    %v2431 = vlaneseq
    %v2432 = vshrl.u32 %v2431, 7
    %v2433 = vsub.s32 %v2430, %v2432
    %v2434 = vrot.slane %v461, %v2433
    %v2436 = vunpack.c.l.s4 1414812756
    %v2437 = vunpack.c.0.s8 %v2436
    %v2438 = vlaneseq
    %v2439 = vshrl.u32 %v2438, 7
    %v2440 = vsub.s32 %v2437, %v2439
    %v2441 = vrot.slane %v461, %v2440
    %v2443 = vunpack.c.l.s4 1987475062
    %v2444 = vunpack.c.0.s8 %v2443
    %v2445 = vlaneseq
    %v2446 = vshrl.u32 %v2445, 7
    %v2447 = vsub.s32 %v2444, %v2446
    %v2448 = vrot.slane %v461, %v2447
    %v2450 = vunpack.c.l.s4 269488144
    %v2451 = vunpack.c.0.s8 %v2450
    %v2452 = vlaneseq
    %v2453 = vshrl.u32 %v2452, 7
    %v2454 = vsub.s32 %v2451, %v2453
    %v2455 = vrot.slane %v464, %v2454
    %v2457 = vunpack.c.l.s4 842150450
    %v2458 = vunpack.c.0.s8 %v2457
    %v2459 = vlaneseq
    %v2460 = vshrl.u32 %v2459, 7
    %v2461 = vsub.s32 %v2458, %v2460
    %v2462 = vrot.slane %v464, %v2461
    %v2464 = vunpack.c.l.s4 1414812756
    %v2465 = vunpack.c.0.s8 %v2464
    %v2466 = vlaneseq
    %v2467 = vshrl.u32 %v2466, 7
    %v2468 = vsub.s32 %v2465, %v2467
    %v2469 = vrot.slane %v464, %v2468
    %v2471 = vunpack.c.l.s4 1987475062
    %v2472 = vunpack.c.0.s8 %v2471
    %v2473 = vlaneseq
    %v2474 = vshrl.u32 %v2473, 7
    %v2475 = vsub.s32 %v2472, %v2474
    %v2476 = vrot.slane %v464, %v2475
    %v2478 = vunpack.c.l.s4 269488144
    %v2479 = vunpack.c.0.s8 %v2478
    %v2480 = vlaneseq
    %v2481 = vshrl.u32 %v2480, 7
    %v2482 = vsub.s32 %v2479, %v2481
    %v2483 = vrot.slane %v467, %v2482
    %v2485 = vunpack.c.l.s4 842150450
    %v2486 = vunpack.c.0.s8 %v2485
    %v2487 = vlaneseq
    %v2488 = vshrl.u32 %v2487, 7
    %v2489 = vsub.s32 %v2486, %v2488
    %v2490 = vrot.slane %v467, %v2489
    %v2492 = vunpack.c.l.s4 1414812756
    %v2493 = vunpack.c.0.s8 %v2492
    %v2494 = vlaneseq
    %v2495 = vshrl.u32 %v2494, 7
    %v2496 = vsub.s32 %v2493, %v2495
    %v2497 = vrot.slane %v467, %v2496
    %v2499 = vunpack.c.l.s4 1987475062
    %v2500 = vunpack.c.0.s8 %v2499
    %v2501 = vlaneseq
    %v2502 = vshrl.u32 %v2501, 7
    %v2503 = vsub.s32 %v2500, %v2502
    %v2504 = vrot.slane %v467, %v2503
    %v2506 = vunpack.c.l.s4 269488144
    %v2507 = vunpack.c.0.s8 %v2506
    %v2508 = vlaneseq
    %v2509 = vshrl.u32 %v2508, 7
    %v2510 = vsub.s32 %v2507, %v2509
    %v2511 = vrot.slane %v470, %v2510
    %v2513 = vunpack.c.l.s4 842150450
    %v2514 = vunpack.c.0.s8 %v2513
    %v2515 = vlaneseq
    %v2516 = vshrl.u32 %v2515, 7
    %v2517 = vsub.s32 %v2514, %v2516
    %v2518 = vrot.slane %v470, %v2517
    %v2520 = vunpack.c.l.s4 1414812756
    %v2521 = vunpack.c.0.s8 %v2520
    %v2522 = vlaneseq
    %v2523 = vshrl.u32 %v2522, 7
    %v2524 = vsub.s32 %v2521, %v2523
    %v2525 = vrot.slane %v470, %v2524
    %v2527 = vunpack.c.l.s4 1987475062
    %v2528 = vunpack.c.0.s8 %v2527
    %v2529 = vlaneseq
    %v2530 = vshrl.u32 %v2529, 7
    %v2531 = vsub.s32 %v2528, %v2530
    %v2532 = vrot.slane %v470, %v2531
    %v2534 = vunpack.c.l.s4 269488144
    %v2535 = vunpack.c.0.s8 %v2534
    %v2536 = vlaneseq
    %v2537 = vshrl.u32 %v2536, 7
    %v2538 = vsub.s32 %v2535, %v2537
    %v2539 = vrot.slane %v473, %v2538
    %v2541 = vunpack.c.l.s4 842150450
    %v2542 = vunpack.c.0.s8 %v2541
    %v2543 = vlaneseq
    %v2544 = vshrl.u32 %v2543, 7
    %v2545 = vsub.s32 %v2542, %v2544
    %v2546 = vrot.slane %v473, %v2545
    %v2548 = vunpack.c.l.s4 1414812756
    %v2549 = vunpack.c.0.s8 %v2548
    %v2550 = vlaneseq
    %v2551 = vshrl.u32 %v2550, 7
    %v2552 = vsub.s32 %v2549, %v2551
    %v2553 = vrot.slane %v473, %v2552
    %v2555 = vunpack.c.l.s4 1987475062
    %v2556 = vunpack.c.0.s8 %v2555
    %v2557 = vlaneseq
    %v2558 = vshrl.u32 %v2557, 7
    %v2559 = vsub.s32 %v2556, %v2558
    %v2560 = vrot.slane %v473, %v2559
    %v2562 = vunpack.c.l.s4 269488144
    %v2563 = vunpack.c.0.s8 %v2562
    %v2564 = vlaneseq
    %v2565 = vshrl.u32 %v2564, 7
    %v2566 = vsub.s32 %v2563, %v2565
    %v2567 = vrot.slane %v476, %v2566
    %v2569 = vunpack.c.l.s4 842150450
    %v2570 = vunpack.c.0.s8 %v2569
    %v2571 = vlaneseq
    %v2572 = vshrl.u32 %v2571, 7
    %v2573 = vsub.s32 %v2570, %v2572
    %v2574 = vrot.slane %v476, %v2573
    %v2576 = vunpack.c.l.s4 1414812756
    %v2577 = vunpack.c.0.s8 %v2576
    %v2578 = vlaneseq
    %v2579 = vshrl.u32 %v2578, 7
    %v2580 = vsub.s32 %v2577, %v2579
    %v2581 = vrot.slane %v476, %v2580
    %v2583 = vunpack.c.l.s4 1987475062
    %v2584 = vunpack.c.0.s8 %v2583
    %v2585 = vlaneseq
    %v2586 = vshrl.u32 %v2585, 7
    %v2587 = vsub.s32 %v2584, %v2586
    %v2588 = vrot.slane %v476, %v2587
    %v2590 = vunpack.c.l.s4 269488144
    %v2591 = vunpack.c.0.s8 %v2590
    %v2592 = vlaneseq
    %v2593 = vshrl.u32 %v2592, 7
    %v2594 = vsub.s32 %v2591, %v2593
    %v2595 = vrot.slane %v479, %v2594
    %v2597 = vunpack.c.l.s4 842150450
    %v2598 = vunpack.c.0.s8 %v2597
    %v2599 = vlaneseq
    %v2600 = vshrl.u32 %v2599, 7
    %v2601 = vsub.s32 %v2598, %v2600
    %v2602 = vrot.slane %v479, %v2601
    %v2604 = vunpack.c.l.s4 1414812756
    %v2605 = vunpack.c.0.s8 %v2604
    %v2606 = vlaneseq
    %v2607 = vshrl.u32 %v2606, 7
    %v2608 = vsub.s32 %v2605, %v2607
    %v2609 = vrot.slane %v479, %v2608
    %v2611 = vunpack.c.l.s4 1987475062
    %v2612 = vunpack.c.0.s8 %v2611
    %v2613 = vlaneseq
    %v2614 = vshrl.u32 %v2613, 7
    %v2615 = vsub.s32 %v2612, %v2614
    %v2616 = vrot.slane %v479, %v2615
    %v2618 = vunpack.c.l.s4 269488144
    %v2619 = vunpack.c.0.s8 %v2618
    %v2620 = vlaneseq
    %v2621 = vshrl.u32 %v2620, 7
    %v2622 = vsub.s32 %v2619, %v2621
    %v2623 = vrot.slane %v482, %v2622
    %v2625 = vunpack.c.l.s4 842150450
    %v2626 = vunpack.c.0.s8 %v2625
    %v2627 = vlaneseq
    %v2628 = vshrl.u32 %v2627, 7
    %v2629 = vsub.s32 %v2626, %v2628
    %v2630 = vrot.slane %v482, %v2629
    %v2632 = vunpack.c.l.s4 1414812756
    %v2633 = vunpack.c.0.s8 %v2632
    %v2634 = vlaneseq
    %v2635 = vshrl.u32 %v2634, 7
    %v2636 = vsub.s32 %v2633, %v2635
    %v2637 = vrot.slane %v482, %v2636
    %v2639 = vunpack.c.l.s4 1987475062
    %v2640 = vunpack.c.0.s8 %v2639
    %v2641 = vlaneseq
    %v2642 = vshrl.u32 %v2641, 7
    %v2643 = vsub.s32 %v2640, %v2642
    %v2644 = vrot.slane %v482, %v2643
    %v2646 = vunpack.c.l.s4 269488144
    %v2647 = vunpack.c.0.s8 %v2646
    %v2648 = vlaneseq
    %v2649 = vshrl.u32 %v2648, 7
    %v2650 = vsub.s32 %v2647, %v2649
    %v2651 = vrot.slane %v485, %v2650
    %v2653 = vunpack.c.l.s4 842150450
    %v2654 = vunpack.c.0.s8 %v2653
    %v2655 = vlaneseq
    %v2656 = vshrl.u32 %v2655, 7
    %v2657 = vsub.s32 %v2654, %v2656
    %v2658 = vrot.slane %v485, %v2657
    %v2660 = vunpack.c.l.s4 1414812756
    %v2661 = vunpack.c.0.s8 %v2660
    %v2662 = vlaneseq
    %v2663 = vshrl.u32 %v2662, 7
    %v2664 = vsub.s32 %v2661, %v2663
    %v2665 = vrot.slane %v485, %v2664
    %v2667 = vunpack.c.l.s4 1987475062
    %v2668 = vunpack.c.0.s8 %v2667
    %v2669 = vlaneseq
    %v2670 = vshrl.u32 %v2669, 7
    %v2671 = vsub.s32 %v2668, %v2670
    %v2672 = vrot.slane %v485, %v2671
    %v2674 = vunpack.c.l.s4 269488144
    %v2675 = vunpack.c.0.s8 %v2674
    %v2676 = vlaneseq
    %v2677 = vshrl.u32 %v2676, 7
    %v2678 = vsub.s32 %v2675, %v2677
    %v2679 = vrot.slane %v488, %v2678
    %v2681 = vunpack.c.l.s4 842150450
    %v2682 = vunpack.c.0.s8 %v2681
    %v2683 = vlaneseq
    %v2684 = vshrl.u32 %v2683, 7
    %v2685 = vsub.s32 %v2682, %v2684
    %v2686 = vrot.slane %v488, %v2685
    %v2688 = vunpack.c.l.s4 1414812756
    %v2689 = vunpack.c.0.s8 %v2688
    %v2690 = vlaneseq
    %v2691 = vshrl.u32 %v2690, 7
    %v2692 = vsub.s32 %v2689, %v2691
    %v2693 = vrot.slane %v488, %v2692
    %v2695 = vunpack.c.l.s4 1987475062
    %v2696 = vunpack.c.0.s8 %v2695
    %v2697 = vlaneseq
    %v2698 = vshrl.u32 %v2697, 7
    %v2699 = vsub.s32 %v2696, %v2698
    %v2700 = vrot.slane %v488, %v2699
    %v2702 = vunpack.c.l.s4 269488144
    %v2703 = vunpack.c.0.s8 %v2702
    %v2704 = vlaneseq
    %v2705 = vshrl.u32 %v2704, 7
    %v2706 = vsub.s32 %v2703, %v2705
    %v2707 = vrot.slane %v491, %v2706
    %v2709 = vunpack.c.l.s4 842150450
    %v2710 = vunpack.c.0.s8 %v2709
    %v2711 = vlaneseq
    %v2712 = vshrl.u32 %v2711, 7
    %v2713 = vsub.s32 %v2710, %v2712
    %v2714 = vrot.slane %v491, %v2713
    %v2716 = vunpack.c.l.s4 1414812756
    %v2717 = vunpack.c.0.s8 %v2716
    %v2718 = vlaneseq
    %v2719 = vshrl.u32 %v2718, 7
    %v2720 = vsub.s32 %v2717, %v2719
    %v2721 = vrot.slane %v491, %v2720
    %v2723 = vunpack.c.l.s4 1987475062
    %v2724 = vunpack.c.0.s8 %v2723
    %v2725 = vlaneseq
    %v2726 = vshrl.u32 %v2725, 7
    %v2727 = vsub.s32 %v2724, %v2726
    %v2728 = vrot.slane %v491, %v2727
    %v2730 = vunpack.c.l.s4 269488144
    %v2731 = vunpack.c.0.s8 %v2730
    %v2732 = vlaneseq
    %v2733 = vshrl.u32 %v2732, 7
    %v2734 = vsub.s32 %v2731, %v2733
    %v2735 = vrot.slane %v494, %v2734
    %v2737 = vunpack.c.l.s4 842150450
    %v2738 = vunpack.c.0.s8 %v2737
    %v2739 = vlaneseq
    %v2740 = vshrl.u32 %v2739, 7
    %v2741 = vsub.s32 %v2738, %v2740
    %v2742 = vrot.slane %v494, %v2741
    %v2744 = vunpack.c.l.s4 1414812756
    %v2745 = vunpack.c.0.s8 %v2744
    %v2746 = vlaneseq
    %v2747 = vshrl.u32 %v2746, 7
    %v2748 = vsub.s32 %v2745, %v2747
    %v2749 = vrot.slane %v494, %v2748
    %v2751 = vunpack.c.l.s4 1987475062
    %v2752 = vunpack.c.0.s8 %v2751
    %v2753 = vlaneseq
    %v2754 = vshrl.u32 %v2753, 7
    %v2755 = vsub.s32 %v2752, %v2754
    %v2756 = vrot.slane %v494, %v2755
    %v2758 = vunpack.c.l.s4 269488144
    %v2759 = vunpack.c.0.s8 %v2758
    %v2760 = vlaneseq
    %v2761 = vshrl.u32 %v2760, 7
    %v2762 = vsub.s32 %v2759, %v2761
    %v2763 = vrot.slane %v497, %v2762
    %v2765 = vunpack.c.l.s4 842150450
    %v2766 = vunpack.c.0.s8 %v2765
    %v2767 = vlaneseq
    %v2768 = vshrl.u32 %v2767, 7
    %v2769 = vsub.s32 %v2766, %v2768
    %v2770 = vrot.slane %v497, %v2769
    %v2772 = vunpack.c.l.s4 1414812756
    %v2773 = vunpack.c.0.s8 %v2772
    %v2774 = vlaneseq
    %v2775 = vshrl.u32 %v2774, 7
    %v2776 = vsub.s32 %v2773, %v2775
    %v2777 = vrot.slane %v497, %v2776
    %v2779 = vunpack.c.l.s4 1987475062
    %v2780 = vunpack.c.0.s8 %v2779
    %v2781 = vlaneseq
    %v2782 = vshrl.u32 %v2781, 7
    %v2783 = vsub.s32 %v2780, %v2782
    %v2784 = vrot.slane %v497, %v2783
    %v2786 = vunpack.c.l.s4 269488144
    %v2787 = vunpack.c.0.s8 %v2786
    %v2788 = vlaneseq
    %v2789 = vshrl.u32 %v2788, 7
    %v2790 = vsub.s32 %v2787, %v2789
    %v2791 = vrot.slane %v500, %v2790
    %v2793 = vunpack.c.l.s4 842150450
    %v2794 = vunpack.c.0.s8 %v2793
    %v2795 = vlaneseq
    %v2796 = vshrl.u32 %v2795, 7
    %v2797 = vsub.s32 %v2794, %v2796
    %v2798 = vrot.slane %v500, %v2797
    %v2800 = vunpack.c.l.s4 1414812756
    %v2801 = vunpack.c.0.s8 %v2800
    %v2802 = vlaneseq
    %v2803 = vshrl.u32 %v2802, 7
    %v2804 = vsub.s32 %v2801, %v2803
    %v2805 = vrot.slane %v500, %v2804
    %v2807 = vunpack.c.l.s4 1987475062
    %v2808 = vunpack.c.0.s8 %v2807
    %v2809 = vlaneseq
    %v2810 = vshrl.u32 %v2809, 7
    %v2811 = vsub.s32 %v2808, %v2810
    %v2812 = vrot.slane %v500, %v2811
    %v2814 = vunpack.c.l.s4 269488144
    %v2815 = vunpack.c.0.s8 %v2814
    %v2816 = vlaneseq
    %v2817 = vshrl.u32 %v2816, 7
    %v2818 = vsub.s32 %v2815, %v2817
    %v2819 = vrot.slane %v503, %v2818
    %v2821 = vunpack.c.l.s4 842150450
    %v2822 = vunpack.c.0.s8 %v2821
    %v2823 = vlaneseq
    %v2824 = vshrl.u32 %v2823, 7
    %v2825 = vsub.s32 %v2822, %v2824
    %v2826 = vrot.slane %v503, %v2825
    %v2828 = vunpack.c.l.s4 1414812756
    %v2829 = vunpack.c.0.s8 %v2828
    %v2830 = vlaneseq
    %v2831 = vshrl.u32 %v2830, 7
    %v2832 = vsub.s32 %v2829, %v2831
    %v2833 = vrot.slane %v503, %v2832
    %v2835 = vunpack.c.l.s4 1987475062
    %v2836 = vunpack.c.0.s8 %v2835
    %v2837 = vlaneseq
    %v2838 = vshrl.u32 %v2837, 7
    %v2839 = vsub.s32 %v2836, %v2838
    %v2840 = vrot.slane %v503, %v2839
    %v2842 = vunpack.c.l.s4 269488144
    %v2843 = vunpack.c.0.s8 %v2842
    %v2844 = vlaneseq
    %v2845 = vshrl.u32 %v2844, 7
    %v2846 = vsub.s32 %v2843, %v2845
    %v2847 = vrot.slane %v506, %v2846
    %v2849 = vunpack.c.l.s4 842150450
    %v2850 = vunpack.c.0.s8 %v2849
    %v2851 = vlaneseq
    %v2852 = vshrl.u32 %v2851, 7
    %v2853 = vsub.s32 %v2850, %v2852
    %v2854 = vrot.slane %v506, %v2853
    %v2856 = vunpack.c.l.s4 1414812756
    %v2857 = vunpack.c.0.s8 %v2856
    %v2858 = vlaneseq
    %v2859 = vshrl.u32 %v2858, 7
    %v2860 = vsub.s32 %v2857, %v2859
    %v2861 = vrot.slane %v506, %v2860
    %v2863 = vunpack.c.l.s4 1987475062
    %v2864 = vunpack.c.0.s8 %v2863
    %v2865 = vlaneseq
    %v2866 = vshrl.u32 %v2865, 7
    %v2867 = vsub.s32 %v2864, %v2866
    %v2868 = vrot.slane %v506, %v2867
    %v2870 = vunpack.c.l.s4 269488144
    %v2871 = vunpack.c.0.s8 %v2870
    %v2872 = vlaneseq
    %v2873 = vshrl.u32 %v2872, 7
    %v2874 = vsub.s32 %v2871, %v2873
    %v2875 = vrot.slane %v509, %v2874
    %v2877 = vunpack.c.l.s4 842150450
    %v2878 = vunpack.c.0.s8 %v2877
    %v2879 = vlaneseq
    %v2880 = vshrl.u32 %v2879, 7
    %v2881 = vsub.s32 %v2878, %v2880
    %v2882 = vrot.slane %v509, %v2881
    %v2884 = vunpack.c.l.s4 1414812756
    %v2885 = vunpack.c.0.s8 %v2884
    %v2886 = vlaneseq
    %v2887 = vshrl.u32 %v2886, 7
    %v2888 = vsub.s32 %v2885, %v2887
    %v2889 = vrot.slane %v509, %v2888
    %v2891 = vunpack.c.l.s4 1987475062
    %v2892 = vunpack.c.0.s8 %v2891
    %v2893 = vlaneseq
    %v2894 = vshrl.u32 %v2893, 7
    %v2895 = vsub.s32 %v2892, %v2894
    %v2896 = vrot.slane %v509, %v2895
    %v2898 = vunpack.c.l.s4 269488144
    %v2899 = vunpack.c.0.s8 %v2898
    %v2900 = vlaneseq
    %v2901 = vshrl.u32 %v2900, 7
    %v2902 = vsub.s32 %v2899, %v2901
    %v2903 = vrot.slane %v512, %v2902
    %v2905 = vunpack.c.l.s4 842150450
    %v2906 = vunpack.c.0.s8 %v2905
    %v2907 = vlaneseq
    %v2908 = vshrl.u32 %v2907, 7
    %v2909 = vsub.s32 %v2906, %v2908
    %v2910 = vrot.slane %v512, %v2909
    %v2912 = vunpack.c.l.s4 1414812756
    %v2913 = vunpack.c.0.s8 %v2912
    %v2914 = vlaneseq
    %v2915 = vshrl.u32 %v2914, 7
    %v2916 = vsub.s32 %v2913, %v2915
    %v2917 = vrot.slane %v512, %v2916
    %v2919 = vunpack.c.l.s4 1987475062
    %v2920 = vunpack.c.0.s8 %v2919
    %v2921 = vlaneseq
    %v2922 = vshrl.u32 %v2921, 7
    %v2923 = vsub.s32 %v2920, %v2922
    %v2924 = vrot.slane %v512, %v2923
    %v2926 = vunpack.c.l.s4 269488144
    %v2927 = vunpack.c.0.s8 %v2926
    %v2928 = vlaneseq
    %v2929 = vshrl.u32 %v2928, 7
    %v2930 = vsub.s32 %v2927, %v2929
    %v2931 = vrot.slane %v515, %v2930
    %v2933 = vunpack.c.l.s4 842150450
    %v2934 = vunpack.c.0.s8 %v2933
    %v2935 = vlaneseq
    %v2936 = vshrl.u32 %v2935, 7
    %v2937 = vsub.s32 %v2934, %v2936
    %v2938 = vrot.slane %v515, %v2937
    %v2940 = vunpack.c.l.s4 1414812756
    %v2941 = vunpack.c.0.s8 %v2940
    %v2942 = vlaneseq
    %v2943 = vshrl.u32 %v2942, 7
    %v2944 = vsub.s32 %v2941, %v2943
    %v2945 = vrot.slane %v515, %v2944
    %v2947 = vunpack.c.l.s4 1987475062
    %v2948 = vunpack.c.0.s8 %v2947
    %v2949 = vlaneseq
    %v2950 = vshrl.u32 %v2949, 7
    %v2951 = vsub.s32 %v2948, %v2950
    %v2952 = vrot.slane %v515, %v2951
    %v2954 = vunpack.c.l.s4 269488144
    %v2955 = vunpack.c.0.s8 %v2954
    %v2956 = vlaneseq
    %v2957 = vshrl.u32 %v2956, 7
    %v2958 = vsub.s32 %v2955, %v2957
    %v2959 = vrot.slane %v518, %v2958
    %v2961 = vunpack.c.l.s4 842150450
    %v2962 = vunpack.c.0.s8 %v2961
    %v2963 = vlaneseq
    %v2964 = vshrl.u32 %v2963, 7
    %v2965 = vsub.s32 %v2962, %v2964
    %v2966 = vrot.slane %v518, %v2965
    %v2968 = vunpack.c.l.s4 1414812756
    %v2969 = vunpack.c.0.s8 %v2968
    %v2970 = vlaneseq
    %v2971 = vshrl.u32 %v2970, 7
    %v2972 = vsub.s32 %v2969, %v2971
    %v2973 = vrot.slane %v518, %v2972
    %v2975 = vunpack.c.l.s4 1987475062
    %v2976 = vunpack.c.0.s8 %v2975
    %v2977 = vlaneseq
    %v2978 = vshrl.u32 %v2977, 7
    %v2979 = vsub.s32 %v2976, %v2978
    %v2980 = vrot.slane %v518, %v2979
    %v2982 = vunpack.c.l.s4 269488144
    %v2983 = vunpack.c.0.s8 %v2982
    %v2984 = vlaneseq
    %v2985 = vshrl.u32 %v2984, 7
    %v2986 = vsub.s32 %v2983, %v2985
    %v2987 = vrot.slane %v521, %v2986
    %v2989 = vunpack.c.l.s4 842150450
    %v2990 = vunpack.c.0.s8 %v2989
    %v2991 = vlaneseq
    %v2992 = vshrl.u32 %v2991, 7
    %v2993 = vsub.s32 %v2990, %v2992
    %v2994 = vrot.slane %v521, %v2993
    %v2996 = vunpack.c.l.s4 1414812756
    %v2997 = vunpack.c.0.s8 %v2996
    %v2998 = vlaneseq
    %v2999 = vshrl.u32 %v2998, 7
    %v3000 = vsub.s32 %v2997, %v2999
    %v3001 = vrot.slane %v521, %v3000
    %v3003 = vunpack.c.l.s4 1987475062
    %v3004 = vunpack.c.0.s8 %v3003
    %v3005 = vlaneseq
    %v3006 = vshrl.u32 %v3005, 7
    %v3007 = vsub.s32 %v3004, %v3006
    %v3008 = vrot.slane %v521, %v3007
    %v3010 = vunpack.c.l.s4 269488144
    %v3011 = vunpack.c.0.s8 %v3010
    %v3012 = vlaneseq
    %v3013 = vshrl.u32 %v3012, 7
    %v3014 = vsub.s32 %v3011, %v3013
    %v3015 = vrot.slane %v524, %v3014
    %v3017 = vunpack.c.l.s4 842150450
    %v3018 = vunpack.c.0.s8 %v3017
    %v3019 = vlaneseq
    %v3020 = vshrl.u32 %v3019, 7
    %v3021 = vsub.s32 %v3018, %v3020
    %v3022 = vrot.slane %v524, %v3021
    %v3024 = vunpack.c.l.s4 1414812756
    %v3025 = vunpack.c.0.s8 %v3024
    %v3026 = vlaneseq
    %v3027 = vshrl.u32 %v3026, 7
    %v3028 = vsub.s32 %v3025, %v3027
    %v3029 = vrot.slane %v524, %v3028
    %v3031 = vunpack.c.l.s4 1987475062
    %v3032 = vunpack.c.0.s8 %v3031
    %v3033 = vlaneseq
    %v3034 = vshrl.u32 %v3033, 7
    %v3035 = vsub.s32 %v3032, %v3034
    %v3036 = vrot.slane %v524, %v3035
    %v3038 = vunpack.c.l.s4 269488144
    %v3039 = vunpack.c.0.s8 %v3038
    %v3040 = vlaneseq
    %v3041 = vshrl.u32 %v3040, 7
    %v3042 = vsub.s32 %v3039, %v3041
    %v3043 = vrot.slane %v527, %v3042
    %v3045 = vunpack.c.l.s4 842150450
    %v3046 = vunpack.c.0.s8 %v3045
    %v3047 = vlaneseq
    %v3048 = vshrl.u32 %v3047, 7
    %v3049 = vsub.s32 %v3046, %v3048
    %v3050 = vrot.slane %v527, %v3049
    %v3052 = vunpack.c.l.s4 1414812756
    %v3053 = vunpack.c.0.s8 %v3052
    %v3054 = vlaneseq
    %v3055 = vshrl.u32 %v3054, 7
    %v3056 = vsub.s32 %v3053, %v3055
    %v3057 = vrot.slane %v527, %v3056
    %v3059 = vunpack.c.l.s4 1987475062
    %v3060 = vunpack.c.0.s8 %v3059
    %v3061 = vlaneseq
    %v3062 = vshrl.u32 %v3061, 7
    %v3063 = vsub.s32 %v3060, %v3062
    %v3064 = vrot.slane %v527, %v3063
    %v3066 = vunpack.c.l.s4 269488144
    %v3067 = vunpack.c.0.s8 %v3066
    %v3068 = vlaneseq
    %v3069 = vshrl.u32 %v3068, 7
    %v3070 = vsub.s32 %v3067, %v3069
    %v3071 = vrot.slane %v530, %v3070
    %v3073 = vunpack.c.l.s4 842150450
    %v3074 = vunpack.c.0.s8 %v3073
    %v3075 = vlaneseq
    %v3076 = vshrl.u32 %v3075, 7
    %v3077 = vsub.s32 %v3074, %v3076
    %v3078 = vrot.slane %v530, %v3077
    %v3080 = vunpack.c.l.s4 1414812756
    %v3081 = vunpack.c.0.s8 %v3080
    %v3082 = vlaneseq
    %v3083 = vshrl.u32 %v3082, 7
    %v3084 = vsub.s32 %v3081, %v3083
    %v3085 = vrot.slane %v530, %v3084
    %v3087 = vunpack.c.l.s4 1987475062
    %v3088 = vunpack.c.0.s8 %v3087
    %v3089 = vlaneseq
    %v3090 = vshrl.u32 %v3089, 7
    %v3091 = vsub.s32 %v3088, %v3090
    %v3092 = vrot.slane %v530, %v3091
    %v3094 = vunpack.c.l.s4 269488144
    %v3095 = vunpack.c.0.s8 %v3094
    %v3096 = vlaneseq
    %v3097 = vshrl.u32 %v3096, 7
    %v3098 = vsub.s32 %v3095, %v3097
    %v3099 = vrot.slane %v533, %v3098
    %v3101 = vunpack.c.l.s4 842150450
    %v3102 = vunpack.c.0.s8 %v3101
    %v3103 = vlaneseq
    %v3104 = vshrl.u32 %v3103, 7
    %v3105 = vsub.s32 %v3102, %v3104
    %v3106 = vrot.slane %v533, %v3105
    %v3108 = vunpack.c.l.s4 1414812756
    %v3109 = vunpack.c.0.s8 %v3108
    %v3110 = vlaneseq
    %v3111 = vshrl.u32 %v3110, 7
    %v3112 = vsub.s32 %v3109, %v3111
    %v3113 = vrot.slane %v533, %v3112
    %v3115 = vunpack.c.l.s4 1987475062
    %v3116 = vunpack.c.0.s8 %v3115
    %v3117 = vlaneseq
    %v3118 = vshrl.u32 %v3117, 7
    %v3119 = vsub.s32 %v3116, %v3118
    %v3120 = vrot.slane %v533, %v3119
    %v3122 = vunpack.c.l.s4 269488144
    %v3123 = vunpack.c.0.s8 %v3122
    %v3124 = vlaneseq
    %v3125 = vshrl.u32 %v3124, 7
    %v3126 = vsub.s32 %v3123, %v3125
    %v3127 = vrot.slane %v536, %v3126
    %v3129 = vunpack.c.l.s4 842150450
    %v3130 = vunpack.c.0.s8 %v3129
    %v3131 = vlaneseq
    %v3132 = vshrl.u32 %v3131, 7
    %v3133 = vsub.s32 %v3130, %v3132
    %v3134 = vrot.slane %v536, %v3133
    %v3136 = vunpack.c.l.s4 1414812756
    %v3137 = vunpack.c.0.s8 %v3136
    %v3138 = vlaneseq
    %v3139 = vshrl.u32 %v3138, 7
    %v3140 = vsub.s32 %v3137, %v3139
    %v3141 = vrot.slane %v536, %v3140
    %v3143 = vunpack.c.l.s4 1987475062
    %v3144 = vunpack.c.0.s8 %v3143
    %v3145 = vlaneseq
    %v3146 = vshrl.u32 %v3145, 7
    %v3147 = vsub.s32 %v3144, %v3146
    %v3148 = vrot.slane %v536, %v3147
    %v3150 = vunpack.c.l.s4 269488144
    %v3151 = vunpack.c.0.s8 %v3150
    %v3152 = vlaneseq
    %v3153 = vshrl.u32 %v3152, 7
    %v3154 = vsub.s32 %v3151, %v3153
    %v3155 = vrot.slane %v539, %v3154
    %v3157 = vunpack.c.l.s4 842150450
    %v3158 = vunpack.c.0.s8 %v3157
    %v3159 = vlaneseq
    %v3160 = vshrl.u32 %v3159, 7
    %v3161 = vsub.s32 %v3158, %v3160
    %v3162 = vrot.slane %v539, %v3161
    %v3164 = vunpack.c.l.s4 1414812756
    %v3165 = vunpack.c.0.s8 %v3164
    %v3166 = vlaneseq
    %v3167 = vshrl.u32 %v3166, 7
    %v3168 = vsub.s32 %v3165, %v3167
    %v3169 = vrot.slane %v539, %v3168
    %v3171 = vunpack.c.l.s4 1987475062
    %v3172 = vunpack.c.0.s8 %v3171
    %v3173 = vlaneseq
    %v3174 = vshrl.u32 %v3173, 7
    %v3175 = vsub.s32 %v3172, %v3174
    %v3176 = vrot.slane %v539, %v3175
    %v3178 = vunpack.c.l.s4 269488144
    %v3179 = vunpack.c.0.s8 %v3178
    %v3180 = vlaneseq
    %v3181 = vshrl.u32 %v3180, 7
    %v3182 = vsub.s32 %v3179, %v3181
    %v3183 = vrot.slane %v542, %v3182
    %v3185 = vunpack.c.l.s4 842150450
    %v3186 = vunpack.c.0.s8 %v3185
    %v3187 = vlaneseq
    %v3188 = vshrl.u32 %v3187, 7
    %v3189 = vsub.s32 %v3186, %v3188
    %v3190 = vrot.slane %v542, %v3189
    %v3192 = vunpack.c.l.s4 1414812756
    %v3193 = vunpack.c.0.s8 %v3192
    %v3194 = vlaneseq
    %v3195 = vshrl.u32 %v3194, 7
    %v3196 = vsub.s32 %v3193, %v3195
    %v3197 = vrot.slane %v542, %v3196
    %v3199 = vunpack.c.l.s4 1987475062
    %v3200 = vunpack.c.0.s8 %v3199
    %v3201 = vlaneseq
    %v3202 = vshrl.u32 %v3201, 7
    %v3203 = vsub.s32 %v3200, %v3202
    %v3204 = vrot.slane %v542, %v3203
    %v3206 = vunpack.c.l.s4 269488144
    %v3207 = vunpack.c.0.s8 %v3206
    %v3208 = vlaneseq
    %v3209 = vshrl.u32 %v3208, 7
    %v3210 = vsub.s32 %v3207, %v3209
    %v3211 = vrot.slane %v545, %v3210
    %v3213 = vunpack.c.l.s4 842150450
    %v3214 = vunpack.c.0.s8 %v3213
    %v3215 = vlaneseq
    %v3216 = vshrl.u32 %v3215, 7
    %v3217 = vsub.s32 %v3214, %v3216
    %v3218 = vrot.slane %v545, %v3217
    %v3220 = vunpack.c.l.s4 1414812756
    %v3221 = vunpack.c.0.s8 %v3220
    %v3222 = vlaneseq
    %v3223 = vshrl.u32 %v3222, 7
    %v3224 = vsub.s32 %v3221, %v3223
    %v3225 = vrot.slane %v545, %v3224
    %v3227 = vunpack.c.l.s4 1987475062
    %v3228 = vunpack.c.0.s8 %v3227
    %v3229 = vlaneseq
    %v3230 = vshrl.u32 %v3229, 7
    %v3231 = vsub.s32 %v3228, %v3230
    %v3232 = vrot.slane %v545, %v3231
    %v3234 = vunpack.c.l.s4 269488144
    %v3235 = vunpack.c.0.s8 %v3234
    %v3236 = vlaneseq
    %v3237 = vshrl.u32 %v3236, 7
    %v3238 = vsub.s32 %v3235, %v3237
    %v3239 = vrot.slane %v548, %v3238
    %v3241 = vunpack.c.l.s4 842150450
    %v3242 = vunpack.c.0.s8 %v3241
    %v3243 = vlaneseq
    %v3244 = vshrl.u32 %v3243, 7
    %v3245 = vsub.s32 %v3242, %v3244
    %v3246 = vrot.slane %v548, %v3245
    %v3248 = vunpack.c.l.s4 1414812756
    %v3249 = vunpack.c.0.s8 %v3248
    %v3250 = vlaneseq
    %v3251 = vshrl.u32 %v3250, 7
    %v3252 = vsub.s32 %v3249, %v3251
    %v3253 = vrot.slane %v548, %v3252
    %v3255 = vunpack.c.l.s4 1987475062
    %v3256 = vunpack.c.0.s8 %v3255
    %v3257 = vlaneseq
    %v3258 = vshrl.u32 %v3257, 7
    %v3259 = vsub.s32 %v3256, %v3258
    %v3260 = vrot.slane %v548, %v3259
    %v3262 = vunpack.c.l.s4 269488144
    %v3263 = vunpack.c.0.s8 %v3262
    %v3264 = vlaneseq
    %v3265 = vshrl.u32 %v3264, 7
    %v3266 = vsub.s32 %v3263, %v3265
    %v3267 = vrot.slane %v551, %v3266
    %v3269 = vunpack.c.l.s4 842150450
    %v3270 = vunpack.c.0.s8 %v3269
    %v3271 = vlaneseq
    %v3272 = vshrl.u32 %v3271, 7
    %v3273 = vsub.s32 %v3270, %v3272
    %v3274 = vrot.slane %v551, %v3273
    %v3276 = vunpack.c.l.s4 1414812756
    %v3277 = vunpack.c.0.s8 %v3276
    %v3278 = vlaneseq
    %v3279 = vshrl.u32 %v3278, 7
    %v3280 = vsub.s32 %v3277, %v3279
    %v3281 = vrot.slane %v551, %v3280
    %v3283 = vunpack.c.l.s4 1987475062
    %v3284 = vunpack.c.0.s8 %v3283
    %v3285 = vlaneseq
    %v3286 = vshrl.u32 %v3285, 7
    %v3287 = vsub.s32 %v3284, %v3286
    %v3288 = vrot.slane %v551, %v3287
    %v3290 = vunpack.c.l.s4 269488144
    %v3291 = vunpack.c.0.s8 %v3290
    %v3292 = vlaneseq
    %v3293 = vshrl.u32 %v3292, 7
    %v3294 = vsub.s32 %v3291, %v3293
    %v3295 = vrot.slane %v554, %v3294
    %v3297 = vunpack.c.l.s4 842150450
    %v3298 = vunpack.c.0.s8 %v3297
    %v3299 = vlaneseq
    %v3300 = vshrl.u32 %v3299, 7
    %v3301 = vsub.s32 %v3298, %v3300
    %v3302 = vrot.slane %v554, %v3301
    %v3304 = vunpack.c.l.s4 1414812756
    %v3305 = vunpack.c.0.s8 %v3304
    %v3306 = vlaneseq
    %v3307 = vshrl.u32 %v3306, 7
    %v3308 = vsub.s32 %v3305, %v3307
    %v3309 = vrot.slane %v554, %v3308
    %v3311 = vunpack.c.l.s4 1987475062
    %v3312 = vunpack.c.0.s8 %v3311
    %v3313 = vlaneseq
    %v3314 = vshrl.u32 %v3313, 7
    %v3315 = vsub.s32 %v3312, %v3314
    %v3316 = vrot.slane %v554, %v3315
    %v3318 = vunpack.c.l.s4 269488144
    %v3319 = vunpack.c.0.s8 %v3318
    %v3320 = vlaneseq
    %v3321 = vshrl.u32 %v3320, 7
    %v3322 = vsub.s32 %v3319, %v3321
    %v3323 = vrot.slane %v557, %v3322
    %v3325 = vunpack.c.l.s4 842150450
    %v3326 = vunpack.c.0.s8 %v3325
    %v3327 = vlaneseq
    %v3328 = vshrl.u32 %v3327, 7
    %v3329 = vsub.s32 %v3326, %v3328
    %v3330 = vrot.slane %v557, %v3329
    %v3332 = vunpack.c.l.s4 1414812756
    %v3333 = vunpack.c.0.s8 %v3332
    %v3334 = vlaneseq
    %v3335 = vshrl.u32 %v3334, 7
    %v3336 = vsub.s32 %v3333, %v3335
    %v3337 = vrot.slane %v557, %v3336
    %v3339 = vunpack.c.l.s4 1987475062
    %v3340 = vunpack.c.0.s8 %v3339
    %v3341 = vlaneseq
    %v3342 = vshrl.u32 %v3341, 7
    %v3343 = vsub.s32 %v3340, %v3342
    %v3344 = vrot.slane %v557, %v3343
    %v3346 = vunpack.c.l.s4 269488144
    %v3347 = vunpack.c.0.s8 %v3346
    %v3348 = vlaneseq
    %v3349 = vshrl.u32 %v3348, 7
    %v3350 = vsub.s32 %v3347, %v3349
    %v3351 = vrot.slane %v560, %v3350
    %v3353 = vunpack.c.l.s4 842150450
    %v3354 = vunpack.c.0.s8 %v3353
    %v3355 = vlaneseq
    %v3356 = vshrl.u32 %v3355, 7
    %v3357 = vsub.s32 %v3354, %v3356
    %v3358 = vrot.slane %v560, %v3357
    %v3360 = vunpack.c.l.s4 1414812756
    %v3361 = vunpack.c.0.s8 %v3360
    %v3362 = vlaneseq
    %v3363 = vshrl.u32 %v3362, 7
    %v3364 = vsub.s32 %v3361, %v3363
    %v3365 = vrot.slane %v560, %v3364
    %v3367 = vunpack.c.l.s4 1987475062
    %v3368 = vunpack.c.0.s8 %v3367
    %v3369 = vlaneseq
    %v3370 = vshrl.u32 %v3369, 7
    %v3371 = vsub.s32 %v3368, %v3370
    %v3372 = vrot.slane %v560, %v3371
    %v3374 = vunpack.c.l.s4 269488144
    %v3375 = vunpack.c.0.s8 %v3374
    %v3376 = vlaneseq
    %v3377 = vshrl.u32 %v3376, 7
    %v3378 = vsub.s32 %v3375, %v3377
    %v3379 = vrot.slane %v563, %v3378
    %v3381 = vunpack.c.l.s4 842150450
    %v3382 = vunpack.c.0.s8 %v3381
    %v3383 = vlaneseq
    %v3384 = vshrl.u32 %v3383, 7
    %v3385 = vsub.s32 %v3382, %v3384
    %v3386 = vrot.slane %v563, %v3385
    %v3388 = vunpack.c.l.s4 1414812756
    %v3389 = vunpack.c.0.s8 %v3388
    %v3390 = vlaneseq
    %v3391 = vshrl.u32 %v3390, 7
    %v3392 = vsub.s32 %v3389, %v3391
    %v3393 = vrot.slane %v563, %v3392
    %v3395 = vunpack.c.l.s4 1987475062
    %v3396 = vunpack.c.0.s8 %v3395
    %v3397 = vlaneseq
    %v3398 = vshrl.u32 %v3397, 7
    %v3399 = vsub.s32 %v3396, %v3398
    %v3400 = vrot.slane %v563, %v3399
    %v3402 = vunpack.c.l.s4 269488144
    %v3403 = vunpack.c.0.s8 %v3402
    %v3404 = vlaneseq
    %v3405 = vshrl.u32 %v3404, 7
    %v3406 = vsub.s32 %v3403, %v3405
    %v3407 = vrot.slane %v566, %v3406
    %v3409 = vunpack.c.l.s4 842150450
    %v3410 = vunpack.c.0.s8 %v3409
    %v3411 = vlaneseq
    %v3412 = vshrl.u32 %v3411, 7
    %v3413 = vsub.s32 %v3410, %v3412
    %v3414 = vrot.slane %v566, %v3413
    %v3416 = vunpack.c.l.s4 1414812756
    %v3417 = vunpack.c.0.s8 %v3416
    %v3418 = vlaneseq
    %v3419 = vshrl.u32 %v3418, 7
    %v3420 = vsub.s32 %v3417, %v3419
    %v3421 = vrot.slane %v566, %v3420
    %v3423 = vunpack.c.l.s4 1987475062
    %v3424 = vunpack.c.0.s8 %v3423
    %v3425 = vlaneseq
    %v3426 = vshrl.u32 %v3425, 7
    %v3427 = vsub.s32 %v3424, %v3426
    %v3428 = vrot.slane %v566, %v3427
    %v3430 = vunpack.c.l.s4 269488144
    %v3431 = vunpack.c.0.s8 %v3430
    %v3432 = vlaneseq
    %v3433 = vshrl.u32 %v3432, 7
    %v3434 = vsub.s32 %v3431, %v3433
    %v3435 = vrot.slane %v569, %v3434
    %v3437 = vunpack.c.l.s4 842150450
    %v3438 = vunpack.c.0.s8 %v3437
    %v3439 = vlaneseq
    %v3440 = vshrl.u32 %v3439, 7
    %v3441 = vsub.s32 %v3438, %v3440
    %v3442 = vrot.slane %v569, %v3441
    %v3444 = vunpack.c.l.s4 1414812756
    %v3445 = vunpack.c.0.s8 %v3444
    %v3446 = vlaneseq
    %v3447 = vshrl.u32 %v3446, 7
    %v3448 = vsub.s32 %v3445, %v3447
    %v3449 = vrot.slane %v569, %v3448
    %v3451 = vunpack.c.l.s4 1987475062
    %v3452 = vunpack.c.0.s8 %v3451
    %v3453 = vlaneseq
    %v3454 = vshrl.u32 %v3453, 7
    %v3455 = vsub.s32 %v3452, %v3454
    %v3456 = vrot.slane %v569, %v3455
    %v3458 = vunpack.c.l.s4 269488144
    %v3459 = vunpack.c.0.s8 %v3458
    %v3460 = vlaneseq
    %v3461 = vshrl.u32 %v3460, 7
    %v3462 = vsub.s32 %v3459, %v3461
    %v3463 = vrot.slane %v572, %v3462
    %v3465 = vunpack.c.l.s4 842150450
    %v3466 = vunpack.c.0.s8 %v3465
    %v3467 = vlaneseq
    %v3468 = vshrl.u32 %v3467, 7
    %v3469 = vsub.s32 %v3466, %v3468
    %v3470 = vrot.slane %v572, %v3469
    %v3472 = vunpack.c.l.s4 1414812756
    %v3473 = vunpack.c.0.s8 %v3472
    %v3474 = vlaneseq
    %v3475 = vshrl.u32 %v3474, 7
    %v3476 = vsub.s32 %v3473, %v3475
    %v3477 = vrot.slane %v572, %v3476
    %v3479 = vunpack.c.l.s4 1987475062
    %v3480 = vunpack.c.0.s8 %v3479
    %v3481 = vlaneseq
    %v3482 = vshrl.u32 %v3481, 7
    %v3483 = vsub.s32 %v3480, %v3482
    %v3484 = vrot.slane %v572, %v3483
    %v3486 = vunpack.c.l.s4 269488144
    %v3487 = vunpack.c.0.s8 %v3486
    %v3488 = vlaneseq
    %v3489 = vshrl.u32 %v3488, 7
    %v3490 = vsub.s32 %v3487, %v3489
    %v3491 = vrot.slane %v575, %v3490
    %v3493 = vunpack.c.l.s4 842150450
    %v3494 = vunpack.c.0.s8 %v3493
    %v3495 = vlaneseq
    %v3496 = vshrl.u32 %v3495, 7
    %v3497 = vsub.s32 %v3494, %v3496
    %v3498 = vrot.slane %v575, %v3497
    %v3500 = vunpack.c.l.s4 1414812756
    %v3501 = vunpack.c.0.s8 %v3500
    %v3502 = vlaneseq
    %v3503 = vshrl.u32 %v3502, 7
    %v3504 = vsub.s32 %v3501, %v3503
    %v3505 = vrot.slane %v575, %v3504
    %v3507 = vunpack.c.l.s4 1987475062
    %v3508 = vunpack.c.0.s8 %v3507
    %v3509 = vlaneseq
    %v3510 = vshrl.u32 %v3509, 7
    %v3511 = vsub.s32 %v3508, %v3510
    %v3512 = vrot.slane %v575, %v3511
    %v3514 = vunpack.c.l.s4 269488144
    %v3515 = vunpack.c.0.s8 %v3514
    %v3516 = vlaneseq
    %v3517 = vshrl.u32 %v3516, 7
    %v3518 = vsub.s32 %v3515, %v3517
    %v3519 = vrot.slane %v578, %v3518
    %v3521 = vunpack.c.l.s4 842150450
    %v3522 = vunpack.c.0.s8 %v3521
    %v3523 = vlaneseq
    %v3524 = vshrl.u32 %v3523, 7
    %v3525 = vsub.s32 %v3522, %v3524
    %v3526 = vrot.slane %v578, %v3525
    %v3528 = vunpack.c.l.s4 1414812756
    %v3529 = vunpack.c.0.s8 %v3528
    %v3530 = vlaneseq
    %v3531 = vshrl.u32 %v3530, 7
    %v3532 = vsub.s32 %v3529, %v3531
    %v3533 = vrot.slane %v578, %v3532
    %v3535 = vunpack.c.l.s4 1987475062
    %v3536 = vunpack.c.0.s8 %v3535
    %v3537 = vlaneseq
    %v3538 = vshrl.u32 %v3537, 7
    %v3539 = vsub.s32 %v3536, %v3538
    %v3540 = vrot.slane %v578, %v3539
    %v3542 = vunpack.c.l.s4 269488144
    %v3543 = vunpack.c.0.s8 %v3542
    %v3544 = vlaneseq
    %v3545 = vshrl.u32 %v3544, 7
    %v3546 = vsub.s32 %v3543, %v3545
    %v3547 = vrot.slane %v581, %v3546
    %v3549 = vunpack.c.l.s4 842150450
    %v3550 = vunpack.c.0.s8 %v3549
    %v3551 = vlaneseq
    %v3552 = vshrl.u32 %v3551, 7
    %v3553 = vsub.s32 %v3550, %v3552
    %v3554 = vrot.slane %v581, %v3553
    %v3556 = vunpack.c.l.s4 1414812756
    %v3557 = vunpack.c.0.s8 %v3556
    %v3558 = vlaneseq
    %v3559 = vshrl.u32 %v3558, 7
    %v3560 = vsub.s32 %v3557, %v3559
    %v3561 = vrot.slane %v581, %v3560
    %v3563 = vunpack.c.l.s4 1987475062
    %v3564 = vunpack.c.0.s8 %v3563
    %v3565 = vlaneseq
    %v3566 = vshrl.u32 %v3565, 7
    %v3567 = vsub.s32 %v3564, %v3566
    %v3568 = vrot.slane %v581, %v3567
    %v3570 = vunpack.c.l.s4 269488144
    %v3571 = vunpack.c.0.s8 %v3570
    %v3572 = vlaneseq
    %v3573 = vshrl.u32 %v3572, 7
    %v3574 = vsub.s32 %v3571, %v3573
    %v3575 = vrot.slane %v584, %v3574
    %v3577 = vunpack.c.l.s4 842150450
    %v3578 = vunpack.c.0.s8 %v3577
    %v3579 = vlaneseq
    %v3580 = vshrl.u32 %v3579, 7
    %v3581 = vsub.s32 %v3578, %v3580
    %v3582 = vrot.slane %v584, %v3581
    %v3584 = vunpack.c.l.s4 1414812756
    %v3585 = vunpack.c.0.s8 %v3584
    %v3586 = vlaneseq
    %v3587 = vshrl.u32 %v3586, 7
    %v3588 = vsub.s32 %v3585, %v3587
    %v3589 = vrot.slane %v584, %v3588
    %v3591 = vunpack.c.l.s4 1987475062
    %v3592 = vunpack.c.0.s8 %v3591
    %v3593 = vlaneseq
    %v3594 = vshrl.u32 %v3593, 7
    %v3595 = vsub.s32 %v3592, %v3594
    %v3596 = vrot.slane %v584, %v3595
    %v3598 = vunpack.c.l.s4 269488144
    %v3599 = vunpack.c.0.s8 %v3598
    %v3600 = vlaneseq
    %v3601 = vshrl.u32 %v3600, 7
    %v3602 = vsub.s32 %v3599, %v3601
    %v3603 = vrot.slane %v587, %v3602
    %v3605 = vunpack.c.l.s4 842150450
    %v3606 = vunpack.c.0.s8 %v3605
    %v3607 = vlaneseq
    %v3608 = vshrl.u32 %v3607, 7
    %v3609 = vsub.s32 %v3606, %v3608
    %v3610 = vrot.slane %v587, %v3609
    %v3612 = vunpack.c.l.s4 1414812756
    %v3613 = vunpack.c.0.s8 %v3612
    %v3614 = vlaneseq
    %v3615 = vshrl.u32 %v3614, 7
    %v3616 = vsub.s32 %v3613, %v3615
    %v3617 = vrot.slane %v587, %v3616
    %v3619 = vunpack.c.l.s4 1987475062
    %v3620 = vunpack.c.0.s8 %v3619
    %v3621 = vlaneseq
    %v3622 = vshrl.u32 %v3621, 7
    %v3623 = vsub.s32 %v3620, %v3622
    %v3624 = vrot.slane %v587, %v3623
    %v3626 = vunpack.c.l.s4 269488144
    %v3627 = vunpack.c.0.s8 %v3626
    %v3628 = vlaneseq
    %v3629 = vshrl.u32 %v3628, 7
    %v3630 = vsub.s32 %v3627, %v3629
    %v3631 = vrot.slane %v590, %v3630
    %v3633 = vunpack.c.l.s4 842150450
    %v3634 = vunpack.c.0.s8 %v3633
    %v3635 = vlaneseq
    %v3636 = vshrl.u32 %v3635, 7
    %v3637 = vsub.s32 %v3634, %v3636
    %v3638 = vrot.slane %v590, %v3637
    %v3640 = vunpack.c.l.s4 1414812756
    %v3641 = vunpack.c.0.s8 %v3640
    %v3642 = vlaneseq
    %v3643 = vshrl.u32 %v3642, 7
    %v3644 = vsub.s32 %v3641, %v3643
    %v3645 = vrot.slane %v590, %v3644
    %v3647 = vunpack.c.l.s4 1987475062
    %v3648 = vunpack.c.0.s8 %v3647
    %v3649 = vlaneseq
    %v3650 = vshrl.u32 %v3649, 7
    %v3651 = vsub.s32 %v3648, %v3650
    %v3652 = vrot.slane %v590, %v3651
    %v3654 = vunpack.c.l.s4 269488144
    %v3655 = vunpack.c.0.s8 %v3654
    %v3656 = vlaneseq
    %v3657 = vshrl.u32 %v3656, 7
    %v3658 = vsub.s32 %v3655, %v3657
    %v3659 = vrot.slane %v593, %v3658
    %v3661 = vunpack.c.l.s4 842150450
    %v3662 = vunpack.c.0.s8 %v3661
    %v3663 = vlaneseq
    %v3664 = vshrl.u32 %v3663, 7
    %v3665 = vsub.s32 %v3662, %v3664
    %v3666 = vrot.slane %v593, %v3665
    %v3668 = vunpack.c.l.s4 1414812756
    %v3669 = vunpack.c.0.s8 %v3668
    %v3670 = vlaneseq
    %v3671 = vshrl.u32 %v3670, 7
    %v3672 = vsub.s32 %v3669, %v3671
    %v3673 = vrot.slane %v593, %v3672
    %v3675 = vunpack.c.l.s4 1987475062
    %v3676 = vunpack.c.0.s8 %v3675
    %v3677 = vlaneseq
    %v3678 = vshrl.u32 %v3677, 7
    %v3679 = vsub.s32 %v3676, %v3678
    %v3680 = vrot.slane %v593, %v3679
    %v3682 = vunpack.c.l.s4 269488144
    %v3683 = vunpack.c.0.s8 %v3682
    %v3684 = vlaneseq
    %v3685 = vshrl.u32 %v3684, 7
    %v3686 = vsub.s32 %v3683, %v3685
    %v3687 = vrot.slane %v596, %v3686
    %v3689 = vunpack.c.l.s4 842150450
    %v3690 = vunpack.c.0.s8 %v3689
    %v3691 = vlaneseq
    %v3692 = vshrl.u32 %v3691, 7
    %v3693 = vsub.s32 %v3690, %v3692
    %v3694 = vrot.slane %v596, %v3693
    %v3696 = vunpack.c.l.s4 1414812756
    %v3697 = vunpack.c.0.s8 %v3696
    %v3698 = vlaneseq
    %v3699 = vshrl.u32 %v3698, 7
    %v3700 = vsub.s32 %v3697, %v3699
    %v3701 = vrot.slane %v596, %v3700
    %v3703 = vunpack.c.l.s4 1987475062
    %v3704 = vunpack.c.0.s8 %v3703
    %v3705 = vlaneseq
    %v3706 = vshrl.u32 %v3705, 7
    %v3707 = vsub.s32 %v3704, %v3706
    %v3708 = vrot.slane %v596, %v3707
    %v3710 = vunpack.c.l.s4 269488144
    %v3711 = vunpack.c.0.s8 %v3710
    %v3712 = vlaneseq
    %v3713 = vshrl.u32 %v3712, 7
    %v3714 = vsub.s32 %v3711, %v3713
    %v3715 = vrot.slane %v599, %v3714
    %v3717 = vunpack.c.l.s4 842150450
    %v3718 = vunpack.c.0.s8 %v3717
    %v3719 = vlaneseq
    %v3720 = vshrl.u32 %v3719, 7
    %v3721 = vsub.s32 %v3718, %v3720
    %v3722 = vrot.slane %v599, %v3721
    %v3724 = vunpack.c.l.s4 1414812756
    %v3725 = vunpack.c.0.s8 %v3724
    %v3726 = vlaneseq
    %v3727 = vshrl.u32 %v3726, 7
    %v3728 = vsub.s32 %v3725, %v3727
    %v3729 = vrot.slane %v599, %v3728
    %v3731 = vunpack.c.l.s4 1987475062
    %v3732 = vunpack.c.0.s8 %v3731
    %v3733 = vlaneseq
    %v3734 = vshrl.u32 %v3733, 7
    %v3735 = vsub.s32 %v3732, %v3734
    %v3736 = vrot.slane %v599, %v3735
    %v3738 = vunpack.c.l.s4 269488144
    %v3739 = vunpack.c.0.s8 %v3738
    %v3740 = vlaneseq
    %v3741 = vshrl.u32 %v3740, 7
    %v3742 = vsub.s32 %v3739, %v3741
    %v3743 = vrot.slane %v602, %v3742
    %v3745 = vunpack.c.l.s4 842150450
    %v3746 = vunpack.c.0.s8 %v3745
    %v3747 = vlaneseq
    %v3748 = vshrl.u32 %v3747, 7
    %v3749 = vsub.s32 %v3746, %v3748
    %v3750 = vrot.slane %v602, %v3749
    %v3752 = vunpack.c.l.s4 1414812756
    %v3753 = vunpack.c.0.s8 %v3752
    %v3754 = vlaneseq
    %v3755 = vshrl.u32 %v3754, 7
    %v3756 = vsub.s32 %v3753, %v3755
    %v3757 = vrot.slane %v602, %v3756
    %v3759 = vunpack.c.l.s4 1987475062
    %v3760 = vunpack.c.0.s8 %v3759
    %v3761 = vlaneseq
    %v3762 = vshrl.u32 %v3761, 7
    %v3763 = vsub.s32 %v3760, %v3762
    %v3764 = vrot.slane %v602, %v3763
    %v3766 = vunpack.c.l.s4 269488144
    %v3767 = vunpack.c.0.s8 %v3766
    %v3768 = vlaneseq
    %v3769 = vshrl.u32 %v3768, 7
    %v3770 = vsub.s32 %v3767, %v3769
    %v3771 = vrot.slane %v605, %v3770
    %v3773 = vunpack.c.l.s4 842150450
    %v3774 = vunpack.c.0.s8 %v3773
    %v3775 = vlaneseq
    %v3776 = vshrl.u32 %v3775, 7
    %v3777 = vsub.s32 %v3774, %v3776
    %v3778 = vrot.slane %v605, %v3777
    %v3780 = vunpack.c.l.s4 1414812756
    %v3781 = vunpack.c.0.s8 %v3780
    %v3782 = vlaneseq
    %v3783 = vshrl.u32 %v3782, 7
    %v3784 = vsub.s32 %v3781, %v3783
    %v3785 = vrot.slane %v605, %v3784
    %v3787 = vunpack.c.l.s4 1987475062
    %v3788 = vunpack.c.0.s8 %v3787
    %v3789 = vlaneseq
    %v3790 = vshrl.u32 %v3789, 7
    %v3791 = vsub.s32 %v3788, %v3790
    %v3792 = vrot.slane %v605, %v3791
    %v3794 = vunpack.c.l.s4 269488144
    %v3795 = vunpack.c.0.s8 %v3794
    %v3796 = vlaneseq
    %v3797 = vshrl.u32 %v3796, 7
    %v3798 = vsub.s32 %v3795, %v3797
    %v3799 = vrot.slane %v608, %v3798
    %v3801 = vunpack.c.l.s4 842150450
    %v3802 = vunpack.c.0.s8 %v3801
    %v3803 = vlaneseq
    %v3804 = vshrl.u32 %v3803, 7
    %v3805 = vsub.s32 %v3802, %v3804
    %v3806 = vrot.slane %v608, %v3805
    %v3808 = vunpack.c.l.s4 1414812756
    %v3809 = vunpack.c.0.s8 %v3808
    %v3810 = vlaneseq
    %v3811 = vshrl.u32 %v3810, 7
    %v3812 = vsub.s32 %v3809, %v3811
    %v3813 = vrot.slane %v608, %v3812
    %v3815 = vunpack.c.l.s4 1987475062
    %v3816 = vunpack.c.0.s8 %v3815
    %v3817 = vlaneseq
    %v3818 = vshrl.u32 %v3817, 7
    %v3819 = vsub.s32 %v3816, %v3818
    %v3820 = vrot.slane %v608, %v3819
    %v3822 = vunpack.c.l.s4 269488144
    %v3823 = vunpack.c.0.s8 %v3822
    %v3824 = vlaneseq
    %v3825 = vshrl.u32 %v3824, 7
    %v3826 = vsub.s32 %v3823, %v3825
    %v3827 = vrot.slane %v611, %v3826
    %v3829 = vunpack.c.l.s4 842150450
    %v3830 = vunpack.c.0.s8 %v3829
    %v3831 = vlaneseq
    %v3832 = vshrl.u32 %v3831, 7
    %v3833 = vsub.s32 %v3830, %v3832
    %v3834 = vrot.slane %v611, %v3833
    %v3836 = vunpack.c.l.s4 1414812756
    %v3837 = vunpack.c.0.s8 %v3836
    %v3838 = vlaneseq
    %v3839 = vshrl.u32 %v3838, 7
    %v3840 = vsub.s32 %v3837, %v3839
    %v3841 = vrot.slane %v611, %v3840
    %v3843 = vunpack.c.l.s4 1987475062
    %v3844 = vunpack.c.0.s8 %v3843
    %v3845 = vlaneseq
    %v3846 = vshrl.u32 %v3845, 7
    %v3847 = vsub.s32 %v3844, %v3846
    %v3848 = vrot.slane %v611, %v3847
    %v3850 = vunpack.c.l.s4 269488144
    %v3851 = vunpack.c.0.s8 %v3850
    %v3852 = vlaneseq
    %v3853 = vshrl.u32 %v3852, 7
    %v3854 = vsub.s32 %v3851, %v3853
    %v3855 = vrot.slane %v614, %v3854
    %v3857 = vunpack.c.l.s4 842150450
    %v3858 = vunpack.c.0.s8 %v3857
    %v3859 = vlaneseq
    %v3860 = vshrl.u32 %v3859, 7
    %v3861 = vsub.s32 %v3858, %v3860
    %v3862 = vrot.slane %v614, %v3861
    %v3864 = vunpack.c.l.s4 1414812756
    %v3865 = vunpack.c.0.s8 %v3864
    %v3866 = vlaneseq
    %v3867 = vshrl.u32 %v3866, 7
    %v3868 = vsub.s32 %v3865, %v3867
    %v3869 = vrot.slane %v614, %v3868
    %v3871 = vunpack.c.l.s4 1987475062
    %v3872 = vunpack.c.0.s8 %v3871
    %v3873 = vlaneseq
    %v3874 = vshrl.u32 %v3873, 7
    %v3875 = vsub.s32 %v3872, %v3874
    %v3876 = vrot.slane %v614, %v3875
    %v3878 = vunpack.c.l.s4 269488144
    %v3879 = vunpack.c.0.s8 %v3878
    %v3880 = vlaneseq
    %v3881 = vshrl.u32 %v3880, 7
    %v3882 = vsub.s32 %v3879, %v3881
    %v3883 = vrot.slane %v617, %v3882
    %v3885 = vunpack.c.l.s4 842150450
    %v3886 = vunpack.c.0.s8 %v3885
    %v3887 = vlaneseq
    %v3888 = vshrl.u32 %v3887, 7
    %v3889 = vsub.s32 %v3886, %v3888
    %v3890 = vrot.slane %v617, %v3889
    %v3892 = vunpack.c.l.s4 1414812756
    %v3893 = vunpack.c.0.s8 %v3892
    %v3894 = vlaneseq
    %v3895 = vshrl.u32 %v3894, 7
    %v3896 = vsub.s32 %v3893, %v3895
    %v3897 = vrot.slane %v617, %v3896
    %v3899 = vunpack.c.l.s4 1987475062
    %v3900 = vunpack.c.0.s8 %v3899
    %v3901 = vlaneseq
    %v3902 = vshrl.u32 %v3901, 7
    %v3903 = vsub.s32 %v3900, %v3902
    %v3904 = vrot.slane %v617, %v3903
    %v3906 = vunpack.c.l.s4 269488144
    %v3907 = vunpack.c.0.s8 %v3906
    %v3908 = vlaneseq
    %v3909 = vshrl.u32 %v3908, 7
    %v3910 = vsub.s32 %v3907, %v3909
    %v3911 = vrot.slane %v620, %v3910
    %v3913 = vunpack.c.l.s4 842150450
    %v3914 = vunpack.c.0.s8 %v3913
    %v3915 = vlaneseq
    %v3916 = vshrl.u32 %v3915, 7
    %v3917 = vsub.s32 %v3914, %v3916
    %v3918 = vrot.slane %v620, %v3917
    %v3920 = vunpack.c.l.s4 1414812756
    %v3921 = vunpack.c.0.s8 %v3920
    %v3922 = vlaneseq
    %v3923 = vshrl.u32 %v3922, 7
    %v3924 = vsub.s32 %v3921, %v3923
    %v3925 = vrot.slane %v620, %v3924
    %v3927 = vunpack.c.l.s4 1987475062
    %v3928 = vunpack.c.0.s8 %v3927
    %v3929 = vlaneseq
    %v3930 = vshrl.u32 %v3929, 7
    %v3931 = vsub.s32 %v3928, %v3930
    %v3932 = vrot.slane %v620, %v3931
    %v3934 = vunpack.c.l.s4 269488144
    %v3935 = vunpack.c.0.s8 %v3934
    %v3936 = vlaneseq
    %v3937 = vshrl.u32 %v3936, 7
    %v3938 = vsub.s32 %v3935, %v3937
    %v3939 = vrot.slane %v623, %v3938
    %v3941 = vunpack.c.l.s4 842150450
    %v3942 = vunpack.c.0.s8 %v3941
    %v3943 = vlaneseq
    %v3944 = vshrl.u32 %v3943, 7
    %v3945 = vsub.s32 %v3942, %v3944
    %v3946 = vrot.slane %v623, %v3945
    %v3948 = vunpack.c.l.s4 1414812756
    %v3949 = vunpack.c.0.s8 %v3948
    %v3950 = vlaneseq
    %v3951 = vshrl.u32 %v3950, 7
    %v3952 = vsub.s32 %v3949, %v3951
    %v3953 = vrot.slane %v623, %v3952
    %v3955 = vunpack.c.l.s4 1987475062
    %v3956 = vunpack.c.0.s8 %v3955
    %v3957 = vlaneseq
    %v3958 = vshrl.u32 %v3957, 7
    %v3959 = vsub.s32 %v3956, %v3958
    %v3960 = vrot.slane %v623, %v3959
    %v3962 = vunpack.c.l.s4 269488144
    %v3963 = vunpack.c.0.s8 %v3962
    %v3964 = vlaneseq
    %v3965 = vshrl.u32 %v3964, 7
    %v3966 = vsub.s32 %v3963, %v3965
    %v3967 = vrot.slane %v626, %v3966
    %v3969 = vunpack.c.l.s4 842150450
    %v3970 = vunpack.c.0.s8 %v3969
    %v3971 = vlaneseq
    %v3972 = vshrl.u32 %v3971, 7
    %v3973 = vsub.s32 %v3970, %v3972
    %v3974 = vrot.slane %v626, %v3973
    %v3976 = vunpack.c.l.s4 1414812756
    %v3977 = vunpack.c.0.s8 %v3976
    %v3978 = vlaneseq
    %v3979 = vshrl.u32 %v3978, 7
    %v3980 = vsub.s32 %v3977, %v3979
    %v3981 = vrot.slane %v626, %v3980
    %v3983 = vunpack.c.l.s4 1987475062
    %v3984 = vunpack.c.0.s8 %v3983
    %v3985 = vlaneseq
    %v3986 = vshrl.u32 %v3985, 7
    %v3987 = vsub.s32 %v3984, %v3986
    %v3988 = vrot.slane %v626, %v3987
    %v3990 = vunpack.c.l.s4 269488144
    %v3991 = vunpack.c.0.s8 %v3990
    %v3992 = vlaneseq
    %v3993 = vshrl.u32 %v3992, 7
    %v3994 = vsub.s32 %v3991, %v3993
    %v3995 = vrot.slane %v629, %v3994
    %v3997 = vunpack.c.l.s4 842150450
    %v3998 = vunpack.c.0.s8 %v3997
    %v3999 = vlaneseq
    %v4000 = vshrl.u32 %v3999, 7
    %v4001 = vsub.s32 %v3998, %v4000
    %v4002 = vrot.slane %v629, %v4001
    %v4004 = vunpack.c.l.s4 1414812756
    %v4005 = vunpack.c.0.s8 %v4004
    %v4006 = vlaneseq
    %v4007 = vshrl.u32 %v4006, 7
    %v4008 = vsub.s32 %v4005, %v4007
    %v4009 = vrot.slane %v629, %v4008
    %v4011 = vunpack.c.l.s4 1987475062
    %v4012 = vunpack.c.0.s8 %v4011
    %v4013 = vlaneseq
    %v4014 = vshrl.u32 %v4013, 7
    %v4015 = vsub.s32 %v4012, %v4014
    %v4016 = vrot.slane %v629, %v4015
    %v4018 = vunpack.c.l.s4 269488144
    %v4019 = vunpack.c.0.s8 %v4018
    %v4020 = vlaneseq
    %v4021 = vshrl.u32 %v4020, 7
    %v4022 = vsub.s32 %v4019, %v4021
    %v4023 = vrot.slane %v632, %v4022
    %v4025 = vunpack.c.l.s4 842150450
    %v4026 = vunpack.c.0.s8 %v4025
    %v4027 = vlaneseq
    %v4028 = vshrl.u32 %v4027, 7
    %v4029 = vsub.s32 %v4026, %v4028
    %v4030 = vrot.slane %v632, %v4029
    %v4032 = vunpack.c.l.s4 1414812756
    %v4033 = vunpack.c.0.s8 %v4032
    %v4034 = vlaneseq
    %v4035 = vshrl.u32 %v4034, 7
    %v4036 = vsub.s32 %v4033, %v4035
    %v4037 = vrot.slane %v632, %v4036
    %v4039 = vunpack.c.l.s4 1987475062
    %v4040 = vunpack.c.0.s8 %v4039
    %v4041 = vlaneseq
    %v4042 = vshrl.u32 %v4041, 7
    %v4043 = vsub.s32 %v4040, %v4042
    %v4044 = vrot.slane %v632, %v4043
    %v4046 = vunpack.c.l.s4 269488144
    %v4047 = vunpack.c.0.s8 %v4046
    %v4048 = vlaneseq
    %v4049 = vshrl.u32 %v4048, 7
    %v4050 = vsub.s32 %v4047, %v4049
    %v4051 = vrot.slane %v635, %v4050
    %v4053 = vunpack.c.l.s4 842150450
    %v4054 = vunpack.c.0.s8 %v4053
    %v4055 = vlaneseq
    %v4056 = vshrl.u32 %v4055, 7
    %v4057 = vsub.s32 %v4054, %v4056
    %v4058 = vrot.slane %v635, %v4057
    %v4060 = vunpack.c.l.s4 1414812756
    %v4061 = vunpack.c.0.s8 %v4060
    %v4062 = vlaneseq
    %v4063 = vshrl.u32 %v4062, 7
    %v4064 = vsub.s32 %v4061, %v4063
    %v4065 = vrot.slane %v635, %v4064
    %v4067 = vunpack.c.l.s4 1987475062
    %v4068 = vunpack.c.0.s8 %v4067
    %v4069 = vlaneseq
    %v4070 = vshrl.u32 %v4069, 7
    %v4071 = vsub.s32 %v4068, %v4070
    %v4072 = vrot.slane %v635, %v4071
    %v4074 = vunpack.c.l.s4 269488144
    %v4075 = vunpack.c.0.s8 %v4074
    %v4076 = vlaneseq
    %v4077 = vshrl.u32 %v4076, 7
    %v4078 = vsub.s32 %v4075, %v4077
    %v4079 = vrot.slane %v638, %v4078
    %v4081 = vunpack.c.l.s4 842150450
    %v4082 = vunpack.c.0.s8 %v4081
    %v4083 = vlaneseq
    %v4084 = vshrl.u32 %v4083, 7
    %v4085 = vsub.s32 %v4082, %v4084
    %v4086 = vrot.slane %v638, %v4085
    %v4088 = vunpack.c.l.s4 1414812756
    %v4089 = vunpack.c.0.s8 %v4088
    %v4090 = vlaneseq
    %v4091 = vshrl.u32 %v4090, 7
    %v4092 = vsub.s32 %v4089, %v4091
    %v4093 = vrot.slane %v638, %v4092
    %v4095 = vunpack.c.l.s4 1987475062
    %v4096 = vunpack.c.0.s8 %v4095
    %v4097 = vlaneseq
    %v4098 = vshrl.u32 %v4097, 7
    %v4099 = vsub.s32 %v4096, %v4098
    %v4100 = vrot.slane %v638, %v4099
    %v4102 = vunpack.c.l.s4 269488144
    %v4103 = vunpack.c.0.s8 %v4102
    %v4104 = vlaneseq
    %v4105 = vshrl.u32 %v4104, 7
    %v4106 = vsub.s32 %v4103, %v4105
    %v4107 = vrot.slane %v641, %v4106
    %v4109 = vunpack.c.l.s4 842150450
    %v4110 = vunpack.c.0.s8 %v4109
    %v4111 = vlaneseq
    %v4112 = vshrl.u32 %v4111, 7
    %v4113 = vsub.s32 %v4110, %v4112
    %v4114 = vrot.slane %v641, %v4113
    %v4116 = vunpack.c.l.s4 1414812756
    %v4117 = vunpack.c.0.s8 %v4116
    %v4118 = vlaneseq
    %v4119 = vshrl.u32 %v4118, 7
    %v4120 = vsub.s32 %v4117, %v4119
    %v4121 = vrot.slane %v641, %v4120
    %v4123 = vunpack.c.l.s4 1987475062
    %v4124 = vunpack.c.0.s8 %v4123
    %v4125 = vlaneseq
    %v4126 = vshrl.u32 %v4125, 7
    %v4127 = vsub.s32 %v4124, %v4126
    %v4128 = vrot.slane %v641, %v4127
    %v4130 = vunpack.c.l.s4 269488144
    %v4131 = vunpack.c.0.s8 %v4130
    %v4132 = vlaneseq
    %v4133 = vshrl.u32 %v4132, 7
    %v4134 = vsub.s32 %v4131, %v4133
    %v4135 = vrot.slane %v644, %v4134
    %v4137 = vunpack.c.l.s4 842150450
    %v4138 = vunpack.c.0.s8 %v4137
    %v4139 = vlaneseq
    %v4140 = vshrl.u32 %v4139, 7
    %v4141 = vsub.s32 %v4138, %v4140
    %v4142 = vrot.slane %v644, %v4141
    %v4144 = vunpack.c.l.s4 1414812756
    %v4145 = vunpack.c.0.s8 %v4144
    %v4146 = vlaneseq
    %v4147 = vshrl.u32 %v4146, 7
    %v4148 = vsub.s32 %v4145, %v4147
    %v4149 = vrot.slane %v644, %v4148
    %v4151 = vunpack.c.l.s4 1987475062
    %v4152 = vunpack.c.0.s8 %v4151
    %v4153 = vlaneseq
    %v4154 = vshrl.u32 %v4153, 7
    %v4155 = vsub.s32 %v4152, %v4154
    %v4156 = vrot.slane %v644, %v4155
    %v4158 = vunpack.c.l.s4 269488144
    %v4159 = vunpack.c.0.s8 %v4158
    %v4160 = vlaneseq
    %v4161 = vshrl.u32 %v4160, 7
    %v4162 = vsub.s32 %v4159, %v4161
    %v4163 = vrot.slane %v647, %v4162
    %v4165 = vunpack.c.l.s4 842150450
    %v4166 = vunpack.c.0.s8 %v4165
    %v4167 = vlaneseq
    %v4168 = vshrl.u32 %v4167, 7
    %v4169 = vsub.s32 %v4166, %v4168
    %v4170 = vrot.slane %v647, %v4169
    %v4172 = vunpack.c.l.s4 1414812756
    %v4173 = vunpack.c.0.s8 %v4172
    %v4174 = vlaneseq
    %v4175 = vshrl.u32 %v4174, 7
    %v4176 = vsub.s32 %v4173, %v4175
    %v4177 = vrot.slane %v647, %v4176
    %v4179 = vunpack.c.l.s4 1987475062
    %v4180 = vunpack.c.0.s8 %v4179
    %v4181 = vlaneseq
    %v4182 = vshrl.u32 %v4181, 7
    %v4183 = vsub.s32 %v4180, %v4182
    %v4184 = vrot.slane %v647, %v4183
    %v4186 = vunpack.c.l.s4 269488144
    %v4187 = vunpack.c.0.s8 %v4186
    %v4188 = vlaneseq
    %v4189 = vshrl.u32 %v4188, 7
    %v4190 = vsub.s32 %v4187, %v4189
    %v4191 = vrot.slane %v650, %v4190
    %v4193 = vunpack.c.l.s4 842150450
    %v4194 = vunpack.c.0.s8 %v4193
    %v4195 = vlaneseq
    %v4196 = vshrl.u32 %v4195, 7
    %v4197 = vsub.s32 %v4194, %v4196
    %v4198 = vrot.slane %v650, %v4197
    %v4200 = vunpack.c.l.s4 1414812756
    %v4201 = vunpack.c.0.s8 %v4200
    %v4202 = vlaneseq
    %v4203 = vshrl.u32 %v4202, 7
    %v4204 = vsub.s32 %v4201, %v4203
    %v4205 = vrot.slane %v650, %v4204
    %v4207 = vunpack.c.l.s4 1987475062
    %v4208 = vunpack.c.0.s8 %v4207
    %v4209 = vlaneseq
    %v4210 = vshrl.u32 %v4209, 7
    %v4211 = vsub.s32 %v4208, %v4210
    %v4212 = vrot.slane %v650, %v4211
    %v4214 = vunpack.c.l.s4 269488144
    %v4215 = vunpack.c.0.s8 %v4214
    %v4216 = vlaneseq
    %v4217 = vshrl.u32 %v4216, 7
    %v4218 = vsub.s32 %v4215, %v4217
    %v4219 = vrot.slane %v653, %v4218
    %v4221 = vunpack.c.l.s4 842150450
    %v4222 = vunpack.c.0.s8 %v4221
    %v4223 = vlaneseq
    %v4224 = vshrl.u32 %v4223, 7
    %v4225 = vsub.s32 %v4222, %v4224
    %v4226 = vrot.slane %v653, %v4225
    %v4228 = vunpack.c.l.s4 1414812756
    %v4229 = vunpack.c.0.s8 %v4228
    %v4230 = vlaneseq
    %v4231 = vshrl.u32 %v4230, 7
    %v4232 = vsub.s32 %v4229, %v4231
    %v4233 = vrot.slane %v653, %v4232
    %v4235 = vunpack.c.l.s4 1987475062
    %v4236 = vunpack.c.0.s8 %v4235
    %v4237 = vlaneseq
    %v4238 = vshrl.u32 %v4237, 7
    %v4239 = vsub.s32 %v4236, %v4238
    %v4240 = vrot.slane %v653, %v4239
    %v4242 = vunpack.c.l.s4 269488144
    %v4243 = vunpack.c.0.s8 %v4242
    %v4244 = vlaneseq
    %v4245 = vshrl.u32 %v4244, 7
    %v4246 = vsub.s32 %v4243, %v4245
    %v4247 = vrot.slane %v656, %v4246
    %v4249 = vunpack.c.l.s4 842150450
    %v4250 = vunpack.c.0.s8 %v4249
    %v4251 = vlaneseq
    %v4252 = vshrl.u32 %v4251, 7
    %v4253 = vsub.s32 %v4250, %v4252
    %v4254 = vrot.slane %v656, %v4253
    %v4256 = vunpack.c.l.s4 1414812756
    %v4257 = vunpack.c.0.s8 %v4256
    %v4258 = vlaneseq
    %v4259 = vshrl.u32 %v4258, 7
    %v4260 = vsub.s32 %v4257, %v4259
    %v4261 = vrot.slane %v656, %v4260
    %v4263 = vunpack.c.l.s4 1987475062
    %v4264 = vunpack.c.0.s8 %v4263
    %v4265 = vlaneseq
    %v4266 = vshrl.u32 %v4265, 7
    %v4267 = vsub.s32 %v4264, %v4266
    %v4268 = vrot.slane %v656, %v4267
    %v4270 = vunpack.c.l.s4 269488144
    %v4271 = vunpack.c.0.s8 %v4270
    %v4272 = vlaneseq
    %v4273 = vshrl.u32 %v4272, 7
    %v4274 = vsub.s32 %v4271, %v4273
    %v4275 = vrot.slane %v659, %v4274
    %v4277 = vunpack.c.l.s4 842150450
    %v4278 = vunpack.c.0.s8 %v4277
    %v4279 = vlaneseq
    %v4280 = vshrl.u32 %v4279, 7
    %v4281 = vsub.s32 %v4278, %v4280
    %v4282 = vrot.slane %v659, %v4281
    %v4284 = vunpack.c.l.s4 1414812756
    %v4285 = vunpack.c.0.s8 %v4284
    %v4286 = vlaneseq
    %v4287 = vshrl.u32 %v4286, 7
    %v4288 = vsub.s32 %v4285, %v4287
    %v4289 = vrot.slane %v659, %v4288
    %v4291 = vunpack.c.l.s4 1987475062
    %v4292 = vunpack.c.0.s8 %v4291
    %v4293 = vlaneseq
    %v4294 = vshrl.u32 %v4293, 7
    %v4295 = vsub.s32 %v4292, %v4294
    %v4296 = vrot.slane %v659, %v4295
    %v4298 = vunpack.c.l.s4 269488144
    %v4299 = vunpack.c.0.s8 %v4298
    %v4300 = vlaneseq
    %v4301 = vshrl.u32 %v4300, 7
    %v4302 = vsub.s32 %v4299, %v4301
    %v4303 = vrot.slane %v662, %v4302
    %v4305 = vunpack.c.l.s4 842150450
    %v4306 = vunpack.c.0.s8 %v4305
    %v4307 = vlaneseq
    %v4308 = vshrl.u32 %v4307, 7
    %v4309 = vsub.s32 %v4306, %v4308
    %v4310 = vrot.slane %v662, %v4309
    %v4312 = vunpack.c.l.s4 1414812756
    %v4313 = vunpack.c.0.s8 %v4312
    %v4314 = vlaneseq
    %v4315 = vshrl.u32 %v4314, 7
    %v4316 = vsub.s32 %v4313, %v4315
    %v4317 = vrot.slane %v662, %v4316
    %v4319 = vunpack.c.l.s4 1987475062
    %v4320 = vunpack.c.0.s8 %v4319
    %v4321 = vlaneseq
    %v4322 = vshrl.u32 %v4321, 7
    %v4323 = vsub.s32 %v4320, %v4322
    %v4324 = vrot.slane %v662, %v4323
    %v4326 = vunpack.c.l.s4 269488144
    %v4327 = vunpack.c.0.s8 %v4326
    %v4328 = vlaneseq
    %v4329 = vshrl.u32 %v4328, 7
    %v4330 = vsub.s32 %v4327, %v4329
    %v4331 = vrot.slane %v665, %v4330
    %v4333 = vunpack.c.l.s4 842150450
    %v4334 = vunpack.c.0.s8 %v4333
    %v4335 = vlaneseq
    %v4336 = vshrl.u32 %v4335, 7
    %v4337 = vsub.s32 %v4334, %v4336
    %v4338 = vrot.slane %v665, %v4337
    %v4340 = vunpack.c.l.s4 1414812756
    %v4341 = vunpack.c.0.s8 %v4340
    %v4342 = vlaneseq
    %v4343 = vshrl.u32 %v4342, 7
    %v4344 = vsub.s32 %v4341, %v4343
    %v4345 = vrot.slane %v665, %v4344
    %v4347 = vunpack.c.l.s4 1987475062
    %v4348 = vunpack.c.0.s8 %v4347
    %v4349 = vlaneseq
    %v4350 = vshrl.u32 %v4349, 7
    %v4351 = vsub.s32 %v4348, %v4350
    %v4352 = vrot.slane %v665, %v4351
    %v4354 = vunpack.c.l.s4 269488144
    %v4355 = vunpack.c.0.s8 %v4354
    %v4356 = vlaneseq
    %v4357 = vshrl.u32 %v4356, 7
    %v4358 = vsub.s32 %v4355, %v4357
    %v4359 = vrot.slane %v668, %v4358
    %v4361 = vunpack.c.l.s4 842150450
    %v4362 = vunpack.c.0.s8 %v4361
    %v4363 = vlaneseq
    %v4364 = vshrl.u32 %v4363, 7
    %v4365 = vsub.s32 %v4362, %v4364
    %v4366 = vrot.slane %v668, %v4365
    %v4368 = vunpack.c.l.s4 1414812756
    %v4369 = vunpack.c.0.s8 %v4368
    %v4370 = vlaneseq
    %v4371 = vshrl.u32 %v4370, 7
    %v4372 = vsub.s32 %v4369, %v4371
    %v4373 = vrot.slane %v668, %v4372
    %v4375 = vunpack.c.l.s4 1987475062
    %v4376 = vunpack.c.0.s8 %v4375
    %v4377 = vlaneseq
    %v4378 = vshrl.u32 %v4377, 7
    %v4379 = vsub.s32 %v4376, %v4378
    %v4380 = vrot.slane %v668, %v4379
    %v4381 = vcombine.low %v803, %v810
    %v4382 = vcombine.low %v817, %v824
    %v4384 = vunpack.c.l.s4 1983009808
    %v4385 = vunpack.c.0.s8 %v4384
    %v4386 = vlaneseq
    %v4387 = vshrl.u32 %v4386, 7
    %v4388 = vsub.s32 %v4385, %v4387
    %v4389 = vrot.slane %v4381, %v4388
    %v4391 = vunpack.c.l.s4 1983009808
    %v4392 = vunpack.c.0.s8 %v4391
    %v4393 = vlaneseq
    %v4394 = vshrl.u32 %v4393, 7
    %v4395 = vsub.s32 %v4392, %v4394
    %v4396 = vrot.slane %v4382, %v4395
    %v4397 = vcombine.low %v4389, %v4396
    %v4398 = vcombine.low %v831, %v838
    %v4399 = vcombine.low %v845, %v852
    %v4401 = vunpack.c.l.s4 1983009808
    %v4402 = vunpack.c.0.s8 %v4401
    %v4403 = vlaneseq
    %v4404 = vshrl.u32 %v4403, 7
    %v4405 = vsub.s32 %v4402, %v4404
    %v4406 = vrot.slane %v4398, %v4405
    %v4408 = vunpack.c.l.s4 1983009808
    %v4409 = vunpack.c.0.s8 %v4408
    %v4410 = vlaneseq
    %v4411 = vshrl.u32 %v4410, 7
    %v4412 = vsub.s32 %v4409, %v4411
    %v4413 = vrot.slane %v4399, %v4412
    %v4414 = vcombine.low %v4406, %v4413
    %v4415 = vcombine.low %v859, %v866
    %v4416 = vcombine.low %v873, %v880
    %v4418 = vunpack.c.l.s4 1983009808
    %v4419 = vunpack.c.0.s8 %v4418
    %v4420 = vlaneseq
    %v4421 = vshrl.u32 %v4420, 7
    %v4422 = vsub.s32 %v4419, %v4421
    %v4423 = vrot.slane %v4415, %v4422
    %v4425 = vunpack.c.l.s4 1983009808
    %v4426 = vunpack.c.0.s8 %v4425
    %v4427 = vlaneseq
    %v4428 = vshrl.u32 %v4427, 7
    %v4429 = vsub.s32 %v4426, %v4428
    %v4430 = vrot.slane %v4416, %v4429
    %v4431 = vcombine.low %v4423, %v4430
    %v4432 = vcombine.low %v887, %v894
    %v4433 = vcombine.low %v901, %v908
    %v4435 = vunpack.c.l.s4 1983009808
    %v4436 = vunpack.c.0.s8 %v4435
    %v4437 = vlaneseq
    %v4438 = vshrl.u32 %v4437, 7
    %v4439 = vsub.s32 %v4436, %v4438
    %v4440 = vrot.slane %v4432, %v4439
    %v4442 = vunpack.c.l.s4 1983009808
    %v4443 = vunpack.c.0.s8 %v4442
    %v4444 = vlaneseq
    %v4445 = vshrl.u32 %v4444, 7
    %v4446 = vsub.s32 %v4443, %v4445
    %v4447 = vrot.slane %v4433, %v4446
    %v4448 = vcombine.low %v4440, %v4447
    %v4449 = vcombine.low %v915, %v922
    %v4450 = vcombine.low %v929, %v936
    %v4452 = vunpack.c.l.s4 1983009808
    %v4453 = vunpack.c.0.s8 %v4452
    %v4454 = vlaneseq
    %v4455 = vshrl.u32 %v4454, 7
    %v4456 = vsub.s32 %v4453, %v4455
    %v4457 = vrot.slane %v4449, %v4456
    %v4459 = vunpack.c.l.s4 1983009808
    %v4460 = vunpack.c.0.s8 %v4459
    %v4461 = vlaneseq
    %v4462 = vshrl.u32 %v4461, 7
    %v4463 = vsub.s32 %v4460, %v4462
    %v4464 = vrot.slane %v4450, %v4463
    %v4465 = vcombine.low %v4457, %v4464
    %v4466 = vcombine.low %v943, %v950
    %v4467 = vcombine.low %v957, %v964
    %v4469 = vunpack.c.l.s4 1983009808
    %v4470 = vunpack.c.0.s8 %v4469
    %v4471 = vlaneseq
    %v4472 = vshrl.u32 %v4471, 7
    %v4473 = vsub.s32 %v4470, %v4472
    %v4474 = vrot.slane %v4466, %v4473
    %v4476 = vunpack.c.l.s4 1983009808
    %v4477 = vunpack.c.0.s8 %v4476
    %v4478 = vlaneseq
    %v4479 = vshrl.u32 %v4478, 7
    %v4480 = vsub.s32 %v4477, %v4479
    %v4481 = vrot.slane %v4467, %v4480
    %v4482 = vcombine.low %v4474, %v4481
    %v4483 = vcombine.low %v971, %v978
    %v4484 = vcombine.low %v985, %v992
    %v4486 = vunpack.c.l.s4 1983009808
    %v4487 = vunpack.c.0.s8 %v4486
    %v4488 = vlaneseq
    %v4489 = vshrl.u32 %v4488, 7
    %v4490 = vsub.s32 %v4487, %v4489
    %v4491 = vrot.slane %v4483, %v4490
    %v4493 = vunpack.c.l.s4 1983009808
    %v4494 = vunpack.c.0.s8 %v4493
    %v4495 = vlaneseq
    %v4496 = vshrl.u32 %v4495, 7
    %v4497 = vsub.s32 %v4494, %v4496
    %v4498 = vrot.slane %v4484, %v4497
    %v4499 = vcombine.low %v4491, %v4498
    %v4500 = vcombine.low %v999, %v1006
    %v4501 = vcombine.low %v1013, %v1020
    %v4503 = vunpack.c.l.s4 1983009808
    %v4504 = vunpack.c.0.s8 %v4503
    %v4505 = vlaneseq
    %v4506 = vshrl.u32 %v4505, 7
    %v4507 = vsub.s32 %v4504, %v4506
    %v4508 = vrot.slane %v4500, %v4507
    %v4510 = vunpack.c.l.s4 1983009808
    %v4511 = vunpack.c.0.s8 %v4510
    %v4512 = vlaneseq
    %v4513 = vshrl.u32 %v4512, 7
    %v4514 = vsub.s32 %v4511, %v4513
    %v4515 = vrot.slane %v4501, %v4514
    %v4516 = vcombine.low %v4508, %v4515
    %v4517 = vcombine.low %v1027, %v1034
    %v4518 = vcombine.low %v1041, %v1048
    %v4520 = vunpack.c.l.s4 1983009808
    %v4521 = vunpack.c.0.s8 %v4520
    %v4522 = vlaneseq
    %v4523 = vshrl.u32 %v4522, 7
    %v4524 = vsub.s32 %v4521, %v4523
    %v4525 = vrot.slane %v4517, %v4524
    %v4527 = vunpack.c.l.s4 1983009808
    %v4528 = vunpack.c.0.s8 %v4527
    %v4529 = vlaneseq
    %v4530 = vshrl.u32 %v4529, 7
    %v4531 = vsub.s32 %v4528, %v4530
    %v4532 = vrot.slane %v4518, %v4531
    %v4533 = vcombine.low %v4525, %v4532
    %v4534 = vcombine.low %v1055, %v1062
    %v4535 = vcombine.low %v1069, %v1076
    %v4537 = vunpack.c.l.s4 1983009808
    %v4538 = vunpack.c.0.s8 %v4537
    %v4539 = vlaneseq
    %v4540 = vshrl.u32 %v4539, 7
    %v4541 = vsub.s32 %v4538, %v4540
    %v4542 = vrot.slane %v4534, %v4541
    %v4544 = vunpack.c.l.s4 1983009808
    %v4545 = vunpack.c.0.s8 %v4544
    %v4546 = vlaneseq
    %v4547 = vshrl.u32 %v4546, 7
    %v4548 = vsub.s32 %v4545, %v4547
    %v4549 = vrot.slane %v4535, %v4548
    %v4550 = vcombine.low %v4542, %v4549
    %v4551 = vcombine.low %v1083, %v1090
    %v4552 = vcombine.low %v1097, %v1104
    %v4554 = vunpack.c.l.s4 1983009808
    %v4555 = vunpack.c.0.s8 %v4554
    %v4556 = vlaneseq
    %v4557 = vshrl.u32 %v4556, 7
    %v4558 = vsub.s32 %v4555, %v4557
    %v4559 = vrot.slane %v4551, %v4558
    %v4561 = vunpack.c.l.s4 1983009808
    %v4562 = vunpack.c.0.s8 %v4561
    %v4563 = vlaneseq
    %v4564 = vshrl.u32 %v4563, 7
    %v4565 = vsub.s32 %v4562, %v4564
    %v4566 = vrot.slane %v4552, %v4565
    %v4567 = vcombine.low %v4559, %v4566
    %v4568 = vcombine.low %v1111, %v1118
    %v4569 = vcombine.low %v1125, %v1132
    %v4571 = vunpack.c.l.s4 1983009808
    %v4572 = vunpack.c.0.s8 %v4571
    %v4573 = vlaneseq
    %v4574 = vshrl.u32 %v4573, 7
    %v4575 = vsub.s32 %v4572, %v4574
    %v4576 = vrot.slane %v4568, %v4575
    %v4578 = vunpack.c.l.s4 1983009808
    %v4579 = vunpack.c.0.s8 %v4578
    %v4580 = vlaneseq
    %v4581 = vshrl.u32 %v4580, 7
    %v4582 = vsub.s32 %v4579, %v4581
    %v4583 = vrot.slane %v4569, %v4582
    %v4584 = vcombine.low %v4576, %v4583
    %v4585 = vcombine.low %v1139, %v1146
    %v4586 = vcombine.low %v1153, %v1160
    %v4588 = vunpack.c.l.s4 1983009808
    %v4589 = vunpack.c.0.s8 %v4588
    %v4590 = vlaneseq
    %v4591 = vshrl.u32 %v4590, 7
    %v4592 = vsub.s32 %v4589, %v4591
    %v4593 = vrot.slane %v4585, %v4592
    %v4595 = vunpack.c.l.s4 1983009808
    %v4596 = vunpack.c.0.s8 %v4595
    %v4597 = vlaneseq
    %v4598 = vshrl.u32 %v4597, 7
    %v4599 = vsub.s32 %v4596, %v4598
    %v4600 = vrot.slane %v4586, %v4599
    %v4601 = vcombine.low %v4593, %v4600
    %v4602 = vcombine.low %v1167, %v1174
    %v4603 = vcombine.low %v1181, %v1188
    %v4605 = vunpack.c.l.s4 1983009808
    %v4606 = vunpack.c.0.s8 %v4605
    %v4607 = vlaneseq
    %v4608 = vshrl.u32 %v4607, 7
    %v4609 = vsub.s32 %v4606, %v4608
    %v4610 = vrot.slane %v4602, %v4609
    %v4612 = vunpack.c.l.s4 1983009808
    %v4613 = vunpack.c.0.s8 %v4612
    %v4614 = vlaneseq
    %v4615 = vshrl.u32 %v4614, 7
    %v4616 = vsub.s32 %v4613, %v4615
    %v4617 = vrot.slane %v4603, %v4616
    %v4618 = vcombine.low %v4610, %v4617
    %v4619 = vcombine.low %v1195, %v1202
    %v4620 = vcombine.low %v1209, %v1216
    %v4622 = vunpack.c.l.s4 1983009808
    %v4623 = vunpack.c.0.s8 %v4622
    %v4624 = vlaneseq
    %v4625 = vshrl.u32 %v4624, 7
    %v4626 = vsub.s32 %v4623, %v4625
    %v4627 = vrot.slane %v4619, %v4626
    %v4629 = vunpack.c.l.s4 1983009808
    %v4630 = vunpack.c.0.s8 %v4629
    %v4631 = vlaneseq
    %v4632 = vshrl.u32 %v4631, 7
    %v4633 = vsub.s32 %v4630, %v4632
    %v4634 = vrot.slane %v4620, %v4633
    %v4635 = vcombine.low %v4627, %v4634
    %v4636 = vcombine.low %v1223, %v1230
    %v4637 = vcombine.low %v1237, %v1244
    %v4639 = vunpack.c.l.s4 1983009808
    %v4640 = vunpack.c.0.s8 %v4639
    %v4641 = vlaneseq
    %v4642 = vshrl.u32 %v4641, 7
    %v4643 = vsub.s32 %v4640, %v4642
    %v4644 = vrot.slane %v4636, %v4643
    %v4646 = vunpack.c.l.s4 1983009808
    %v4647 = vunpack.c.0.s8 %v4646
    %v4648 = vlaneseq
    %v4649 = vshrl.u32 %v4648, 7
    %v4650 = vsub.s32 %v4647, %v4649
    %v4651 = vrot.slane %v4637, %v4650
    %v4652 = vcombine.low %v4644, %v4651
    %v4653 = vcombine.low %v1251, %v1258
    %v4654 = vcombine.low %v1265, %v1272
    %v4656 = vunpack.c.l.s4 1983009808
    %v4657 = vunpack.c.0.s8 %v4656
    %v4658 = vlaneseq
    %v4659 = vshrl.u32 %v4658, 7
    %v4660 = vsub.s32 %v4657, %v4659
    %v4661 = vrot.slane %v4653, %v4660
    %v4663 = vunpack.c.l.s4 1983009808
    %v4664 = vunpack.c.0.s8 %v4663
    %v4665 = vlaneseq
    %v4666 = vshrl.u32 %v4665, 7
    %v4667 = vsub.s32 %v4664, %v4666
    %v4668 = vrot.slane %v4654, %v4667
    %v4669 = vcombine.low %v4661, %v4668
    %v4670 = vcombine.low %v1279, %v1286
    %v4671 = vcombine.low %v1293, %v1300
    %v4673 = vunpack.c.l.s4 1983009808
    %v4674 = vunpack.c.0.s8 %v4673
    %v4675 = vlaneseq
    %v4676 = vshrl.u32 %v4675, 7
    %v4677 = vsub.s32 %v4674, %v4676
    %v4678 = vrot.slane %v4670, %v4677
    %v4680 = vunpack.c.l.s4 1983009808
    %v4681 = vunpack.c.0.s8 %v4680
    %v4682 = vlaneseq
    %v4683 = vshrl.u32 %v4682, 7
    %v4684 = vsub.s32 %v4681, %v4683
    %v4685 = vrot.slane %v4671, %v4684
    %v4686 = vcombine.low %v4678, %v4685
    %v4687 = vcombine.low %v1307, %v1314
    %v4688 = vcombine.low %v1321, %v1328
    %v4690 = vunpack.c.l.s4 1983009808
    %v4691 = vunpack.c.0.s8 %v4690
    %v4692 = vlaneseq
    %v4693 = vshrl.u32 %v4692, 7
    %v4694 = vsub.s32 %v4691, %v4693
    %v4695 = vrot.slane %v4687, %v4694
    %v4697 = vunpack.c.l.s4 1983009808
    %v4698 = vunpack.c.0.s8 %v4697
    %v4699 = vlaneseq
    %v4700 = vshrl.u32 %v4699, 7
    %v4701 = vsub.s32 %v4698, %v4700
    %v4702 = vrot.slane %v4688, %v4701
    %v4703 = vcombine.low %v4695, %v4702
    %v4704 = vcombine.low %v1335, %v1342
    %v4705 = vcombine.low %v1349, %v1356
    %v4707 = vunpack.c.l.s4 1983009808
    %v4708 = vunpack.c.0.s8 %v4707
    %v4709 = vlaneseq
    %v4710 = vshrl.u32 %v4709, 7
    %v4711 = vsub.s32 %v4708, %v4710
    %v4712 = vrot.slane %v4704, %v4711
    %v4714 = vunpack.c.l.s4 1983009808
    %v4715 = vunpack.c.0.s8 %v4714
    %v4716 = vlaneseq
    %v4717 = vshrl.u32 %v4716, 7
    %v4718 = vsub.s32 %v4715, %v4717
    %v4719 = vrot.slane %v4705, %v4718
    %v4720 = vcombine.low %v4712, %v4719
    %v4721 = vcombine.low %v1363, %v1370
    %v4722 = vcombine.low %v1377, %v1384
    %v4724 = vunpack.c.l.s4 1983009808
    %v4725 = vunpack.c.0.s8 %v4724
    %v4726 = vlaneseq
    %v4727 = vshrl.u32 %v4726, 7
    %v4728 = vsub.s32 %v4725, %v4727
    %v4729 = vrot.slane %v4721, %v4728
    %v4731 = vunpack.c.l.s4 1983009808
    %v4732 = vunpack.c.0.s8 %v4731
    %v4733 = vlaneseq
    %v4734 = vshrl.u32 %v4733, 7
    %v4735 = vsub.s32 %v4732, %v4734
    %v4736 = vrot.slane %v4722, %v4735
    %v4737 = vcombine.low %v4729, %v4736
    %v4738 = vcombine.low %v1391, %v1398
    %v4739 = vcombine.low %v1405, %v1412
    %v4741 = vunpack.c.l.s4 1983009808
    %v4742 = vunpack.c.0.s8 %v4741
    %v4743 = vlaneseq
    %v4744 = vshrl.u32 %v4743, 7
    %v4745 = vsub.s32 %v4742, %v4744
    %v4746 = vrot.slane %v4738, %v4745
    %v4748 = vunpack.c.l.s4 1983009808
    %v4749 = vunpack.c.0.s8 %v4748
    %v4750 = vlaneseq
    %v4751 = vshrl.u32 %v4750, 7
    %v4752 = vsub.s32 %v4749, %v4751
    %v4753 = vrot.slane %v4739, %v4752
    %v4754 = vcombine.low %v4746, %v4753
    %v4755 = vcombine.low %v1419, %v1426
    %v4756 = vcombine.low %v1433, %v1440
    %v4758 = vunpack.c.l.s4 1983009808
    %v4759 = vunpack.c.0.s8 %v4758
    %v4760 = vlaneseq
    %v4761 = vshrl.u32 %v4760, 7
    %v4762 = vsub.s32 %v4759, %v4761
    %v4763 = vrot.slane %v4755, %v4762
    %v4765 = vunpack.c.l.s4 1983009808
    %v4766 = vunpack.c.0.s8 %v4765
    %v4767 = vlaneseq
    %v4768 = vshrl.u32 %v4767, 7
    %v4769 = vsub.s32 %v4766, %v4768
    %v4770 = vrot.slane %v4756, %v4769
    %v4771 = vcombine.low %v4763, %v4770
    %v4772 = vcombine.low %v1447, %v1454
    %v4773 = vcombine.low %v1461, %v1468
    %v4775 = vunpack.c.l.s4 1983009808
    %v4776 = vunpack.c.0.s8 %v4775
    %v4777 = vlaneseq
    %v4778 = vshrl.u32 %v4777, 7
    %v4779 = vsub.s32 %v4776, %v4778
    %v4780 = vrot.slane %v4772, %v4779
    %v4782 = vunpack.c.l.s4 1983009808
    %v4783 = vunpack.c.0.s8 %v4782
    %v4784 = vlaneseq
    %v4785 = vshrl.u32 %v4784, 7
    %v4786 = vsub.s32 %v4783, %v4785
    %v4787 = vrot.slane %v4773, %v4786
    %v4788 = vcombine.low %v4780, %v4787
    %v4789 = vcombine.low %v1475, %v1482
    %v4790 = vcombine.low %v1489, %v1496
    %v4792 = vunpack.c.l.s4 1983009808
    %v4793 = vunpack.c.0.s8 %v4792
    %v4794 = vlaneseq
    %v4795 = vshrl.u32 %v4794, 7
    %v4796 = vsub.s32 %v4793, %v4795
    %v4797 = vrot.slane %v4789, %v4796
    %v4799 = vunpack.c.l.s4 1983009808
    %v4800 = vunpack.c.0.s8 %v4799
    %v4801 = vlaneseq
    %v4802 = vshrl.u32 %v4801, 7
    %v4803 = vsub.s32 %v4800, %v4802
    %v4804 = vrot.slane %v4790, %v4803
    %v4805 = vcombine.low %v4797, %v4804
    %v4806 = vcombine.low %v1503, %v1510
    %v4807 = vcombine.low %v1517, %v1524
    %v4809 = vunpack.c.l.s4 1983009808
    %v4810 = vunpack.c.0.s8 %v4809
    %v4811 = vlaneseq
    %v4812 = vshrl.u32 %v4811, 7
    %v4813 = vsub.s32 %v4810, %v4812
    %v4814 = vrot.slane %v4806, %v4813
    %v4816 = vunpack.c.l.s4 1983009808
    %v4817 = vunpack.c.0.s8 %v4816
    %v4818 = vlaneseq
    %v4819 = vshrl.u32 %v4818, 7
    %v4820 = vsub.s32 %v4817, %v4819
    %v4821 = vrot.slane %v4807, %v4820
    %v4822 = vcombine.low %v4814, %v4821
    %v4823 = vcombine.low %v1531, %v1538
    %v4824 = vcombine.low %v1545, %v1552
    %v4826 = vunpack.c.l.s4 1983009808
    %v4827 = vunpack.c.0.s8 %v4826
    %v4828 = vlaneseq
    %v4829 = vshrl.u32 %v4828, 7
    %v4830 = vsub.s32 %v4827, %v4829
    %v4831 = vrot.slane %v4823, %v4830
    %v4833 = vunpack.c.l.s4 1983009808
    %v4834 = vunpack.c.0.s8 %v4833
    %v4835 = vlaneseq
    %v4836 = vshrl.u32 %v4835, 7
    %v4837 = vsub.s32 %v4834, %v4836
    %v4838 = vrot.slane %v4824, %v4837
    %v4839 = vcombine.low %v4831, %v4838
    %v4840 = vcombine.low %v1559, %v1566
    %v4841 = vcombine.low %v1573, %v1580
    %v4843 = vunpack.c.l.s4 1983009808
    %v4844 = vunpack.c.0.s8 %v4843
    %v4845 = vlaneseq
    %v4846 = vshrl.u32 %v4845, 7
    %v4847 = vsub.s32 %v4844, %v4846
    %v4848 = vrot.slane %v4840, %v4847
    %v4850 = vunpack.c.l.s4 1983009808
    %v4851 = vunpack.c.0.s8 %v4850
    %v4852 = vlaneseq
    %v4853 = vshrl.u32 %v4852, 7
    %v4854 = vsub.s32 %v4851, %v4853
    %v4855 = vrot.slane %v4841, %v4854
    %v4856 = vcombine.low %v4848, %v4855
    %v4857 = vcombine.low %v1587, %v1594
    %v4858 = vcombine.low %v1601, %v1608
    %v4860 = vunpack.c.l.s4 1983009808
    %v4861 = vunpack.c.0.s8 %v4860
    %v4862 = vlaneseq
    %v4863 = vshrl.u32 %v4862, 7
    %v4864 = vsub.s32 %v4861, %v4863
    %v4865 = vrot.slane %v4857, %v4864
    %v4867 = vunpack.c.l.s4 1983009808
    %v4868 = vunpack.c.0.s8 %v4867
    %v4869 = vlaneseq
    %v4870 = vshrl.u32 %v4869, 7
    %v4871 = vsub.s32 %v4868, %v4870
    %v4872 = vrot.slane %v4858, %v4871
    %v4873 = vcombine.low %v4865, %v4872
    %v4874 = vcombine.low %v1615, %v1622
    %v4875 = vcombine.low %v1629, %v1636
    %v4877 = vunpack.c.l.s4 1983009808
    %v4878 = vunpack.c.0.s8 %v4877
    %v4879 = vlaneseq
    %v4880 = vshrl.u32 %v4879, 7
    %v4881 = vsub.s32 %v4878, %v4880
    %v4882 = vrot.slane %v4874, %v4881
    %v4884 = vunpack.c.l.s4 1983009808
    %v4885 = vunpack.c.0.s8 %v4884
    %v4886 = vlaneseq
    %v4887 = vshrl.u32 %v4886, 7
    %v4888 = vsub.s32 %v4885, %v4887
    %v4889 = vrot.slane %v4875, %v4888
    %v4890 = vcombine.low %v4882, %v4889
    %v4891 = vcombine.low %v1643, %v1650
    %v4892 = vcombine.low %v1657, %v1664
    %v4894 = vunpack.c.l.s4 1983009808
    %v4895 = vunpack.c.0.s8 %v4894
    %v4896 = vlaneseq
    %v4897 = vshrl.u32 %v4896, 7
    %v4898 = vsub.s32 %v4895, %v4897
    %v4899 = vrot.slane %v4891, %v4898
    %v4901 = vunpack.c.l.s4 1983009808
    %v4902 = vunpack.c.0.s8 %v4901
    %v4903 = vlaneseq
    %v4904 = vshrl.u32 %v4903, 7
    %v4905 = vsub.s32 %v4902, %v4904
    %v4906 = vrot.slane %v4892, %v4905
    %v4907 = vcombine.low %v4899, %v4906
    %v4908 = vcombine.low %v1671, %v1678
    %v4909 = vcombine.low %v1685, %v1692
    %v4911 = vunpack.c.l.s4 1983009808
    %v4912 = vunpack.c.0.s8 %v4911
    %v4913 = vlaneseq
    %v4914 = vshrl.u32 %v4913, 7
    %v4915 = vsub.s32 %v4912, %v4914
    %v4916 = vrot.slane %v4908, %v4915
    %v4918 = vunpack.c.l.s4 1983009808
    %v4919 = vunpack.c.0.s8 %v4918
    %v4920 = vlaneseq
    %v4921 = vshrl.u32 %v4920, 7
    %v4922 = vsub.s32 %v4919, %v4921
    %v4923 = vrot.slane %v4909, %v4922
    %v4924 = vcombine.low %v4916, %v4923
    %v4925 = vcombine.low %v1699, %v1706
    %v4926 = vcombine.low %v1713, %v1720
    %v4928 = vunpack.c.l.s4 1983009808
    %v4929 = vunpack.c.0.s8 %v4928
    %v4930 = vlaneseq
    %v4931 = vshrl.u32 %v4930, 7
    %v4932 = vsub.s32 %v4929, %v4931
    %v4933 = vrot.slane %v4925, %v4932
    %v4935 = vunpack.c.l.s4 1983009808
    %v4936 = vunpack.c.0.s8 %v4935
    %v4937 = vlaneseq
    %v4938 = vshrl.u32 %v4937, 7
    %v4939 = vsub.s32 %v4936, %v4938
    %v4940 = vrot.slane %v4926, %v4939
    %v4941 = vcombine.low %v4933, %v4940
    %v4942 = vcombine.low %v1727, %v1734
    %v4943 = vcombine.low %v1741, %v1748
    %v4945 = vunpack.c.l.s4 1983009808
    %v4946 = vunpack.c.0.s8 %v4945
    %v4947 = vlaneseq
    %v4948 = vshrl.u32 %v4947, 7
    %v4949 = vsub.s32 %v4946, %v4948
    %v4950 = vrot.slane %v4942, %v4949
    %v4952 = vunpack.c.l.s4 1983009808
    %v4953 = vunpack.c.0.s8 %v4952
    %v4954 = vlaneseq
    %v4955 = vshrl.u32 %v4954, 7
    %v4956 = vsub.s32 %v4953, %v4955
    %v4957 = vrot.slane %v4943, %v4956
    %v4958 = vcombine.low %v4950, %v4957
    %v4959 = vcombine.low %v1755, %v1762
    %v4960 = vcombine.low %v1769, %v1776
    %v4962 = vunpack.c.l.s4 1983009808
    %v4963 = vunpack.c.0.s8 %v4962
    %v4964 = vlaneseq
    %v4965 = vshrl.u32 %v4964, 7
    %v4966 = vsub.s32 %v4963, %v4965
    %v4967 = vrot.slane %v4959, %v4966
    %v4969 = vunpack.c.l.s4 1983009808
    %v4970 = vunpack.c.0.s8 %v4969
    %v4971 = vlaneseq
    %v4972 = vshrl.u32 %v4971, 7
    %v4973 = vsub.s32 %v4970, %v4972
    %v4974 = vrot.slane %v4960, %v4973
    %v4975 = vcombine.low %v4967, %v4974
    %v4976 = vcombine.low %v1783, %v1790
    %v4977 = vcombine.low %v1797, %v1804
    %v4979 = vunpack.c.l.s4 1983009808
    %v4980 = vunpack.c.0.s8 %v4979
    %v4981 = vlaneseq
    %v4982 = vshrl.u32 %v4981, 7
    %v4983 = vsub.s32 %v4980, %v4982
    %v4984 = vrot.slane %v4976, %v4983
    %v4986 = vunpack.c.l.s4 1983009808
    %v4987 = vunpack.c.0.s8 %v4986
    %v4988 = vlaneseq
    %v4989 = vshrl.u32 %v4988, 7
    %v4990 = vsub.s32 %v4987, %v4989
    %v4991 = vrot.slane %v4977, %v4990
    %v4992 = vcombine.low %v4984, %v4991
    %v4993 = vcombine.low %v1811, %v1818
    %v4994 = vcombine.low %v1825, %v1832
    %v4996 = vunpack.c.l.s4 1983009808
    %v4997 = vunpack.c.0.s8 %v4996
    %v4998 = vlaneseq
    %v4999 = vshrl.u32 %v4998, 7
    %v5000 = vsub.s32 %v4997, %v4999
    %v5001 = vrot.slane %v4993, %v5000
    %v5003 = vunpack.c.l.s4 1983009808
    %v5004 = vunpack.c.0.s8 %v5003
    %v5005 = vlaneseq
    %v5006 = vshrl.u32 %v5005, 7
    %v5007 = vsub.s32 %v5004, %v5006
    %v5008 = vrot.slane %v4994, %v5007
    %v5009 = vcombine.low %v5001, %v5008
    %v5010 = vcombine.low %v1839, %v1846
    %v5011 = vcombine.low %v1853, %v1860
    %v5013 = vunpack.c.l.s4 1983009808
    %v5014 = vunpack.c.0.s8 %v5013
    %v5015 = vlaneseq
    %v5016 = vshrl.u32 %v5015, 7
    %v5017 = vsub.s32 %v5014, %v5016
    %v5018 = vrot.slane %v5010, %v5017
    %v5020 = vunpack.c.l.s4 1983009808
    %v5021 = vunpack.c.0.s8 %v5020
    %v5022 = vlaneseq
    %v5023 = vshrl.u32 %v5022, 7
    %v5024 = vsub.s32 %v5021, %v5023
    %v5025 = vrot.slane %v5011, %v5024
    %v5026 = vcombine.low %v5018, %v5025
    %v5027 = vcombine.low %v1867, %v1874
    %v5028 = vcombine.low %v1881, %v1888
    %v5030 = vunpack.c.l.s4 1983009808
    %v5031 = vunpack.c.0.s8 %v5030
    %v5032 = vlaneseq
    %v5033 = vshrl.u32 %v5032, 7
    %v5034 = vsub.s32 %v5031, %v5033
    %v5035 = vrot.slane %v5027, %v5034
    %v5037 = vunpack.c.l.s4 1983009808
    %v5038 = vunpack.c.0.s8 %v5037
    %v5039 = vlaneseq
    %v5040 = vshrl.u32 %v5039, 7
    %v5041 = vsub.s32 %v5038, %v5040
    %v5042 = vrot.slane %v5028, %v5041
    %v5043 = vcombine.low %v5035, %v5042
    %v5044 = vcombine.low %v1895, %v1902
    %v5045 = vcombine.low %v1909, %v1916
    %v5047 = vunpack.c.l.s4 1983009808
    %v5048 = vunpack.c.0.s8 %v5047
    %v5049 = vlaneseq
    %v5050 = vshrl.u32 %v5049, 7
    %v5051 = vsub.s32 %v5048, %v5050
    %v5052 = vrot.slane %v5044, %v5051
    %v5054 = vunpack.c.l.s4 1983009808
    %v5055 = vunpack.c.0.s8 %v5054
    %v5056 = vlaneseq
    %v5057 = vshrl.u32 %v5056, 7
    %v5058 = vsub.s32 %v5055, %v5057
    %v5059 = vrot.slane %v5045, %v5058
    %v5060 = vcombine.low %v5052, %v5059
    %v5061 = vcombine.low %v1923, %v1930
    %v5062 = vcombine.low %v1937, %v1944
    %v5064 = vunpack.c.l.s4 1983009808
    %v5065 = vunpack.c.0.s8 %v5064
    %v5066 = vlaneseq
    %v5067 = vshrl.u32 %v5066, 7
    %v5068 = vsub.s32 %v5065, %v5067
    %v5069 = vrot.slane %v5061, %v5068
    %v5071 = vunpack.c.l.s4 1983009808
    %v5072 = vunpack.c.0.s8 %v5071
    %v5073 = vlaneseq
    %v5074 = vshrl.u32 %v5073, 7
    %v5075 = vsub.s32 %v5072, %v5074
    %v5076 = vrot.slane %v5062, %v5075
    %v5077 = vcombine.low %v5069, %v5076
    %v5078 = vcombine.low %v1951, %v1958
    %v5079 = vcombine.low %v1965, %v1972
    %v5081 = vunpack.c.l.s4 1983009808
    %v5082 = vunpack.c.0.s8 %v5081
    %v5083 = vlaneseq
    %v5084 = vshrl.u32 %v5083, 7
    %v5085 = vsub.s32 %v5082, %v5084
    %v5086 = vrot.slane %v5078, %v5085
    %v5088 = vunpack.c.l.s4 1983009808
    %v5089 = vunpack.c.0.s8 %v5088
    %v5090 = vlaneseq
    %v5091 = vshrl.u32 %v5090, 7
    %v5092 = vsub.s32 %v5089, %v5091
    %v5093 = vrot.slane %v5079, %v5092
    %v5094 = vcombine.low %v5086, %v5093
    %v5095 = vcombine.low %v1979, %v1986
    %v5096 = vcombine.low %v1993, %v2000
    %v5098 = vunpack.c.l.s4 1983009808
    %v5099 = vunpack.c.0.s8 %v5098
    %v5100 = vlaneseq
    %v5101 = vshrl.u32 %v5100, 7
    %v5102 = vsub.s32 %v5099, %v5101
    %v5103 = vrot.slane %v5095, %v5102
    %v5105 = vunpack.c.l.s4 1983009808
    %v5106 = vunpack.c.0.s8 %v5105
    %v5107 = vlaneseq
    %v5108 = vshrl.u32 %v5107, 7
    %v5109 = vsub.s32 %v5106, %v5108
    %v5110 = vrot.slane %v5096, %v5109
    %v5111 = vcombine.low %v5103, %v5110
    %v5112 = vcombine.low %v2007, %v2014
    %v5113 = vcombine.low %v2021, %v2028
    %v5115 = vunpack.c.l.s4 1983009808
    %v5116 = vunpack.c.0.s8 %v5115
    %v5117 = vlaneseq
    %v5118 = vshrl.u32 %v5117, 7
    %v5119 = vsub.s32 %v5116, %v5118
    %v5120 = vrot.slane %v5112, %v5119
    %v5122 = vunpack.c.l.s4 1983009808
    %v5123 = vunpack.c.0.s8 %v5122
    %v5124 = vlaneseq
    %v5125 = vshrl.u32 %v5124, 7
    %v5126 = vsub.s32 %v5123, %v5125
    %v5127 = vrot.slane %v5113, %v5126
    %v5128 = vcombine.low %v5120, %v5127
    %v5129 = vcombine.low %v2035, %v2042
    %v5130 = vcombine.low %v2049, %v2056
    %v5132 = vunpack.c.l.s4 1983009808
    %v5133 = vunpack.c.0.s8 %v5132
    %v5134 = vlaneseq
    %v5135 = vshrl.u32 %v5134, 7
    %v5136 = vsub.s32 %v5133, %v5135
    %v5137 = vrot.slane %v5129, %v5136
    %v5139 = vunpack.c.l.s4 1983009808
    %v5140 = vunpack.c.0.s8 %v5139
    %v5141 = vlaneseq
    %v5142 = vshrl.u32 %v5141, 7
    %v5143 = vsub.s32 %v5140, %v5142
    %v5144 = vrot.slane %v5130, %v5143
    %v5145 = vcombine.low %v5137, %v5144
    %v5146 = vcombine.low %v2063, %v2070
    %v5147 = vcombine.low %v2077, %v2084
    %v5149 = vunpack.c.l.s4 1983009808
    %v5150 = vunpack.c.0.s8 %v5149
    %v5151 = vlaneseq
    %v5152 = vshrl.u32 %v5151, 7
    %v5153 = vsub.s32 %v5150, %v5152
    %v5154 = vrot.slane %v5146, %v5153
    %v5156 = vunpack.c.l.s4 1983009808
    %v5157 = vunpack.c.0.s8 %v5156
    %v5158 = vlaneseq
    %v5159 = vshrl.u32 %v5158, 7
    %v5160 = vsub.s32 %v5157, %v5159
    %v5161 = vrot.slane %v5147, %v5160
    %v5162 = vcombine.low %v5154, %v5161
    %v5163 = vcombine.low %v2091, %v2098
    %v5164 = vcombine.low %v2105, %v2112
    %v5166 = vunpack.c.l.s4 1983009808
    %v5167 = vunpack.c.0.s8 %v5166
    %v5168 = vlaneseq
    %v5169 = vshrl.u32 %v5168, 7
    %v5170 = vsub.s32 %v5167, %v5169
    %v5171 = vrot.slane %v5163, %v5170
    %v5173 = vunpack.c.l.s4 1983009808
    %v5174 = vunpack.c.0.s8 %v5173
    %v5175 = vlaneseq
    %v5176 = vshrl.u32 %v5175, 7
    %v5177 = vsub.s32 %v5174, %v5176
    %v5178 = vrot.slane %v5164, %v5177
    %v5179 = vcombine.low %v5171, %v5178
    %v5180 = vcombine.low %v2119, %v2126
    %v5181 = vcombine.low %v2133, %v2140
    %v5183 = vunpack.c.l.s4 1983009808
    %v5184 = vunpack.c.0.s8 %v5183
    %v5185 = vlaneseq
    %v5186 = vshrl.u32 %v5185, 7
    %v5187 = vsub.s32 %v5184, %v5186
    %v5188 = vrot.slane %v5180, %v5187
    %v5190 = vunpack.c.l.s4 1983009808
    %v5191 = vunpack.c.0.s8 %v5190
    %v5192 = vlaneseq
    %v5193 = vshrl.u32 %v5192, 7
    %v5194 = vsub.s32 %v5191, %v5193
    %v5195 = vrot.slane %v5181, %v5194
    %v5196 = vcombine.low %v5188, %v5195
    %v5197 = vcombine.low %v2147, %v2154
    %v5198 = vcombine.low %v2161, %v2168
    %v5200 = vunpack.c.l.s4 1983009808
    %v5201 = vunpack.c.0.s8 %v5200
    %v5202 = vlaneseq
    %v5203 = vshrl.u32 %v5202, 7
    %v5204 = vsub.s32 %v5201, %v5203
    %v5205 = vrot.slane %v5197, %v5204
    %v5207 = vunpack.c.l.s4 1983009808
    %v5208 = vunpack.c.0.s8 %v5207
    %v5209 = vlaneseq
    %v5210 = vshrl.u32 %v5209, 7
    %v5211 = vsub.s32 %v5208, %v5210
    %v5212 = vrot.slane %v5198, %v5211
    %v5213 = vcombine.low %v5205, %v5212
    %v5214 = vcombine.low %v2175, %v2182
    %v5215 = vcombine.low %v2189, %v2196
    %v5217 = vunpack.c.l.s4 1983009808
    %v5218 = vunpack.c.0.s8 %v5217
    %v5219 = vlaneseq
    %v5220 = vshrl.u32 %v5219, 7
    %v5221 = vsub.s32 %v5218, %v5220
    %v5222 = vrot.slane %v5214, %v5221
    %v5224 = vunpack.c.l.s4 1983009808
    %v5225 = vunpack.c.0.s8 %v5224
    %v5226 = vlaneseq
    %v5227 = vshrl.u32 %v5226, 7
    %v5228 = vsub.s32 %v5225, %v5227
    %v5229 = vrot.slane %v5215, %v5228
    %v5230 = vcombine.low %v5222, %v5229
    %v5231 = vcombine.low %v2203, %v2210
    %v5232 = vcombine.low %v2217, %v2224
    %v5234 = vunpack.c.l.s4 1983009808
    %v5235 = vunpack.c.0.s8 %v5234
    %v5236 = vlaneseq
    %v5237 = vshrl.u32 %v5236, 7
    %v5238 = vsub.s32 %v5235, %v5237
    %v5239 = vrot.slane %v5231, %v5238
    %v5241 = vunpack.c.l.s4 1983009808
    %v5242 = vunpack.c.0.s8 %v5241
    %v5243 = vlaneseq
    %v5244 = vshrl.u32 %v5243, 7
    %v5245 = vsub.s32 %v5242, %v5244
    %v5246 = vrot.slane %v5232, %v5245
    %v5247 = vcombine.low %v5239, %v5246
    %v5248 = vcombine.low %v2231, %v2238
    %v5249 = vcombine.low %v2245, %v2252
    %v5251 = vunpack.c.l.s4 1983009808
    %v5252 = vunpack.c.0.s8 %v5251
    %v5253 = vlaneseq
    %v5254 = vshrl.u32 %v5253, 7
    %v5255 = vsub.s32 %v5252, %v5254
    %v5256 = vrot.slane %v5248, %v5255
    %v5258 = vunpack.c.l.s4 1983009808
    %v5259 = vunpack.c.0.s8 %v5258
    %v5260 = vlaneseq
    %v5261 = vshrl.u32 %v5260, 7
    %v5262 = vsub.s32 %v5259, %v5261
    %v5263 = vrot.slane %v5249, %v5262
    %v5264 = vcombine.low %v5256, %v5263
    %v5265 = vcombine.low %v2259, %v2266
    %v5266 = vcombine.low %v2273, %v2280
    %v5268 = vunpack.c.l.s4 1983009808
    %v5269 = vunpack.c.0.s8 %v5268
    %v5270 = vlaneseq
    %v5271 = vshrl.u32 %v5270, 7
    %v5272 = vsub.s32 %v5269, %v5271
    %v5273 = vrot.slane %v5265, %v5272
    %v5275 = vunpack.c.l.s4 1983009808
    %v5276 = vunpack.c.0.s8 %v5275
    %v5277 = vlaneseq
    %v5278 = vshrl.u32 %v5277, 7
    %v5279 = vsub.s32 %v5276, %v5278
    %v5280 = vrot.slane %v5266, %v5279
    %v5281 = vcombine.low %v5273, %v5280
    %v5282 = vcombine.low %v2287, %v2294
    %v5283 = vcombine.low %v2301, %v2308
    %v5285 = vunpack.c.l.s4 1983009808
    %v5286 = vunpack.c.0.s8 %v5285
    %v5287 = vlaneseq
    %v5288 = vshrl.u32 %v5287, 7
    %v5289 = vsub.s32 %v5286, %v5288
    %v5290 = vrot.slane %v5282, %v5289
    %v5292 = vunpack.c.l.s4 1983009808
    %v5293 = vunpack.c.0.s8 %v5292
    %v5294 = vlaneseq
    %v5295 = vshrl.u32 %v5294, 7
    %v5296 = vsub.s32 %v5293, %v5295
    %v5297 = vrot.slane %v5283, %v5296
    %v5298 = vcombine.low %v5290, %v5297
    %v5299 = vcombine.low %v2315, %v2322
    %v5300 = vcombine.low %v2329, %v2336
    %v5302 = vunpack.c.l.s4 1983009808
    %v5303 = vunpack.c.0.s8 %v5302
    %v5304 = vlaneseq
    %v5305 = vshrl.u32 %v5304, 7
    %v5306 = vsub.s32 %v5303, %v5305
    %v5307 = vrot.slane %v5299, %v5306
    %v5309 = vunpack.c.l.s4 1983009808
    %v5310 = vunpack.c.0.s8 %v5309
    %v5311 = vlaneseq
    %v5312 = vshrl.u32 %v5311, 7
    %v5313 = vsub.s32 %v5310, %v5312
    %v5314 = vrot.slane %v5300, %v5313
    %v5315 = vcombine.low %v5307, %v5314
    %v5316 = vcombine.low %v2343, %v2350
    %v5317 = vcombine.low %v2357, %v2364
    %v5319 = vunpack.c.l.s4 1983009808
    %v5320 = vunpack.c.0.s8 %v5319
    %v5321 = vlaneseq
    %v5322 = vshrl.u32 %v5321, 7
    %v5323 = vsub.s32 %v5320, %v5322
    %v5324 = vrot.slane %v5316, %v5323
    %v5326 = vunpack.c.l.s4 1983009808
    %v5327 = vunpack.c.0.s8 %v5326
    %v5328 = vlaneseq
    %v5329 = vshrl.u32 %v5328, 7
    %v5330 = vsub.s32 %v5327, %v5329
    %v5331 = vrot.slane %v5317, %v5330
    %v5332 = vcombine.low %v5324, %v5331
    %v5333 = vcombine.low %v2371, %v2378
    %v5334 = vcombine.low %v2385, %v2392
    %v5336 = vunpack.c.l.s4 1983009808
    %v5337 = vunpack.c.0.s8 %v5336
    %v5338 = vlaneseq
    %v5339 = vshrl.u32 %v5338, 7
    %v5340 = vsub.s32 %v5337, %v5339
    %v5341 = vrot.slane %v5333, %v5340
    %v5343 = vunpack.c.l.s4 1983009808
    %v5344 = vunpack.c.0.s8 %v5343
    %v5345 = vlaneseq
    %v5346 = vshrl.u32 %v5345, 7
    %v5347 = vsub.s32 %v5344, %v5346
    %v5348 = vrot.slane %v5334, %v5347
    %v5349 = vcombine.low %v5341, %v5348
    %v5350 = vcombine.low %v2399, %v2406
    %v5351 = vcombine.low %v2413, %v2420
    %v5353 = vunpack.c.l.s4 1983009808
    %v5354 = vunpack.c.0.s8 %v5353
    %v5355 = vlaneseq
    %v5356 = vshrl.u32 %v5355, 7
    %v5357 = vsub.s32 %v5354, %v5356
    %v5358 = vrot.slane %v5350, %v5357
    %v5360 = vunpack.c.l.s4 1983009808
    %v5361 = vunpack.c.0.s8 %v5360
    %v5362 = vlaneseq
    %v5363 = vshrl.u32 %v5362, 7
    %v5364 = vsub.s32 %v5361, %v5363
    %v5365 = vrot.slane %v5351, %v5364
    %v5366 = vcombine.low %v5358, %v5365
    %v5367 = vcombine.low %v2427, %v2434
    %v5368 = vcombine.low %v2441, %v2448
    %v5370 = vunpack.c.l.s4 1983009808
    %v5371 = vunpack.c.0.s8 %v5370
    %v5372 = vlaneseq
    %v5373 = vshrl.u32 %v5372, 7
    %v5374 = vsub.s32 %v5371, %v5373
    %v5375 = vrot.slane %v5367, %v5374
    %v5377 = vunpack.c.l.s4 1983009808
    %v5378 = vunpack.c.0.s8 %v5377
    %v5379 = vlaneseq
    %v5380 = vshrl.u32 %v5379, 7
    %v5381 = vsub.s32 %v5378, %v5380
    %v5382 = vrot.slane %v5368, %v5381
    %v5383 = vcombine.low %v5375, %v5382
    %v5384 = vcombine.low %v2455, %v2462
    %v5385 = vcombine.low %v2469, %v2476
    %v5387 = vunpack.c.l.s4 1983009808
    %v5388 = vunpack.c.0.s8 %v5387
    %v5389 = vlaneseq
    %v5390 = vshrl.u32 %v5389, 7
    %v5391 = vsub.s32 %v5388, %v5390
    %v5392 = vrot.slane %v5384, %v5391
    %v5394 = vunpack.c.l.s4 1983009808
    %v5395 = vunpack.c.0.s8 %v5394
    %v5396 = vlaneseq
    %v5397 = vshrl.u32 %v5396, 7
    %v5398 = vsub.s32 %v5395, %v5397
    %v5399 = vrot.slane %v5385, %v5398
    %v5400 = vcombine.low %v5392, %v5399
    %v5401 = vcombine.low %v2483, %v2490
    %v5402 = vcombine.low %v2497, %v2504
    %v5404 = vunpack.c.l.s4 1983009808
    %v5405 = vunpack.c.0.s8 %v5404
    %v5406 = vlaneseq
    %v5407 = vshrl.u32 %v5406, 7
    %v5408 = vsub.s32 %v5405, %v5407
    %v5409 = vrot.slane %v5401, %v5408
    %v5411 = vunpack.c.l.s4 1983009808
    %v5412 = vunpack.c.0.s8 %v5411
    %v5413 = vlaneseq
    %v5414 = vshrl.u32 %v5413, 7
    %v5415 = vsub.s32 %v5412, %v5414
    %v5416 = vrot.slane %v5402, %v5415
    %v5417 = vcombine.low %v5409, %v5416
    %v5418 = vcombine.low %v2511, %v2518
    %v5419 = vcombine.low %v2525, %v2532
    %v5421 = vunpack.c.l.s4 1983009808
    %v5422 = vunpack.c.0.s8 %v5421
    %v5423 = vlaneseq
    %v5424 = vshrl.u32 %v5423, 7
    %v5425 = vsub.s32 %v5422, %v5424
    %v5426 = vrot.slane %v5418, %v5425
    %v5428 = vunpack.c.l.s4 1983009808
    %v5429 = vunpack.c.0.s8 %v5428
    %v5430 = vlaneseq
    %v5431 = vshrl.u32 %v5430, 7
    %v5432 = vsub.s32 %v5429, %v5431
    %v5433 = vrot.slane %v5419, %v5432
    %v5434 = vcombine.low %v5426, %v5433
    %v5435 = vcombine.low %v2539, %v2546
    %v5436 = vcombine.low %v2553, %v2560
    %v5438 = vunpack.c.l.s4 1983009808
    %v5439 = vunpack.c.0.s8 %v5438
    %v5440 = vlaneseq
    %v5441 = vshrl.u32 %v5440, 7
    %v5442 = vsub.s32 %v5439, %v5441
    %v5443 = vrot.slane %v5435, %v5442
    %v5445 = vunpack.c.l.s4 1983009808
    %v5446 = vunpack.c.0.s8 %v5445
    %v5447 = vlaneseq
    %v5448 = vshrl.u32 %v5447, 7
    %v5449 = vsub.s32 %v5446, %v5448
    %v5450 = vrot.slane %v5436, %v5449
    %v5451 = vcombine.low %v5443, %v5450
    %v5452 = vcombine.low %v2567, %v2574
    %v5453 = vcombine.low %v2581, %v2588
    %v5455 = vunpack.c.l.s4 1983009808
    %v5456 = vunpack.c.0.s8 %v5455
    %v5457 = vlaneseq
    %v5458 = vshrl.u32 %v5457, 7
    %v5459 = vsub.s32 %v5456, %v5458
    %v5460 = vrot.slane %v5452, %v5459
    %v5462 = vunpack.c.l.s4 1983009808
    %v5463 = vunpack.c.0.s8 %v5462
    %v5464 = vlaneseq
    %v5465 = vshrl.u32 %v5464, 7
    %v5466 = vsub.s32 %v5463, %v5465
    %v5467 = vrot.slane %v5453, %v5466
    %v5468 = vcombine.low %v5460, %v5467
    %v5469 = vcombine.low %v2595, %v2602
    %v5470 = vcombine.low %v2609, %v2616
    %v5472 = vunpack.c.l.s4 1983009808
    %v5473 = vunpack.c.0.s8 %v5472
    %v5474 = vlaneseq
    %v5475 = vshrl.u32 %v5474, 7
    %v5476 = vsub.s32 %v5473, %v5475
    %v5477 = vrot.slane %v5469, %v5476
    %v5479 = vunpack.c.l.s4 1983009808
    %v5480 = vunpack.c.0.s8 %v5479
    %v5481 = vlaneseq
    %v5482 = vshrl.u32 %v5481, 7
    %v5483 = vsub.s32 %v5480, %v5482
    %v5484 = vrot.slane %v5470, %v5483
    %v5485 = vcombine.low %v5477, %v5484
    %v5486 = vcombine.low %v2623, %v2630
    %v5487 = vcombine.low %v2637, %v2644
    %v5489 = vunpack.c.l.s4 1983009808
    %v5490 = vunpack.c.0.s8 %v5489
    %v5491 = vlaneseq
    %v5492 = vshrl.u32 %v5491, 7
    %v5493 = vsub.s32 %v5490, %v5492
    %v5494 = vrot.slane %v5486, %v5493
    %v5496 = vunpack.c.l.s4 1983009808
    %v5497 = vunpack.c.0.s8 %v5496
    %v5498 = vlaneseq
    %v5499 = vshrl.u32 %v5498, 7
    %v5500 = vsub.s32 %v5497, %v5499
    %v5501 = vrot.slane %v5487, %v5500
    %v5502 = vcombine.low %v5494, %v5501
    %v5503 = vcombine.low %v2651, %v2658
    %v5504 = vcombine.low %v2665, %v2672
    %v5506 = vunpack.c.l.s4 1983009808
    %v5507 = vunpack.c.0.s8 %v5506
    %v5508 = vlaneseq
    %v5509 = vshrl.u32 %v5508, 7
    %v5510 = vsub.s32 %v5507, %v5509
    %v5511 = vrot.slane %v5503, %v5510
    %v5513 = vunpack.c.l.s4 1983009808
    %v5514 = vunpack.c.0.s8 %v5513
    %v5515 = vlaneseq
    %v5516 = vshrl.u32 %v5515, 7
    %v5517 = vsub.s32 %v5514, %v5516
    %v5518 = vrot.slane %v5504, %v5517
    %v5519 = vcombine.low %v5511, %v5518
    %v5520 = vcombine.low %v2679, %v2686
    %v5521 = vcombine.low %v2693, %v2700
    %v5523 = vunpack.c.l.s4 1983009808
    %v5524 = vunpack.c.0.s8 %v5523
    %v5525 = vlaneseq
    %v5526 = vshrl.u32 %v5525, 7
    %v5527 = vsub.s32 %v5524, %v5526
    %v5528 = vrot.slane %v5520, %v5527
    %v5530 = vunpack.c.l.s4 1983009808
    %v5531 = vunpack.c.0.s8 %v5530
    %v5532 = vlaneseq
    %v5533 = vshrl.u32 %v5532, 7
    %v5534 = vsub.s32 %v5531, %v5533
    %v5535 = vrot.slane %v5521, %v5534
    %v5536 = vcombine.low %v5528, %v5535
    %v5537 = vcombine.low %v2707, %v2714
    %v5538 = vcombine.low %v2721, %v2728
    %v5540 = vunpack.c.l.s4 1983009808
    %v5541 = vunpack.c.0.s8 %v5540
    %v5542 = vlaneseq
    %v5543 = vshrl.u32 %v5542, 7
    %v5544 = vsub.s32 %v5541, %v5543
    %v5545 = vrot.slane %v5537, %v5544
    %v5547 = vunpack.c.l.s4 1983009808
    %v5548 = vunpack.c.0.s8 %v5547
    %v5549 = vlaneseq
    %v5550 = vshrl.u32 %v5549, 7
    %v5551 = vsub.s32 %v5548, %v5550
    %v5552 = vrot.slane %v5538, %v5551
    %v5553 = vcombine.low %v5545, %v5552
    %v5554 = vcombine.low %v2735, %v2742
    %v5555 = vcombine.low %v2749, %v2756
    %v5557 = vunpack.c.l.s4 1983009808
    %v5558 = vunpack.c.0.s8 %v5557
    %v5559 = vlaneseq
    %v5560 = vshrl.u32 %v5559, 7
    %v5561 = vsub.s32 %v5558, %v5560
    %v5562 = vrot.slane %v5554, %v5561
    %v5564 = vunpack.c.l.s4 1983009808
    %v5565 = vunpack.c.0.s8 %v5564
    %v5566 = vlaneseq
    %v5567 = vshrl.u32 %v5566, 7
    %v5568 = vsub.s32 %v5565, %v5567
    %v5569 = vrot.slane %v5555, %v5568
    %v5570 = vcombine.low %v5562, %v5569
    %v5571 = vcombine.low %v2763, %v2770
    %v5572 = vcombine.low %v2777, %v2784
    %v5574 = vunpack.c.l.s4 1983009808
    %v5575 = vunpack.c.0.s8 %v5574
    %v5576 = vlaneseq
    %v5577 = vshrl.u32 %v5576, 7
    %v5578 = vsub.s32 %v5575, %v5577
    %v5579 = vrot.slane %v5571, %v5578
    %v5581 = vunpack.c.l.s4 1983009808
    %v5582 = vunpack.c.0.s8 %v5581
    %v5583 = vlaneseq
    %v5584 = vshrl.u32 %v5583, 7
    %v5585 = vsub.s32 %v5582, %v5584
    %v5586 = vrot.slane %v5572, %v5585
    %v5587 = vcombine.low %v5579, %v5586
    %v5588 = vcombine.low %v2791, %v2798
    %v5589 = vcombine.low %v2805, %v2812
    %v5591 = vunpack.c.l.s4 1983009808
    %v5592 = vunpack.c.0.s8 %v5591
    %v5593 = vlaneseq
    %v5594 = vshrl.u32 %v5593, 7
    %v5595 = vsub.s32 %v5592, %v5594
    %v5596 = vrot.slane %v5588, %v5595
    %v5598 = vunpack.c.l.s4 1983009808
    %v5599 = vunpack.c.0.s8 %v5598
    %v5600 = vlaneseq
    %v5601 = vshrl.u32 %v5600, 7
    %v5602 = vsub.s32 %v5599, %v5601
    %v5603 = vrot.slane %v5589, %v5602
    %v5604 = vcombine.low %v5596, %v5603
    %v5605 = vcombine.low %v2819, %v2826
    %v5606 = vcombine.low %v2833, %v2840
    %v5608 = vunpack.c.l.s4 1983009808
    %v5609 = vunpack.c.0.s8 %v5608
    %v5610 = vlaneseq
    %v5611 = vshrl.u32 %v5610, 7
    %v5612 = vsub.s32 %v5609, %v5611
    %v5613 = vrot.slane %v5605, %v5612
    %v5615 = vunpack.c.l.s4 1983009808
    %v5616 = vunpack.c.0.s8 %v5615
    %v5617 = vlaneseq
    %v5618 = vshrl.u32 %v5617, 7
    %v5619 = vsub.s32 %v5616, %v5618
    %v5620 = vrot.slane %v5606, %v5619
    %v5621 = vcombine.low %v5613, %v5620
    %v5622 = vcombine.low %v2847, %v2854
    %v5623 = vcombine.low %v2861, %v2868
    %v5625 = vunpack.c.l.s4 1983009808
    %v5626 = vunpack.c.0.s8 %v5625
    %v5627 = vlaneseq
    %v5628 = vshrl.u32 %v5627, 7
    %v5629 = vsub.s32 %v5626, %v5628
    %v5630 = vrot.slane %v5622, %v5629
    %v5632 = vunpack.c.l.s4 1983009808
    %v5633 = vunpack.c.0.s8 %v5632
    %v5634 = vlaneseq
    %v5635 = vshrl.u32 %v5634, 7
    %v5636 = vsub.s32 %v5633, %v5635
    %v5637 = vrot.slane %v5623, %v5636
    %v5638 = vcombine.low %v5630, %v5637
    %v5639 = vcombine.low %v2875, %v2882
    %v5640 = vcombine.low %v2889, %v2896
    %v5642 = vunpack.c.l.s4 1983009808
    %v5643 = vunpack.c.0.s8 %v5642
    %v5644 = vlaneseq
    %v5645 = vshrl.u32 %v5644, 7
    %v5646 = vsub.s32 %v5643, %v5645
    %v5647 = vrot.slane %v5639, %v5646
    %v5649 = vunpack.c.l.s4 1983009808
    %v5650 = vunpack.c.0.s8 %v5649
    %v5651 = vlaneseq
    %v5652 = vshrl.u32 %v5651, 7
    %v5653 = vsub.s32 %v5650, %v5652
    %v5654 = vrot.slane %v5640, %v5653
    %v5655 = vcombine.low %v5647, %v5654
    %v5656 = vcombine.low %v2903, %v2910
    %v5657 = vcombine.low %v2917, %v2924
    %v5659 = vunpack.c.l.s4 1983009808
    %v5660 = vunpack.c.0.s8 %v5659
    %v5661 = vlaneseq
    %v5662 = vshrl.u32 %v5661, 7
    %v5663 = vsub.s32 %v5660, %v5662
    %v5664 = vrot.slane %v5656, %v5663
    %v5666 = vunpack.c.l.s4 1983009808
    %v5667 = vunpack.c.0.s8 %v5666
    %v5668 = vlaneseq
    %v5669 = vshrl.u32 %v5668, 7
    %v5670 = vsub.s32 %v5667, %v5669
    %v5671 = vrot.slane %v5657, %v5670
    %v5672 = vcombine.low %v5664, %v5671
    %v5673 = vcombine.low %v2931, %v2938
    %v5674 = vcombine.low %v2945, %v2952
    %v5676 = vunpack.c.l.s4 1983009808
    %v5677 = vunpack.c.0.s8 %v5676
    %v5678 = vlaneseq
    %v5679 = vshrl.u32 %v5678, 7
    %v5680 = vsub.s32 %v5677, %v5679
    %v5681 = vrot.slane %v5673, %v5680
    %v5683 = vunpack.c.l.s4 1983009808
    %v5684 = vunpack.c.0.s8 %v5683
    %v5685 = vlaneseq
    %v5686 = vshrl.u32 %v5685, 7
    %v5687 = vsub.s32 %v5684, %v5686
    %v5688 = vrot.slane %v5674, %v5687
    %v5689 = vcombine.low %v5681, %v5688
    %v5690 = vcombine.low %v2959, %v2966
    %v5691 = vcombine.low %v2973, %v2980
    %v5693 = vunpack.c.l.s4 1983009808
    %v5694 = vunpack.c.0.s8 %v5693
    %v5695 = vlaneseq
    %v5696 = vshrl.u32 %v5695, 7
    %v5697 = vsub.s32 %v5694, %v5696
    %v5698 = vrot.slane %v5690, %v5697
    %v5700 = vunpack.c.l.s4 1983009808
    %v5701 = vunpack.c.0.s8 %v5700
    %v5702 = vlaneseq
    %v5703 = vshrl.u32 %v5702, 7
    %v5704 = vsub.s32 %v5701, %v5703
    %v5705 = vrot.slane %v5691, %v5704
    %v5706 = vcombine.low %v5698, %v5705
    %v5707 = vcombine.low %v2987, %v2994
    %v5708 = vcombine.low %v3001, %v3008
    %v5710 = vunpack.c.l.s4 1983009808
    %v5711 = vunpack.c.0.s8 %v5710
    %v5712 = vlaneseq
    %v5713 = vshrl.u32 %v5712, 7
    %v5714 = vsub.s32 %v5711, %v5713
    %v5715 = vrot.slane %v5707, %v5714
    %v5717 = vunpack.c.l.s4 1983009808
    %v5718 = vunpack.c.0.s8 %v5717
    %v5719 = vlaneseq
    %v5720 = vshrl.u32 %v5719, 7
    %v5721 = vsub.s32 %v5718, %v5720
    %v5722 = vrot.slane %v5708, %v5721
    %v5723 = vcombine.low %v5715, %v5722
    %v5724 = vcombine.low %v3015, %v3022
    %v5725 = vcombine.low %v3029, %v3036
    %v5727 = vunpack.c.l.s4 1983009808
    %v5728 = vunpack.c.0.s8 %v5727
    %v5729 = vlaneseq
    %v5730 = vshrl.u32 %v5729, 7
    %v5731 = vsub.s32 %v5728, %v5730
    %v5732 = vrot.slane %v5724, %v5731
    %v5734 = vunpack.c.l.s4 1983009808
    %v5735 = vunpack.c.0.s8 %v5734
    %v5736 = vlaneseq
    %v5737 = vshrl.u32 %v5736, 7
    %v5738 = vsub.s32 %v5735, %v5737
    %v5739 = vrot.slane %v5725, %v5738
    %v5740 = vcombine.low %v5732, %v5739
    %v5741 = vcombine.low %v3043, %v3050
    %v5742 = vcombine.low %v3057, %v3064
    %v5744 = vunpack.c.l.s4 1983009808
    %v5745 = vunpack.c.0.s8 %v5744
    %v5746 = vlaneseq
    %v5747 = vshrl.u32 %v5746, 7
    %v5748 = vsub.s32 %v5745, %v5747
    %v5749 = vrot.slane %v5741, %v5748
    %v5751 = vunpack.c.l.s4 1983009808
    %v5752 = vunpack.c.0.s8 %v5751
    %v5753 = vlaneseq
    %v5754 = vshrl.u32 %v5753, 7
    %v5755 = vsub.s32 %v5752, %v5754
    %v5756 = vrot.slane %v5742, %v5755
    %v5757 = vcombine.low %v5749, %v5756
    %v5758 = vcombine.low %v3071, %v3078
    %v5759 = vcombine.low %v3085, %v3092
    %v5761 = vunpack.c.l.s4 1983009808
    %v5762 = vunpack.c.0.s8 %v5761
    %v5763 = vlaneseq
    %v5764 = vshrl.u32 %v5763, 7
    %v5765 = vsub.s32 %v5762, %v5764
    %v5766 = vrot.slane %v5758, %v5765
    %v5768 = vunpack.c.l.s4 1983009808
    %v5769 = vunpack.c.0.s8 %v5768
    %v5770 = vlaneseq
    %v5771 = vshrl.u32 %v5770, 7
    %v5772 = vsub.s32 %v5769, %v5771
    %v5773 = vrot.slane %v5759, %v5772
    %v5774 = vcombine.low %v5766, %v5773
    %v5775 = vcombine.low %v3099, %v3106
    %v5776 = vcombine.low %v3113, %v3120
    %v5778 = vunpack.c.l.s4 1983009808
    %v5779 = vunpack.c.0.s8 %v5778
    %v5780 = vlaneseq
    %v5781 = vshrl.u32 %v5780, 7
    %v5782 = vsub.s32 %v5779, %v5781
    %v5783 = vrot.slane %v5775, %v5782
    %v5785 = vunpack.c.l.s4 1983009808
    %v5786 = vunpack.c.0.s8 %v5785
    %v5787 = vlaneseq
    %v5788 = vshrl.u32 %v5787, 7
    %v5789 = vsub.s32 %v5786, %v5788
    %v5790 = vrot.slane %v5776, %v5789
    %v5791 = vcombine.low %v5783, %v5790
    %v5792 = vcombine.low %v3127, %v3134
    %v5793 = vcombine.low %v3141, %v3148
    %v5795 = vunpack.c.l.s4 1983009808
    %v5796 = vunpack.c.0.s8 %v5795
    %v5797 = vlaneseq
    %v5798 = vshrl.u32 %v5797, 7
    %v5799 = vsub.s32 %v5796, %v5798
    %v5800 = vrot.slane %v5792, %v5799
    %v5802 = vunpack.c.l.s4 1983009808
    %v5803 = vunpack.c.0.s8 %v5802
    %v5804 = vlaneseq
    %v5805 = vshrl.u32 %v5804, 7
    %v5806 = vsub.s32 %v5803, %v5805
    %v5807 = vrot.slane %v5793, %v5806
    %v5808 = vcombine.low %v5800, %v5807
    %v5809 = vcombine.low %v3155, %v3162
    %v5810 = vcombine.low %v3169, %v3176
    %v5812 = vunpack.c.l.s4 1983009808
    %v5813 = vunpack.c.0.s8 %v5812
    %v5814 = vlaneseq
    %v5815 = vshrl.u32 %v5814, 7
    %v5816 = vsub.s32 %v5813, %v5815
    %v5817 = vrot.slane %v5809, %v5816
    %v5819 = vunpack.c.l.s4 1983009808
    %v5820 = vunpack.c.0.s8 %v5819
    %v5821 = vlaneseq
    %v5822 = vshrl.u32 %v5821, 7
    %v5823 = vsub.s32 %v5820, %v5822
    %v5824 = vrot.slane %v5810, %v5823
    %v5825 = vcombine.low %v5817, %v5824
    %v5826 = vcombine.low %v3183, %v3190
    %v5827 = vcombine.low %v3197, %v3204
    %v5829 = vunpack.c.l.s4 1983009808
    %v5830 = vunpack.c.0.s8 %v5829
    %v5831 = vlaneseq
    %v5832 = vshrl.u32 %v5831, 7
    %v5833 = vsub.s32 %v5830, %v5832
    %v5834 = vrot.slane %v5826, %v5833
    %v5836 = vunpack.c.l.s4 1983009808
    %v5837 = vunpack.c.0.s8 %v5836
    %v5838 = vlaneseq
    %v5839 = vshrl.u32 %v5838, 7
    %v5840 = vsub.s32 %v5837, %v5839
    %v5841 = vrot.slane %v5827, %v5840
    %v5842 = vcombine.low %v5834, %v5841
    %v5843 = vcombine.low %v3211, %v3218
    %v5844 = vcombine.low %v3225, %v3232
    %v5846 = vunpack.c.l.s4 1983009808
    %v5847 = vunpack.c.0.s8 %v5846
    %v5848 = vlaneseq
    %v5849 = vshrl.u32 %v5848, 7
    %v5850 = vsub.s32 %v5847, %v5849
    %v5851 = vrot.slane %v5843, %v5850
    %v5853 = vunpack.c.l.s4 1983009808
    %v5854 = vunpack.c.0.s8 %v5853
    %v5855 = vlaneseq
    %v5856 = vshrl.u32 %v5855, 7
    %v5857 = vsub.s32 %v5854, %v5856
    %v5858 = vrot.slane %v5844, %v5857
    %v5859 = vcombine.low %v5851, %v5858
    %v5860 = vcombine.low %v3239, %v3246
    %v5861 = vcombine.low %v3253, %v3260
    %v5863 = vunpack.c.l.s4 1983009808
    %v5864 = vunpack.c.0.s8 %v5863
    %v5865 = vlaneseq
    %v5866 = vshrl.u32 %v5865, 7
    %v5867 = vsub.s32 %v5864, %v5866
    %v5868 = vrot.slane %v5860, %v5867
    %v5870 = vunpack.c.l.s4 1983009808
    %v5871 = vunpack.c.0.s8 %v5870
    %v5872 = vlaneseq
    %v5873 = vshrl.u32 %v5872, 7
    %v5874 = vsub.s32 %v5871, %v5873
    %v5875 = vrot.slane %v5861, %v5874
    %v5876 = vcombine.low %v5868, %v5875
    %v5877 = vcombine.low %v3267, %v3274
    %v5878 = vcombine.low %v3281, %v3288
    %v5880 = vunpack.c.l.s4 1983009808
    %v5881 = vunpack.c.0.s8 %v5880
    %v5882 = vlaneseq
    %v5883 = vshrl.u32 %v5882, 7
    %v5884 = vsub.s32 %v5881, %v5883
    %v5885 = vrot.slane %v5877, %v5884
    %v5887 = vunpack.c.l.s4 1983009808
    %v5888 = vunpack.c.0.s8 %v5887
    %v5889 = vlaneseq
    %v5890 = vshrl.u32 %v5889, 7
    %v5891 = vsub.s32 %v5888, %v5890
    %v5892 = vrot.slane %v5878, %v5891
    %v5893 = vcombine.low %v5885, %v5892
    %v5894 = vcombine.low %v3295, %v3302
    %v5895 = vcombine.low %v3309, %v3316
    %v5897 = vunpack.c.l.s4 1983009808
    %v5898 = vunpack.c.0.s8 %v5897
    %v5899 = vlaneseq
    %v5900 = vshrl.u32 %v5899, 7
    %v5901 = vsub.s32 %v5898, %v5900
    %v5902 = vrot.slane %v5894, %v5901
    %v5904 = vunpack.c.l.s4 1983009808
    %v5905 = vunpack.c.0.s8 %v5904
    %v5906 = vlaneseq
    %v5907 = vshrl.u32 %v5906, 7
    %v5908 = vsub.s32 %v5905, %v5907
    %v5909 = vrot.slane %v5895, %v5908
    %v5910 = vcombine.low %v5902, %v5909
    %v5911 = vcombine.low %v3323, %v3330
    %v5912 = vcombine.low %v3337, %v3344
    %v5914 = vunpack.c.l.s4 1983009808
    %v5915 = vunpack.c.0.s8 %v5914
    %v5916 = vlaneseq
    %v5917 = vshrl.u32 %v5916, 7
    %v5918 = vsub.s32 %v5915, %v5917
    %v5919 = vrot.slane %v5911, %v5918
    %v5921 = vunpack.c.l.s4 1983009808
    %v5922 = vunpack.c.0.s8 %v5921
    %v5923 = vlaneseq
    %v5924 = vshrl.u32 %v5923, 7
    %v5925 = vsub.s32 %v5922, %v5924
    %v5926 = vrot.slane %v5912, %v5925
    %v5927 = vcombine.low %v5919, %v5926
    %v5928 = vcombine.low %v3351, %v3358
    %v5929 = vcombine.low %v3365, %v3372
    %v5931 = vunpack.c.l.s4 1983009808
    %v5932 = vunpack.c.0.s8 %v5931
    %v5933 = vlaneseq
    %v5934 = vshrl.u32 %v5933, 7
    %v5935 = vsub.s32 %v5932, %v5934
    %v5936 = vrot.slane %v5928, %v5935
    %v5938 = vunpack.c.l.s4 1983009808
    %v5939 = vunpack.c.0.s8 %v5938
    %v5940 = vlaneseq
    %v5941 = vshrl.u32 %v5940, 7
    %v5942 = vsub.s32 %v5939, %v5941
    %v5943 = vrot.slane %v5929, %v5942
    %v5944 = vcombine.low %v5936, %v5943
    %v5945 = vcombine.low %v3379, %v3386
    %v5946 = vcombine.low %v3393, %v3400
    %v5948 = vunpack.c.l.s4 1983009808
    %v5949 = vunpack.c.0.s8 %v5948
    %v5950 = vlaneseq
    %v5951 = vshrl.u32 %v5950, 7
    %v5952 = vsub.s32 %v5949, %v5951
    %v5953 = vrot.slane %v5945, %v5952
    %v5955 = vunpack.c.l.s4 1983009808
    %v5956 = vunpack.c.0.s8 %v5955
    %v5957 = vlaneseq
    %v5958 = vshrl.u32 %v5957, 7
    %v5959 = vsub.s32 %v5956, %v5958
    %v5960 = vrot.slane %v5946, %v5959
    %v5961 = vcombine.low %v5953, %v5960
    %v5962 = vcombine.low %v3407, %v3414
    %v5963 = vcombine.low %v3421, %v3428
    %v5965 = vunpack.c.l.s4 1983009808
    %v5966 = vunpack.c.0.s8 %v5965
    %v5967 = vlaneseq
    %v5968 = vshrl.u32 %v5967, 7
    %v5969 = vsub.s32 %v5966, %v5968
    %v5970 = vrot.slane %v5962, %v5969
    %v5972 = vunpack.c.l.s4 1983009808
    %v5973 = vunpack.c.0.s8 %v5972
    %v5974 = vlaneseq
    %v5975 = vshrl.u32 %v5974, 7
    %v5976 = vsub.s32 %v5973, %v5975
    %v5977 = vrot.slane %v5963, %v5976
    %v5978 = vcombine.low %v5970, %v5977
    %v5979 = vcombine.low %v3435, %v3442
    %v5980 = vcombine.low %v3449, %v3456
    %v5982 = vunpack.c.l.s4 1983009808
    %v5983 = vunpack.c.0.s8 %v5982
    %v5984 = vlaneseq
    %v5985 = vshrl.u32 %v5984, 7
    %v5986 = vsub.s32 %v5983, %v5985
    %v5987 = vrot.slane %v5979, %v5986
    %v5989 = vunpack.c.l.s4 1983009808
    %v5990 = vunpack.c.0.s8 %v5989
    %v5991 = vlaneseq
    %v5992 = vshrl.u32 %v5991, 7
    %v5993 = vsub.s32 %v5990, %v5992
    %v5994 = vrot.slane %v5980, %v5993
    %v5995 = vcombine.low %v5987, %v5994
    %v5996 = vcombine.low %v3463, %v3470
    %v5997 = vcombine.low %v3477, %v3484
    %v5999 = vunpack.c.l.s4 1983009808
    %v6000 = vunpack.c.0.s8 %v5999
    %v6001 = vlaneseq
    %v6002 = vshrl.u32 %v6001, 7
    %v6003 = vsub.s32 %v6000, %v6002
    %v6004 = vrot.slane %v5996, %v6003
    %v6006 = vunpack.c.l.s4 1983009808
    %v6007 = vunpack.c.0.s8 %v6006
    %v6008 = vlaneseq
    %v6009 = vshrl.u32 %v6008, 7
    %v6010 = vsub.s32 %v6007, %v6009
    %v6011 = vrot.slane %v5997, %v6010
    %v6012 = vcombine.low %v6004, %v6011
    %v6013 = vcombine.low %v3491, %v3498
    %v6014 = vcombine.low %v3505, %v3512
    %v6016 = vunpack.c.l.s4 1983009808
    %v6017 = vunpack.c.0.s8 %v6016
    %v6018 = vlaneseq
    %v6019 = vshrl.u32 %v6018, 7
    %v6020 = vsub.s32 %v6017, %v6019
    %v6021 = vrot.slane %v6013, %v6020
    %v6023 = vunpack.c.l.s4 1983009808
    %v6024 = vunpack.c.0.s8 %v6023
    %v6025 = vlaneseq
    %v6026 = vshrl.u32 %v6025, 7
    %v6027 = vsub.s32 %v6024, %v6026
    %v6028 = vrot.slane %v6014, %v6027
    %v6029 = vcombine.low %v6021, %v6028
    %v6030 = vcombine.low %v3519, %v3526
    %v6031 = vcombine.low %v3533, %v3540
    %v6033 = vunpack.c.l.s4 1983009808
    %v6034 = vunpack.c.0.s8 %v6033
    %v6035 = vlaneseq
    %v6036 = vshrl.u32 %v6035, 7
    %v6037 = vsub.s32 %v6034, %v6036
    %v6038 = vrot.slane %v6030, %v6037
    %v6040 = vunpack.c.l.s4 1983009808
    %v6041 = vunpack.c.0.s8 %v6040
    %v6042 = vlaneseq
    %v6043 = vshrl.u32 %v6042, 7
    %v6044 = vsub.s32 %v6041, %v6043
    %v6045 = vrot.slane %v6031, %v6044
    %v6046 = vcombine.low %v6038, %v6045
    %v6047 = vcombine.low %v3547, %v3554
    %v6048 = vcombine.low %v3561, %v3568
    %v6050 = vunpack.c.l.s4 1983009808
    %v6051 = vunpack.c.0.s8 %v6050
    %v6052 = vlaneseq
    %v6053 = vshrl.u32 %v6052, 7
    %v6054 = vsub.s32 %v6051, %v6053
    %v6055 = vrot.slane %v6047, %v6054
    %v6057 = vunpack.c.l.s4 1983009808
    %v6058 = vunpack.c.0.s8 %v6057
    %v6059 = vlaneseq
    %v6060 = vshrl.u32 %v6059, 7
    %v6061 = vsub.s32 %v6058, %v6060
    %v6062 = vrot.slane %v6048, %v6061
    %v6063 = vcombine.low %v6055, %v6062
    %v6064 = vcombine.low %v3575, %v3582
    %v6065 = vcombine.low %v3589, %v3596
    %v6067 = vunpack.c.l.s4 1983009808
    %v6068 = vunpack.c.0.s8 %v6067
    %v6069 = vlaneseq
    %v6070 = vshrl.u32 %v6069, 7
    %v6071 = vsub.s32 %v6068, %v6070
    %v6072 = vrot.slane %v6064, %v6071
    %v6074 = vunpack.c.l.s4 1983009808
    %v6075 = vunpack.c.0.s8 %v6074
    %v6076 = vlaneseq
    %v6077 = vshrl.u32 %v6076, 7
    %v6078 = vsub.s32 %v6075, %v6077
    %v6079 = vrot.slane %v6065, %v6078
    %v6080 = vcombine.low %v6072, %v6079
    %v6081 = vcombine.low %v3603, %v3610
    %v6082 = vcombine.low %v3617, %v3624
    %v6084 = vunpack.c.l.s4 1983009808
    %v6085 = vunpack.c.0.s8 %v6084
    %v6086 = vlaneseq
    %v6087 = vshrl.u32 %v6086, 7
    %v6088 = vsub.s32 %v6085, %v6087
    %v6089 = vrot.slane %v6081, %v6088
    %v6091 = vunpack.c.l.s4 1983009808
    %v6092 = vunpack.c.0.s8 %v6091
    %v6093 = vlaneseq
    %v6094 = vshrl.u32 %v6093, 7
    %v6095 = vsub.s32 %v6092, %v6094
    %v6096 = vrot.slane %v6082, %v6095
    %v6097 = vcombine.low %v6089, %v6096
    %v6098 = vcombine.low %v3631, %v3638
    %v6099 = vcombine.low %v3645, %v3652
    %v6101 = vunpack.c.l.s4 1983009808
    %v6102 = vunpack.c.0.s8 %v6101
    %v6103 = vlaneseq
    %v6104 = vshrl.u32 %v6103, 7
    %v6105 = vsub.s32 %v6102, %v6104
    %v6106 = vrot.slane %v6098, %v6105
    %v6108 = vunpack.c.l.s4 1983009808
    %v6109 = vunpack.c.0.s8 %v6108
    %v6110 = vlaneseq
    %v6111 = vshrl.u32 %v6110, 7
    %v6112 = vsub.s32 %v6109, %v6111
    %v6113 = vrot.slane %v6099, %v6112
    %v6114 = vcombine.low %v6106, %v6113
    %v6115 = vcombine.low %v3659, %v3666
    %v6116 = vcombine.low %v3673, %v3680
    %v6118 = vunpack.c.l.s4 1983009808
    %v6119 = vunpack.c.0.s8 %v6118
    %v6120 = vlaneseq
    %v6121 = vshrl.u32 %v6120, 7
    %v6122 = vsub.s32 %v6119, %v6121
    %v6123 = vrot.slane %v6115, %v6122
    %v6125 = vunpack.c.l.s4 1983009808
    %v6126 = vunpack.c.0.s8 %v6125
    %v6127 = vlaneseq
    %v6128 = vshrl.u32 %v6127, 7
    %v6129 = vsub.s32 %v6126, %v6128
    %v6130 = vrot.slane %v6116, %v6129
    %v6131 = vcombine.low %v6123, %v6130
    %v6132 = vcombine.low %v3687, %v3694
    %v6133 = vcombine.low %v3701, %v3708
    %v6135 = vunpack.c.l.s4 1983009808
    %v6136 = vunpack.c.0.s8 %v6135
    %v6137 = vlaneseq
    %v6138 = vshrl.u32 %v6137, 7
    %v6139 = vsub.s32 %v6136, %v6138
    %v6140 = vrot.slane %v6132, %v6139
    %v6142 = vunpack.c.l.s4 1983009808
    %v6143 = vunpack.c.0.s8 %v6142
    %v6144 = vlaneseq
    %v6145 = vshrl.u32 %v6144, 7
    %v6146 = vsub.s32 %v6143, %v6145
    %v6147 = vrot.slane %v6133, %v6146
    %v6148 = vcombine.low %v6140, %v6147
    %v6149 = vcombine.low %v3715, %v3722
    %v6150 = vcombine.low %v3729, %v3736
    %v6152 = vunpack.c.l.s4 1983009808
    %v6153 = vunpack.c.0.s8 %v6152
    %v6154 = vlaneseq
    %v6155 = vshrl.u32 %v6154, 7
    %v6156 = vsub.s32 %v6153, %v6155
    %v6157 = vrot.slane %v6149, %v6156
    %v6159 = vunpack.c.l.s4 1983009808
    %v6160 = vunpack.c.0.s8 %v6159
    %v6161 = vlaneseq
    %v6162 = vshrl.u32 %v6161, 7
    %v6163 = vsub.s32 %v6160, %v6162
    %v6164 = vrot.slane %v6150, %v6163
    %v6165 = vcombine.low %v6157, %v6164
    %v6166 = vcombine.low %v3743, %v3750
    %v6167 = vcombine.low %v3757, %v3764
    %v6169 = vunpack.c.l.s4 1983009808
    %v6170 = vunpack.c.0.s8 %v6169
    %v6171 = vlaneseq
    %v6172 = vshrl.u32 %v6171, 7
    %v6173 = vsub.s32 %v6170, %v6172
    %v6174 = vrot.slane %v6166, %v6173
    %v6176 = vunpack.c.l.s4 1983009808
    %v6177 = vunpack.c.0.s8 %v6176
    %v6178 = vlaneseq
    %v6179 = vshrl.u32 %v6178, 7
    %v6180 = vsub.s32 %v6177, %v6179
    %v6181 = vrot.slane %v6167, %v6180
    %v6182 = vcombine.low %v6174, %v6181
    %v6183 = vcombine.low %v3771, %v3778
    %v6184 = vcombine.low %v3785, %v3792
    %v6186 = vunpack.c.l.s4 1983009808
    %v6187 = vunpack.c.0.s8 %v6186
    %v6188 = vlaneseq
    %v6189 = vshrl.u32 %v6188, 7
    %v6190 = vsub.s32 %v6187, %v6189
    %v6191 = vrot.slane %v6183, %v6190
    %v6193 = vunpack.c.l.s4 1983009808
    %v6194 = vunpack.c.0.s8 %v6193
    %v6195 = vlaneseq
    %v6196 = vshrl.u32 %v6195, 7
    %v6197 = vsub.s32 %v6194, %v6196
    %v6198 = vrot.slane %v6184, %v6197
    %v6199 = vcombine.low %v6191, %v6198
    %v6200 = vcombine.low %v3799, %v3806
    %v6201 = vcombine.low %v3813, %v3820
    %v6203 = vunpack.c.l.s4 1983009808
    %v6204 = vunpack.c.0.s8 %v6203
    %v6205 = vlaneseq
    %v6206 = vshrl.u32 %v6205, 7
    %v6207 = vsub.s32 %v6204, %v6206
    %v6208 = vrot.slane %v6200, %v6207
    %v6210 = vunpack.c.l.s4 1983009808
    %v6211 = vunpack.c.0.s8 %v6210
    %v6212 = vlaneseq
    %v6213 = vshrl.u32 %v6212, 7
    %v6214 = vsub.s32 %v6211, %v6213
    %v6215 = vrot.slane %v6201, %v6214
    %v6216 = vcombine.low %v6208, %v6215
    %v6217 = vcombine.low %v3827, %v3834
    %v6218 = vcombine.low %v3841, %v3848
    %v6220 = vunpack.c.l.s4 1983009808
    %v6221 = vunpack.c.0.s8 %v6220
    %v6222 = vlaneseq
    %v6223 = vshrl.u32 %v6222, 7
    %v6224 = vsub.s32 %v6221, %v6223
    %v6225 = vrot.slane %v6217, %v6224
    %v6227 = vunpack.c.l.s4 1983009808
    %v6228 = vunpack.c.0.s8 %v6227
    %v6229 = vlaneseq
    %v6230 = vshrl.u32 %v6229, 7
    %v6231 = vsub.s32 %v6228, %v6230
    %v6232 = vrot.slane %v6218, %v6231
    %v6233 = vcombine.low %v6225, %v6232
    %v6234 = vcombine.low %v3855, %v3862
    %v6235 = vcombine.low %v3869, %v3876
    %v6237 = vunpack.c.l.s4 1983009808
    %v6238 = vunpack.c.0.s8 %v6237
    %v6239 = vlaneseq
    %v6240 = vshrl.u32 %v6239, 7
    %v6241 = vsub.s32 %v6238, %v6240
    %v6242 = vrot.slane %v6234, %v6241
    %v6244 = vunpack.c.l.s4 1983009808
    %v6245 = vunpack.c.0.s8 %v6244
    %v6246 = vlaneseq
    %v6247 = vshrl.u32 %v6246, 7
    %v6248 = vsub.s32 %v6245, %v6247
    %v6249 = vrot.slane %v6235, %v6248
    %v6250 = vcombine.low %v6242, %v6249
    %v6251 = vcombine.low %v3883, %v3890
    %v6252 = vcombine.low %v3897, %v3904
    %v6254 = vunpack.c.l.s4 1983009808
    %v6255 = vunpack.c.0.s8 %v6254
    %v6256 = vlaneseq
    %v6257 = vshrl.u32 %v6256, 7
    %v6258 = vsub.s32 %v6255, %v6257
    %v6259 = vrot.slane %v6251, %v6258
    %v6261 = vunpack.c.l.s4 1983009808
    %v6262 = vunpack.c.0.s8 %v6261
    %v6263 = vlaneseq
    %v6264 = vshrl.u32 %v6263, 7
    %v6265 = vsub.s32 %v6262, %v6264
    %v6266 = vrot.slane %v6252, %v6265
    %v6267 = vcombine.low %v6259, %v6266
    %v6268 = vcombine.low %v3911, %v3918
    %v6269 = vcombine.low %v3925, %v3932
    %v6271 = vunpack.c.l.s4 1983009808
    %v6272 = vunpack.c.0.s8 %v6271
    %v6273 = vlaneseq
    %v6274 = vshrl.u32 %v6273, 7
    %v6275 = vsub.s32 %v6272, %v6274
    %v6276 = vrot.slane %v6268, %v6275
    %v6278 = vunpack.c.l.s4 1983009808
    %v6279 = vunpack.c.0.s8 %v6278
    %v6280 = vlaneseq
    %v6281 = vshrl.u32 %v6280, 7
    %v6282 = vsub.s32 %v6279, %v6281
    %v6283 = vrot.slane %v6269, %v6282
    %v6284 = vcombine.low %v6276, %v6283
    %v6285 = vcombine.low %v3939, %v3946
    %v6286 = vcombine.low %v3953, %v3960
    %v6288 = vunpack.c.l.s4 1983009808
    %v6289 = vunpack.c.0.s8 %v6288
    %v6290 = vlaneseq
    %v6291 = vshrl.u32 %v6290, 7
    %v6292 = vsub.s32 %v6289, %v6291
    %v6293 = vrot.slane %v6285, %v6292
    %v6295 = vunpack.c.l.s4 1983009808
    %v6296 = vunpack.c.0.s8 %v6295
    %v6297 = vlaneseq
    %v6298 = vshrl.u32 %v6297, 7
    %v6299 = vsub.s32 %v6296, %v6298
    %v6300 = vrot.slane %v6286, %v6299
    %v6301 = vcombine.low %v6293, %v6300
    %v6302 = vcombine.low %v3967, %v3974
    %v6303 = vcombine.low %v3981, %v3988
    %v6305 = vunpack.c.l.s4 1983009808
    %v6306 = vunpack.c.0.s8 %v6305
    %v6307 = vlaneseq
    %v6308 = vshrl.u32 %v6307, 7
    %v6309 = vsub.s32 %v6306, %v6308
    %v6310 = vrot.slane %v6302, %v6309
    %v6312 = vunpack.c.l.s4 1983009808
    %v6313 = vunpack.c.0.s8 %v6312
    %v6314 = vlaneseq
    %v6315 = vshrl.u32 %v6314, 7
    %v6316 = vsub.s32 %v6313, %v6315
    %v6317 = vrot.slane %v6303, %v6316
    %v6318 = vcombine.low %v6310, %v6317
    %v6319 = vcombine.low %v3995, %v4002
    %v6320 = vcombine.low %v4009, %v4016
    %v6322 = vunpack.c.l.s4 1983009808
    %v6323 = vunpack.c.0.s8 %v6322
    %v6324 = vlaneseq
    %v6325 = vshrl.u32 %v6324, 7
    %v6326 = vsub.s32 %v6323, %v6325
    %v6327 = vrot.slane %v6319, %v6326
    %v6329 = vunpack.c.l.s4 1983009808
    %v6330 = vunpack.c.0.s8 %v6329
    %v6331 = vlaneseq
    %v6332 = vshrl.u32 %v6331, 7
    %v6333 = vsub.s32 %v6330, %v6332
    %v6334 = vrot.slane %v6320, %v6333
    %v6335 = vcombine.low %v6327, %v6334
    %v6336 = vcombine.low %v4023, %v4030
    %v6337 = vcombine.low %v4037, %v4044
    %v6339 = vunpack.c.l.s4 1983009808
    %v6340 = vunpack.c.0.s8 %v6339
    %v6341 = vlaneseq
    %v6342 = vshrl.u32 %v6341, 7
    %v6343 = vsub.s32 %v6340, %v6342
    %v6344 = vrot.slane %v6336, %v6343
    %v6346 = vunpack.c.l.s4 1983009808
    %v6347 = vunpack.c.0.s8 %v6346
    %v6348 = vlaneseq
    %v6349 = vshrl.u32 %v6348, 7
    %v6350 = vsub.s32 %v6347, %v6349
    %v6351 = vrot.slane %v6337, %v6350
    %v6352 = vcombine.low %v6344, %v6351
    %v6353 = vcombine.low %v4051, %v4058
    %v6354 = vcombine.low %v4065, %v4072
    %v6356 = vunpack.c.l.s4 1983009808
    %v6357 = vunpack.c.0.s8 %v6356
    %v6358 = vlaneseq
    %v6359 = vshrl.u32 %v6358, 7
    %v6360 = vsub.s32 %v6357, %v6359
    %v6361 = vrot.slane %v6353, %v6360
    %v6363 = vunpack.c.l.s4 1983009808
    %v6364 = vunpack.c.0.s8 %v6363
    %v6365 = vlaneseq
    %v6366 = vshrl.u32 %v6365, 7
    %v6367 = vsub.s32 %v6364, %v6366
    %v6368 = vrot.slane %v6354, %v6367
    %v6369 = vcombine.low %v6361, %v6368
    %v6370 = vcombine.low %v4079, %v4086
    %v6371 = vcombine.low %v4093, %v4100
    %v6373 = vunpack.c.l.s4 1983009808
    %v6374 = vunpack.c.0.s8 %v6373
    %v6375 = vlaneseq
    %v6376 = vshrl.u32 %v6375, 7
    %v6377 = vsub.s32 %v6374, %v6376
    %v6378 = vrot.slane %v6370, %v6377
    %v6380 = vunpack.c.l.s4 1983009808
    %v6381 = vunpack.c.0.s8 %v6380
    %v6382 = vlaneseq
    %v6383 = vshrl.u32 %v6382, 7
    %v6384 = vsub.s32 %v6381, %v6383
    %v6385 = vrot.slane %v6371, %v6384
    %v6386 = vcombine.low %v6378, %v6385
    %v6387 = vcombine.low %v4107, %v4114
    %v6388 = vcombine.low %v4121, %v4128
    %v6390 = vunpack.c.l.s4 1983009808
    %v6391 = vunpack.c.0.s8 %v6390
    %v6392 = vlaneseq
    %v6393 = vshrl.u32 %v6392, 7
    %v6394 = vsub.s32 %v6391, %v6393
    %v6395 = vrot.slane %v6387, %v6394
    %v6397 = vunpack.c.l.s4 1983009808
    %v6398 = vunpack.c.0.s8 %v6397
    %v6399 = vlaneseq
    %v6400 = vshrl.u32 %v6399, 7
    %v6401 = vsub.s32 %v6398, %v6400
    %v6402 = vrot.slane %v6388, %v6401
    %v6403 = vcombine.low %v6395, %v6402
    %v6404 = vcombine.low %v4135, %v4142
    %v6405 = vcombine.low %v4149, %v4156
    %v6407 = vunpack.c.l.s4 1983009808
    %v6408 = vunpack.c.0.s8 %v6407
    %v6409 = vlaneseq
    %v6410 = vshrl.u32 %v6409, 7
    %v6411 = vsub.s32 %v6408, %v6410
    %v6412 = vrot.slane %v6404, %v6411
    %v6414 = vunpack.c.l.s4 1983009808
    %v6415 = vunpack.c.0.s8 %v6414
    %v6416 = vlaneseq
    %v6417 = vshrl.u32 %v6416, 7
    %v6418 = vsub.s32 %v6415, %v6417
    %v6419 = vrot.slane %v6405, %v6418
    %v6420 = vcombine.low %v6412, %v6419
    %v6421 = vcombine.low %v4163, %v4170
    %v6422 = vcombine.low %v4177, %v4184
    %v6424 = vunpack.c.l.s4 1983009808
    %v6425 = vunpack.c.0.s8 %v6424
    %v6426 = vlaneseq
    %v6427 = vshrl.u32 %v6426, 7
    %v6428 = vsub.s32 %v6425, %v6427
    %v6429 = vrot.slane %v6421, %v6428
    %v6431 = vunpack.c.l.s4 1983009808
    %v6432 = vunpack.c.0.s8 %v6431
    %v6433 = vlaneseq
    %v6434 = vshrl.u32 %v6433, 7
    %v6435 = vsub.s32 %v6432, %v6434
    %v6436 = vrot.slane %v6422, %v6435
    %v6437 = vcombine.low %v6429, %v6436
    %v6438 = vcombine.low %v4191, %v4198
    %v6439 = vcombine.low %v4205, %v4212
    %v6441 = vunpack.c.l.s4 1983009808
    %v6442 = vunpack.c.0.s8 %v6441
    %v6443 = vlaneseq
    %v6444 = vshrl.u32 %v6443, 7
    %v6445 = vsub.s32 %v6442, %v6444
    %v6446 = vrot.slane %v6438, %v6445
    %v6448 = vunpack.c.l.s4 1983009808
    %v6449 = vunpack.c.0.s8 %v6448
    %v6450 = vlaneseq
    %v6451 = vshrl.u32 %v6450, 7
    %v6452 = vsub.s32 %v6449, %v6451
    %v6453 = vrot.slane %v6439, %v6452
    %v6454 = vcombine.low %v6446, %v6453
    %v6455 = vcombine.low %v4219, %v4226
    %v6456 = vcombine.low %v4233, %v4240
    %v6458 = vunpack.c.l.s4 1983009808
    %v6459 = vunpack.c.0.s8 %v6458
    %v6460 = vlaneseq
    %v6461 = vshrl.u32 %v6460, 7
    %v6462 = vsub.s32 %v6459, %v6461
    %v6463 = vrot.slane %v6455, %v6462
    %v6465 = vunpack.c.l.s4 1983009808
    %v6466 = vunpack.c.0.s8 %v6465
    %v6467 = vlaneseq
    %v6468 = vshrl.u32 %v6467, 7
    %v6469 = vsub.s32 %v6466, %v6468
    %v6470 = vrot.slane %v6456, %v6469
    %v6471 = vcombine.low %v6463, %v6470
    %v6472 = vcombine.low %v4247, %v4254
    %v6473 = vcombine.low %v4261, %v4268
    %v6475 = vunpack.c.l.s4 1983009808
    %v6476 = vunpack.c.0.s8 %v6475
    %v6477 = vlaneseq
    %v6478 = vshrl.u32 %v6477, 7
    %v6479 = vsub.s32 %v6476, %v6478
    %v6480 = vrot.slane %v6472, %v6479
    %v6482 = vunpack.c.l.s4 1983009808
    %v6483 = vunpack.c.0.s8 %v6482
    %v6484 = vlaneseq
    %v6485 = vshrl.u32 %v6484, 7
    %v6486 = vsub.s32 %v6483, %v6485
    %v6487 = vrot.slane %v6473, %v6486
    %v6488 = vcombine.low %v6480, %v6487
    %v6489 = vcombine.low %v4275, %v4282
    %v6490 = vcombine.low %v4289, %v4296
    %v6492 = vunpack.c.l.s4 1983009808
    %v6493 = vunpack.c.0.s8 %v6492
    %v6494 = vlaneseq
    %v6495 = vshrl.u32 %v6494, 7
    %v6496 = vsub.s32 %v6493, %v6495
    %v6497 = vrot.slane %v6489, %v6496
    %v6499 = vunpack.c.l.s4 1983009808
    %v6500 = vunpack.c.0.s8 %v6499
    %v6501 = vlaneseq
    %v6502 = vshrl.u32 %v6501, 7
    %v6503 = vsub.s32 %v6500, %v6502
    %v6504 = vrot.slane %v6490, %v6503
    %v6505 = vcombine.low %v6497, %v6504
    %v6506 = vcombine.low %v4303, %v4310
    %v6507 = vcombine.low %v4317, %v4324
    %v6509 = vunpack.c.l.s4 1983009808
    %v6510 = vunpack.c.0.s8 %v6509
    %v6511 = vlaneseq
    %v6512 = vshrl.u32 %v6511, 7
    %v6513 = vsub.s32 %v6510, %v6512
    %v6514 = vrot.slane %v6506, %v6513
    %v6516 = vunpack.c.l.s4 1983009808
    %v6517 = vunpack.c.0.s8 %v6516
    %v6518 = vlaneseq
    %v6519 = vshrl.u32 %v6518, 7
    %v6520 = vsub.s32 %v6517, %v6519
    %v6521 = vrot.slane %v6507, %v6520
    %v6522 = vcombine.low %v6514, %v6521
    %v6523 = vcombine.low %v4331, %v4338
    %v6524 = vcombine.low %v4345, %v4352
    %v6526 = vunpack.c.l.s4 1983009808
    %v6527 = vunpack.c.0.s8 %v6526
    %v6528 = vlaneseq
    %v6529 = vshrl.u32 %v6528, 7
    %v6530 = vsub.s32 %v6527, %v6529
    %v6531 = vrot.slane %v6523, %v6530
    %v6533 = vunpack.c.l.s4 1983009808
    %v6534 = vunpack.c.0.s8 %v6533
    %v6535 = vlaneseq
    %v6536 = vshrl.u32 %v6535, 7
    %v6537 = vsub.s32 %v6534, %v6536
    %v6538 = vrot.slane %v6524, %v6537
    %v6539 = vcombine.low %v6531, %v6538
    %v6540 = vcombine.low %v4359, %v4366
    %v6541 = vcombine.low %v4373, %v4380
    %v6543 = vunpack.c.l.s4 1983009808
    %v6544 = vunpack.c.0.s8 %v6543
    %v6545 = vlaneseq
    %v6546 = vshrl.u32 %v6545, 7
    %v6547 = vsub.s32 %v6544, %v6546
    %v6548 = vrot.slane %v6540, %v6547
    %v6550 = vunpack.c.l.s4 1983009808
    %v6551 = vunpack.c.0.s8 %v6550
    %v6552 = vlaneseq
    %v6553 = vshrl.u32 %v6552, 7
    %v6554 = vsub.s32 %v6551, %v6553
    %v6555 = vrot.slane %v6541, %v6554
    %v6556 = vcombine.low %v6548, %v6555
    %6557 = vset.pattern.permute.xlu0 0
    %6558 = vperm.xlu0 %6557, %v4397
    %v6559 = vpop.permute.xlu0 %6558
    %6560 = vset.pattern.permute.xlu0 0
    %6561 = vperm.xlu0 %6560, %v4414
    %v6562 = vpop.permute.xlu0 %6561
    %6563 = vset.pattern.permute.xlu0 0
    %6564 = vperm.xlu0 %6563, %v4431
    %v6565 = vpop.permute.xlu0 %6564
    %6566 = vset.pattern.permute.xlu0 0
    %6567 = vperm.xlu0 %6566, %v4448
    %v6568 = vpop.permute.xlu0 %6567
    %6569 = vset.pattern.permute.xlu0 0
    %6570 = vperm.xlu0 %6569, %v4465
    %v6571 = vpop.permute.xlu0 %6570
    %6572 = vset.pattern.permute.xlu0 0
    %6573 = vperm.xlu0 %6572, %v4482
    %v6574 = vpop.permute.xlu0 %6573
    %6575 = vset.pattern.permute.xlu0 0
    %6576 = vperm.xlu0 %6575, %v4499
    %v6577 = vpop.permute.xlu0 %6576
    %6578 = vset.pattern.permute.xlu0 0
    %6579 = vperm.xlu0 %6578, %v4516
    %v6580 = vpop.permute.xlu0 %6579
    %6581 = vset.pattern.permute.xlu0 0
    %6582 = vperm.xlu0 %6581, %v4533
    %v6583 = vpop.permute.xlu0 %6582
    %6584 = vset.pattern.permute.xlu0 0
    %6585 = vperm.xlu0 %6584, %v4550
    %v6586 = vpop.permute.xlu0 %6585
    %6587 = vset.pattern.permute.xlu0 0
    %6588 = vperm.xlu0 %6587, %v4567
    %v6589 = vpop.permute.xlu0 %6588
    %6590 = vset.pattern.permute.xlu0 0
    %6591 = vperm.xlu0 %6590, %v4584
    %v6592 = vpop.permute.xlu0 %6591
    %6593 = vset.pattern.permute.xlu0 0
    %6594 = vperm.xlu0 %6593, %v4601
    %v6595 = vpop.permute.xlu0 %6594
    %6596 = vset.pattern.permute.xlu0 0
    %6597 = vperm.xlu0 %6596, %v4618
    %v6598 = vpop.permute.xlu0 %6597
    %6599 = vset.pattern.permute.xlu0 0
    %6600 = vperm.xlu0 %6599, %v4635
    %v6601 = vpop.permute.xlu0 %6600
    %6602 = vset.pattern.permute.xlu0 0
    %6603 = vperm.xlu0 %6602, %v4652
    %v6604 = vpop.permute.xlu0 %6603
    %6605 = vset.pattern.permute.xlu0 0
    %6606 = vperm.xlu0 %6605, %v4669
    %v6607 = vpop.permute.xlu0 %6606
    %6608 = vset.pattern.permute.xlu0 0
    %6609 = vperm.xlu0 %6608, %v4686
    %v6610 = vpop.permute.xlu0 %6609
    %6611 = vset.pattern.permute.xlu0 0
    %6612 = vperm.xlu0 %6611, %v4703
    %v6613 = vpop.permute.xlu0 %6612
    %6614 = vset.pattern.permute.xlu0 0
    %6615 = vperm.xlu0 %6614, %v4720
    %v6616 = vpop.permute.xlu0 %6615
    %6617 = vset.pattern.permute.xlu0 0
    %6618 = vperm.xlu0 %6617, %v4737
    %v6619 = vpop.permute.xlu0 %6618
    %6620 = vset.pattern.permute.xlu0 0
    %6621 = vperm.xlu0 %6620, %v4754
    %v6622 = vpop.permute.xlu0 %6621
    %6623 = vset.pattern.permute.xlu0 0
    %6624 = vperm.xlu0 %6623, %v4771
    %v6625 = vpop.permute.xlu0 %6624
    %6626 = vset.pattern.permute.xlu0 0
    %6627 = vperm.xlu0 %6626, %v4788
    %v6628 = vpop.permute.xlu0 %6627
    %6629 = vset.pattern.permute.xlu0 0
    %6630 = vperm.xlu0 %6629, %v4805
    %v6631 = vpop.permute.xlu0 %6630
    %6632 = vset.pattern.permute.xlu0 0
    %6633 = vperm.xlu0 %6632, %v4822
    %v6634 = vpop.permute.xlu0 %6633
    %6635 = vset.pattern.permute.xlu0 0
    %6636 = vperm.xlu0 %6635, %v4839
    %v6637 = vpop.permute.xlu0 %6636
    %6638 = vset.pattern.permute.xlu0 0
    %6639 = vperm.xlu0 %6638, %v4856
    %v6640 = vpop.permute.xlu0 %6639
    %6641 = vset.pattern.permute.xlu0 0
    %6642 = vperm.xlu0 %6641, %v4873
    %v6643 = vpop.permute.xlu0 %6642
    %6644 = vset.pattern.permute.xlu0 0
    %6645 = vperm.xlu0 %6644, %v4890
    %v6646 = vpop.permute.xlu0 %6645
    %6647 = vset.pattern.permute.xlu0 0
    %6648 = vperm.xlu0 %6647, %v4907
    %v6649 = vpop.permute.xlu0 %6648
    %6650 = vset.pattern.permute.xlu0 0
    %6651 = vperm.xlu0 %6650, %v4924
    %v6652 = vpop.permute.xlu0 %6651
    %6653 = vset.pattern.permute.xlu0 0
    %6654 = vperm.xlu0 %6653, %v4941
    %v6655 = vpop.permute.xlu0 %6654
    %6656 = vset.pattern.permute.xlu0 0
    %6657 = vperm.xlu0 %6656, %v4958
    %v6658 = vpop.permute.xlu0 %6657
    %6659 = vset.pattern.permute.xlu0 0
    %6660 = vperm.xlu0 %6659, %v4975
    %v6661 = vpop.permute.xlu0 %6660
    %6662 = vset.pattern.permute.xlu0 0
    %6663 = vperm.xlu0 %6662, %v4992
    %v6664 = vpop.permute.xlu0 %6663
    %6665 = vset.pattern.permute.xlu0 0
    %6666 = vperm.xlu0 %6665, %v5009
    %v6667 = vpop.permute.xlu0 %6666
    %6668 = vset.pattern.permute.xlu0 0
    %6669 = vperm.xlu0 %6668, %v5026
    %v6670 = vpop.permute.xlu0 %6669
    %6671 = vset.pattern.permute.xlu0 0
    %6672 = vperm.xlu0 %6671, %v5043
    %v6673 = vpop.permute.xlu0 %6672
    %6674 = vset.pattern.permute.xlu0 0
    %6675 = vperm.xlu0 %6674, %v5060
    %v6676 = vpop.permute.xlu0 %6675
    %6677 = vset.pattern.permute.xlu0 0
    %6678 = vperm.xlu0 %6677, %v5077
    %v6679 = vpop.permute.xlu0 %6678
    %6680 = vset.pattern.permute.xlu0 0
    %6681 = vperm.xlu0 %6680, %v5094
    %v6682 = vpop.permute.xlu0 %6681
    %6683 = vset.pattern.permute.xlu0 0
    %6684 = vperm.xlu0 %6683, %v5111
    %v6685 = vpop.permute.xlu0 %6684
    %6686 = vset.pattern.permute.xlu0 0
    %6687 = vperm.xlu0 %6686, %v5128
    %v6688 = vpop.permute.xlu0 %6687
    %6689 = vset.pattern.permute.xlu0 0
    %6690 = vperm.xlu0 %6689, %v5145
    %v6691 = vpop.permute.xlu0 %6690
    %6692 = vset.pattern.permute.xlu0 0
    %6693 = vperm.xlu0 %6692, %v5162
    %v6694 = vpop.permute.xlu0 %6693
    %6695 = vset.pattern.permute.xlu0 0
    %6696 = vperm.xlu0 %6695, %v5179
    %v6697 = vpop.permute.xlu0 %6696
    %6698 = vset.pattern.permute.xlu0 0
    %6699 = vperm.xlu0 %6698, %v5196
    %v6700 = vpop.permute.xlu0 %6699
    %6701 = vset.pattern.permute.xlu0 0
    %6702 = vperm.xlu0 %6701, %v5213
    %v6703 = vpop.permute.xlu0 %6702
    %6704 = vset.pattern.permute.xlu0 0
    %6705 = vperm.xlu0 %6704, %v5230
    %v6706 = vpop.permute.xlu0 %6705
    %6707 = vset.pattern.permute.xlu0 0
    %6708 = vperm.xlu0 %6707, %v5247
    %v6709 = vpop.permute.xlu0 %6708
    %6710 = vset.pattern.permute.xlu0 0
    %6711 = vperm.xlu0 %6710, %v5264
    %v6712 = vpop.permute.xlu0 %6711
    %6713 = vset.pattern.permute.xlu0 0
    %6714 = vperm.xlu0 %6713, %v5281
    %v6715 = vpop.permute.xlu0 %6714
    %6716 = vset.pattern.permute.xlu0 0
    %6717 = vperm.xlu0 %6716, %v5298
    %v6718 = vpop.permute.xlu0 %6717
    %6719 = vset.pattern.permute.xlu0 0
    %6720 = vperm.xlu0 %6719, %v5315
    %v6721 = vpop.permute.xlu0 %6720
    %6722 = vset.pattern.permute.xlu0 0
    %6723 = vperm.xlu0 %6722, %v5332
    %v6724 = vpop.permute.xlu0 %6723
    %6725 = vset.pattern.permute.xlu0 0
    %6726 = vperm.xlu0 %6725, %v5349
    %v6727 = vpop.permute.xlu0 %6726
    %6728 = vset.pattern.permute.xlu0 0
    %6729 = vperm.xlu0 %6728, %v5366
    %v6730 = vpop.permute.xlu0 %6729
    %6731 = vset.pattern.permute.xlu0 0
    %6732 = vperm.xlu0 %6731, %v5383
    %v6733 = vpop.permute.xlu0 %6732
    %6734 = vset.pattern.permute.xlu0 0
    %6735 = vperm.xlu0 %6734, %v5400
    %v6736 = vpop.permute.xlu0 %6735
    %6737 = vset.pattern.permute.xlu0 0
    %6738 = vperm.xlu0 %6737, %v5417
    %v6739 = vpop.permute.xlu0 %6738
    %6740 = vset.pattern.permute.xlu0 0
    %6741 = vperm.xlu0 %6740, %v5434
    %v6742 = vpop.permute.xlu0 %6741
    %6743 = vset.pattern.permute.xlu0 0
    %6744 = vperm.xlu0 %6743, %v5451
    %v6745 = vpop.permute.xlu0 %6744
    %6746 = vset.pattern.permute.xlu0 0
    %6747 = vperm.xlu0 %6746, %v5468
    %v6748 = vpop.permute.xlu0 %6747
    %6749 = vset.pattern.permute.xlu0 0
    %6750 = vperm.xlu0 %6749, %v5485
    %v6751 = vpop.permute.xlu0 %6750
    %6752 = vset.pattern.permute.xlu0 0
    %6753 = vperm.xlu0 %6752, %v5502
    %v6754 = vpop.permute.xlu0 %6753
    %6755 = vset.pattern.permute.xlu0 0
    %6756 = vperm.xlu0 %6755, %v5519
    %v6757 = vpop.permute.xlu0 %6756
    %6758 = vset.pattern.permute.xlu0 0
    %6759 = vperm.xlu0 %6758, %v5536
    %v6760 = vpop.permute.xlu0 %6759
    %6761 = vset.pattern.permute.xlu0 0
    %6762 = vperm.xlu0 %6761, %v5553
    %v6763 = vpop.permute.xlu0 %6762
    %6764 = vset.pattern.permute.xlu0 0
    %6765 = vperm.xlu0 %6764, %v5570
    %v6766 = vpop.permute.xlu0 %6765
    %6767 = vset.pattern.permute.xlu0 0
    %6768 = vperm.xlu0 %6767, %v5587
    %v6769 = vpop.permute.xlu0 %6768
    %6770 = vset.pattern.permute.xlu0 0
    %6771 = vperm.xlu0 %6770, %v5604
    %v6772 = vpop.permute.xlu0 %6771
    %6773 = vset.pattern.permute.xlu0 0
    %6774 = vperm.xlu0 %6773, %v5621
    %v6775 = vpop.permute.xlu0 %6774
    %6776 = vset.pattern.permute.xlu0 0
    %6777 = vperm.xlu0 %6776, %v5638
    %v6778 = vpop.permute.xlu0 %6777
    %6779 = vset.pattern.permute.xlu0 0
    %6780 = vperm.xlu0 %6779, %v5655
    %v6781 = vpop.permute.xlu0 %6780
    %6782 = vset.pattern.permute.xlu0 0
    %6783 = vperm.xlu0 %6782, %v5672
    %v6784 = vpop.permute.xlu0 %6783
    %6785 = vset.pattern.permute.xlu0 0
    %6786 = vperm.xlu0 %6785, %v5689
    %v6787 = vpop.permute.xlu0 %6786
    %6788 = vset.pattern.permute.xlu0 0
    %6789 = vperm.xlu0 %6788, %v5706
    %v6790 = vpop.permute.xlu0 %6789
    %6791 = vset.pattern.permute.xlu0 0
    %6792 = vperm.xlu0 %6791, %v5723
    %v6793 = vpop.permute.xlu0 %6792
    %6794 = vset.pattern.permute.xlu0 0
    %6795 = vperm.xlu0 %6794, %v5740
    %v6796 = vpop.permute.xlu0 %6795
    %6797 = vset.pattern.permute.xlu0 0
    %6798 = vperm.xlu0 %6797, %v5757
    %v6799 = vpop.permute.xlu0 %6798
    %6800 = vset.pattern.permute.xlu0 0
    %6801 = vperm.xlu0 %6800, %v5774
    %v6802 = vpop.permute.xlu0 %6801
    %6803 = vset.pattern.permute.xlu0 0
    %6804 = vperm.xlu0 %6803, %v5791
    %v6805 = vpop.permute.xlu0 %6804
    %6806 = vset.pattern.permute.xlu0 0
    %6807 = vperm.xlu0 %6806, %v5808
    %v6808 = vpop.permute.xlu0 %6807
    %6809 = vset.pattern.permute.xlu0 0
    %6810 = vperm.xlu0 %6809, %v5825
    %v6811 = vpop.permute.xlu0 %6810
    %6812 = vset.pattern.permute.xlu0 0
    %6813 = vperm.xlu0 %6812, %v5842
    %v6814 = vpop.permute.xlu0 %6813
    %6815 = vset.pattern.permute.xlu0 0
    %6816 = vperm.xlu0 %6815, %v5859
    %v6817 = vpop.permute.xlu0 %6816
    %6818 = vset.pattern.permute.xlu0 0
    %6819 = vperm.xlu0 %6818, %v5876
    %v6820 = vpop.permute.xlu0 %6819
    %6821 = vset.pattern.permute.xlu0 0
    %6822 = vperm.xlu0 %6821, %v5893
    %v6823 = vpop.permute.xlu0 %6822
    %6824 = vset.pattern.permute.xlu0 0
    %6825 = vperm.xlu0 %6824, %v5910
    %v6826 = vpop.permute.xlu0 %6825
    %6827 = vset.pattern.permute.xlu0 0
    %6828 = vperm.xlu0 %6827, %v5927
    %v6829 = vpop.permute.xlu0 %6828
    %6830 = vset.pattern.permute.xlu0 0
    %6831 = vperm.xlu0 %6830, %v5944
    %v6832 = vpop.permute.xlu0 %6831
    %6833 = vset.pattern.permute.xlu0 0
    %6834 = vperm.xlu0 %6833, %v5961
    %v6835 = vpop.permute.xlu0 %6834
    %6836 = vset.pattern.permute.xlu0 0
    %6837 = vperm.xlu0 %6836, %v5978
    %v6838 = vpop.permute.xlu0 %6837
    %6839 = vset.pattern.permute.xlu0 0
    %6840 = vperm.xlu0 %6839, %v5995
    %v6841 = vpop.permute.xlu0 %6840
    %6842 = vset.pattern.permute.xlu0 0
    %6843 = vperm.xlu0 %6842, %v6012
    %v6844 = vpop.permute.xlu0 %6843
    %6845 = vset.pattern.permute.xlu0 0
    %6846 = vperm.xlu0 %6845, %v6029
    %v6847 = vpop.permute.xlu0 %6846
    %6848 = vset.pattern.permute.xlu0 0
    %6849 = vperm.xlu0 %6848, %v6046
    %v6850 = vpop.permute.xlu0 %6849
    %6851 = vset.pattern.permute.xlu0 0
    %6852 = vperm.xlu0 %6851, %v6063
    %v6853 = vpop.permute.xlu0 %6852
    %6854 = vset.pattern.permute.xlu0 0
    %6855 = vperm.xlu0 %6854, %v6080
    %v6856 = vpop.permute.xlu0 %6855
    %6857 = vset.pattern.permute.xlu0 0
    %6858 = vperm.xlu0 %6857, %v6097
    %v6859 = vpop.permute.xlu0 %6858
    %6860 = vset.pattern.permute.xlu0 0
    %6861 = vperm.xlu0 %6860, %v6114
    %v6862 = vpop.permute.xlu0 %6861
    %6863 = vset.pattern.permute.xlu0 0
    %6864 = vperm.xlu0 %6863, %v6131
    %v6865 = vpop.permute.xlu0 %6864
    %6866 = vset.pattern.permute.xlu0 0
    %6867 = vperm.xlu0 %6866, %v6148
    %v6868 = vpop.permute.xlu0 %6867
    %6869 = vset.pattern.permute.xlu0 0
    %6870 = vperm.xlu0 %6869, %v6165
    %v6871 = vpop.permute.xlu0 %6870
    %6872 = vset.pattern.permute.xlu0 0
    %6873 = vperm.xlu0 %6872, %v6182
    %v6874 = vpop.permute.xlu0 %6873
    %6875 = vset.pattern.permute.xlu0 0
    %6876 = vperm.xlu0 %6875, %v6199
    %v6877 = vpop.permute.xlu0 %6876
    %6878 = vset.pattern.permute.xlu0 0
    %6879 = vperm.xlu0 %6878, %v6216
    %v6880 = vpop.permute.xlu0 %6879
    %6881 = vset.pattern.permute.xlu0 0
    %6882 = vperm.xlu0 %6881, %v6233
    %v6883 = vpop.permute.xlu0 %6882
    %6884 = vset.pattern.permute.xlu0 0
    %6885 = vperm.xlu0 %6884, %v6250
    %v6886 = vpop.permute.xlu0 %6885
    %6887 = vset.pattern.permute.xlu0 0
    %6888 = vperm.xlu0 %6887, %v6267
    %v6889 = vpop.permute.xlu0 %6888
    %6890 = vset.pattern.permute.xlu0 0
    %6891 = vperm.xlu0 %6890, %v6284
    %v6892 = vpop.permute.xlu0 %6891
    %6893 = vset.pattern.permute.xlu0 0
    %6894 = vperm.xlu0 %6893, %v6301
    %v6895 = vpop.permute.xlu0 %6894
    %6896 = vset.pattern.permute.xlu0 0
    %6897 = vperm.xlu0 %6896, %v6318
    %v6898 = vpop.permute.xlu0 %6897
    %6899 = vset.pattern.permute.xlu0 0
    %6900 = vperm.xlu0 %6899, %v6335
    %v6901 = vpop.permute.xlu0 %6900
    %6902 = vset.pattern.permute.xlu0 0
    %6903 = vperm.xlu0 %6902, %v6352
    %v6904 = vpop.permute.xlu0 %6903
    %6905 = vset.pattern.permute.xlu0 0
    %6906 = vperm.xlu0 %6905, %v6369
    %v6907 = vpop.permute.xlu0 %6906
    %6908 = vset.pattern.permute.xlu0 0
    %6909 = vperm.xlu0 %6908, %v6386
    %v6910 = vpop.permute.xlu0 %6909
    %6911 = vset.pattern.permute.xlu0 0
    %6912 = vperm.xlu0 %6911, %v6403
    %v6913 = vpop.permute.xlu0 %6912
    %6914 = vset.pattern.permute.xlu0 0
    %6915 = vperm.xlu0 %6914, %v6420
    %v6916 = vpop.permute.xlu0 %6915
    %6917 = vset.pattern.permute.xlu0 0
    %6918 = vperm.xlu0 %6917, %v6437
    %v6919 = vpop.permute.xlu0 %6918
    %6920 = vset.pattern.permute.xlu0 0
    %6921 = vperm.xlu0 %6920, %v6454
    %v6922 = vpop.permute.xlu0 %6921
    %6923 = vset.pattern.permute.xlu0 0
    %6924 = vperm.xlu0 %6923, %v6471
    %v6925 = vpop.permute.xlu0 %6924
    %6926 = vset.pattern.permute.xlu0 0
    %6927 = vperm.xlu0 %6926, %v6488
    %v6928 = vpop.permute.xlu0 %6927
    %6929 = vset.pattern.permute.xlu0 0
    %6930 = vperm.xlu0 %6929, %v6505
    %v6931 = vpop.permute.xlu0 %6930
    %6932 = vset.pattern.permute.xlu0 0
    %6933 = vperm.xlu0 %6932, %v6522
    %v6934 = vpop.permute.xlu0 %6933
    %6935 = vset.pattern.permute.xlu0 0
    %6936 = vperm.xlu0 %6935, %v6539
    %v6937 = vpop.permute.xlu0 %6936
    %6938 = vset.pattern.permute.xlu0 0
    %6939 = vperm.xlu0 %6938, %v6556
    %v6940 = vpop.permute.xlu0 %6939
    %v6941 = vlaneseq
    %v6942 = vand.u32 %v6941, 127
    %v6943 = vlaneseq
    %v6944 = vshrl.u32 %v6943, 7
    %v6945 = vsub.s32 %v6942, %v6944
    %v6946 = vrot.slane %v6559, %v6945
    %v6947 = vadd.s32 %v6942, 4294967288
    %v6948 = vlaneseq
    %v6949 = vshrl.u32 %v6948, 7
    %v6950 = vsub.s32 %v6947, %v6949
    %v6951 = vrot.slane %v6562, %v6950
    %vm6952 = vcmask 130112
    %v6953 = vsel %vm6952, %v6951, %v6946
    %v6954 = vadd.s32 %v6942, 4294967280
    %v6955 = vlaneseq
    %v6956 = vshrl.u32 %v6955, 7
    %v6957 = vsub.s32 %v6954, %v6956
    %v6958 = vrot.slane %v6565, %v6957
    %vm6959 = vcmask 195712
    %v6960 = vsel %vm6959, %v6958, %v6953
    %v6961 = vadd.s32 %v6942, 4294967272
    %v6962 = vlaneseq
    %v6963 = vshrl.u32 %v6962, 7
    %v6964 = vsub.s32 %v6961, %v6963
    %v6965 = vrot.slane %v6568, %v6964
    %vm6966 = vcmask 261312
    %v6967 = vsel %vm6966, %v6965, %v6960
    %v6968 = vadd.s32 %v6942, 4294967264
    %v6969 = vlaneseq
    %v6970 = vshrl.u32 %v6969, 7
    %v6971 = vsub.s32 %v6968, %v6970
    %v6972 = vrot.slane %v6571, %v6971
    %vm6973 = vcmask 326912
    %v6974 = vsel %vm6973, %v6972, %v6967
    %v6975 = vadd.s32 %v6942, 4294967256
    %v6976 = vlaneseq
    %v6977 = vshrl.u32 %v6976, 7
    %v6978 = vsub.s32 %v6975, %v6977
    %v6979 = vrot.slane %v6574, %v6978
    %vm6980 = vcmask 392512
    %v6981 = vsel %vm6980, %v6979, %v6974
    %v6982 = vadd.s32 %v6942, 4294967248
    %v6983 = vlaneseq
    %v6984 = vshrl.u32 %v6983, 7
    %v6985 = vsub.s32 %v6982, %v6984
    %v6986 = vrot.slane %v6577, %v6985
    %vm6987 = vcmask 458112
    %v6988 = vsel %vm6987, %v6986, %v6981
    %v6989 = vadd.s32 %v6942, 4294967240
    %v6990 = vlaneseq
    %v6991 = vshrl.u32 %v6990, 7
    %v6992 = vsub.s32 %v6989, %v6991
    %v6993 = vrot.slane %v6580, %v6992
    %vm6994 = vcmask 523712
    %v6995 = vsel %vm6994, %v6993, %v6988
    %v6996 = vadd.s32 %v6942, 4294967232
    %v6997 = vlaneseq
    %v6998 = vshrl.u32 %v6997, 7
    %v6999 = vsub.s32 %v6996, %v6998
    %v7000 = vrot.slane %v6583, %v6999
    %vm7001 = vcmask 589312
    %v7002 = vsel %vm7001, %v7000, %v6995
    %v7003 = vadd.s32 %v6942, 4294967224
    %v7004 = vlaneseq
    %v7005 = vshrl.u32 %v7004, 7
    %v7006 = vsub.s32 %v7003, %v7005
    %v7007 = vrot.slane %v6586, %v7006
    %vm7008 = vcmask 654912
    %v7009 = vsel %vm7008, %v7007, %v7002
    %v7010 = vadd.s32 %v6942, 4294967216
    %v7011 = vlaneseq
    %v7012 = vshrl.u32 %v7011, 7
    %v7013 = vsub.s32 %v7010, %v7012
    %v7014 = vrot.slane %v6589, %v7013
    %vm7015 = vcmask 720512
    %v7016 = vsel %vm7015, %v7014, %v7009
    %v7017 = vadd.s32 %v6942, 4294967208
    %v7018 = vlaneseq
    %v7019 = vshrl.u32 %v7018, 7
    %v7020 = vsub.s32 %v7017, %v7019
    %v7021 = vrot.slane %v6592, %v7020
    %vm7022 = vcmask 786112
    %v7023 = vsel %vm7022, %v7021, %v7016
    %v7024 = vadd.s32 %v6942, 4294967200
    %v7025 = vlaneseq
    %v7026 = vshrl.u32 %v7025, 7
    %v7027 = vsub.s32 %v7024, %v7026
    %v7028 = vrot.slane %v6595, %v7027
    %vm7029 = vcmask 851712
    %v7030 = vsel %vm7029, %v7028, %v7023
    %v7031 = vadd.s32 %v6942, 4294967192
    %v7032 = vlaneseq
    %v7033 = vshrl.u32 %v7032, 7
    %v7034 = vsub.s32 %v7031, %v7033
    %v7035 = vrot.slane %v6598, %v7034
    %vm7036 = vcmask 917312
    %v7037 = vsel %vm7036, %v7035, %v7030
    %v7038 = vadd.s32 %v6942, 4294967184
    %v7039 = vlaneseq
    %v7040 = vshrl.u32 %v7039, 7
    %v7041 = vsub.s32 %v7038, %v7040
    %v7042 = vrot.slane %v6601, %v7041
    %vm7043 = vcmask 982912
    %v7044 = vsel %vm7043, %v7042, %v7037
    %v7045 = vadd.s32 %v6942, 4294967176
    %v7046 = vlaneseq
    %v7047 = vshrl.u32 %v7046, 7
    %v7048 = vsub.s32 %v7045, %v7047
    %v7049 = vrot.slane %v6604, %v7048
    %vm7050 = vcmask 1048512
    %v7051 = vsel %vm7050, %v7049, %v7044
    %v7052 = vlaneseq
    %v7053 = vshrl.u32 %v7052, 7
    %v7054 = vsub.s32 %v6942, %v7053
    %v7055 = vrot.slane %v6607, %v7054
    %v7056 = vlaneseq
    %v7057 = vshrl.u32 %v7056, 7
    %v7058 = vsub.s32 %v6947, %v7057
    %v7059 = vrot.slane %v6610, %v7058
    %v7060 = vsel %vm6952, %v7059, %v7055
    %v7061 = vlaneseq
    %v7062 = vshrl.u32 %v7061, 7
    %v7063 = vsub.s32 %v6954, %v7062
    %v7064 = vrot.slane %v6613, %v7063
    %v7065 = vsel %vm6959, %v7064, %v7060
    %v7066 = vlaneseq
    %v7067 = vshrl.u32 %v7066, 7
    %v7068 = vsub.s32 %v6961, %v7067
    %v7069 = vrot.slane %v6616, %v7068
    %v7070 = vsel %vm6966, %v7069, %v7065
    %v7071 = vlaneseq
    %v7072 = vshrl.u32 %v7071, 7
    %v7073 = vsub.s32 %v6968, %v7072
    %v7074 = vrot.slane %v6619, %v7073
    %v7075 = vsel %vm6973, %v7074, %v7070
    %v7076 = vlaneseq
    %v7077 = vshrl.u32 %v7076, 7
    %v7078 = vsub.s32 %v6975, %v7077
    %v7079 = vrot.slane %v6622, %v7078
    %v7080 = vsel %vm6980, %v7079, %v7075
    %v7081 = vlaneseq
    %v7082 = vshrl.u32 %v7081, 7
    %v7083 = vsub.s32 %v6982, %v7082
    %v7084 = vrot.slane %v6625, %v7083
    %v7085 = vsel %vm6987, %v7084, %v7080
    %v7086 = vlaneseq
    %v7087 = vshrl.u32 %v7086, 7
    %v7088 = vsub.s32 %v6989, %v7087
    %v7089 = vrot.slane %v6628, %v7088
    %v7090 = vsel %vm6994, %v7089, %v7085
    %v7091 = vlaneseq
    %v7092 = vshrl.u32 %v7091, 7
    %v7093 = vsub.s32 %v6996, %v7092
    %v7094 = vrot.slane %v6631, %v7093
    %v7095 = vsel %vm7001, %v7094, %v7090
    %v7096 = vlaneseq
    %v7097 = vshrl.u32 %v7096, 7
    %v7098 = vsub.s32 %v7003, %v7097
    %v7099 = vrot.slane %v6634, %v7098
    %v7100 = vsel %vm7008, %v7099, %v7095
    %v7101 = vlaneseq
    %v7102 = vshrl.u32 %v7101, 7
    %v7103 = vsub.s32 %v7010, %v7102
    %v7104 = vrot.slane %v6637, %v7103
    %v7105 = vsel %vm7015, %v7104, %v7100
    %v7106 = vlaneseq
    %v7107 = vshrl.u32 %v7106, 7
    %v7108 = vsub.s32 %v7017, %v7107
    %v7109 = vrot.slane %v6640, %v7108
    %v7110 = vsel %vm7022, %v7109, %v7105
    %v7111 = vlaneseq
    %v7112 = vshrl.u32 %v7111, 7
    %v7113 = vsub.s32 %v7024, %v7112
    %v7114 = vrot.slane %v6643, %v7113
    %v7115 = vsel %vm7029, %v7114, %v7110
    %v7116 = vlaneseq
    %v7117 = vshrl.u32 %v7116, 7
    %v7118 = vsub.s32 %v7031, %v7117
    %v7119 = vrot.slane %v6646, %v7118
    %v7120 = vsel %vm7036, %v7119, %v7115
    %v7121 = vlaneseq
    %v7122 = vshrl.u32 %v7121, 7
    %v7123 = vsub.s32 %v7038, %v7122
    %v7124 = vrot.slane %v6649, %v7123
    %v7125 = vsel %vm7043, %v7124, %v7120
    %v7126 = vlaneseq
    %v7127 = vshrl.u32 %v7126, 7
    %v7128 = vsub.s32 %v7045, %v7127
    %v7129 = vrot.slane %v6652, %v7128
    %v7130 = vsel %vm7050, %v7129, %v7125
    %v7131 = vlaneseq
    %v7132 = vshrl.u32 %v7131, 7
    %v7133 = vsub.s32 %v6942, %v7132
    %v7134 = vrot.slane %v6655, %v7133
    %v7135 = vlaneseq
    %v7136 = vshrl.u32 %v7135, 7
    %v7137 = vsub.s32 %v6947, %v7136
    %v7138 = vrot.slane %v6658, %v7137
    %v7139 = vsel %vm6952, %v7138, %v7134
    %v7140 = vlaneseq
    %v7141 = vshrl.u32 %v7140, 7
    %v7142 = vsub.s32 %v6954, %v7141
    %v7143 = vrot.slane %v6661, %v7142
    %v7144 = vsel %vm6959, %v7143, %v7139
    %v7145 = vlaneseq
    %v7146 = vshrl.u32 %v7145, 7
    %v7147 = vsub.s32 %v6961, %v7146
    %v7148 = vrot.slane %v6664, %v7147
    %v7149 = vsel %vm6966, %v7148, %v7144
    %v7150 = vlaneseq
    %v7151 = vshrl.u32 %v7150, 7
    %v7152 = vsub.s32 %v6968, %v7151
    %v7153 = vrot.slane %v6667, %v7152
    %v7154 = vsel %vm6973, %v7153, %v7149
    %v7155 = vlaneseq
    %v7156 = vshrl.u32 %v7155, 7
    %v7157 = vsub.s32 %v6975, %v7156
    %v7158 = vrot.slane %v6670, %v7157
    %v7159 = vsel %vm6980, %v7158, %v7154
    %v7160 = vlaneseq
    %v7161 = vshrl.u32 %v7160, 7
    %v7162 = vsub.s32 %v6982, %v7161
    %v7163 = vrot.slane %v6673, %v7162
    %v7164 = vsel %vm6987, %v7163, %v7159
    %v7165 = vlaneseq
    %v7166 = vshrl.u32 %v7165, 7
    %v7167 = vsub.s32 %v6989, %v7166
    %v7168 = vrot.slane %v6676, %v7167
    %v7169 = vsel %vm6994, %v7168, %v7164
    %v7170 = vlaneseq
    %v7171 = vshrl.u32 %v7170, 7
    %v7172 = vsub.s32 %v6996, %v7171
    %v7173 = vrot.slane %v6679, %v7172
    %v7174 = vsel %vm7001, %v7173, %v7169
    %v7175 = vlaneseq
    %v7176 = vshrl.u32 %v7175, 7
    %v7177 = vsub.s32 %v7003, %v7176
    %v7178 = vrot.slane %v6682, %v7177
    %v7179 = vsel %vm7008, %v7178, %v7174
    %v7180 = vlaneseq
    %v7181 = vshrl.u32 %v7180, 7
    %v7182 = vsub.s32 %v7010, %v7181
    %v7183 = vrot.slane %v6685, %v7182
    %v7184 = vsel %vm7015, %v7183, %v7179
    %v7185 = vlaneseq
    %v7186 = vshrl.u32 %v7185, 7
    %v7187 = vsub.s32 %v7017, %v7186
    %v7188 = vrot.slane %v6688, %v7187
    %v7189 = vsel %vm7022, %v7188, %v7184
    %v7190 = vlaneseq
    %v7191 = vshrl.u32 %v7190, 7
    %v7192 = vsub.s32 %v7024, %v7191
    %v7193 = vrot.slane %v6691, %v7192
    %v7194 = vsel %vm7029, %v7193, %v7189
    %v7195 = vlaneseq
    %v7196 = vshrl.u32 %v7195, 7
    %v7197 = vsub.s32 %v7031, %v7196
    %v7198 = vrot.slane %v6694, %v7197
    %v7199 = vsel %vm7036, %v7198, %v7194
    %v7200 = vlaneseq
    %v7201 = vshrl.u32 %v7200, 7
    %v7202 = vsub.s32 %v7038, %v7201
    %v7203 = vrot.slane %v6697, %v7202
    %v7204 = vsel %vm7043, %v7203, %v7199
    %v7205 = vlaneseq
    %v7206 = vshrl.u32 %v7205, 7
    %v7207 = vsub.s32 %v7045, %v7206
    %v7208 = vrot.slane %v6700, %v7207
    %v7209 = vsel %vm7050, %v7208, %v7204
    %v7210 = vlaneseq
    %v7211 = vshrl.u32 %v7210, 7
    %v7212 = vsub.s32 %v6942, %v7211
    %v7213 = vrot.slane %v6703, %v7212
    %v7214 = vlaneseq
    %v7215 = vshrl.u32 %v7214, 7
    %v7216 = vsub.s32 %v6947, %v7215
    %v7217 = vrot.slane %v6706, %v7216
    %v7218 = vsel %vm6952, %v7217, %v7213
    %v7219 = vlaneseq
    %v7220 = vshrl.u32 %v7219, 7
    %v7221 = vsub.s32 %v6954, %v7220
    %v7222 = vrot.slane %v6709, %v7221
    %v7223 = vsel %vm6959, %v7222, %v7218
    %v7224 = vlaneseq
    %v7225 = vshrl.u32 %v7224, 7
    %v7226 = vsub.s32 %v6961, %v7225
    %v7227 = vrot.slane %v6712, %v7226
    %v7228 = vsel %vm6966, %v7227, %v7223
    %v7229 = vlaneseq
    %v7230 = vshrl.u32 %v7229, 7
    %v7231 = vsub.s32 %v6968, %v7230
    %v7232 = vrot.slane %v6715, %v7231
    %v7233 = vsel %vm6973, %v7232, %v7228
    %v7234 = vlaneseq
    %v7235 = vshrl.u32 %v7234, 7
    %v7236 = vsub.s32 %v6975, %v7235
    %v7237 = vrot.slane %v6718, %v7236
    %v7238 = vsel %vm6980, %v7237, %v7233
    %v7239 = vlaneseq
    %v7240 = vshrl.u32 %v7239, 7
    %v7241 = vsub.s32 %v6982, %v7240
    %v7242 = vrot.slane %v6721, %v7241
    %v7243 = vsel %vm6987, %v7242, %v7238
    %v7244 = vlaneseq
    %v7245 = vshrl.u32 %v7244, 7
    %v7246 = vsub.s32 %v6989, %v7245
    %v7247 = vrot.slane %v6724, %v7246
    %v7248 = vsel %vm6994, %v7247, %v7243
    %v7249 = vlaneseq
    %v7250 = vshrl.u32 %v7249, 7
    %v7251 = vsub.s32 %v6996, %v7250
    %v7252 = vrot.slane %v6727, %v7251
    %v7253 = vsel %vm7001, %v7252, %v7248
    %v7254 = vlaneseq
    %v7255 = vshrl.u32 %v7254, 7
    %v7256 = vsub.s32 %v7003, %v7255
    %v7257 = vrot.slane %v6730, %v7256
    %v7258 = vsel %vm7008, %v7257, %v7253
    %v7259 = vlaneseq
    %v7260 = vshrl.u32 %v7259, 7
    %v7261 = vsub.s32 %v7010, %v7260
    %v7262 = vrot.slane %v6733, %v7261
    %v7263 = vsel %vm7015, %v7262, %v7258
    %v7264 = vlaneseq
    %v7265 = vshrl.u32 %v7264, 7
    %v7266 = vsub.s32 %v7017, %v7265
    %v7267 = vrot.slane %v6736, %v7266
    %v7268 = vsel %vm7022, %v7267, %v7263
    %v7269 = vlaneseq
    %v7270 = vshrl.u32 %v7269, 7
    %v7271 = vsub.s32 %v7024, %v7270
    %v7272 = vrot.slane %v6739, %v7271
    %v7273 = vsel %vm7029, %v7272, %v7268
    %v7274 = vlaneseq
    %v7275 = vshrl.u32 %v7274, 7
    %v7276 = vsub.s32 %v7031, %v7275
    %v7277 = vrot.slane %v6742, %v7276
    %v7278 = vsel %vm7036, %v7277, %v7273
    %v7279 = vlaneseq
    %v7280 = vshrl.u32 %v7279, 7
    %v7281 = vsub.s32 %v7038, %v7280
    %v7282 = vrot.slane %v6745, %v7281
    %v7283 = vsel %vm7043, %v7282, %v7278
    %v7284 = vlaneseq
    %v7285 = vshrl.u32 %v7284, 7
    %v7286 = vsub.s32 %v7045, %v7285
    %v7287 = vrot.slane %v6748, %v7286
    %v7288 = vsel %vm7050, %v7287, %v7283
    %v7289 = vlaneseq
    %v7290 = vshrl.u32 %v7289, 7
    %v7291 = vsub.s32 %v6942, %v7290
    %v7292 = vrot.slane %v6751, %v7291
    %v7293 = vlaneseq
    %v7294 = vshrl.u32 %v7293, 7
    %v7295 = vsub.s32 %v6947, %v7294
    %v7296 = vrot.slane %v6754, %v7295
    %v7297 = vsel %vm6952, %v7296, %v7292
    %v7298 = vlaneseq
    %v7299 = vshrl.u32 %v7298, 7
    %v7300 = vsub.s32 %v6954, %v7299
    %v7301 = vrot.slane %v6757, %v7300
    %v7302 = vsel %vm6959, %v7301, %v7297
    %v7303 = vlaneseq
    %v7304 = vshrl.u32 %v7303, 7
    %v7305 = vsub.s32 %v6961, %v7304
    %v7306 = vrot.slane %v6760, %v7305
    %v7307 = vsel %vm6966, %v7306, %v7302
    %v7308 = vlaneseq
    %v7309 = vshrl.u32 %v7308, 7
    %v7310 = vsub.s32 %v6968, %v7309
    %v7311 = vrot.slane %v6763, %v7310
    %v7312 = vsel %vm6973, %v7311, %v7307
    %v7313 = vlaneseq
    %v7314 = vshrl.u32 %v7313, 7
    %v7315 = vsub.s32 %v6975, %v7314
    %v7316 = vrot.slane %v6766, %v7315
    %v7317 = vsel %vm6980, %v7316, %v7312
    %v7318 = vlaneseq
    %v7319 = vshrl.u32 %v7318, 7
    %v7320 = vsub.s32 %v6982, %v7319
    %v7321 = vrot.slane %v6769, %v7320
    %v7322 = vsel %vm6987, %v7321, %v7317
    %v7323 = vlaneseq
    %v7324 = vshrl.u32 %v7323, 7
    %v7325 = vsub.s32 %v6989, %v7324
    %v7326 = vrot.slane %v6772, %v7325
    %v7327 = vsel %vm6994, %v7326, %v7322
    %v7328 = vlaneseq
    %v7329 = vshrl.u32 %v7328, 7
    %v7330 = vsub.s32 %v6996, %v7329
    %v7331 = vrot.slane %v6775, %v7330
    %v7332 = vsel %vm7001, %v7331, %v7327
    %v7333 = vlaneseq
    %v7334 = vshrl.u32 %v7333, 7
    %v7335 = vsub.s32 %v7003, %v7334
    %v7336 = vrot.slane %v6778, %v7335
    %v7337 = vsel %vm7008, %v7336, %v7332
    %v7338 = vlaneseq
    %v7339 = vshrl.u32 %v7338, 7
    %v7340 = vsub.s32 %v7010, %v7339
    %v7341 = vrot.slane %v6781, %v7340
    %v7342 = vsel %vm7015, %v7341, %v7337
    %v7343 = vlaneseq
    %v7344 = vshrl.u32 %v7343, 7
    %v7345 = vsub.s32 %v7017, %v7344
    %v7346 = vrot.slane %v6784, %v7345
    %v7347 = vsel %vm7022, %v7346, %v7342
    %v7348 = vlaneseq
    %v7349 = vshrl.u32 %v7348, 7
    %v7350 = vsub.s32 %v7024, %v7349
    %v7351 = vrot.slane %v6787, %v7350
    %v7352 = vsel %vm7029, %v7351, %v7347
    %v7353 = vlaneseq
    %v7354 = vshrl.u32 %v7353, 7
    %v7355 = vsub.s32 %v7031, %v7354
    %v7356 = vrot.slane %v6790, %v7355
    %v7357 = vsel %vm7036, %v7356, %v7352
    %v7358 = vlaneseq
    %v7359 = vshrl.u32 %v7358, 7
    %v7360 = vsub.s32 %v7038, %v7359
    %v7361 = vrot.slane %v6793, %v7360
    %v7362 = vsel %vm7043, %v7361, %v7357
    %v7363 = vlaneseq
    %v7364 = vshrl.u32 %v7363, 7
    %v7365 = vsub.s32 %v7045, %v7364
    %v7366 = vrot.slane %v6796, %v7365
    %v7367 = vsel %vm7050, %v7366, %v7362
    %v7368 = vlaneseq
    %v7369 = vshrl.u32 %v7368, 7
    %v7370 = vsub.s32 %v6942, %v7369
    %v7371 = vrot.slane %v6799, %v7370
    %v7372 = vlaneseq
    %v7373 = vshrl.u32 %v7372, 7
    %v7374 = vsub.s32 %v6947, %v7373
    %v7375 = vrot.slane %v6802, %v7374
    %v7376 = vsel %vm6952, %v7375, %v7371
    %v7377 = vlaneseq
    %v7378 = vshrl.u32 %v7377, 7
    %v7379 = vsub.s32 %v6954, %v7378
    %v7380 = vrot.slane %v6805, %v7379
    %v7381 = vsel %vm6959, %v7380, %v7376
    %v7382 = vlaneseq
    %v7383 = vshrl.u32 %v7382, 7
    %v7384 = vsub.s32 %v6961, %v7383
    %v7385 = vrot.slane %v6808, %v7384
    %v7386 = vsel %vm6966, %v7385, %v7381
    %v7387 = vlaneseq
    %v7388 = vshrl.u32 %v7387, 7
    %v7389 = vsub.s32 %v6968, %v7388
    %v7390 = vrot.slane %v6811, %v7389
    %v7391 = vsel %vm6973, %v7390, %v7386
    %v7392 = vlaneseq
    %v7393 = vshrl.u32 %v7392, 7
    %v7394 = vsub.s32 %v6975, %v7393
    %v7395 = vrot.slane %v6814, %v7394
    %v7396 = vsel %vm6980, %v7395, %v7391
    %v7397 = vlaneseq
    %v7398 = vshrl.u32 %v7397, 7
    %v7399 = vsub.s32 %v6982, %v7398
    %v7400 = vrot.slane %v6817, %v7399
    %v7401 = vsel %vm6987, %v7400, %v7396
    %v7402 = vlaneseq
    %v7403 = vshrl.u32 %v7402, 7
    %v7404 = vsub.s32 %v6989, %v7403
    %v7405 = vrot.slane %v6820, %v7404
    %v7406 = vsel %vm6994, %v7405, %v7401
    %v7407 = vlaneseq
    %v7408 = vshrl.u32 %v7407, 7
    %v7409 = vsub.s32 %v6996, %v7408
    %v7410 = vrot.slane %v6823, %v7409
    %v7411 = vsel %vm7001, %v7410, %v7406
    %v7412 = vlaneseq
    %v7413 = vshrl.u32 %v7412, 7
    %v7414 = vsub.s32 %v7003, %v7413
    %v7415 = vrot.slane %v6826, %v7414
    %v7416 = vsel %vm7008, %v7415, %v7411
    %v7417 = vlaneseq
    %v7418 = vshrl.u32 %v7417, 7
    %v7419 = vsub.s32 %v7010, %v7418
    %v7420 = vrot.slane %v6829, %v7419
    %v7421 = vsel %vm7015, %v7420, %v7416
    %v7422 = vlaneseq
    %v7423 = vshrl.u32 %v7422, 7
    %v7424 = vsub.s32 %v7017, %v7423
    %v7425 = vrot.slane %v6832, %v7424
    %v7426 = vsel %vm7022, %v7425, %v7421
    %v7427 = vlaneseq
    %v7428 = vshrl.u32 %v7427, 7
    %v7429 = vsub.s32 %v7024, %v7428
    %v7430 = vrot.slane %v6835, %v7429
    %v7431 = vsel %vm7029, %v7430, %v7426
    %v7432 = vlaneseq
    %v7433 = vshrl.u32 %v7432, 7
    %v7434 = vsub.s32 %v7031, %v7433
    %v7435 = vrot.slane %v6838, %v7434
    %v7436 = vsel %vm7036, %v7435, %v7431
    %v7437 = vlaneseq
    %v7438 = vshrl.u32 %v7437, 7
    %v7439 = vsub.s32 %v7038, %v7438
    %v7440 = vrot.slane %v6841, %v7439
    %v7441 = vsel %vm7043, %v7440, %v7436
    %v7442 = vlaneseq
    %v7443 = vshrl.u32 %v7442, 7
    %v7444 = vsub.s32 %v7045, %v7443
    %v7445 = vrot.slane %v6844, %v7444
    %v7446 = vsel %vm7050, %v7445, %v7441
    %v7447 = vlaneseq
    %v7448 = vshrl.u32 %v7447, 7
    %v7449 = vsub.s32 %v6942, %v7448
    %v7450 = vrot.slane %v6847, %v7449
    %v7451 = vlaneseq
    %v7452 = vshrl.u32 %v7451, 7
    %v7453 = vsub.s32 %v6947, %v7452
    %v7454 = vrot.slane %v6850, %v7453
    %v7455 = vsel %vm6952, %v7454, %v7450
    %v7456 = vlaneseq
    %v7457 = vshrl.u32 %v7456, 7
    %v7458 = vsub.s32 %v6954, %v7457
    %v7459 = vrot.slane %v6853, %v7458
    %v7460 = vsel %vm6959, %v7459, %v7455
    %v7461 = vlaneseq
    %v7462 = vshrl.u32 %v7461, 7
    %v7463 = vsub.s32 %v6961, %v7462
    %v7464 = vrot.slane %v6856, %v7463
    %v7465 = vsel %vm6966, %v7464, %v7460
    %v7466 = vlaneseq
    %v7467 = vshrl.u32 %v7466, 7
    %v7468 = vsub.s32 %v6968, %v7467
    %v7469 = vrot.slane %v6859, %v7468
    %v7470 = vsel %vm6973, %v7469, %v7465
    %v7471 = vlaneseq
    %v7472 = vshrl.u32 %v7471, 7
    %v7473 = vsub.s32 %v6975, %v7472
    %v7474 = vrot.slane %v6862, %v7473
    %v7475 = vsel %vm6980, %v7474, %v7470
    %v7476 = vlaneseq
    %v7477 = vshrl.u32 %v7476, 7
    %v7478 = vsub.s32 %v6982, %v7477
    %v7479 = vrot.slane %v6865, %v7478
    %v7480 = vsel %vm6987, %v7479, %v7475
    %v7481 = vlaneseq
    %v7482 = vshrl.u32 %v7481, 7
    %v7483 = vsub.s32 %v6989, %v7482
    %v7484 = vrot.slane %v6868, %v7483
    %v7485 = vsel %vm6994, %v7484, %v7480
    %v7486 = vlaneseq
    %v7487 = vshrl.u32 %v7486, 7
    %v7488 = vsub.s32 %v6996, %v7487
    %v7489 = vrot.slane %v6871, %v7488
    %v7490 = vsel %vm7001, %v7489, %v7485
    %v7491 = vlaneseq
    %v7492 = vshrl.u32 %v7491, 7
    %v7493 = vsub.s32 %v7003, %v7492
    %v7494 = vrot.slane %v6874, %v7493
    %v7495 = vsel %vm7008, %v7494, %v7490
    %v7496 = vlaneseq
    %v7497 = vshrl.u32 %v7496, 7
    %v7498 = vsub.s32 %v7010, %v7497
    %v7499 = vrot.slane %v6877, %v7498
    %v7500 = vsel %vm7015, %v7499, %v7495
    %v7501 = vlaneseq
    %v7502 = vshrl.u32 %v7501, 7
    %v7503 = vsub.s32 %v7017, %v7502
    %v7504 = vrot.slane %v6880, %v7503
    %v7505 = vsel %vm7022, %v7504, %v7500
    %v7506 = vlaneseq
    %v7507 = vshrl.u32 %v7506, 7
    %v7508 = vsub.s32 %v7024, %v7507
    %v7509 = vrot.slane %v6883, %v7508
    %v7510 = vsel %vm7029, %v7509, %v7505
    %v7511 = vlaneseq
    %v7512 = vshrl.u32 %v7511, 7
    %v7513 = vsub.s32 %v7031, %v7512
    %v7514 = vrot.slane %v6886, %v7513
    %v7515 = vsel %vm7036, %v7514, %v7510
    %v7516 = vlaneseq
    %v7517 = vshrl.u32 %v7516, 7
    %v7518 = vsub.s32 %v7038, %v7517
    %v7519 = vrot.slane %v6889, %v7518
    %v7520 = vsel %vm7043, %v7519, %v7515
    %v7521 = vlaneseq
    %v7522 = vshrl.u32 %v7521, 7
    %v7523 = vsub.s32 %v7045, %v7522
    %v7524 = vrot.slane %v6892, %v7523
    %v7525 = vsel %vm7050, %v7524, %v7520
    %v7526 = vlaneseq
    %v7527 = vshrl.u32 %v7526, 7
    %v7528 = vsub.s32 %v6942, %v7527
    %v7529 = vrot.slane %v6895, %v7528
    %v7530 = vlaneseq
    %v7531 = vshrl.u32 %v7530, 7
    %v7532 = vsub.s32 %v6947, %v7531
    %v7533 = vrot.slane %v6898, %v7532
    %v7534 = vsel %vm6952, %v7533, %v7529
    %v7535 = vlaneseq
    %v7536 = vshrl.u32 %v7535, 7
    %v7537 = vsub.s32 %v6954, %v7536
    %v7538 = vrot.slane %v6901, %v7537
    %v7539 = vsel %vm6959, %v7538, %v7534
    %v7540 = vlaneseq
    %v7541 = vshrl.u32 %v7540, 7
    %v7542 = vsub.s32 %v6961, %v7541
    %v7543 = vrot.slane %v6904, %v7542
    %v7544 = vsel %vm6966, %v7543, %v7539
    %v7545 = vlaneseq
    %v7546 = vshrl.u32 %v7545, 7
    %v7547 = vsub.s32 %v6968, %v7546
    %v7548 = vrot.slane %v6907, %v7547
    %v7549 = vsel %vm6973, %v7548, %v7544
    %v7550 = vlaneseq
    %v7551 = vshrl.u32 %v7550, 7
    %v7552 = vsub.s32 %v6975, %v7551
    %v7553 = vrot.slane %v6910, %v7552
    %v7554 = vsel %vm6980, %v7553, %v7549
    %v7555 = vlaneseq
    %v7556 = vshrl.u32 %v7555, 7
    %v7557 = vsub.s32 %v6982, %v7556
    %v7558 = vrot.slane %v6913, %v7557
    %v7559 = vsel %vm6987, %v7558, %v7554
    %v7560 = vlaneseq
    %v7561 = vshrl.u32 %v7560, 7
    %v7562 = vsub.s32 %v6989, %v7561
    %v7563 = vrot.slane %v6916, %v7562
    %v7564 = vsel %vm6994, %v7563, %v7559
    %v7565 = vlaneseq
    %v7566 = vshrl.u32 %v7565, 7
    %v7567 = vsub.s32 %v6996, %v7566
    %v7568 = vrot.slane %v6919, %v7567
    %v7569 = vsel %vm7001, %v7568, %v7564
    %v7570 = vlaneseq
    %v7571 = vshrl.u32 %v7570, 7
    %v7572 = vsub.s32 %v7003, %v7571
    %v7573 = vrot.slane %v6922, %v7572
    %v7574 = vsel %vm7008, %v7573, %v7569
    %v7575 = vlaneseq
    %v7576 = vshrl.u32 %v7575, 7
    %v7577 = vsub.s32 %v7010, %v7576
    %v7578 = vrot.slane %v6925, %v7577
    %v7579 = vsel %vm7015, %v7578, %v7574
    %v7580 = vlaneseq
    %v7581 = vshrl.u32 %v7580, 7
    %v7582 = vsub.s32 %v7017, %v7581
    %v7583 = vrot.slane %v6928, %v7582
    %v7584 = vsel %vm7022, %v7583, %v7579
    %v7585 = vlaneseq
    %v7586 = vshrl.u32 %v7585, 7
    %v7587 = vsub.s32 %v7024, %v7586
    %v7588 = vrot.slane %v6931, %v7587
    %v7589 = vsel %vm7029, %v7588, %v7584
    %v7590 = vlaneseq
    %v7591 = vshrl.u32 %v7590, 7
    %v7592 = vsub.s32 %v7031, %v7591
    %v7593 = vrot.slane %v6934, %v7592
    %v7594 = vsel %vm7036, %v7593, %v7589
    %v7595 = vlaneseq
    %v7596 = vshrl.u32 %v7595, 7
    %v7597 = vsub.s32 %v7038, %v7596
    %v7598 = vrot.slane %v6937, %v7597
    %v7599 = vsel %vm7043, %v7598, %v7594
    %v7600 = vlaneseq
    %v7601 = vshrl.u32 %v7600, 7
    %v7602 = vsub.s32 %v7045, %v7601
    %v7603 = vrot.slane %v6940, %v7602
    %v7604 = vsel %vm7050, %v7603, %v7599
    %vm7605 = vcmask 1041409
    %v7606 = vsel %vm7605, %v7367, %v7051
    %v7607 = vsel %vm7605, %v7446, %v7130
    %v7608 = vsel %vm7605, %v7525, %v7209
    %v7609 = vsel %vm7605, %v7604, %v7288
    %v7610 = vcombine.low %v7606, %v7607
    %v7611 = vcombine.low %v7608, %v7609
    %v7613 = vunpack.c.l.s4 1983009808
    %v7614 = vunpack.c.0.s8 %v7613
    %v7615 = vlaneseq
    %v7616 = vshrl.u32 %v7615, 7
    %v7617 = vsub.s32 %v7614, %v7616
    %v7618 = vrot.slane %v7610, %v7617
    %v7620 = vunpack.c.l.s4 1983009808
    %v7621 = vunpack.c.0.s8 %v7620
    %v7622 = vlaneseq
    %v7623 = vshrl.u32 %v7622, 7
    %v7624 = vsub.s32 %v7621, %v7623
    %v7625 = vrot.slane %v7611, %v7624
    %v7626 = vcombine.low %v7618, %v7625
    %v7628 = vadd.f32 %v283, %v7626
    %7629 = vst [vmem:[#allocation2] sm:$0xff] %v7628
    // Predicated region
    $region22: #{tpu_custom_call.1} parent=1 // pred_check
      %p7630 = pneg %p22
    $region23: #{tpu_custom_call.1} parent=1 // pred_check_branch
      %7632 = sbr.rel (%p7630) target = $region25
    $region24: #{tpu_custom_call.1} parent=1 // pred_region
      %v7633 = vld [vmem:[#allocation2] sm:$0xff]
      %v7634 = vmul.f32 %v7633, 0.015625
      %7635 = vst [vmem:[#allocation2] sm:$0xff] %v7634
      %v7637 = vcombine.high %v7634, %v7634
      %v7639 = vunpack.c.l.s4 1983009808
      %v7640 = vunpack.c.0.s8 %v7639
      %v7641 = vlaneseq
      %v7642 = vshrl.u32 %v7641, 7
      %v7643 = vsub.s32 %v7640, %v7642
      %v7644 = vrot.slane %v7634, %v7643
      %v7646 = vunpack.c.l.s4 1983009808
      %v7647 = vunpack.c.0.s8 %v7646
      %v7648 = vlaneseq
      %v7649 = vshrl.u32 %v7648, 7
      %v7650 = vsub.s32 %v7647, %v7649
      %v7651 = vrot.slane %v7637, %v7650
      %v7652 = vcombine.high %v7644, %v7644
      %v7653 = vcombine.high %v7651, %v7651
      %vm7658 = vcmask 1041408
      %v7659 = vsel %vm7658, %v7644, 0.0
      %v7660 = vrot.slane %v7659, 4
      %v7661 = vadd.f32 %v7659, %v7660
      %v7662 = vrot.slane %v7661, 2
      %v7663 = vadd.f32 %v7661, %v7662
      %v7664 = vrot.slane %v7663, 1
      %v7665 = vadd.f32 %v7663, %v7664
      %v7666 = vsel %vm7658, %v7652, 0.0
      %v7667 = vrot.slane %v7666, 4
      %v7668 = vadd.f32 %v7666, %v7667
      %v7669 = vrot.slane %v7668, 2
      %v7670 = vadd.f32 %v7668, %v7669
      %v7671 = vrot.slane %v7670, 1
      %v7672 = vadd.f32 %v7670, %v7671
      %v7673 = vsel %vm7658, %v7651, 0.0
      %v7674 = vrot.slane %v7673, 4
      %v7675 = vadd.f32 %v7673, %v7674
      %v7676 = vrot.slane %v7675, 2
      %v7677 = vadd.f32 %v7675, %v7676
      %v7678 = vrot.slane %v7677, 1
      %v7679 = vadd.f32 %v7677, %v7678
      %v7680 = vsel %vm7658, %v7653, 0.0
      %v7681 = vrot.slane %v7680, 4
      %v7682 = vadd.f32 %v7680, %v7681
      %v7683 = vrot.slane %v7682, 2
      %v7684 = vadd.f32 %v7682, %v7683
      %v7685 = vrot.slane %v7684, 1
      %v7686 = vadd.f32 %v7684, %v7685
      %v7687 = vrcp.pop 2.0
      %v7688 = vmul.f32 %v7665, %v7687
      %v7689 = vmul.f32 %v7672, %v7687
      %v7690 = vmul.f32 %v7679, %v7687
      %v7691 = vmul.f32 %v7686, %v7687
      %v7696 = vcombine.low %v7688, %v7689
      %v7697 = vcombine.low %v7690, %v7691
      %v7699 = vunpack.c.l.s4 1983009808
      %v7700 = vunpack.c.0.s8 %v7699
      %v7701 = vlaneseq
      %v7702 = vshrl.u32 %v7701, 7
      %v7703 = vsub.s32 %v7700, %v7702
      %v7704 = vrot.slane %v7696, %v7703
      %v7706 = vunpack.c.l.s4 1983009808
      %v7707 = vunpack.c.0.s8 %v7706
      %v7708 = vlaneseq
      %v7709 = vshrl.u32 %v7708, 7
      %v7710 = vsub.s32 %v7707, %v7709
      %v7711 = vrot.slane %v7697, %v7710
      %v7712 = vcombine.low %v7704, %v7711
      %v7714 = vsub.f32 %v7634, %v7712
      %v7715 = vmul.f32 %v7714, %v7714
      %v7717 = vcombine.high %v7715, %v7715
      %v7719 = vunpack.c.l.s4 1983009808
      %v7720 = vunpack.c.0.s8 %v7719
      %v7721 = vlaneseq
      %v7722 = vshrl.u32 %v7721, 7
      %v7723 = vsub.s32 %v7720, %v7722
      %v7724 = vrot.slane %v7715, %v7723
      %v7726 = vunpack.c.l.s4 1983009808
      %v7727 = vunpack.c.0.s8 %v7726
      %v7728 = vlaneseq
      %v7729 = vshrl.u32 %v7728, 7
      %v7730 = vsub.s32 %v7727, %v7729
      %v7731 = vrot.slane %v7717, %v7730
      %v7732 = vcombine.high %v7724, %v7724
      %v7733 = vcombine.high %v7731, %v7731
      %v7738 = vsel %vm7658, %v7724, 0.0
      %v7739 = vrot.slane %v7738, 4
      %v7740 = vadd.f32 %v7738, %v7739
      %v7741 = vrot.slane %v7740, 2
      %v7742 = vadd.f32 %v7740, %v7741
      %v7743 = vrot.slane %v7742, 1
      %v7744 = vadd.f32 %v7742, %v7743
      %v7745 = vsel %vm7658, %v7732, 0.0
      %v7746 = vrot.slane %v7745, 4
      %v7747 = vadd.f32 %v7745, %v7746
      %v7748 = vrot.slane %v7747, 2
      %v7749 = vadd.f32 %v7747, %v7748
      %v7750 = vrot.slane %v7749, 1
      %v7751 = vadd.f32 %v7749, %v7750
      %v7752 = vsel %vm7658, %v7731, 0.0
      %v7753 = vrot.slane %v7752, 4
      %v7754 = vadd.f32 %v7752, %v7753
      %v7755 = vrot.slane %v7754, 2
      %v7756 = vadd.f32 %v7754, %v7755
      %v7757 = vrot.slane %v7756, 1
      %v7758 = vadd.f32 %v7756, %v7757
      %v7759 = vsel %vm7658, %v7733, 0.0
      %v7760 = vrot.slane %v7759, 4
      %v7761 = vadd.f32 %v7759, %v7760
      %v7762 = vrot.slane %v7761, 2
      %v7763 = vadd.f32 %v7761, %v7762
      %v7764 = vrot.slane %v7763, 1
      %v7765 = vadd.f32 %v7763, %v7764
      %v7766 = vmul.f32 %v7744, %v7687
      %v7767 = vmul.f32 %v7751, %v7687
      %v7768 = vmul.f32 %v7758, %v7687
      %v7769 = vmul.f32 %v7765, %v7687
      %v7770 = vadd.f32 %v7766, 1e-05
      %v7771 = vadd.f32 %v7767, 1e-05
      %v7772 = vadd.f32 %v7768, 1e-05
      %v7773 = vadd.f32 %v7769, 1e-05
      %v7774 = vrsqrt.pop %v7770
      %v7775 = vrsqrt.pop %v7771
      %v7776 = vrsqrt.pop %v7772
      %v7777 = vrsqrt.pop %v7773
      %v7782 = vcombine.low %v7774, %v7775
      %v7783 = vcombine.low %v7776, %v7777
      %v7785 = vunpack.c.l.s4 1983009808
      %v7786 = vunpack.c.0.s8 %v7785
      %v7787 = vlaneseq
      %v7788 = vshrl.u32 %v7787, 7
      %v7789 = vsub.s32 %v7786, %v7788
      %v7790 = vrot.slane %v7782, %v7789
      %v7792 = vunpack.c.l.s4 1983009808
      %v7793 = vunpack.c.0.s8 %v7792
      %v7794 = vlaneseq
      %v7795 = vshrl.u32 %v7794, 7
      %v7796 = vsub.s32 %v7793, %v7795
      %v7797 = vrot.slane %v7783, %v7796
      %v7798 = vcombine.low %v7790, %v7797
      %v7800 = vmul.f32 %v7714, %v7798
      %v7801 = vld [vmem:[%s1] sm:$0xf]
      %v7803 = vlaneseq
      %v7804 = vshrl.u32 %v7803, 7
      %v7805 = vsub.s32 0, %v7804
      %v7806 = vrot.slane %v7801, %v7805
      %v7807 = vlaneseq
      %v7808 = vshrl.u32 %v7807, 7
      %v7809 = vsub.s32 1, %v7808
      %v7810 = vrot.slane %v7801, %v7809
      %v7811 = vlaneseq
      %v7812 = vshrl.u32 %v7811, 7
      %v7813 = vsub.s32 2, %v7812
      %v7814 = vrot.slane %v7801, %v7813
      %v7815 = vlaneseq
      %v7816 = vshrl.u32 %v7815, 7
      %v7817 = vsub.s32 3, %v7816
      %v7818 = vrot.slane %v7801, %v7817
      %v7819 = vcombine.low %v7806, %v7810
      %v7820 = vcombine.low %v7814, %v7818
      %v7822 = vunpack.c.l.s4 1983009808
      %v7823 = vunpack.c.0.s8 %v7822
      %v7824 = vlaneseq
      %v7825 = vshrl.u32 %v7824, 7
      %v7826 = vsub.s32 %v7823, %v7825
      %v7827 = vrot.slane %v7819, %v7826
      %v7829 = vunpack.c.l.s4 1983009808
      %v7830 = vunpack.c.0.s8 %v7829
      %v7831 = vlaneseq
      %v7832 = vshrl.u32 %v7831, 7
      %v7833 = vsub.s32 %v7830, %v7832
      %v7834 = vrot.slane %v7820, %v7833
      %v7835 = vcombine.low %v7827, %v7834
      %v7837 = vmul.f32 %v7800, %v7835
      %v7838 = vld [vmem:[%s2] sm:$0xf]
      %v7840 = vlaneseq
      %v7841 = vshrl.u32 %v7840, 7
      %v7842 = vsub.s32 0, %v7841
      %v7843 = vrot.slane %v7838, %v7842
      %v7844 = vlaneseq
      %v7845 = vshrl.u32 %v7844, 7
      %v7846 = vsub.s32 1, %v7845
      %v7847 = vrot.slane %v7838, %v7846
      %v7848 = vlaneseq
      %v7849 = vshrl.u32 %v7848, 7
      %v7850 = vsub.s32 2, %v7849
      %v7851 = vrot.slane %v7838, %v7850
      %v7852 = vlaneseq
      %v7853 = vshrl.u32 %v7852, 7
      %v7854 = vsub.s32 3, %v7853
      %v7855 = vrot.slane %v7838, %v7854
      %v7856 = vcombine.low %v7843, %v7847
      %v7857 = vcombine.low %v7851, %v7855
      %v7859 = vunpack.c.l.s4 1983009808
      %v7860 = vunpack.c.0.s8 %v7859
      %v7861 = vlaneseq
      %v7862 = vshrl.u32 %v7861, 7
      %v7863 = vsub.s32 %v7860, %v7862
      %v7864 = vrot.slane %v7856, %v7863
      %v7866 = vunpack.c.l.s4 1983009808
      %v7867 = vunpack.c.0.s8 %v7866
      %v7868 = vlaneseq
      %v7869 = vshrl.u32 %v7868, 7
      %v7870 = vsub.s32 %v7867, %v7869
      %v7871 = vrot.slane %v7857, %v7870
      %v7872 = vcombine.low %v7864, %v7871
      %v7874 = vadd.f32 %v7837, %v7872
      %v7876 = vcombine.high %v7874, %v7874
      %v7878 = vunpack.c.l.s4 1983009808
      %v7879 = vunpack.c.0.s8 %v7878
      %v7880 = vlaneseq
      %v7881 = vshrl.u32 %v7880, 7
      %v7882 = vsub.s32 %v7879, %v7881
      %v7883 = vrot.slane %v7874, %v7882
      %v7885 = vunpack.c.l.s4 1983009808
      %v7886 = vunpack.c.0.s8 %v7885
      %v7887 = vlaneseq
      %v7888 = vshrl.u32 %v7887, 7
      %v7889 = vsub.s32 %v7886, %v7888
      %v7890 = vrot.slane %v7876, %v7889
      %v7891 = vcombine.high %v7883, %v7883
      %v7892 = vcombine.high %v7890, %v7890
      %v7897 = vpack.c.bf16 %v7883, %v7883
      %v7898 = vpack.c.bf16 %v7891, %v7891
      %v7899 = vpack.c.bf16 %v7890, %v7890
      %v7900 = vpack.c.bf16 %v7892, %v7892
      %v7901 = vld [vmem:[%s3] sm:$0xff]
      %v7902 = vld [vmem:[%s3 + $0x8] sm:$0xff]
      %v7903 = vld [vmem:[%s3 + $0x10] sm:$0xff]
      %v7904 = vld [vmem:[%s3 + $0x18] sm:$0xff]
      %v7905 = vld [vmem:[%s3 + $0x20] sm:$0xff]
      %v7906 = vld [vmem:[%s3 + $0x28] sm:$0xff]
      %v7907 = vld [vmem:[%s3 + $0x30] sm:$0xff]
      %v7908 = vld [vmem:[%s3 + $0x38] sm:$0xff]
      %v7909 = vpack.c.bf16 %v7905, %v7901
      %v7910 = vpack.c.bf16 %v7906, %v7902
      %v7911 = vpack.c.bf16 %v7907, %v7903
      %v7912 = vpack.c.bf16 %v7908, %v7904
      %7913 = vmatprep.subr.bf16.mxu0 0
      %7914 = vmatpush1.bf16.xpose.msra.mxu0 0
      %7915 = vmatprep.subr.bf16.mxu0 0
      %7916 = vmatpush1.bf16.xpose.msra.mxu0 0
      %7917 = vmatprep.subr.bf16.mxu0 0
      %7918 = vmatpush1.bf16.xpose.msra.mxu0 0
      %7919 = vmatprep.subr.bf16.mxu0 0
      %7920 = vmatpush1.bf16.xpose.msra.mxu0 0
      %7921 = vmatprep.subr.bf16.mxu0 0
      %7922 = vmatpush1.bf16.xpose.msra.mxu0 0
      %7923 = vmatprep.subr.bf16.mxu0 0
      %7924 = vmatpush1.bf16.xpose.msra.mxu0 0
      %7925 = vmatprep.subr.bf16.mxu0 0
      %7926 = vmatpush1.bf16.xpose.msra.mxu0 0
      %7927 = vmatprep.subr.bf16.mxu0 %v7910
      %7928 = vmatpush1.bf16.xpose.msra.mxu0 %v7909
      %7929 = vmatprep.subr.bf16.mxu0 0
      %7930 = vmatpush2.bf16.xpose.msra.mxu0 0
      %7931 = vmatprep.subr.bf16.mxu0 0
      %7932 = vmatpush2.bf16.xpose.msra.mxu0 0
      %7933 = vmatprep.subr.bf16.mxu0 0
      %7934 = vmatpush2.bf16.xpose.msra.mxu0 0
      %7935 = vmatprep.subr.bf16.mxu0 0
      %7936 = vmatpush2.bf16.xpose.msra.mxu0 0
      %7937 = vmatprep.subr.bf16.mxu0 0
      %7938 = vmatpush2.bf16.xpose.msra.mxu0 0
      %7939 = vmatprep.subr.bf16.mxu0 0
      %7940 = vmatpush2.bf16.xpose.msra.mxu0 0
      %7941 = vmatprep.subr.bf16.mxu0 0
      %7942 = vmatpush2.bf16.xpose.msra.mxu0 0
      %7943 = vmatprep.subr.bf16.mxu0 0
      %7944 = vmatpush2.bf16.xpose.msra.mxu0 0
      %7945 = vmatprep.mubr.bf16.mxu0 %v7898
      %7946 = vmatmul.mubr.bf16.gmra.mxu0 %v7897
      %v7947 = vpop.f32.mrf.mxu0
      %v7948 = vadd.f32 0.0, %v7947
      %v7949 = vpop.f32.mrf.mxu0
      %v7950 = vpop.f32.mrf.mxu0
      %v7951 = vpop.f32.mrf.mxu0
      %7952 = vdwg.mxu0
      %7953 = vmatprep.subr.bf16.mxu0 0
      %7954 = vmatpush1.bf16.xpose.msra.mxu0 0
      %7955 = vmatprep.subr.bf16.mxu0 0
      %7956 = vmatpush1.bf16.xpose.msra.mxu0 0
      %7957 = vmatprep.subr.bf16.mxu0 0
      %7958 = vmatpush1.bf16.xpose.msra.mxu0 0
      %7959 = vmatprep.subr.bf16.mxu0 0
      %7960 = vmatpush1.bf16.xpose.msra.mxu0 0
      %7961 = vmatprep.subr.bf16.mxu0 0
      %7962 = vmatpush1.bf16.xpose.msra.mxu0 0
      %7963 = vmatprep.subr.bf16.mxu0 0
      %7964 = vmatpush1.bf16.xpose.msra.mxu0 0
      %7965 = vmatprep.subr.bf16.mxu0 0
      %7966 = vmatpush1.bf16.xpose.msra.mxu0 0
      %7967 = vmatprep.subr.bf16.mxu0 %v7912
      %7968 = vmatpush1.bf16.xpose.msra.mxu0 %v7911
      %7969 = vmatprep.subr.bf16.mxu0 0
      %7970 = vmatpush2.bf16.xpose.msra.mxu0 0
      %7971 = vmatprep.subr.bf16.mxu0 0
      %7972 = vmatpush2.bf16.xpose.msra.mxu0 0
      %7973 = vmatprep.subr.bf16.mxu0 0
      %7974 = vmatpush2.bf16.xpose.msra.mxu0 0
      %7975 = vmatprep.subr.bf16.mxu0 0
      %7976 = vmatpush2.bf16.xpose.msra.mxu0 0
      %7977 = vmatprep.subr.bf16.mxu0 0
      %7978 = vmatpush2.bf16.xpose.msra.mxu0 0
      %7979 = vmatprep.subr.bf16.mxu0 0
      %7980 = vmatpush2.bf16.xpose.msra.mxu0 0
      %7981 = vmatprep.subr.bf16.mxu0 0
      %7982 = vmatpush2.bf16.xpose.msra.mxu0 0
      %7983 = vmatprep.subr.bf16.mxu0 0
      %7984 = vmatpush2.bf16.xpose.msra.mxu0 0
      %7985 = vmatprep.mubr.bf16.mxu0 %v7900
      %7986 = vmatmul.mubr.bf16.gmra.mxu0 %v7899
      %v7987 = vpop.f32.mrf.mxu0
      %v7988 = vadd.f32 %v7948, %v7987
      %v7989 = vpop.f32.mrf.mxu0
      %v7990 = vpop.f32.mrf.mxu0
      %v7991 = vpop.f32.mrf.mxu0
      %7992 = vdwg.mxu0
      %p7993 = scmp.eq.s32.totalorder 0, 0
      // Predicated region
      $region26: #{tpu_custom_call.1} parent=24 // pred_check
        %p7994 = pneg %p7993
      $region27: #{tpu_custom_call.1} parent=24 // pred_check_branch
        %7996 = sbr.rel (%p7994) target = $region29
      $region28: #{tpu_custom_call.1} parent=24 // pred_region
        %vm7997 = vcmask 123904
        %7998 = vst.msk [vmem:[#allocation4] sm:$0x3] %vm7997, %v7988
      $region29: #{tpu_custom_call.1} parent=24 // pred_fallthru
        _
      %p7999 = scmp.gt.s32.totalorder 0, 0
      // Predicated region
      $region30: #{tpu_custom_call.1} parent=24 // pred_check
        %p8000 = pneg %p7999
      $region31: #{tpu_custom_call.1} parent=24 // pred_check_branch
        %8002 = sbr.rel (%p8000) target = $region33
      $region32: #{tpu_custom_call.1} parent=24 // pred_region
        %v8003 = vld [vmem:[#allocation4] sm:$0x3]
        %v8004 = vadd.f32 %v8003, %v7988
        %vm8005 = vcmask 123904
        %8006 = vst.msk [vmem:[#allocation4] sm:$0x3] %vm8005, %v8004
      $region33: #{tpu_custom_call.1} parent=24 // pred_fallthru
        _
    $region25: #{tpu_custom_call.1} parent=1 // pred_fallthru
      _
    // Predicated region
    $region34: #{tpu_custom_call.1} parent=1 // pred_check
      _
    $region35: #{tpu_custom_call.1} parent=1 // pred_check_branch
      %8008 = sbr.rel (0) target = $region37
    $region36: #{tpu_custom_call.1} parent=1 // pred_region
      %s8010 = ssub.s32 128, 128
      %8011 = vsyncadd [#allocation3], %s8010
      %s8013 = sshll.u32 [#allocation2], 4
      %s8014 = int_to_ptr.vmem [resolvable:$true] %s8013
      %8016 = dma.vmem_to_hbm [thread:$0]  %s8014, 128, %s4, [#allocation3]
    $region37: #{tpu_custom_call.1} parent=1 // pred_fallthru
      _
    // Predicated region
    $region38: #{tpu_custom_call.1} parent=1 // pred_check
      _
    $region39: #{tpu_custom_call.1} parent=1 // pred_check_branch
      %8018 = sbr.rel (0) target = $region41
    $region40: #{tpu_custom_call.1} parent=1 // pred_region
      %s8020 = ssub.s32 32, 32
      %8021 = vsyncadd [#allocation5], %s8020
      %s8023 = sshll.u32 [#allocation4], 4
      %s8024 = int_to_ptr.vmem [resolvable:$true] %s8023
      %8026 = dma.vmem_to_hbm [thread:$0]  %s8024, 32, %s5, [#allocation5]
    $region41: #{tpu_custom_call.1} parent=1 // pred_fallthru
      _
    // Predicated region
    $region42: #{tpu_custom_call.1} parent=1 // pred_check
      _
    $region43: #{tpu_custom_call.1} parent=1 // pred_check_branch
      %8028 = sbr.rel (0) target = $region45
    $region44: #{tpu_custom_call.1} parent=1 // pred_region
      %8029 = dma.done [#allocation3], 128
    $region45: #{tpu_custom_call.1} parent=1 // pred_fallthru
      _
    // Predicated region
    $region46: #{tpu_custom_call.1} parent=1 // pred_check
      _
    $region47: #{tpu_custom_call.1} parent=1 // pred_check_branch
      %8031 = sbr.rel (0) target = $region49
    $region48: #{tpu_custom_call.1} parent=1 // pred_region
      %8032 = dma.done [#allocation5], 32
    $region49: #{tpu_custom_call.1} parent=1 // pred_fallthru
      _
    %8033 = vsyncpa [#allocation3], 1
    %8034 = vsyncpa [#allocation5], 1

</llo_original>
